<compile_context>
chip_gen: v7x
topology: tpu7x:2x2x1
jax: 0.10.0
libtpu: 0.0.40
codegen_flags: <defaults>
</compile_context>

<pallas_src>
import functools
import math

import jax
import jax.numpy as jnp
import numpy as np
from jax import lax
from jax.experimental import pallas as pl
from jax.experimental.pallas import tpu as pltpu

MXU_DTYPE = jnp.bfloat16          # MXU operand dtype; accumulation is always f32
ACT_DTYPE = jnp.bfloat16          # inter-kernel activation dtype (halves HBM traffic)
LN_EPS = 1e-5

_CP = pltpu.CompilerParams(vmem_limit_bytes=32 * 1024 * 1024)

LAYER_KEYS = ('in_wt', 'in_b', 'out_wt', 'out_b', 'l1_wt', 'l1_b',
              'l2_wt', 'l2_b', 'ln1_g', 'ln1_b', 'ln2_g', 'ln2_b')
N_LAYER_REFS = len(LAYER_KEYS)


# --------------------------- in-kernel helpers ------------------------------

def _layernorm(x, g, b, eps=LN_EPS):
    mu = jnp.mean(x, axis=-1, keepdims=True)
    var = jnp.mean(jnp.square(x - mu), axis=-1, keepdims=True)
    return (x - mu) * lax.rsqrt(var + eps) * g + b


def _encoder_layer(x, refs, nhead, head_dim, mask_bias):
    """One post-norm TransformerEncoderLayer on a batch-folded (R, D) block."""
    (in_wt, in_b, out_wt, out_b, l1_wt, l1_b, l2_wt, l2_b,
     ln1_g, ln1_b, ln2_g, ln2_b) = refs
    R, D = x.shape
    scale = 1.0 / math.sqrt(head_dim)

    qkv = jnp.dot(x.astype(MXU_DTYPE), in_wt[...],
                  preferred_element_type=jnp.float32) + in_b[...]       # (R, 3D)
    qkvb = qkv.astype(MXU_DTYPE)                 # single cast for all heads

    heads = []
    for h in range(nhead):
        lo = h * head_dim
        qh = qkvb[:, lo:lo + head_dim]
        kh = qkvb[:, D + lo:D + lo + head_dim]
        vh = qkvb[:, 2 * D + lo:2 * D + lo + head_dim]
        s = lax.dot_general(qh, kh, (((1,), (1,)), ((), ())),
                            preferred_element_type=jnp.float32) * scale
        s = s + mask_bias                        # block-diagonal: batches separate
        m = jnp.max(s, axis=-1, keepdims=True)
        p = jnp.exp(s - m)
        p = p * pl.reciprocal(jnp.sum(p, axis=-1, keepdims=True), approx=True)
        heads.append(jnp.dot(p.astype(MXU_DTYPE), vh,
                             preferred_element_type=jnp.float32))       # (R, Dh)

    # heads lane-concatenated -> one (R,D)x(D,D) output projection
    a = jnp.concatenate(heads, axis=-1).astype(MXU_DTYPE)
    attn = jnp.dot(a, out_wt[...], preferred_element_type=jnp.float32) + out_b[...]

    x1 = _layernorm(x + attn, ln1_g[...], ln1_b[...])                   # residual+LN1
    h1 = jnp.maximum(jnp.dot(x1.astype(MXU_DTYPE), l1_wt[...],
                             preferred_element_type=jnp.float32) + l1_b[...], 0.0)
    h2 = jnp.dot(h1.astype(MXU_DTYPE), l2_wt[...],
                 preferred_element_type=jnp.float32) + l2_b[...]
    return _layernorm(x1 + h2, ln2_g[...], ln2_b[...])                  # residual+LN2


# ------------------------------ fused kernels --------------------------------

def _stage0_kernel(x_ref, bias_ref, *refs, nlayers, nhead, head_dim):
    o_ref, lrefs = refs[-1], refs[:-1]
    x = x_ref[...].astype(jnp.float32)
    bias = bias_ref[...]
    for li in range(nlayers):
        x = _encoder_layer(x, lrefs[li * N_LAYER_REFS:(li + 1) * N_LAYER_REFS],
                           nhead, head_dim, bias)
    o_ref[...] = x.astype(o_ref.dtype)


def _down_stage_kernel(x2_ref, bias_ref, pkeep_ref, nkeep_ref, convw_ref,
                       convb_ref, lng_ref, lnb_ref, pe_ref, *refs,
                       nlayers, nhead, head_dim, sub, cin):
    o_ref, lrefs = refs[-1], refs[:-1]
    v = x2_ref[...].astype(jnp.float32)                   # (R, sub*Cin)
    # max-pool over window elements (static lane slices)
    pooled = v[:, 0:cin]
    for j in range(1, sub):
        pooled = jnp.maximum(pooled, v[:, j * cin:(j + 1) * cin])
    R = pooled.shape[0]

    # Conv1d(kernel=3, padding=1): shifted rows built in-VMEM; per-sequence edge
    # rows zeroed (pkeep/nkeep constants), taps lane-concatenated -> one matmul.
    zero = jnp.zeros((1, cin), jnp.float32)
    prev = jnp.concatenate([zero, pooled[0:R - 1, :]], axis=0) * pkeep_ref[...]
    nxt = jnp.concatenate([pooled[1:R, :], zero], axis=0) * nkeep_ref[...]
    xcat = jnp.concatenate([prev, pooled, nxt], axis=1).astype(MXU_DTYPE)  # (R,3Cin)
    y = jnp.dot(xcat, convw_ref[...], preferred_element_type=jnp.float32) + convb_ref[...]
    y = jnp.maximum(y, 0.0)
    y = _layernorm(y, lng_ref[...], lnb_ref[...])
    x = y + pe_ref[...]                                   # PE (dropout = eval no-op)

    bias = bias_ref[...]
    for li in range(nlayers):
        x = _encoder_layer(x, lrefs[li * N_LAYER_REFS:(li + 1) * N_LAYER_REFS],
                           nhead, head_dim, bias)
    o_ref[...] = x.astype(o_ref.dtype)


def _neck_up_kernel(x_ref, feat_ref, bias_ref, lng_ref, lnb_ref, ctw_ref,
                    ctb_ref, *refs, nlayers, nhead, head_dim, has_skip):
    o_ref, lrefs = refs[-1], refs[:-1]
    x = x_ref[...].astype(jnp.float32)
    if has_skip:
        x = x + feat_ref[...].astype(jnp.float32)
    bias = bias_ref[...]
    for li in range(nlayers):
        x = _encoder_layer(x, lrefs[li * N_LAYER_REFS:(li + 1) * N_LAYER_REFS],
                           nhead, head_dim, bias)
    xn = jnp.maximum(_layernorm(x, lng_ref[...], lnb_ref[...]), 0.0)
    y = jnp.dot(xn.astype(MXU_DTYPE), ctw_ref[...],
                preferred_element_type=jnp.float32) + ctb_ref[...]
    o_ref[...] = y.astype(o_ref.dtype)        # interleaved; reshape outside is free


def _neck_bottom_kernel(x_ref, feat_ref, bias_ref, decw_ref, decb_ref, *refs,
                        nlayers, nhead, head_dim, has_skip):
    o_ref, lrefs = refs[-1], refs[:-1]
    x = x_ref[...].astype(jnp.float32)
    if has_skip:
        x = x + feat_ref[...].astype(jnp.float32)
    bias = bias_ref[...]
    for li in range(nlayers):
        x = _encoder_layer(x, lrefs[li * N_LAYER_REFS:(li + 1) * N_LAYER_REFS],
                           nhead, head_dim, bias)
    y = jnp.dot(x.astype(MXU_DTYPE), decw_ref[...],
                preferred_element_type=jnp.float32) + decb_ref[...]
    o_ref[...] = y.astype(o_ref.dtype)


# ------------------------------ call wrappers ---------------------------------

def _layer_args(layers):
    flat = []
    for lp in layers:
        flat.extend(lp[k] for k in LAYER_KEYS)
    return flat


def _attn_bias(rows, seq):
    b = np.arange(rows) // seq
    return jnp.asarray(np.where(b[:, None] == b[None, :], 0.0, -1e30)
                       .astype(np.float32))


def _edge_keep(rows, seq):
    r = np.arange(rows)
    pk = (r % seq != 0).astype(np.float32)[:, None]
    nk = (r % seq != seq - 1).astype(np.float32)[:, None]
    return jnp.asarray(pk), jnp.asarray(nk)


def _enc_flops(R, D, nhead):
    hd = D // nhead
    return (2 * R * D * 3 * D + nhead * (4 * R * R * hd)
            + 2 * R * D * D + 4 * R * D * 4 * D)


def _enc_trans(R, D, nhead):
    return nhead * R * R


def _cost(flops, trans, args, out_shape, out_dtype):
    b = sum(int(a.size) * np.dtype(a.dtype).itemsize for a in args)
    b += int(np.prod(out_shape)) * np.dtype(out_dtype).itemsize
    return pl.CostEstimate(flops=int(flops), transcendentals=int(trans),
                           bytes_accessed=int(b))


def backbone_stage0(x, layers, nhead, seq):
    R, D = x.shape
    nlayers = len(layers)
    kern = functools.partial(_stage0_kernel, nlayers=nlayers, nhead=nhead,
                             head_dim=D // nhead)
    args = [x, _attn_bias(R, seq)] + _layer_args(layers)
    cost = _cost(nlayers * _enc_flops(R, D, nhead),
                 nlayers * _enc_trans(R, D, nhead), args, (R, D), ACT_DTYPE)
    return pl.pallas_call(
        kern, out_shape=jax.ShapeDtypeStruct((R, D), ACT_DTYPE),
        compiler_params=_CP, cost_estimate=cost)(*args)


def backbone_down_stage(x, sp, nhead, seq, sub, batch):
    R_in, cin = x.shape
    R, cout = R_in // sub, 2 * cin
    nlayers = len(sp['layers'])
    x2 = x.reshape(R, sub * cin)                 # free row-major window regroup
    pe = jnp.tile(sp['pe'][:seq], (batch, 1))    # (R, Cout)
    pkeep, nkeep = _edge_keep(R, seq)
    kern = functools.partial(_down_stage_kernel, nlayers=nlayers, nhead=nhead,
                             head_dim=cout // nhead, sub=sub, cin=cin)
    args = [x2, _attn_bias(R, seq), pkeep, nkeep, sp['conv_wt'], sp['conv_b'],
            sp['ln_g'], sp['ln_b'], pe] + _layer_args(sp['layers'])
    flops = 2 * R * 3 * cin * cout + nlayers * _enc_flops(R, cout, nhead)
    cost = _cost(flops, nlayers * _enc_trans(R, cout, nhead), args, (R, cout),
                 ACT_DTYPE)
    return pl.pallas_call(
        kern, out_shape=jax.ShapeDtypeStruct((R, cout), ACT_DTYPE),
        compiler_params=_CP, cost_estimate=cost)(*args)


def neck_up_stage(data, feat, sp, nhead, seq, sub, has_skip):
    R, D = data.shape
    cout = D // 2
    nlayers = len(sp['layers'])
    kern = functools.partial(_neck_up_kernel, nlayers=nlayers, nhead=nhead,
                             head_dim=D // nhead, has_skip=has_skip)
    args = [data, feat, _attn_bias(R, seq), sp['ln_g'], sp['ln_b'],
            sp['ct_wt'], sp['ct_b']] + _layer_args(sp['layers'])
    flops = nlayers * _enc_flops(R, D, nhead) + 2 * R * D * sub * cout
    cost = _cost(flops, nlayers * _enc_trans(R, D, nhead), args,
                 (R, sub * cout), ACT_DTYPE)
    y = pl.pallas_call(
        kern, out_shape=jax.ShapeDtypeStruct((R, sub * cout), ACT_DTYPE),
        compiler_params=_CP, cost_estimate=cost)(*args)
    # pre-interleaved ConvTranspose weight -> the stride-k upsample is a free
    # row-major reshape on the HBM array between calls
    return y.reshape(R * sub, cout)


def neck_bottom_stage(data, feat, sp, dec_wt, dec_b, nhead, seq, has_skip):
    R, D = data.shape
    n_pad = dec_wt.shape[1]
    nlayers = len(sp['layers'])
    kern = functools.partial(_neck_bottom_kernel, nlayers=nlayers, nhead=nhead,
                             head_dim=D // nhead, has_skip=has_skip)
    args = [data, feat, _attn_bias(R, seq), dec_wt, dec_b] + _layer_args(sp['layers'])
    flops = nlayers * _enc_flops(R, D, nhead) + 2 * R * D * n_pad
    cost = _cost(flops, nlayers * _enc_trans(R, D, nhead), args, (R, n_pad),
                 jnp.float32)
    return pl.pallas_call(
        kern, out_shape=jax.ShapeDtypeStruct((R, n_pad), jnp.float32),
        compiler_params=_CP, cost_estimate=cost)(*args)


# --------------------------- parameter construction -------------------------

def sinusoid_pe(max_len, d):
    pos = jnp.arange(max_len, dtype=jnp.float32)[:, None]
    div = jnp.exp(jnp.arange(0, d, 2, dtype=jnp.float32) * (-math.log(10000.0) / d))
    pe = jnp.zeros((max_len, d), jnp.float32)
    pe = pe.at[:, 0::2].set(jnp.sin(pos * div))
    pe = pe.at[:, 1::2].set(jnp.cos(pos * div))
    return pe


def init_linear(key, out_dim, in_dim, scale=0.05):
    kw, kb = jax.random.split(key)
    return (scale * jax.random.normal(kw, (out_dim, in_dim), jnp.float32),
            scale * jax.random.normal(kb, (out_dim,), jnp.float32))


def init_encoder_layer(key, d):
    ks = jax.random.split(key, 4)
    in_w, in_b = init_linear(ks[0], 3 * d, d)
    out_w, out_b = init_linear(ks[1], d, d)
    l1_w, l1_b = init_linear(ks[2], 4 * d, d)
    l2_w, l2_b = init_linear(ks[3], d, 4 * d)
    return dict(in_w=in_w, in_b=in_b, out_w=out_w, out_b=out_b,
                l1_w=l1_w, l1_b=l1_b, l2_w=l2_w, l2_b=l2_b,
                ln1_g=jnp.ones((d,), jnp.float32), ln1_b=jnp.zeros((d,), jnp.float32),
                ln2_g=jnp.ones((d,), jnp.float32), ln2_b=jnp.zeros((d,), jnp.float32))


def init_model(key, cfg):
    """Parameters in PyTorch layout (weights (out, in), conv kernels NCW)."""
    tc, bd = cfg['token_count'], cfg['base_dims']
    sc, sl, sub = cfg['stage_count'], cfg['stage_layers'], cfg['stage_subsampling']
    keys = jax.random.split(key, 4)
    params = {'embed': 0.05 * jax.random.normal(keys[0], (tc, bd), jnp.float32)}

    bstages = []
    bkeys = jax.random.split(keys[1], sc)
    for s in range(sc):
        d = bd * 2 ** s
        skeys = jax.random.split(bkeys[s], sl + 1)
        stage = {'layers': [init_encoder_layer(skeys[l], d) for l in range(sl)]}
        if s > 0:
            cwk, cbk = jax.random.split(skeys[sl])
            stage['conv_w'] = 0.05 * jax.random.normal(cwk, (d, d // 2, 3), jnp.float32)
            stage['conv_b'] = 0.05 * jax.random.normal(cbk, (d,), jnp.float32)
            stage['ln_g'] = jnp.ones((d,), jnp.float32)
            stage['ln_b'] = jnp.zeros((d,), jnp.float32)
            stage['pe'] = sinusoid_pe(512, d)
        bstages.append(stage)
    params['backbone'] = bstages

    nstages = []
    nkeys = jax.random.split(keys[2], sc)
    for s in range(sc):
        d = bd * 2 ** s
        skeys = jax.random.split(nkeys[s], sl + 1)
        stage = {'layers': [init_encoder_layer(skeys[l], d) for l in range(sl)]}
        if s > 0:
            cwk, cbk = jax.random.split(skeys[sl])
            stage['ct_w'] = 0.05 * jax.random.normal(cwk, (d, d // 2, sub), jnp.float32)
            stage['ct_b'] = 0.05 * jax.random.normal(cbk, (d // 2,), jnp.float32)
            stage['ln_g'] = jnp.ones((d,), jnp.float32)
            stage['ln_b'] = jnp.zeros((d,), jnp.float32)
        nstages.append(stage)
    params['neck'] = nstages

    dw, db = init_linear(keys[3], tc, bd)
    params['decoder_w'] = dw
    params['decoder_b'] = db
    return params


def _prep_layer(p):
    """Kernel layout: weights pre-transposed + bf16, biases/LN params (1, N) f32."""
    return dict(
        in_wt=p['in_w'].T.astype(MXU_DTYPE), in_b=p['in_b'][None],
        out_wt=p['out_w'].T.astype(MXU_DTYPE), out_b=p['out_b'][None],
        l1_wt=p['l1_w'].T.astype(MXU_DTYPE), l1_b=p['l1_b'][None],
        l2_wt=p['l2_w'].T.astype(MXU_DTYPE), l2_b=p['l2_b'][None],
        ln1_g=p['ln1_g'][None], ln1_b=p['ln1_b'][None],
        ln2_g=p['ln2_g'][None], ln2_b=p['ln2_b'][None])


def prepare_params(params, cfg):
    """One-time repack: transpose / tap-pack / interleave / bf16 / lane-pad."""
    prep = {'embed': params['embed']}

    bstages = []
    for s, sp in enumerate(params['backbone']):
        stage = {'layers': [_prep_layer(lp) for lp in sp['layers']]}
        if s > 0:
            cout_, cin_, _ = sp['conv_w'].shape
            # Conv1d weight (Cout, Cin, 3) -> tap-packed (3*Cin, Cout) so the
            # whole conv is a single MXU matmul against [prev|cur|next] lanes.
            stage['conv_wt'] = jnp.transpose(sp['conv_w'], (2, 1, 0)).reshape(
                3 * cin_, cout_).astype(MXU_DTYPE)
            stage['conv_b'] = sp['conv_b'][None]
            stage['ln_g'] = sp['ln_g'][None]
            stage['ln_b'] = sp['ln_b'][None]
            stage['pe'] = sp['pe']
        bstages.append(stage)
    prep['backbone'] = bstages

    nstages = []
    for s, sp in enumerate(params['neck']):
        stage = {'layers': [_prep_layer(lp) for lp in sp['layers']]}
        if s > 0:
            cin, cout, k = sp['ct_w'].shape
            # ConvTranspose1d (Cin, Cout, k) -> interleaved (Cin, k*Cout) so the
            # stride-k upsample becomes a plain reshape of the matmul output.
            stage['ct_wt'] = jnp.transpose(sp['ct_w'], (0, 2, 1)).reshape(
                cin, k * cout).astype(MXU_DTYPE)
            stage['ct_b'] = jnp.tile(sp['ct_b'], k)[None]
            stage['ln_g'] = sp['ln_g'][None]
            stage['ln_b'] = sp['ln_b'][None]
        nstages.append(stage)
    prep['neck'] = nstages

    tc, bd = cfg['token_count'], cfg['base_dims']
    n_pad = -(-tc // 128) * 128                   # lane-dense decoder output
    w_pad = jnp.zeros((bd, n_pad), jnp.float32).at[:, :tc].set(params['decoder_w'].T)
    b_pad = jnp.zeros((n_pad,), jnp.float32).at[:tc].set(params['decoder_b'])
    prep['decoder_wt'] = w_pad.astype(MXU_DTYPE)
    prep['decoder_b'] = b_pad[None]
    return prep


# ------------------------------- forward pass -------------------------------

def forward(params, tokens, cfg):
    B, S = tokens.shape
    bh = cfg['base_heads']
    sc, sub = cfg['stage_count'], cfg['stage_subsampling']

    # TODO(synk): embedding gather stays as XLA glue (jnp.take); a Pallas DMA
    #             gather brings no benefit at these sizes.
    x = jnp.take(params['embed'], tokens, axis=0).reshape(B * S, cfg['base_dims'])

    # ------------------------------ backbone -------------------------------
    feats, seqs = [], []
    seq = S
    for s in range(sc):
        sp = params['backbone'][s]
        nhead = bh * 2 ** s
        if s == 0:
            x = backbone_stage0(x, sp['layers'], nhead, seq)
        else:
            seq //= sub
            x = backbone_down_stage(x, sp, nhead, seq, sub, B)
        feats.append(x)
        seqs.append(seq)

    # -------------------------------- neck ---------------------------------
    data = None
    for s in reversed(range(sc)):
        sp = params['neck'][s]
        nhead = bh * 2 ** s
        if data is None:
            data, feat, has_skip = feats[s], feats[s], False
        else:
            feat, has_skip = feats[s], True
        if s > 0:
            data = neck_up_stage(data, feat, sp, nhead, seqs[s], sub, has_skip)
        else:
            data = neck_bottom_stage(data, feat, sp, params['decoder_wt'],
                                     params['decoder_b'], nhead, seqs[s], has_skip)

    # ------------------------------- decoder -------------------------------
    return data[:, :cfg['token_count']].reshape(B, S, cfg['token_count'])


# ----------------------------------- main ------------------------------------

if __name__ == "__main__":
    # head_dim = base_dims / base_heads = 16, as in the PyTorch module
    cfg = dict(token_count=50, base_dims=32, base_heads=2, stage_layers=1,
               stage_count=3, stage_subsampling=2)
    key = jax.random.PRNGKey(0)
    pkey, tkey = jax.random.split(key)
    raw_params = init_model(pkey, cfg)
    params = prepare_params(raw_params, cfg)     # one-time weight repack

    B, S = 2, 8     # S divisible by stage_subsampling ** (stage_count - 1)
    tokens = jax.random.randint(tkey, (B, S), 0, cfg['token_count'], dtype=jnp.int32)

    fwd = jax.jit(functools.partial(forward, cfg=cfg))
    logits = fwd(params, tokens)
    jax.block_until_ready(logits)

    assert logits.shape == (B, S, cfg['token_count'])
    assert bool(jnp.all(jnp.isfinite(logits)))
    print("KERNEL_OK")
</pallas_src>

<mosaic_0001>
module attributes {stable_mosaic.version = 11 : i64} {
  func.func @_stage0_kernel(%arg0: memref<16x32xf32, #tpu.memory_space<vmem>>, %arg1: memref<16x16xf32, #tpu.memory_space<vmem>>, %arg2: memref<32x96xbf16, #tpu.memory_space<vmem>>, %arg3: memref<1x96xf32, #tpu.memory_space<vmem>>, %arg4: memref<32x32xbf16, #tpu.memory_space<vmem>>, %arg5: memref<1x32xf32, #tpu.memory_space<vmem>>, %arg6: memref<32x128xbf16, #tpu.memory_space<vmem>>, %arg7: memref<1x128xf32, #tpu.memory_space<vmem>>, %arg8: memref<128x32xbf16, #tpu.memory_space<vmem>>, %arg9: memref<1x32xf32, #tpu.memory_space<vmem>>, %arg10: memref<1x32xf32, #tpu.memory_space<vmem>>, %arg11: memref<1x32xf32, #tpu.memory_space<vmem>>, %arg12: memref<1x32xf32, #tpu.memory_space<vmem>>, %arg13: memref<1x32xf32, #tpu.memory_space<vmem>>, %arg14: memref<16x32xbf16, #tpu.memory_space<vmem>>) attributes {dimension_semantics = [], scalar_prefetch = 0 : i64, scratch_operands = 0 : i64, tpu.core_type = #tpu.core_type<tc>} {
    %c0 = arith.constant 0 : index
    %c0_0 = arith.constant 0 : index
    %0 = vector.load %arg0[%c0, %c0_0] : memref<16x32xf32, #tpu.memory_space<vmem>>, vector<16x32xf32>
    %c0_1 = arith.constant 0 : index
    %c0_2 = arith.constant 0 : index
    %1 = vector.load %arg1[%c0_1, %c0_2] : memref<16x16xf32, #tpu.memory_space<vmem>>, vector<16x16xf32>
    %2 = arith.truncf %0 : vector<16x32xf32> to vector<16x32xbf16>
    %c0_3 = arith.constant 0 : index
    %c0_4 = arith.constant 0 : index
    %3 = vector.load %arg2[%c0_3, %c0_4] : memref<32x96xbf16, #tpu.memory_space<vmem>>, vector<32x96xbf16>
    %cst = arith.constant dense<0.000000e+00> : vector<16x96xf32>
    %4 = tpu.matmul %2, %3, %cst {dimension_numbers = #tpu.dot_dimension_numbers<[1], [0], [0], [1], [0, 0, 1, 1], [], []>} : vector<16x32xbf16>, vector<32x96xbf16>, vector<16x96xf32> -> vector<16x96xf32>
    %c0_5 = arith.constant 0 : index
    %c0_6 = arith.constant 0 : index
    %5 = vector.load %arg3[%c0_5, %c0_6] : memref<1x96xf32, #tpu.memory_space<vmem>>, vector<1x96xf32>
    %6 = vector.broadcast %5 : vector<1x96xf32> to vector<16x96xf32>
    %7 = arith.addf %4, %6 : vector<16x96xf32>
    %8 = arith.truncf %7 : vector<16x96xf32> to vector<16x96xbf16>
    %9 = vector.extract_strided_slice %8 {offsets = [0, 0], sizes = [16, 16], strides = [1, 1]} : vector<16x96xbf16> to vector<16x16xbf16>
    %10 = vector.extract_strided_slice %8 {offsets = [0, 32], sizes = [16, 16], strides = [1, 1]} : vector<16x96xbf16> to vector<16x16xbf16>
    %11 = vector.extract_strided_slice %8 {offsets = [0, 64], sizes = [16, 16], strides = [1, 1]} : vector<16x96xbf16> to vector<16x16xbf16>
    %cst_7 = arith.constant dense<0.000000e+00> : vector<16x16xf32>
    %12 = tpu.matmul %9, %10, %cst_7 {dimension_numbers = #tpu.dot_dimension_numbers<[1], [1], [0], [0], [0, 0, 1, 0], [], []>} : vector<16x16xbf16>, vector<16x16xbf16>, vector<16x16xf32> -> vector<16x16xf32>
    %cst_8 = arith.constant 2.500000e-01 : f32
    %13 = vector.broadcast %cst_8 : f32 to vector<16x16xf32>
    %14 = arith.mulf %12, %13 : vector<16x16xf32>
    %15 = arith.addf %14, %1 : vector<16x16xf32>
    %cst_9 = arith.constant dense<0xFF800000> : vector<16xf32>
    %16 = vector.multi_reduction <maximumf>, %15, %cst_9 [1] : vector<16x16xf32> to vector<16xf32>
    %17 = vector.shape_cast %16 : vector<16xf32> to vector<16x1xf32>
    %18 = vector.broadcast %17 : vector<16x1xf32> to vector<16x16xf32>
    %19 = arith.subf %15, %18 : vector<16x16xf32>
    %20 = math.exp %19 : vector<16x16xf32>
    %cst_10 = arith.constant dense<0.000000e+00> : vector<16xf32>
    %21 = vector.multi_reduction <add>, %20, %cst_10 [1] : vector<16x16xf32> to vector<16xf32>
    %22 = vector.shape_cast %21 : vector<16xf32> to vector<16x1xf32>
    %23 = tpu.reciprocal %22 {approx = true} : vector<16x1xf32> -> vector<16x1xf32>
    %24 = vector.broadcast %23 : vector<16x1xf32> to vector<16x16xf32>
    %25 = arith.mulf %20, %24 : vector<16x16xf32>
    %26 = arith.truncf %25 : vector<16x16xf32> to vector<16x16xbf16>
    %cst_11 = arith.constant dense<0.000000e+00> : vector<16x16xf32>
    %27 = tpu.matmul %26, %11, %cst_11 {dimension_numbers = #tpu.dot_dimension_numbers<[1], [0], [0], [1], [0, 0, 1, 1], [], []>} : vector<16x16xbf16>, vector<16x16xbf16>, vector<16x16xf32> -> vector<16x16xf32>
    %28 = vector.extract_strided_slice %8 {offsets = [0, 16], sizes = [16, 16], strides = [1, 1]} : vector<16x96xbf16> to vector<16x16xbf16>
    %29 = vector.extract_strided_slice %8 {offsets = [0, 48], sizes = [16, 16], strides = [1, 1]} : vector<16x96xbf16> to vector<16x16xbf16>
    %30 = vector.extract_strided_slice %8 {offsets = [0, 80], sizes = [16, 16], strides = [1, 1]} : vector<16x96xbf16> to vector<16x16xbf16>
    %cst_12 = arith.constant dense<0.000000e+00> : vector<16x16xf32>
    %31 = tpu.matmul %28, %29, %cst_12 {dimension_numbers = #tpu.dot_dimension_numbers<[1], [1], [0], [0], [0, 0, 1, 0], [], []>} : vector<16x16xbf16>, vector<16x16xbf16>, vector<16x16xf32> -> vector<16x16xf32>
    %cst_13 = arith.constant 2.500000e-01 : f32
    %32 = vector.broadcast %cst_13 : f32 to vector<16x16xf32>
    %33 = arith.mulf %31, %32 : vector<16x16xf32>
    %34 = arith.addf %33, %1 : vector<16x16xf32>
    %cst_14 = arith.constant dense<0xFF800000> : vector<16xf32>
    %35 = vector.multi_reduction <maximumf>, %34, %cst_14 [1] : vector<16x16xf32> to vector<16xf32>
    %36 = vector.shape_cast %35 : vector<16xf32> to vector<16x1xf32>
    %37 = vector.broadcast %36 : vector<16x1xf32> to vector<16x16xf32>
    %38 = arith.subf %34, %37 : vector<16x16xf32>
    %39 = math.exp %38 : vector<16x16xf32>
    %cst_15 = arith.constant dense<0.000000e+00> : vector<16xf32>
    %40 = vector.multi_reduction <add>, %39, %cst_15 [1] : vector<16x16xf32> to vector<16xf32>
    %41 = vector.shape_cast %40 : vector<16xf32> to vector<16x1xf32>
    %42 = tpu.reciprocal %41 {approx = true} : vector<16x1xf32> -> vector<16x1xf32>
    %43 = vector.broadcast %42 : vector<16x1xf32> to vector<16x16xf32>
    %44 = arith.mulf %39, %43 : vector<16x16xf32>
    %45 = arith.truncf %44 : vector<16x16xf32> to vector<16x16xbf16>
    %cst_16 = arith.constant dense<0.000000e+00> : vector<16x16xf32>
    %46 = tpu.matmul %45, %30, %cst_16 {dimension_numbers = #tpu.dot_dimension_numbers<[1], [0], [0], [1], [0, 0, 1, 1], [], []>} : vector<16x16xbf16>, vector<16x16xbf16>, vector<16x16xf32> -> vector<16x16xf32>
    %47 = tpu.concatenate %27, %46 in 1 : vector<16x16xf32>, vector<16x16xf32> -> vector<16x32xf32>
    %48 = arith.truncf %47 : vector<16x32xf32> to vector<16x32xbf16>
    %c0_17 = arith.constant 0 : index
    %c0_18 = arith.constant 0 : index
    %49 = vector.load %arg4[%c0_17, %c0_18] : memref<32x32xbf16, #tpu.memory_space<vmem>>, vector<32x32xbf16>
    %cst_19 = arith.constant dense<0.000000e+00> : vector<16x32xf32>
    %50 = tpu.matmul %48, %49, %cst_19 {dimension_numbers = #tpu.dot_dimension_numbers<[1], [0], [0], [1], [0, 0, 1, 1], [], []>} : vector<16x32xbf16>, vector<32x32xbf16>, vector<16x32xf32> -> vector<16x32xf32>
    %c0_20 = arith.constant 0 : index
    %c0_21 = arith.constant 0 : index
    %51 = vector.load %arg5[%c0_20, %c0_21] : memref<1x32xf32, #tpu.memory_space<vmem>>, vector<1x32xf32>
    %52 = vector.broadcast %51 : vector<1x32xf32> to vector<16x32xf32>
    %53 = arith.addf %50, %52 : vector<16x32xf32>
    %54 = arith.addf %0, %53 : vector<16x32xf32>
    %c0_22 = arith.constant 0 : index
    %c0_23 = arith.constant 0 : index
    %55 = vector.load %arg10[%c0_22, %c0_23] : memref<1x32xf32, #tpu.memory_space<vmem>>, vector<1x32xf32>
    %c0_24 = arith.constant 0 : index
    %c0_25 = arith.constant 0 : index
    %56 = vector.load %arg11[%c0_24, %c0_25] : memref<1x32xf32, #tpu.memory_space<vmem>>, vector<1x32xf32>
    %cst_26 = arith.constant dense<0.000000e+00> : vector<16xf32>
    %57 = vector.multi_reduction <add>, %54, %cst_26 [1] : vector<16x32xf32> to vector<16xf32>
    %58 = vector.shape_cast %57 : vector<16xf32> to vector<16x1xf32>
    %cst_27 = arith.constant 3.200000e+01 : f32
    %59 = vector.broadcast %cst_27 : f32 to vector<16x1xf32>
    %60 = arith.divf %58, %59 : vector<16x1xf32>
    %61 = vector.broadcast %60 : vector<16x1xf32> to vector<16x32xf32>
    %62 = arith.subf %54, %61 : vector<16x32xf32>
    %63 = arith.mulf %62, %62 : vector<16x32xf32>
    %cst_28 = arith.constant dense<0.000000e+00> : vector<16xf32>
    %64 = vector.multi_reduction <add>, %63, %cst_28 [1] : vector<16x32xf32> to vector<16xf32>
    %65 = vector.shape_cast %64 : vector<16xf32> to vector<16x1xf32>
    %cst_29 = arith.constant 3.200000e+01 : f32
    %66 = vector.broadcast %cst_29 : f32 to vector<16x1xf32>
    %67 = arith.divf %65, %66 : vector<16x1xf32>
    %68 = vector.broadcast %60 : vector<16x1xf32> to vector<16x32xf32>
    %69 = arith.subf %54, %68 : vector<16x32xf32>
    %cst_30 = arith.constant 9.99999974E-6 : f32
    %70 = vector.broadcast %cst_30 : f32 to vector<16x1xf32>
    %71 = arith.addf %67, %70 : vector<16x1xf32>
    %72 = math.rsqrt %71 : vector<16x1xf32>
    %73 = vector.broadcast %72 : vector<16x1xf32> to vector<16x32xf32>
    %74 = arith.mulf %69, %73 : vector<16x32xf32>
    %75 = vector.broadcast %55 : vector<1x32xf32> to vector<16x32xf32>
    %76 = arith.mulf %74, %75 : vector<16x32xf32>
    %77 = vector.broadcast %56 : vector<1x32xf32> to vector<16x32xf32>
    %78 = arith.addf %76, %77 : vector<16x32xf32>
    %79 = arith.truncf %78 : vector<16x32xf32> to vector<16x32xbf16>
    %c0_31 = arith.constant 0 : index
    %c0_32 = arith.constant 0 : index
    %80 = vector.load %arg6[%c0_31, %c0_32] : memref<32x128xbf16, #tpu.memory_space<vmem>>, vector<32x128xbf16>
    %cst_33 = arith.constant dense<0.000000e+00> : vector<16x128xf32>
    %81 = tpu.matmul %79, %80, %cst_33 {dimension_numbers = #tpu.dot_dimension_numbers<[1], [0], [0], [1], [0, 0, 1, 1], [], []>} : vector<16x32xbf16>, vector<32x128xbf16>, vector<16x128xf32> -> vector<16x128xf32>
    %c0_34 = arith.constant 0 : index
    %c0_35 = arith.constant 0 : index
    %82 = vector.load %arg7[%c0_34, %c0_35] : memref<1x128xf32, #tpu.memory_space<vmem>>, vector<1x128xf32>
    %83 = vector.broadcast %82 : vector<1x128xf32> to vector<16x128xf32>
    %84 = arith.addf %81, %83 : vector<16x128xf32>
    %cst_36 = arith.constant 0.000000e+00 : f32
    %85 = vector.broadcast %cst_36 : f32 to vector<16x128xf32>
    %86 = arith.maximumf %84, %85 : vector<16x128xf32>
    %87 = arith.truncf %86 : vector<16x128xf32> to vector<16x128xbf16>
    %c0_37 = arith.constant 0 : index
    %c0_38 = arith.constant 0 : index
    %88 = vector.load %arg8[%c0_37, %c0_38] : memref<128x32xbf16, #tpu.memory_space<vmem>>, vector<128x32xbf16>
    %cst_39 = arith.constant dense<0.000000e+00> : vector<16x32xf32>
    %89 = tpu.matmul %87, %88, %cst_39 {dimension_numbers = #tpu.dot_dimension_numbers<[1], [0], [0], [1], [0, 0, 1, 1], [], []>} : vector<16x128xbf16>, vector<128x32xbf16>, vector<16x32xf32> -> vector<16x32xf32>
    %c0_40 = arith.constant 0 : index
    %c0_41 = arith.constant 0 : index
    %90 = vector.load %arg9[%c0_40, %c0_41] : memref<1x32xf32, #tpu.memory_space<vmem>>, vector<1x32xf32>
    %91 = vector.broadcast %90 : vector<1x32xf32> to vector<16x32xf32>
    %92 = arith.addf %89, %91 : vector<16x32xf32>
    %93 = arith.addf %78, %92 : vector<16x32xf32>
    %c0_42 = arith.constant 0 : index
    %c0_43 = arith.constant 0 : index
    %94 = vector.load %arg12[%c0_42, %c0_43] : memref<1x32xf32, #tpu.memory_space<vmem>>, vector<1x32xf32>
    %c0_44 = arith.constant 0 : index
    %c0_45 = arith.constant 0 : index
    %95 = vector.load %arg13[%c0_44, %c0_45] : memref<1x32xf32, #tpu.memory_space<vmem>>, vector<1x32xf32>
    %cst_46 = arith.constant dense<0.000000e+00> : vector<16xf32>
    %96 = vector.multi_reduction <add>, %93, %cst_46 [1] : vector<16x32xf32> to vector<16xf32>
    %97 = vector.shape_cast %96 : vector<16xf32> to vector<16x1xf32>
    %cst_47 = arith.constant 3.200000e+01 : f32
    %98 = vector.broadcast %cst_47 : f32 to vector<16x1xf32>
    %99 = arith.divf %97, %98 : vector<16x1xf32>
    %100 = vector.broadcast %99 : vector<16x1xf32> to vector<16x32xf32>
    %101 = arith.subf %93, %100 : vector<16x32xf32>
    %102 = arith.mulf %101, %101 : vector<16x32xf32>
    %cst_48 = arith.constant dense<0.000000e+00> : vector<16xf32>
    %103 = vector.multi_reduction <add>, %102, %cst_48 [1] : vector<16x32xf32> to vector<16xf32>
    %104 = vector.shape_cast %103 : vector<16xf32> to vector<16x1xf32>
    %cst_49 = arith.constant 3.200000e+01 : f32
    %105 = vector.broadcast %cst_49 : f32 to vector<16x1xf32>
    %106 = arith.divf %104, %105 : vector<16x1xf32>
    %107 = vector.broadcast %99 : vector<16x1xf32> to vector<16x32xf32>
    %108 = arith.subf %93, %107 : vector<16x32xf32>
    %cst_50 = arith.constant 9.99999974E-6 : f32
    %109 = vector.broadcast %cst_50 : f32 to vector<16x1xf32>
    %110 = arith.addf %106, %109 : vector<16x1xf32>
    %111 = math.rsqrt %110 : vector<16x1xf32>
    %112 = vector.broadcast %111 : vector<16x1xf32> to vector<16x32xf32>
    %113 = arith.mulf %108, %112 : vector<16x32xf32>
    %114 = vector.broadcast %94 : vector<1x32xf32> to vector<16x32xf32>
    %115 = arith.mulf %113, %114 : vector<16x32xf32>
    %116 = vector.broadcast %95 : vector<1x32xf32> to vector<16x32xf32>
    %117 = arith.addf %115, %116 : vector<16x32xf32>
    %118 = arith.truncf %117 : vector<16x32xf32> to vector<16x32xbf16>
    %c0_51 = arith.constant 0 : index
    %c0_52 = arith.constant 0 : index
    %119 = vector.load %arg14[%c0_51, %c0_52] : memref<16x32xbf16, #tpu.memory_space<vmem>>, vector<16x32xbf16>
    tpu.vector_store %arg14[%c0_51, %c0_52], %118 {strides = array<i32>} : memref<16x32xbf16, #tpu.memory_space<vmem>>, vector<16x32xbf16>,
    return
  }
}

module attributes {stable_mosaic.version = 11 : i64} {
  func.func @_down_stage_kernel(%arg0: memref<8x64xbf16, #tpu.memory_space<vmem>>, %arg1: memref<8x8xf32, #tpu.memory_space<vmem>>, %arg2: memref<8x1xf32, #tpu.memory_space<vmem>>, %arg3: memref<8x1xf32, #tpu.memory_space<vmem>>, %arg4: memref<96x64xbf16, #tpu.memory_space<vmem>>, %arg5: memref<1x64xf32, #tpu.memory_space<vmem>>, %arg6: memref<1x64xf32, #tpu.memory_space<vmem>>, %arg7: memref<1x64xf32, #tpu.memory_space<vmem>>, %arg8: memref<8x64xf32, #tpu.memory_space<vmem>>, %arg9: memref<64x192xbf16, #tpu.memory_space<vmem>>, %arg10: memref<1x192xf32, #tpu.memory_space<vmem>>, %arg11: memref<64x64xbf16, #tpu.memory_space<vmem>>, %arg12: memref<1x64xf32, #tpu.memory_space<vmem>>, %arg13: memref<64x256xbf16, #tpu.memory_space<vmem>>, %arg14: memref<1x256xf32, #tpu.memory_space<vmem>>, %arg15: memref<256x64xbf16, #tpu.memory_space<vmem>>, %arg16: memref<1x64xf32, #tpu.memory_space<vmem>>, %arg17: memref<1x64xf32, #tpu.memory_space<vmem>>, %arg18: memref<1x64xf32, #tpu.memory_space<vmem>>, %arg19: memref<1x64xf32, #tpu.memory_space<vmem>>, %arg20: memref<1x64xf32, #tpu.memory_space<vmem>>, %arg21: memref<8x64xbf16, #tpu.memory_space<vmem>>) attributes {dimension_semantics = [], scalar_prefetch = 0 : i64, scratch_operands = 0 : i64, tpu.core_type = #tpu.core_type<tc>} {
    %c0 = arith.constant 0 : index
    %c0_0 = arith.constant 0 : index
    %0 = vector.load %arg0[%c0, %c0_0] : memref<8x64xbf16, #tpu.memory_space<vmem>>, vector<8x64xbf16>
    %1 = arith.extf %0 : vector<8x64xbf16> to vector<8x64xf32>
    %2 = vector.extract_strided_slice %1 {offsets = [0, 0], sizes = [8, 32], strides = [1, 1]} : vector<8x64xf32> to vector<8x32xf32>
    %3 = vector.extract_strided_slice %1 {offsets = [0, 32], sizes = [8, 32], strides = [1, 1]} : vector<8x64xf32> to vector<8x32xf32>
    %4 = arith.maximumf %2, %3 : vector<8x32xf32>
    %cst = arith.constant 0.000000e+00 : f32
    %5 = vector.broadcast %cst : f32 to vector<1x32xf32>
    %6 = vector.extract_strided_slice %4 {offsets = [0, 0], sizes = [7, 32], strides = [1, 1]} : vector<8x32xf32> to vector<7x32xf32>
    %7 = tpu.concatenate %5, %6 in 0 : vector<1x32xf32>, vector<7x32xf32> -> vector<8x32xf32>
    %c0_1 = arith.constant 0 : index
    %c0_2 = arith.constant 0 : index
    %8 = vector.load %arg2[%c0_1, %c0_2] : memref<8x1xf32, #tpu.memory_space<vmem>>, vector<8x1xf32>
    %9 = vector.broadcast %8 : vector<8x1xf32> to vector<8x32xf32>
    %10 = arith.mulf %7, %9 : vector<8x32xf32>
    %11 = vector.extract_strided_slice %4 {offsets = [1, 0], sizes = [7, 32], strides = [1, 1]} : vector<8x32xf32> to vector<7x32xf32>
    %12 = tpu.concatenate %11, %5 in 0 : vector<7x32xf32>, vector<1x32xf32> -> vector<8x32xf32>
    %c0_3 = arith.constant 0 : index
    %c0_4 = arith.constant 0 : index
    %13 = vector.load %arg3[%c0_3, %c0_4] : memref<8x1xf32, #tpu.memory_space<vmem>>, vector<8x1xf32>
    %14 = vector.broadcast %13 : vector<8x1xf32> to vector<8x32xf32>
    %15 = arith.mulf %12, %14 : vector<8x32xf32>
    %16 = tpu.concatenate %10, %4, %15 in 1 : vector<8x32xf32>, vector<8x32xf32>, vector<8x32xf32> -> vector<8x96xf32>
    %17 = arith.truncf %16 : vector<8x96xf32> to vector<8x96xbf16>
    %c0_5 = arith.constant 0 : index
    %c0_6 = arith.constant 0 : index
    %18 = vector.load %arg4[%c0_5, %c0_6] : memref<96x64xbf16, #tpu.memory_space<vmem>>, vector<96x64xbf16>
    %cst_7 = arith.constant dense<0.000000e+00> : vector<8x64xf32>
    %19 = tpu.matmul %17, %18, %cst_7 {dimension_numbers = #tpu.dot_dimension_numbers<[1], [0], [0], [1], [0, 0, 1, 1], [], []>} : vector<8x96xbf16>, vector<96x64xbf16>, vector<8x64xf32> -> vector<8x64xf32>
    %c0_8 = arith.constant 0 : index
    %c0_9 = arith.constant 0 : index
    %20 = vector.load %arg5[%c0_8, %c0_9] : memref<1x64xf32, #tpu.memory_space<vmem>>, vector<1x64xf32>
    %21 = vector.broadcast %20 : vector<1x64xf32> to vector<8x64xf32>
    %22 = arith.addf %19, %21 : vector<8x64xf32>
    %cst_10 = arith.constant 0.000000e+00 : f32
    %23 = vector.broadcast %cst_10 : f32 to vector<8x64xf32>
    %24 = arith.maximumf %22, %23 : vector<8x64xf32>
    %c0_11 = arith.constant 0 : index
    %c0_12 = arith.constant 0 : index
    %25 = vector.load %arg6[%c0_11, %c0_12] : memref<1x64xf32, #tpu.memory_space<vmem>>, vector<1x64xf32>
    %c0_13 = arith.constant 0 : index
    %c0_14 = arith.constant 0 : index
    %26 = vector.load %arg7[%c0_13, %c0_14] : memref<1x64xf32, #tpu.memory_space<vmem>>, vector<1x64xf32>
    %cst_15 = arith.constant dense<0.000000e+00> : vector<8xf32>
    %27 = vector.multi_reduction <add>, %24, %cst_15 [1] : vector<8x64xf32> to vector<8xf32>
    %28 = vector.shape_cast %27 : vector<8xf32> to vector<8x1xf32>
    %cst_16 = arith.constant 6.400000e+01 : f32
    %29 = vector.broadcast %cst_16 : f32 to vector<8x1xf32>
    %30 = arith.divf %28, %29 : vector<8x1xf32>
    %31 = vector.broadcast %30 : vector<8x1xf32> to vector<8x64xf32>
    %32 = arith.subf %24, %31 : vector<8x64xf32>
    %33 = arith.mulf %32, %32 : vector<8x64xf32>
    %cst_17 = arith.constant dense<0.000000e+00> : vector<8xf32>
    %34 = vector.multi_reduction <add>, %33, %cst_17 [1] : vector<8x64xf32> to vector<8xf32>
    %35 = vector.shape_cast %34 : vector<8xf32> to vector<8x1xf32>
    %cst_18 = arith.constant 6.400000e+01 : f32
    %36 = vector.broadcast %cst_18 : f32 to vector<8x1xf32>
    %37 = arith.divf %35, %36 : vector<8x1xf32>
    %38 = vector.broadcast %30 : vector<8x1xf32> to vector<8x64xf32>
    %39 = arith.subf %24, %38 : vector<8x64xf32>
    %cst_19 = arith.constant 9.99999974E-6 : f32
    %40 = vector.broadcast %cst_19 : f32 to vector<8x1xf32>
    %41 = arith.addf %37, %40 : vector<8x1xf32>
    %42 = math.rsqrt %41 : vector<8x1xf32>
    %43 = vector.broadcast %42 : vector<8x1xf32> to vector<8x64xf32>
    %44 = arith.mulf %39, %43 : vector<8x64xf32>
    %45 = vector.broadcast %25 : vector<1x64xf32> to vector<8x64xf32>
    %46 = arith.mulf %44, %45 : vector<8x64xf32>
    %47 = vector.broadcast %26 : vector<1x64xf32> to vector<8x64xf32>
    %48 = arith.addf %46, %47 : vector<8x64xf32>
    %c0_20 = arith.constant 0 : index
    %c0_21 = arith.constant 0 : index
    %49 = vector.load %arg8[%c0_20, %c0_21] : memref<8x64xf32, #tpu.memory_space<vmem>>, vector<8x64xf32>
    %50 = arith.addf %48, %49 : vector<8x64xf32>
    %c0_22 = arith.constant 0 : index
    %c0_23 = arith.constant 0 : index
    %51 = vector.load %arg1[%c0_22, %c0_23] : memref<8x8xf32, #tpu.memory_space<vmem>>, vector<8x8xf32>
    %52 = arith.truncf %50 : vector<8x64xf32> to vector<8x64xbf16>
    %c0_24 = arith.constant 0 : index
    %c0_25 = arith.constant 0 : index
    %53 = vector.load %arg9[%c0_24, %c0_25] : memref<64x192xbf16, #tpu.memory_space<vmem>>, vector<64x192xbf16>
    %cst_26 = arith.constant dense<0.000000e+00> : vector<8x192xf32>
    %54 = tpu.matmul %52, %53, %cst_26 {dimension_numbers = #tpu.dot_dimension_numbers<[1], [0], [0], [1], [0, 0, 1, 1], [], []>} : vector<8x64xbf16>, vector<64x192xbf16>, vector<8x192xf32> -> vector<8x192xf32>
    %c0_27 = arith.constant 0 : index
    %c0_28 = arith.constant 0 : index
    %55 = vector.load %arg10[%c0_27, %c0_28] : memref<1x192xf32, #tpu.memory_space<vmem>>, vector<1x192xf32>
    %56 = vector.broadcast %55 : vector<1x192xf32> to vector<8x192xf32>
    %57 = arith.addf %54, %56 : vector<8x192xf32>
    %58 = arith.truncf %57 : vector<8x192xf32> to vector<8x192xbf16>
    %59 = vector.extract_strided_slice %58 {offsets = [0, 0], sizes = [8, 16], strides = [1, 1]} : vector<8x192xbf16> to vector<8x16xbf16>
    %60 = vector.extract_strided_slice %58 {offsets = [0, 64], sizes = [8, 16], strides = [1, 1]} : vector<8x192xbf16> to vector<8x16xbf16>
    %61 = vector.extract_strided_slice %58 {offsets = [0, 128], sizes = [8, 16], strides = [1, 1]} : vector<8x192xbf16> to vector<8x16xbf16>
    %cst_29 = arith.constant dense<0.000000e+00> : vector<8x8xf32>
    %62 = tpu.matmul %59, %60, %cst_29 {dimension_numbers = #tpu.dot_dimension_numbers<[1], [1], [0], [0], [0, 0, 1, 0], [], []>} : vector<8x16xbf16>, vector<8x16xbf16>, vector<8x8xf32> -> vector<8x8xf32>
    %cst_30 = arith.constant 2.500000e-01 : f32
    %63 = vector.broadcast %cst_30 : f32 to vector<8x8xf32>
    %64 = arith.mulf %62, %63 : vector<8x8xf32>
    %65 = arith.addf %64, %51 : vector<8x8xf32>
    %cst_31 = arith.constant dense<0xFF800000> : vector<8xf32>
    %66 = vector.multi_reduction <maximumf>, %65, %cst_31 [1] : vector<8x8xf32> to vector<8xf32>
    %67 = vector.shape_cast %66 : vector<8xf32> to vector<8x1xf32>
    %68 = vector.broadcast %67 : vector<8x1xf32> to vector<8x8xf32>
    %69 = arith.subf %65, %68 : vector<8x8xf32>
    %70 = math.exp %69 : vector<8x8xf32>
    %cst_32 = arith.constant dense<0.000000e+00> : vector<8xf32>
    %71 = vector.multi_reduction <add>, %70, %cst_32 [1] : vector<8x8xf32> to vector<8xf32>
    %72 = vector.shape_cast %71 : vector<8xf32> to vector<8x1xf32>
    %73 = tpu.reciprocal %72 {approx = true} : vector<8x1xf32> -> vector<8x1xf32>
    %74 = vector.broadcast %73 : vector<8x1xf32> to vector<8x8xf32>
    %75 = arith.mulf %70, %74 : vector<8x8xf32>
    %76 = arith.truncf %75 : vector<8x8xf32> to vector<8x8xbf16>
    %cst_33 = arith.constant dense<0.000000e+00> : vector<8x16xf32>
    %77 = tpu.matmul %76, %61, %cst_33 {dimension_numbers = #tpu.dot_dimension_numbers<[1], [0], [0], [1], [0, 0, 1, 1], [], []>} : vector<8x8xbf16>, vector<8x16xbf16>, vector<8x16xf32> -> vector<8x16xf32>
    %78 = vector.extract_strided_slice %58 {offsets = [0, 16], sizes = [8, 16], strides = [1, 1]} : vector<8x192xbf16> to vector<8x16xbf16>
    %79 = vector.extract_strided_slice %58 {offsets = [0, 80], sizes = [8, 16], strides = [1, 1]} : vector<8x192xbf16> to vector<8x16xbf16>
    %80 = vector.extract_strided_slice %58 {offsets = [0, 144], sizes = [8, 16], strides = [1, 1]} : vector<8x192xbf16> to vector<8x16xbf16>
    %cst_34 = arith.constant dense<0.000000e+00> : vector<8x8xf32>
    %81 = tpu.matmul %78, %79, %cst_34 {dimension_numbers = #tpu.dot_dimension_numbers<[1], [1], [0], [0], [0, 0, 1, 0], [], []>} : vector<8x16xbf16>, vector<8x16xbf16>, vector<8x8xf32> -> vector<8x8xf32>
    %cst_35 = arith.constant 2.500000e-01 : f32
    %82 = vector.broadcast %cst_35 : f32 to vector<8x8xf32>
    %83 = arith.mulf %81, %82 : vector<8x8xf32>
    %84 = arith.addf %83, %51 : vector<8x8xf32>
    %cst_36 = arith.constant dense<0xFF800000> : vector<8xf32>
    %85 = vector.multi_reduction <maximumf>, %84, %cst_36 [1] : vector<8x8xf32> to vector<8xf32>
    %86 = vector.shape_cast %85 : vector<8xf32> to vector<8x1xf32>
    %87 = vector.broadcast %86 : vector<8x1xf32> to vector<8x8xf32>
    %88 = arith.subf %84, %87 : vector<8x8xf32>
    %89 = math.exp %88 : vector<8x8xf32>
    %cst_37 = arith.constant dense<0.000000e+00> : vector<8xf32>
    %90 = vector.multi_reduction <add>, %89, %cst_37 [1] : vector<8x8xf32> to vector<8xf32>
    %91 = vector.shape_cast %90 : vector<8xf32> to vector<8x1xf32>
    %92 = tpu.reciprocal %91 {approx = true} : vector<8x1xf32> -> vector<8x1xf32>
    %93 = vector.broadcast %92 : vector<8x1xf32> to vector<8x8xf32>
    %94 = arith.mulf %89, %93 : vector<8x8xf32>
    %95 = arith.truncf %94 : vector<8x8xf32> to vector<8x8xbf16>
    %cst_38 = arith.constant dense<0.000000e+00> : vector<8x16xf32>
    %96 = tpu.matmul %95, %80, %cst_38 {dimension_numbers = #tpu.dot_dimension_numbers<[1], [0], [0], [1], [0, 0, 1, 1], [], []>} : vector<8x8xbf16>, vector<8x16xbf16>, vector<8x16xf32> -> vector<8x16xf32>
    %97 = vector.extract_strided_slice %58 {offsets = [0, 32], sizes = [8, 16], strides = [1, 1]} : vector<8x192xbf16> to vector<8x16xbf16>
    %98 = vector.extract_strided_slice %58 {offsets = [0, 96], sizes = [8, 16], strides = [1, 1]} : vector<8x192xbf16> to vector<8x16xbf16>
    %99 = vector.extract_strided_slice %58 {offsets = [0, 160], sizes = [8, 16], strides = [1, 1]} : vector<8x192xbf16> to vector<8x16xbf16>
    %cst_39 = arith.constant dense<0.000000e+00> : vector<8x8xf32>
    %100 = tpu.matmul %97, %98, %cst_39 {dimension_numbers = #tpu.dot_dimension_numbers<[1], [1], [0], [0], [0, 0, 1, 0], [], []>} : vector<8x16xbf16>, vector<8x16xbf16>, vector<8x8xf32> -> vector<8x8xf32>
    %cst_40 = arith.constant 2.500000e-01 : f32
    %101 = vector.broadcast %cst_40 : f32 to vector<8x8xf32>
    %102 = arith.mulf %100, %101 : vector<8x8xf32>
    %103 = arith.addf %102, %51 : vector<8x8xf32>
    %cst_41 = arith.constant dense<0xFF800000> : vector<8xf32>
    %104 = vector.multi_reduction <maximumf>, %103, %cst_41 [1] : vector<8x8xf32> to vector<8xf32>
    %105 = vector.shape_cast %104 : vector<8xf32> to vector<8x1xf32>
    %106 = vector.broadcast %105 : vector<8x1xf32> to vector<8x8xf32>
    %107 = arith.subf %103, %106 : vector<8x8xf32>
    %108 = math.exp %107 : vector<8x8xf32>
    %cst_42 = arith.constant dense<0.000000e+00> : vector<8xf32>
    %109 = vector.multi_reduction <add>, %108, %cst_42 [1] : vector<8x8xf32> to vector<8xf32>
    %110 = vector.shape_cast %109 : vector<8xf32> to vector<8x1xf32>
    %111 = tpu.reciprocal %110 {approx = true} : vector<8x1xf32> -> vector<8x1xf32>
    %112 = vector.broadcast %111 : vector<8x1xf32> to vector<8x8xf32>
    %113 = arith.mulf %108, %112 : vector<8x8xf32>
    %114 = arith.truncf %113 : vector<8x8xf32> to vector<8x8xbf16>
    %cst_43 = arith.constant dense<0.000000e+00> : vector<8x16xf32>
    %115 = tpu.matmul %114, %99, %cst_43 {dimension_numbers = #tpu.dot_dimension_numbers<[1], [0], [0], [1], [0, 0, 1, 1], [], []>} : vector<8x8xbf16>, vector<8x16xbf16>, vector<8x16xf32> -> vector<8x16xf32>
    %116 = vector.extract_strided_slice %58 {offsets = [0, 48], sizes = [8, 16], strides = [1, 1]} : vector<8x192xbf16> to vector<8x16xbf16>
    %117 = vector.extract_strided_slice %58 {offsets = [0, 112], sizes = [8, 16], strides = [1, 1]} : vector<8x192xbf16> to vector<8x16xbf16>
    %118 = vector.extract_strided_slice %58 {offsets = [0, 176], sizes = [8, 16], strides = [1, 1]} : vector<8x192xbf16> to vector<8x16xbf16>
    %cst_44 = arith.constant dense<0.000000e+00> : vector<8x8xf32>
    %119 = tpu.matmul %116, %117, %cst_44 {dimension_numbers = #tpu.dot_dimension_numbers<[1], [1], [0], [0], [0, 0, 1, 0], [], []>} : vector<8x16xbf16>, vector<8x16xbf16>, vector<8x8xf32> -> vector<8x8xf32>
    %cst_45 = arith.constant 2.500000e-01 : f32
    %120 = vector.broadcast %cst_45 : f32 to vector<8x8xf32>
    %121 = arith.mulf %119, %120 : vector<8x8xf32>
    %122 = arith.addf %121, %51 : vector<8x8xf32>
    %cst_46 = arith.constant dense<0xFF800000> : vector<8xf32>
    %123 = vector.multi_reduction <maximumf>, %122, %cst_46 [1] : vector<8x8xf32> to vector<8xf32>
    %124 = vector.shape_cast %123 : vector<8xf32> to vector<8x1xf32>
    %125 = vector.broadcast %124 : vector<8x1xf32> to vector<8x8xf32>
    %126 = arith.subf %122, %125 : vector<8x8xf32>
    %127 = math.exp %126 : vector<8x8xf32>
    %cst_47 = arith.constant dense<0.000000e+00> : vector<8xf32>
    %128 = vector.multi_reduction <add>, %127, %cst_47 [1] : vector<8x8xf32> to vector<8xf32>
    %129 = vector.shape_cast %128 : vector<8xf32> to vector<8x1xf32>
    %130 = tpu.reciprocal %129 {approx = true} : vector<8x1xf32> -> vector<8x1xf32>
    %131 = vector.broadcast %130 : vector<8x1xf32> to vector<8x8xf32>
    %132 = arith.mulf %127, %131 : vector<8x8xf32>
    %133 = arith.truncf %132 : vector<8x8xf32> to vector<8x8xbf16>
    %cst_48 = arith.constant dense<0.000000e+00> : vector<8x16xf32>
    %134 = tpu.matmul %133, %118, %cst_48 {dimension_numbers = #tpu.dot_dimension_numbers<[1], [0], [0], [1], [0, 0, 1, 1], [], []>} : vector<8x8xbf16>, vector<8x16xbf16>, vector<8x16xf32> -> vector<8x16xf32>
    %135 = tpu.concatenate %77, %96, %115, %134 in 1 : vector<8x16xf32>, vector<8x16xf32>, vector<8x16xf32>, vector<8x16xf32> -> vector<8x64xf32>
    %136 = arith.truncf %135 : vector<8x64xf32> to vector<8x64xbf16>
    %c0_49 = arith.constant 0 : index
    %c0_50 = arith.constant 0 : index
    %137 = vector.load %arg11[%c0_49, %c0_50] : memref<64x64xbf16, #tpu.memory_space<vmem>>, vector<64x64xbf16>
    %cst_51 = arith.constant dense<0.000000e+00> : vector<8x64xf32>
    %138 = tpu.matmul %136, %137, %cst_51 {dimension_numbers = #tpu.dot_dimension_numbers<[1], [0], [0], [1], [0, 0, 1, 1], [], []>} : vector<8x64xbf16>, vector<64x64xbf16>, vector<8x64xf32> -> vector<8x64xf32>
    %c0_52 = arith.constant 0 : index
    %c0_53 = arith.constant 0 : index
    %139 = vector.load %arg12[%c0_52, %c0_53] : memref<1x64xf32, #tpu.memory_space<vmem>>, vector<1x64xf32>
    %140 = vector.broadcast %139 : vector<1x64xf32> to vector<8x64xf32>
    %141 = arith.addf %138, %140 : vector<8x64xf32>
    %142 = arith.addf %50, %141 : vector<8x64xf32>
    %c0_54 = arith.constant 0 : index
    %c0_55 = arith.constant 0 : index
    %143 = vector.load %arg17[%c0_54, %c0_55] : memref<1x64xf32, #tpu.memory_space<vmem>>, vector<1x64xf32>
    %c0_56 = arith.constant 0 : index
    %c0_57 = arith.constant 0 : index
    %144 = vector.load %arg18[%c0_56, %c0_57] : memref<1x64xf32, #tpu.memory_space<vmem>>, vector<1x64xf32>
    %cst_58 = arith.constant dense<0.000000e+00> : vector<8xf32>
    %145 = vector.multi_reduction <add>, %142, %cst_58 [1] : vector<8x64xf32> to vector<8xf32>
    %146 = vector.shape_cast %145 : vector<8xf32> to vector<8x1xf32>
    %cst_59 = arith.constant 6.400000e+01 : f32
    %147 = vector.broadcast %cst_59 : f32 to vector<8x1xf32>
    %148 = arith.divf %146, %147 : vector<8x1xf32>
    %149 = vector.broadcast %148 : vector<8x1xf32> to vector<8x64xf32>
    %150 = arith.subf %142, %149 : vector<8x64xf32>
    %151 = arith.mulf %150, %150 : vector<8x64xf32>
    %cst_60 = arith.constant dense<0.000000e+00> : vector<8xf32>
    %152 = vector.multi_reduction <add>, %151, %cst_60 [1] : vector<8x64xf32> to vector<8xf32>
    %153 = vector.shape_cast %152 : vector<8xf32> to vector<8x1xf32>
    %cst_61 = arith.constant 6.400000e+01 : f32
    %154 = vector.broadcast %cst_61 : f32 to vector<8x1xf32>
    %155 = arith.divf %153, %154 : vector<8x1xf32>
    %156 = vector.broadcast %148 : vector<8x1xf32> to vector<8x64xf32>
    %157 = arith.subf %142, %156 : vector<8x64xf32>
    %cst_62 = arith.constant 9.99999974E-6 : f32
    %158 = vector.broadcast %cst_62 : f32 to vector<8x1xf32>
    %159 = arith.addf %155, %158 : vector<8x1xf32>
    %160 = math.rsqrt %159 : vector<8x1xf32>
    %161 = vector.broadcast %160 : vector<8x1xf32> to vector<8x64xf32>
    %162 = arith.mulf %157, %161 : vector<8x64xf32>
    %163 = vector.broadcast %143 : vector<1x64xf32> to vector<8x64xf32>
    %164 = arith.mulf %162, %163 : vector<8x64xf32>
    %165 = vector.broadcast %144 : vector<1x64xf32> to vector<8x64xf32>
    %166 = arith.addf %164, %165 : vector<8x64xf32>
    %167 = arith.truncf %166 : vector<8x64xf32> to vector<8x64xbf16>
    %c0_63 = arith.constant 0 : index
    %c0_64 = arith.constant 0 : index
    %168 = vector.load %arg13[%c0_63, %c0_64] : memref<64x256xbf16, #tpu.memory_space<vmem>>, vector<64x256xbf16>
    %cst_65 = arith.constant dense<0.000000e+00> : vector<8x256xf32>
    %169 = tpu.matmul %167, %168, %cst_65 {dimension_numbers = #tpu.dot_dimension_numbers<[1], [0], [0], [1], [0, 0, 1, 1], [], []>} : vector<8x64xbf16>, vector<64x256xbf16>, vector<8x256xf32> -> vector<8x256xf32>
    %c0_66 = arith.constant 0 : index
    %c0_67 = arith.constant 0 : index
    %170 = vector.load %arg14[%c0_66, %c0_67] : memref<1x256xf32, #tpu.memory_space<vmem>>, vector<1x256xf32>
    %171 = vector.broadcast %170 : vector<1x256xf32> to vector<8x256xf32>
    %172 = arith.addf %169, %171 : vector<8x256xf32>
    %cst_68 = arith.constant 0.000000e+00 : f32
    %173 = vector.broadcast %cst_68 : f32 to vector<8x256xf32>
    %174 = arith.maximumf %172, %173 : vector<8x256xf32>
    %175 = arith.truncf %174 : vector<8x256xf32> to vector<8x256xbf16>
    %c0_69 = arith.constant 0 : index
    %c0_70 = arith.constant 0 : index
    %176 = vector.load %arg15[%c0_69, %c0_70] : memref<256x64xbf16, #tpu.memory_space<vmem>>, vector<256x64xbf16>
    %cst_71 = arith.constant dense<0.000000e+00> : vector<8x64xf32>
    %177 = tpu.matmul %175, %176, %cst_71 {dimension_numbers = #tpu.dot_dimension_numbers<[1], [0], [0], [1], [0, 0, 1, 1], [], []>} : vector<8x256xbf16>, vector<256x64xbf16>, vector<8x64xf32> -> vector<8x64xf32>
    %c0_72 = arith.constant 0 : index
    %c0_73 = arith.constant 0 : index
    %178 = vector.load %arg16[%c0_72, %c0_73] : memref<1x64xf32, #tpu.memory_space<vmem>>, vector<1x64xf32>
    %179 = vector.broadcast %178 : vector<1x64xf32> to vector<8x64xf32>
    %180 = arith.addf %177, %179 : vector<8x64xf32>
    %181 = arith.addf %166, %180 : vector<8x64xf32>
    %c0_74 = arith.constant 0 : index
    %c0_75 = arith.constant 0 : index
    %182 = vector.load %arg19[%c0_74, %c0_75] : memref<1x64xf32, #tpu.memory_space<vmem>>, vector<1x64xf32>
    %c0_76 = arith.constant 0 : index
    %c0_77 = arith.constant 0 : index
    %183 = vector.load %arg20[%c0_76, %c0_77] : memref<1x64xf32, #tpu.memory_space<vmem>>, vector<1x64xf32>
    %cst_78 = arith.constant dense<0.000000e+00> : vector<8xf32>
    %184 = vector.multi_reduction <add>, %181, %cst_78 [1] : vector<8x64xf32> to vector<8xf32>
    %185 = vector.shape_cast %184 : vector<8xf32> to vector<8x1xf32>
    %cst_79 = arith.constant 6.400000e+01 : f32
    %186 = vector.broadcast %cst_79 : f32 to vector<8x1xf32>
    %187 = arith.divf %185, %186 : vector<8x1xf32>
    %188 = vector.broadcast %187 : vector<8x1xf32> to vector<8x64xf32>
    %189 = arith.subf %181, %188 : vector<8x64xf32>
    %190 = arith.mulf %189, %189 : vector<8x64xf32>
    %cst_80 = arith.constant dense<0.000000e+00> : vector<8xf32>
    %191 = vector.multi_reduction <add>, %190, %cst_80 [1] : vector<8x64xf32> to vector<8xf32>
    %192 = vector.shape_cast %191 : vector<8xf32> to vector<8x1xf32>
    %cst_81 = arith.constant 6.400000e+01 : f32
    %193 = vector.broadcast %cst_81 : f32 to vector<8x1xf32>
    %194 = arith.divf %192, %193 : vector<8x1xf32>
    %195 = vector.broadcast %187 : vector<8x1xf32> to vector<8x64xf32>
    %196 = arith.subf %181, %195 : vector<8x64xf32>
    %cst_82 = arith.constant 9.99999974E-6 : f32
    %197 = vector.broadcast %cst_82 : f32 to vector<8x1xf32>
    %198 = arith.addf %194, %197 : vector<8x1xf32>
    %199 = math.rsqrt %198 : vector<8x1xf32>
    %200 = vector.broadcast %199 : vector<8x1xf32> to vector<8x64xf32>
    %201 = arith.mulf %196, %200 : vector<8x64xf32>
    %202 = vector.broadcast %182 : vector<1x64xf32> to vector<8x64xf32>
    %203 = arith.mulf %201, %202 : vector<8x64xf32>
    %204 = vector.broadcast %183 : vector<1x64xf32> to vector<8x64xf32>
    %205 = arith.addf %203, %204 : vector<8x64xf32>
    %206 = arith.truncf %205 : vector<8x64xf32> to vector<8x64xbf16>
    %c0_83 = arith.constant 0 : index
    %c0_84 = arith.constant 0 : index
    %207 = vector.load %arg21[%c0_83, %c0_84] : memref<8x64xbf16, #tpu.memory_space<vmem>>, vector<8x64xbf16>
    tpu.vector_store %arg21[%c0_83, %c0_84], %206 {strides = array<i32>} : memref<8x64xbf16, #tpu.memory_space<vmem>>, vector<8x64xbf16>,
    return
  }
}

module attributes {stable_mosaic.version = 11 : i64} {
  func.func @_down_stage_kernel(%arg0: memref<4x128xbf16, #tpu.memory_space<vmem>>, %arg1: memref<4x4xf32, #tpu.memory_space<vmem>>, %arg2: memref<4x1xf32, #tpu.memory_space<vmem>>, %arg3: memref<4x1xf32, #tpu.memory_space<vmem>>, %arg4: memref<192x128xbf16, #tpu.memory_space<vmem>>, %arg5: memref<1x128xf32, #tpu.memory_space<vmem>>, %arg6: memref<1x128xf32, #tpu.memory_space<vmem>>, %arg7: memref<1x128xf32, #tpu.memory_space<vmem>>, %arg8: memref<4x128xf32, #tpu.memory_space<vmem>>, %arg9: memref<128x384xbf16, #tpu.memory_space<vmem>>, %arg10: memref<1x384xf32, #tpu.memory_space<vmem>>, %arg11: memref<128x128xbf16, #tpu.memory_space<vmem>>, %arg12: memref<1x128xf32, #tpu.memory_space<vmem>>, %arg13: memref<128x512xbf16, #tpu.memory_space<vmem>>, %arg14: memref<1x512xf32, #tpu.memory_space<vmem>>, %arg15: memref<512x128xbf16, #tpu.memory_space<vmem>>, %arg16: memref<1x128xf32, #tpu.memory_space<vmem>>, %arg17: memref<1x128xf32, #tpu.memory_space<vmem>>, %arg18: memref<1x128xf32, #tpu.memory_space<vmem>>, %arg19: memref<1x128xf32, #tpu.memory_space<vmem>>, %arg20: memref<1x128xf32, #tpu.memory_space<vmem>>, %arg21: memref<4x128xbf16, #tpu.memory_space<vmem>>) attributes {dimension_semantics = [], scalar_prefetch = 0 : i64, scratch_operands = 0 : i64, tpu.core_type = #tpu.core_type<tc>} {
    %c0 = arith.constant 0 : index
    %c0_0 = arith.constant 0 : index
    %0 = vector.load %arg0[%c0, %c0_0] : memref<4x128xbf16, #tpu.memory_space<vmem>>, vector<4x128xbf16>
    %1 = arith.extf %0 : vector<4x128xbf16> to vector<4x128xf32>
    %2 = vector.extract_strided_slice %1 {offsets = [0, 0], sizes = [4, 64], strides = [1, 1]} : vector<4x128xf32> to vector<4x64xf32>
    %3 = vector.extract_strided_slice %1 {offsets = [0, 64], sizes = [4, 64], strides = [1, 1]} : vector<4x128xf32> to vector<4x64xf32>
    %4 = arith.maximumf %2, %3 : vector<4x64xf32>
    %cst = arith.constant 0.000000e+00 : f32
    %5 = vector.broadcast %cst : f32 to vector<1x64xf32>
    %6 = vector.extract_strided_slice %4 {offsets = [0, 0], sizes = [3, 64], strides = [1, 1]} : vector<4x64xf32> to vector<3x64xf32>
    %7 = tpu.concatenate %5, %6 in 0 : vector<1x64xf32>, vector<3x64xf32> -> vector<4x64xf32>
    %c0_1 = arith.constant 0 : index
    %c0_2 = arith.constant 0 : index
    %8 = vector.load %arg2[%c0_1, %c0_2] : memref<4x1xf32, #tpu.memory_space<vmem>>, vector<4x1xf32>
    %9 = vector.broadcast %8 : vector<4x1xf32> to vector<4x64xf32>
    %10 = arith.mulf %7, %9 : vector<4x64xf32>
    %11 = vector.extract_strided_slice %4 {offsets = [1, 0], sizes = [3, 64], strides = [1, 1]} : vector<4x64xf32> to vector<3x64xf32>
    %12 = tpu.concatenate %11, %5 in 0 : vector<3x64xf32>, vector<1x64xf32> -> vector<4x64xf32>
    %c0_3 = arith.constant 0 : index
    %c0_4 = arith.constant 0 : index
    %13 = vector.load %arg3[%c0_3, %c0_4] : memref<4x1xf32, #tpu.memory_space<vmem>>, vector<4x1xf32>
    %14 = vector.broadcast %13 : vector<4x1xf32> to vector<4x64xf32>
    %15 = arith.mulf %12, %14 : vector<4x64xf32>
    %16 = tpu.concatenate %10, %4, %15 in 1 : vector<4x64xf32>, vector<4x64xf32>, vector<4x64xf32> -> vector<4x192xf32>
    %17 = arith.truncf %16 : vector<4x192xf32> to vector<4x192xbf16>
    %c0_5 = arith.constant 0 : index
    %c0_6 = arith.constant 0 : index
    %18 = vector.load %arg4[%c0_5, %c0_6] : memref<192x128xbf16, #tpu.memory_space<vmem>>, vector<192x128xbf16>
    %cst_7 = arith.constant dense<0.000000e+00> : vector<4x128xf32>
    %19 = tpu.matmul %17, %18, %cst_7 {dimension_numbers = #tpu.dot_dimension_numbers<[1], [0], [0], [1], [0, 0, 1, 1], [], []>} : vector<4x192xbf16>, vector<192x128xbf16>, vector<4x128xf32> -> vector<4x128xf32>
    %c0_8 = arith.constant 0 : index
    %c0_9 = arith.constant 0 : index
    %20 = vector.load %arg5[%c0_8, %c0_9] : memref<1x128xf32, #tpu.memory_space<vmem>>, vector<1x128xf32>
    %21 = vector.broadcast %20 : vector<1x128xf32> to vector<4x128xf32>
    %22 = arith.addf %19, %21 : vector<4x128xf32>
    %cst_10 = arith.constant 0.000000e+00 : f32
    %23 = vector.broadcast %cst_10 : f32 to vector<4x128xf32>
    %24 = arith.maximumf %22, %23 : vector<4x128xf32>
    %c0_11 = arith.constant 0 : index
    %c0_12 = arith.constant 0 : index
    %25 = vector.load %arg6[%c0_11, %c0_12] : memref<1x128xf32, #tpu.memory_space<vmem>>, vector<1x128xf32>
    %c0_13 = arith.constant 0 : index
    %c0_14 = arith.constant 0 : index
    %26 = vector.load %arg7[%c0_13, %c0_14] : memref<1x128xf32, #tpu.memory_space<vmem>>, vector<1x128xf32>
    %cst_15 = arith.constant dense<0.000000e+00> : vector<4xf32>
    %27 = vector.multi_reduction <add>, %24, %cst_15 [1] : vector<4x128xf32> to vector<4xf32>
    %28 = vector.shape_cast %27 : vector<4xf32> to vector<4x1xf32>
    %cst_16 = arith.constant 1.280000e+02 : f32
    %29 = vector.broadcast %cst_16 : f32 to vector<4x1xf32>
    %30 = arith.divf %28, %29 : vector<4x1xf32>
    %31 = vector.broadcast %30 : vector<4x1xf32> to vector<4x128xf32>
    %32 = arith.subf %24, %31 : vector<4x128xf32>
    %33 = arith.mulf %32, %32 : vector<4x128xf32>
    %cst_17 = arith.constant dense<0.000000e+00> : vector<4xf32>
    %34 = vector.multi_reduction <add>, %33, %cst_17 [1] : vector<4x128xf32> to vector<4xf32>
    %35 = vector.shape_cast %34 : vector<4xf32> to vector<4x1xf32>
    %cst_18 = arith.constant 1.280000e+02 : f32
    %36 = vector.broadcast %cst_18 : f32 to vector<4x1xf32>
    %37 = arith.divf %35, %36 : vector<4x1xf32>
    %38 = vector.broadcast %30 : vector<4x1xf32> to vector<4x128xf32>
    %39 = arith.subf %24, %38 : vector<4x128xf32>
    %cst_19 = arith.constant 9.99999974E-6 : f32
    %40 = vector.broadcast %cst_19 : f32 to vector<4x1xf32>
    %41 = arith.addf %37, %40 : vector<4x1xf32>
    %42 = math.rsqrt %41 : vector<4x1xf32>
    %43 = vector.broadcast %42 : vector<4x1xf32> to vector<4x128xf32>
    %44 = arith.mulf %39, %43 : vector<4x128xf32>
    %45 = vector.broadcast %25 : vector<1x128xf32> to vector<4x128xf32>
    %46 = arith.mulf %44, %45 : vector<4x128xf32>
    %47 = vector.broadcast %26 : vector<1x128xf32> to vector<4x128xf32>
    %48 = arith.addf %46, %47 : vector<4x128xf32>
    %c0_20 = arith.constant 0 : index
    %c0_21 = arith.constant 0 : index
    %49 = vector.load %arg8[%c0_20, %c0_21] : memref<4x128xf32, #tpu.memory_space<vmem>>, vector<4x128xf32>
    %50 = arith.addf %48, %49 : vector<4x128xf32>
    %c0_22 = arith.constant 0 : index
    %c0_23 = arith.constant 0 : index
    %51 = vector.load %arg1[%c0_22, %c0_23] : memref<4x4xf32, #tpu.memory_space<vmem>>, vector<4x4xf32>
    %52 = arith.truncf %50 : vector<4x128xf32> to vector<4x128xbf16>
    %c0_24 = arith.constant 0 : index
    %c0_25 = arith.constant 0 : index
    %53 = vector.load %arg9[%c0_24, %c0_25] : memref<128x384xbf16, #tpu.memory_space<vmem>>, vector<128x384xbf16>
    %cst_26 = arith.constant dense<0.000000e+00> : vector<4x384xf32>
    %54 = tpu.matmul %52, %53, %cst_26 {dimension_numbers = #tpu.dot_dimension_numbers<[1], [0], [0], [1], [0, 0, 1, 1], [], []>} : vector<4x128xbf16>, vector<128x384xbf16>, vector<4x384xf32> -> vector<4x384xf32>
    %c0_27 = arith.constant 0 : index
    %c0_28 = arith.constant 0 : index
    %55 = vector.load %arg10[%c0_27, %c0_28] : memref<1x384xf32, #tpu.memory_space<vmem>>, vector<1x384xf32>
    %56 = vector.broadcast %55 : vector<1x384xf32> to vector<4x384xf32>
    %57 = arith.addf %54, %56 : vector<4x384xf32>
    %58 = arith.truncf %57 : vector<4x384xf32> to vector<4x384xbf16>
    %59 = vector.extract_strided_slice %58 {offsets = [0, 0], sizes = [4, 16], strides = [1, 1]} : vector<4x384xbf16> to vector<4x16xbf16>
    %60 = vector.extract_strided_slice %58 {offsets = [0, 128], sizes = [4, 16], strides = [1, 1]} : vector<4x384xbf16> to vector<4x16xbf16>
    %61 = vector.extract_strided_slice %58 {offsets = [0, 256], sizes = [4, 16], strides = [1, 1]} : vector<4x384xbf16> to vector<4x16xbf16>
    %cst_29 = arith.constant dense<0.000000e+00> : vector<4x4xf32>
    %62 = tpu.matmul %59, %60, %cst_29 {dimension_numbers = #tpu.dot_dimension_numbers<[1], [1], [0], [0], [0, 0, 1, 0], [], []>} : vector<4x16xbf16>, vector<4x16xbf16>, vector<4x4xf32> -> vector<4x4xf32>
    %cst_30 = arith.constant 2.500000e-01 : f32
    %63 = vector.broadcast %cst_30 : f32 to vector<4x4xf32>
    %64 = arith.mulf %62, %63 : vector<4x4xf32>
    %65 = arith.addf %64, %51 : vector<4x4xf32>
    %cst_31 = arith.constant dense<0xFF800000> : vector<4xf32>
    %66 = vector.multi_reduction <maximumf>, %65, %cst_31 [1] : vector<4x4xf32> to vector<4xf32>
    %67 = vector.shape_cast %66 : vector<4xf32> to vector<4x1xf32>
    %68 = vector.broadcast %67 : vector<4x1xf32> to vector<4x4xf32>
    %69 = arith.subf %65, %68 : vector<4x4xf32>
    %70 = math.exp %69 : vector<4x4xf32>
    %cst_32 = arith.constant dense<0.000000e+00> : vector<4xf32>
    %71 = vector.multi_reduction <add>, %70, %cst_32 [1] : vector<4x4xf32> to vector<4xf32>
    %72 = vector.shape_cast %71 : vector<4xf32> to vector<4x1xf32>
    %73 = tpu.reciprocal %72 {approx = true} : vector<4x1xf32> -> vector<4x1xf32>
    %74 = vector.broadcast %73 : vector<4x1xf32> to vector<4x4xf32>
    %75 = arith.mulf %70, %74 : vector<4x4xf32>
    %76 = arith.truncf %75 : vector<4x4xf32> to vector<4x4xbf16>
    %cst_33 = arith.constant dense<0.000000e+00> : vector<4x16xf32>
    %77 = tpu.matmul %76, %61, %cst_33 {dimension_numbers = #tpu.dot_dimension_numbers<[1], [0], [0], [1], [0, 0, 1, 1], [], []>} : vector<4x4xbf16>, vector<4x16xbf16>, vector<4x16xf32> -> vector<4x16xf32>
    %78 = vector.extract_strided_slice %58 {offsets = [0, 16], sizes = [4, 16], strides = [1, 1]} : vector<4x384xbf16> to vector<4x16xbf16>
    %79 = vector.extract_strided_slice %58 {offsets = [0, 144], sizes = [4, 16], strides = [1, 1]} : vector<4x384xbf16> to vector<4x16xbf16>
    %80 = vector.extract_strided_slice %58 {offsets = [0, 272], sizes = [4, 16], strides = [1, 1]} : vector<4x384xbf16> to vector<4x16xbf16>
    %cst_34 = arith.constant dense<0.000000e+00> : vector<4x4xf32>
    %81 = tpu.matmul %78, %79, %cst_34 {dimension_numbers = #tpu.dot_dimension_numbers<[1], [1], [0], [0], [0, 0, 1, 0], [], []>} : vector<4x16xbf16>, vector<4x16xbf16>, vector<4x4xf32> -> vector<4x4xf32>
    %cst_35 = arith.constant 2.500000e-01 : f32
    %82 = vector.broadcast %cst_35 : f32 to vector<4x4xf32>
    %83 = arith.mulf %81, %82 : vector<4x4xf32>
    %84 = arith.addf %83, %51 : vector<4x4xf32>
    %cst_36 = arith.constant dense<0xFF800000> : vector<4xf32>
    %85 = vector.multi_reduction <maximumf>, %84, %cst_36 [1] : vector<4x4xf32> to vector<4xf32>
    %86 = vector.shape_cast %85 : vector<4xf32> to vector<4x1xf32>
    %87 = vector.broadcast %86 : vector<4x1xf32> to vector<4x4xf32>
    %88 = arith.subf %84, %87 : vector<4x4xf32>
    %89 = math.exp %88 : vector<4x4xf32>
    %cst_37 = arith.constant dense<0.000000e+00> : vector<4xf32>
    %90 = vector.multi_reduction <add>, %89, %cst_37 [1] : vector<4x4xf32> to vector<4xf32>
    %91 = vector.shape_cast %90 : vector<4xf32> to vector<4x1xf32>
    %92 = tpu.reciprocal %91 {approx = true} : vector<4x1xf32> -> vector<4x1xf32>
    %93 = vector.broadcast %92 : vector<4x1xf32> to vector<4x4xf32>
    %94 = arith.mulf %89, %93 : vector<4x4xf32>
    %95 = arith.truncf %94 : vector<4x4xf32> to vector<4x4xbf16>
    %cst_38 = arith.constant dense<0.000000e+00> : vector<4x16xf32>
    %96 = tpu.matmul %95, %80, %cst_38 {dimension_numbers = #tpu.dot_dimension_numbers<[1], [0], [0], [1], [0, 0, 1, 1], [], []>} : vector<4x4xbf16>, vector<4x16xbf16>, vector<4x16xf32> -> vector<4x16xf32>
    %97 = vector.extract_strided_slice %58 {offsets = [0, 32], sizes = [4, 16], strides = [1, 1]} : vector<4x384xbf16> to vector<4x16xbf16>
    %98 = vector.extract_strided_slice %58 {offsets = [0, 160], sizes = [4, 16], strides = [1, 1]} : vector<4x384xbf16> to vector<4x16xbf16>
    %99 = vector.extract_strided_slice %58 {offsets = [0, 288], sizes = [4, 16], strides = [1, 1]} : vector<4x384xbf16> to vector<4x16xbf16>
    %cst_39 = arith.constant dense<0.000000e+00> : vector<4x4xf32>
    %100 = tpu.matmul %97, %98, %cst_39 {dimension_numbers = #tpu.dot_dimension_numbers<[1], [1], [0], [0], [0, 0, 1, 0], [], []>} : vector<4x16xbf16>, vector<4x16xbf16>, vector<4x4xf32> -> vector<4x4xf32>
    %cst_40 = arith.constant 2.500000e-01 : f32
    %101 = vector.broadcast %cst_40 : f32 to vector<4x4xf32>
    %102 = arith.mulf %100, %101 : vector<4x4xf32>
    %103 = arith.addf %102, %51 : vector<4x4xf32>
    %cst_41 = arith.constant dense<0xFF800000> : vector<4xf32>
    %104 = vector.multi_reduction <maximumf>, %103, %cst_41 [1] : vector<4x4xf32> to vector<4xf32>
    %105 = vector.shape_cast %104 : vector<4xf32> to vector<4x1xf32>
    %106 = vector.broadcast %105 : vector<4x1xf32> to vector<4x4xf32>
    %107 = arith.subf %103, %106 : vector<4x4xf32>
    %108 = math.exp %107 : vector<4x4xf32>
    %cst_42 = arith.constant dense<0.000000e+00> : vector<4xf32>
    %109 = vector.multi_reduction <add>, %108, %cst_42 [1] : vector<4x4xf32> to vector<4xf32>
    %110 = vector.shape_cast %109 : vector<4xf32> to vector<4x1xf32>
    %111 = tpu.reciprocal %110 {approx = true} : vector<4x1xf32> -> vector<4x1xf32>
    %112 = vector.broadcast %111 : vector<4x1xf32> to vector<4x4xf32>
    %113 = arith.mulf %108, %112 : vector<4x4xf32>
    %114 = arith.truncf %113 : vector<4x4xf32> to vector<4x4xbf16>
    %cst_43 = arith.constant dense<0.000000e+00> : vector<4x16xf32>
    %115 = tpu.matmul %114, %99, %cst_43 {dimension_numbers = #tpu.dot_dimension_numbers<[1], [0], [0], [1], [0, 0, 1, 1], [], []>} : vector<4x4xbf16>, vector<4x16xbf16>, vector<4x16xf32> -> vector<4x16xf32>
    %116 = vector.extract_strided_slice %58 {offsets = [0, 48], sizes = [4, 16], strides = [1, 1]} : vector<4x384xbf16> to vector<4x16xbf16>
    %117 = vector.extract_strided_slice %58 {offsets = [0, 176], sizes = [4, 16], strides = [1, 1]} : vector<4x384xbf16> to vector<4x16xbf16>
    %118 = vector.extract_strided_slice %58 {offsets = [0, 304], sizes = [4, 16], strides = [1, 1]} : vector<4x384xbf16> to vector<4x16xbf16>
    %cst_44 = arith.constant dense<0.000000e+00> : vector<4x4xf32>
    %119 = tpu.matmul %116, %117, %cst_44 {dimension_numbers = #tpu.dot_dimension_numbers<[1], [1], [0], [0], [0, 0, 1, 0], [], []>} : vector<4x16xbf16>, vector<4x16xbf16>, vector<4x4xf32> -> vector<4x4xf32>
    %cst_45 = arith.constant 2.500000e-01 : f32
    %120 = vector.broadcast %cst_45 : f32 to vector<4x4xf32>
    %121 = arith.mulf %119, %120 : vector<4x4xf32>
    %122 = arith.addf %121, %51 : vector<4x4xf32>
    %cst_46 = arith.constant dense<0xFF800000> : vector<4xf32>
    %123 = vector.multi_reduction <maximumf>, %122, %cst_46 [1] : vector<4x4xf32> to vector<4xf32>
    %124 = vector.shape_cast %123 : vector<4xf32> to vector<4x1xf32>
    %125 = vector.broadcast %124 : vector<4x1xf32> to vector<4x4xf32>
    %126 = arith.subf %122, %125 : vector<4x4xf32>
    %127 = math.exp %126 : vector<4x4xf32>
    %cst_47 = arith.constant dense<0.000000e+00> : vector<4xf32>
    %128 = vector.multi_reduction <add>, %127, %cst_47 [1] : vector<4x4xf32> to vector<4xf32>
    %129 = vector.shape_cast %128 : vector<4xf32> to vector<4x1xf32>
    %130 = tpu.reciprocal %129 {approx = true} : vector<4x1xf32> -> vector<4x1xf32>
    %131 = vector.broadcast %130 : vector<4x1xf32> to vector<4x4xf32>
    %132 = arith.mulf %127, %131 : vector<4x4xf32>
    %133 = arith.truncf %132 : vector<4x4xf32> to vector<4x4xbf16>
    %cst_48 = arith.constant dense<0.000000e+00> : vector<4x16xf32>
    %134 = tpu.matmul %133, %118, %cst_48 {dimension_numbers = #tpu.dot_dimension_numbers<[1], [0], [0], [1], [0, 0, 1, 1], [], []>} : vector<4x4xbf16>, vector<4x16xbf16>, vector<4x16xf32> -> vector<4x16xf32>
    %135 = vector.extract_strided_slice %58 {offsets = [0, 64], sizes = [4, 16], strides = [1, 1]} : vector<4x384xbf16> to vector<4x16xbf16>
    %136 = vector.extract_strided_slice %58 {offsets = [0, 192], sizes = [4, 16], strides = [1, 1]} : vector<4x384xbf16> to vector<4x16xbf16>
    %137 = vector.extract_strided_slice %58 {offsets = [0, 320], sizes = [4, 16], strides = [1, 1]} : vector<4x384xbf16> to vector<4x16xbf16>
    %cst_49 = arith.constant dense<0.000000e+00> : vector<4x4xf32>
    %138 = tpu.matmul %135, %136, %cst_49 {dimension_numbers = #tpu.dot_dimension_numbers<[1], [1], [0], [0], [0, 0, 1, 0], [], []>} : vector<4x16xbf16>, vector<4x16xbf16>, vector<4x4xf32> -> vector<4x4xf32>
    %cst_50 = arith.constant 2.500000e-01 : f32
    %139 = vector.broadcast %cst_50 : f32 to vector<4x4xf32>
    %140 = arith.mulf %138, %139 : vector<4x4xf32>
    %141 = arith.addf %140, %51 : vector<4x4xf32>
    %cst_51 = arith.constant dense<0xFF800000> : vector<4xf32>
    %142 = vector.multi_reduction <maximumf>, %141, %cst_51 [1] : vector<4x4xf32> to vector<4xf32>
    %143 = vector.shape_cast %142 : vector<4xf32> to vector<4x1xf32>
    %144 = vector.broadcast %143 : vector<4x1xf32> to vector<4x4xf32>
    %145 = arith.subf %141, %144 : vector<4x4xf32>
    %146 = math.exp %145 : vector<4x4xf32>
    %cst_52 = arith.constant dense<0.000000e+00> : vector<4xf32>
    %147 = vector.multi_reduction <add>, %146, %cst_52 [1] : vector<4x4xf32> to vector<4xf32>
    %148 = vector.shape_cast %147 : vector<4xf32> to vector<4x1xf32>
    %149 = tpu.reciprocal %148 {approx = true} : vector<4x1xf32> -> vector<4x1xf32>
    %150 = vector.broadcast %149 : vector<4x1xf32> to vector<4x4xf32>
    %151 = arith.mulf %146, %150 : vector<4x4xf32>
    %152 = arith.truncf %151 : vector<4x4xf32> to vector<4x4xbf16>
    %cst_53 = arith.constant dense<0.000000e+00> : vector<4x16xf32>
    %153 = tpu.matmul %152, %137, %cst_53 {dimension_numbers = #tpu.dot_dimension_numbers<[1], [0], [0], [1], [0, 0, 1, 1], [], []>} : vector<4x4xbf16>, vector<4x16xbf16>, vector<4x16xf32> -> vector<4x16xf32>
    %154 = vector.extract_strided_slice %58 {offsets = [0, 80], sizes = [4, 16], strides = [1, 1]} : vector<4x384xbf16> to vector<4x16xbf16>
    %155 = vector.extract_strided_slice %58 {offsets = [0, 208], sizes = [4, 16], strides = [1, 1]} : vector<4x384xbf16> to vector<4x16xbf16>
    %156 = vector.extract_strided_slice %58 {offsets = [0, 336], sizes = [4, 16], strides = [1, 1]} : vector<4x384xbf16> to vector<4x16xbf16>
    %cst_54 = arith.constant dense<0.000000e+00> : vector<4x4xf32>
    %157 = tpu.matmul %154, %155, %cst_54 {dimension_numbers = #tpu.dot_dimension_numbers<[1], [1], [0], [0], [0, 0, 1, 0], [], []>} : vector<4x16xbf16>, vector<4x16xbf16>, vector<4x4xf32> -> vector<4x4xf32>
    %cst_55 = arith.constant 2.500000e-01 : f32
    %158 = vector.broadcast %cst_55 : f32 to vector<4x4xf32>
    %159 = arith.mulf %157, %158 : vector<4x4xf32>
    %160 = arith.addf %159, %51 : vector<4x4xf32>
    %cst_56 = arith.constant dense<0xFF800000> : vector<4xf32>
    %161 = vector.multi_reduction <maximumf>, %160, %cst_56 [1] : vector<4x4xf32> to vector<4xf32>
    %162 = vector.shape_cast %161 : vector<4xf32> to vector<4x1xf32>
    %163 = vector.broadcast %162 : vector<4x1xf32> to vector<4x4xf32>
    %164 = arith.subf %160, %163 : vector<4x4xf32>
    %165 = math.exp %164 : vector<4x4xf32>
    %cst_57 = arith.constant dense<0.000000e+00> : vector<4xf32>
    %166 = vector.multi_reduction <add>, %165, %cst_57 [1] : vector<4x4xf32> to vector<4xf32>
    %167 = vector.shape_cast %166 : vector<4xf32> to vector<4x1xf32>
    %168 = tpu.reciprocal %167 {approx = true} : vector<4x1xf32> -> vector<4x1xf32>
    %169 = vector.broadcast %168 : vector<4x1xf32> to vector<4x4xf32>
    %170 = arith.mulf %165, %169 : vector<4x4xf32>
    %171 = arith.truncf %170 : vector<4x4xf32> to vector<4x4xbf16>
    %cst_58 = arith.constant dense<0.000000e+00> : vector<4x16xf32>
    %172 = tpu.matmul %171, %156, %cst_58 {dimension_numbers = #tpu.dot_dimension_numbers<[1], [0], [0], [1], [0, 0, 1, 1], [], []>} : vector<4x4xbf16>, vector<4x16xbf16>, vector<4x16xf32> -> vector<4x16xf32>
    %173 = vector.extract_strided_slice %58 {offsets = [0, 96], sizes = [4, 16], strides = [1, 1]} : vector<4x384xbf16> to vector<4x16xbf16>
    %174 = vector.extract_strided_slice %58 {offsets = [0, 224], sizes = [4, 16], strides = [1, 1]} : vector<4x384xbf16> to vector<4x16xbf16>
    %175 = vector.extract_strided_slice %58 {offsets = [0, 352], sizes = [4, 16], strides = [1, 1]} : vector<4x384xbf16> to vector<4x16xbf16>
    %cst_59 = arith.constant dense<0.000000e+00> : vector<4x4xf32>
    %176 = tpu.matmul %173, %174, %cst_59 {dimension_numbers = #tpu.dot_dimension_numbers<[1], [1], [0], [0], [0, 0, 1, 0], [], []>} : vector<4x16xbf16>, vector<4x16xbf16>, vector<4x4xf32> -> vector<4x4xf32>
    %cst_60 = arith.constant 2.500000e-01 : f32
    %177 = vector.broadcast %cst_60 : f32 to vector<4x4xf32>
    %178 = arith.mulf %176, %177 : vector<4x4xf32>
    %179 = arith.addf %178, %51 : vector<4x4xf32>
    %cst_61 = arith.constant dense<0xFF800000> : vector<4xf32>
    %180 = vector.multi_reduction <maximumf>, %179, %cst_61 [1] : vector<4x4xf32> to vector<4xf32>
    %181 = vector.shape_cast %180 : vector<4xf32> to vector<4x1xf32>
    %182 = vector.broadcast %181 : vector<4x1xf32> to vector<4x4xf32>
    %183 = arith.subf %179, %182 : vector<4x4xf32>
    %184 = math.exp %183 : vector<4x4xf32>
    %cst_62 = arith.constant dense<0.000000e+00> : vector<4xf32>
    %185 = vector.multi_reduction <add>, %184, %cst_62 [1] : vector<4x4xf32> to vector<4xf32>
    %186 = vector.shape_cast %185 : vector<4xf32> to vector<4x1xf32>
    %187 = tpu.reciprocal %186 {approx = true} : vector<4x1xf32> -> vector<4x1xf32>
    %188 = vector.broadcast %187 : vector<4x1xf32> to vector<4x4xf32>
    %189 = arith.mulf %184, %188 : vector<4x4xf32>
    %190 = arith.truncf %189 : vector<4x4xf32> to vector<4x4xbf16>
    %cst_63 = arith.constant dense<0.000000e+00> : vector<4x16xf32>
    %191 = tpu.matmul %190, %175, %cst_63 {dimension_numbers = #tpu.dot_dimension_numbers<[1], [0], [0], [1], [0, 0, 1, 1], [], []>} : vector<4x4xbf16>, vector<4x16xbf16>, vector<4x16xf32> -> vector<4x16xf32>
    %192 = vector.extract_strided_slice %58 {offsets = [0, 112], sizes = [4, 16], strides = [1, 1]} : vector<4x384xbf16> to vector<4x16xbf16>
    %193 = vector.extract_strided_slice %58 {offsets = [0, 240], sizes = [4, 16], strides = [1, 1]} : vector<4x384xbf16> to vector<4x16xbf16>
    %194 = vector.extract_strided_slice %58 {offsets = [0, 368], sizes = [4, 16], strides = [1, 1]} : vector<4x384xbf16> to vector<4x16xbf16>
    %cst_64 = arith.constant dense<0.000000e+00> : vector<4x4xf32>
    %195 = tpu.matmul %192, %193, %cst_64 {dimension_numbers = #tpu.dot_dimension_numbers<[1], [1], [0], [0], [0, 0, 1, 0], [], []>} : vector<4x16xbf16>, vector<4x16xbf16>, vector<4x4xf32> -> vector<4x4xf32>
    %cst_65 = arith.constant 2.500000e-01 : f32
    %196 = vector.broadcast %cst_65 : f32 to vector<4x4xf32>
    %197 = arith.mulf %195, %196 : vector<4x4xf32>
    %198 = arith.addf %197, %51 : vector<4x4xf32>
    %cst_66 = arith.constant dense<0xFF800000> : vector<4xf32>
    %199 = vector.multi_reduction <maximumf>, %198, %cst_66 [1] : vector<4x4xf32> to vector<4xf32>
    %200 = vector.shape_cast %199 : vector<4xf32> to vector<4x1xf32>
    %201 = vector.broadcast %200 : vector<4x1xf32> to vector<4x4xf32>
    %202 = arith.subf %198, %201 : vector<4x4xf32>
    %203 = math.exp %202 : vector<4x4xf32>
    %cst_67 = arith.constant dense<0.000000e+00> : vector<4xf32>
    %204 = vector.multi_reduction <add>, %203, %cst_67 [1] : vector<4x4xf32> to vector<4xf32>
    %205 = vector.shape_cast %204 : vector<4xf32> to vector<4x1xf32>
    %206 = tpu.reciprocal %205 {approx = true} : vector<4x1xf32> -> vector<4x1xf32>
    %207 = vector.broadcast %206 : vector<4x1xf32> to vector<4x4xf32>
    %208 = arith.mulf %203, %207 : vector<4x4xf32>
    %209 = arith.truncf %208 : vector<4x4xf32> to vector<4x4xbf16>
    %cst_68 = arith.constant dense<0.000000e+00> : vector<4x16xf32>
    %210 = tpu.matmul %209, %194, %cst_68 {dimension_numbers = #tpu.dot_dimension_numbers<[1], [0], [0], [1], [0, 0, 1, 1], [], []>} : vector<4x4xbf16>, vector<4x16xbf16>, vector<4x16xf32> -> vector<4x16xf32>
    %211 = tpu.concatenate %77, %96, %115, %134, %153, %172, %191, %210 in 1 : vector<4x16xf32>, vector<4x16xf32>, vector<4x16xf32>, vector<4x16xf32>, vector<4x16xf32>, vector<4x16xf32>, vector<4x16xf32>, vector<4x16xf32> -> vector<4x128xf32>
    %212 = arith.truncf %211 : vector<4x128xf32> to vector<4x128xbf16>
    %c0_69 = arith.constant 0 : index
    %c0_70 = arith.constant 0 : index
    %213 = vector.load %arg11[%c0_69, %c0_70] : memref<128x128xbf16, #tpu.memory_space<vmem>>, vector<128x128xbf16>
    %cst_71 = arith.constant dense<0.000000e+00> : vector<4x128xf32>
    %214 = tpu.matmul %212, %213, %cst_71 {dimension_numbers = #tpu.dot_dimension_numbers<[1], [0], [0], [1], [0, 0, 1, 1], [], []>} : vector<4x128xbf16>, vector<128x128xbf16>, vector<4x128xf32> -> vector<4x128xf32>
    %c0_72 = arith.constant 0 : index
    %c0_73 = arith.constant 0 : index
    %215 = vector.load %arg12[%c0_72, %c0_73] : memref<1x128xf32, #tpu.memory_space<vmem>>, vector<1x128xf32>
    %216 = vector.broadcast %215 : vector<1x128xf32> to vector<4x128xf32>
    %217 = arith.addf %214, %216 : vector<4x128xf32>
    %218 = arith.addf %50, %217 : vector<4x128xf32>
    %c0_74 = arith.constant 0 : index
    %c0_75 = arith.constant 0 : index
    %219 = vector.load %arg17[%c0_74, %c0_75] : memref<1x128xf32, #tpu.memory_space<vmem>>, vector<1x128xf32>
    %c0_76 = arith.constant 0 : index
    %c0_77 = arith.constant 0 : index
    %220 = vector.load %arg18[%c0_76, %c0_77] : memref<1x128xf32, #tpu.memory_space<vmem>>, vector<1x128xf32>
    %cst_78 = arith.constant dense<0.000000e+00> : vector<4xf32>
    %221 = vector.multi_reduction <add>, %218, %cst_78 [1] : vector<4x128xf32> to vector<4xf32>
    %222 = vector.shape_cast %221 : vector<4xf32> to vector<4x1xf32>
    %cst_79 = arith.constant 1.280000e+02 : f32
    %223 = vector.broadcast %cst_79 : f32 to vector<4x1xf32>
    %224 = arith.divf %222, %223 : vector<4x1xf32>
    %225 = vector.broadcast %224 : vector<4x1xf32> to vector<4x128xf32>
    %226 = arith.subf %218, %225 : vector<4x128xf32>
    %227 = arith.mulf %226, %226 : vector<4x128xf32>
    %cst_80 = arith.constant dense<0.000000e+00> : vector<4xf32>
    %228 = vector.multi_reduction <add>, %227, %cst_80 [1] : vector<4x128xf32> to vector<4xf32>
    %229 = vector.shape_cast %228 : vector<4xf32> to vector<4x1xf32>
    %cst_81 = arith.constant 1.280000e+02 : f32
    %230 = vector.broadcast %cst_81 : f32 to vector<4x1xf32>
    %231 = arith.divf %229, %230 : vector<4x1xf32>
    %232 = vector.broadcast %224 : vector<4x1xf32> to vector<4x128xf32>
    %233 = arith.subf %218, %232 : vector<4x128xf32>
    %cst_82 = arith.constant 9.99999974E-6 : f32
    %234 = vector.broadcast %cst_82 : f32 to vector<4x1xf32>
    %235 = arith.addf %231, %234 : vector<4x1xf32>
    %236 = math.rsqrt %235 : vector<4x1xf32>
    %237 = vector.broadcast %236 : vector<4x1xf32> to vector<4x128xf32>
    %238 = arith.mulf %233, %237 : vector<4x128xf32>
    %239 = vector.broadcast %219 : vector<1x128xf32> to vector<4x128xf32>
    %240 = arith.mulf %238, %239 : vector<4x128xf32>
    %241 = vector.broadcast %220 : vector<1x128xf32> to vector<4x128xf32>
    %242 = arith.addf %240, %241 : vector<4x128xf32>
    %243 = arith.truncf %242 : vector<4x128xf32> to vector<4x128xbf16>
    %c0_83 = arith.constant 0 : index
    %c0_84 = arith.constant 0 : index
    %244 = vector.load %arg13[%c0_83, %c0_84] : memref<128x512xbf16, #tpu.memory_space<vmem>>, vector<128x512xbf16>
    %cst_85 = arith.constant dense<0.000000e+00> : vector<4x512xf32>
    %245 = tpu.matmul %243, %244, %cst_85 {dimension_numbers = #tpu.dot_dimension_numbers<[1], [0], [0], [1], [0, 0, 1, 1], [], []>} : vector<4x128xbf16>, vector<128x512xbf16>, vector<4x512xf32> -> vector<4x512xf32>
    %c0_86 = arith.constant 0 : index
    %c0_87 = arith.constant 0 : index
    %246 = vector.load %arg14[%c0_86, %c0_87] : memref<1x512xf32, #tpu.memory_space<vmem>>, vector<1x512xf32>
    %247 = vector.broadcast %246 : vector<1x512xf32> to vector<4x512xf32>
    %248 = arith.addf %245, %247 : vector<4x512xf32>
    %cst_88 = arith.constant 0.000000e+00 : f32
    %249 = vector.broadcast %cst_88 : f32 to vector<4x512xf32>
    %250 = arith.maximumf %248, %249 : vector<4x512xf32>
    %251 = arith.truncf %250 : vector<4x512xf32> to vector<4x512xbf16>
    %c0_89 = arith.constant 0 : index
    %c0_90 = arith.constant 0 : index
    %252 = vector.load %arg15[%c0_89, %c0_90] : memref<512x128xbf16, #tpu.memory_space<vmem>>, vector<512x128xbf16>
    %cst_91 = arith.constant dense<0.000000e+00> : vector<4x128xf32>
    %253 = tpu.matmul %251, %252, %cst_91 {dimension_numbers = #tpu.dot_dimension_numbers<[1], [0], [0], [1], [0, 0, 1, 1], [], []>} : vector<4x512xbf16>, vector<512x128xbf16>, vector<4x128xf32> -> vector<4x128xf32>
    %c0_92 = arith.constant 0 : index
    %c0_93 = arith.constant 0 : index
    %254 = vector.load %arg16[%c0_92, %c0_93] : memref<1x128xf32, #tpu.memory_space<vmem>>, vector<1x128xf32>
    %255 = vector.broadcast %254 : vector<1x128xf32> to vector<4x128xf32>
    %256 = arith.addf %253, %255 : vector<4x128xf32>
    %257 = arith.addf %242, %256 : vector<4x128xf32>
    %c0_94 = arith.constant 0 : index
    %c0_95 = arith.constant 0 : index
    %258 = vector.load %arg19[%c0_94, %c0_95] : memref<1x128xf32, #tpu.memory_space<vmem>>, vector<1x128xf32>
    %c0_96 = arith.constant 0 : index
    %c0_97 = arith.constant 0 : index
    %259 = vector.load %arg20[%c0_96, %c0_97] : memref<1x128xf32, #tpu.memory_space<vmem>>, vector<1x128xf32>
    %cst_98 = arith.constant dense<0.000000e+00> : vector<4xf32>
    %260 = vector.multi_reduction <add>, %257, %cst_98 [1] : vector<4x128xf32> to vector<4xf32>
    %261 = vector.shape_cast %260 : vector<4xf32> to vector<4x1xf32>
    %cst_99 = arith.constant 1.280000e+02 : f32
    %262 = vector.broadcast %cst_99 : f32 to vector<4x1xf32>
    %263 = arith.divf %261, %262 : vector<4x1xf32>
    %264 = vector.broadcast %263 : vector<4x1xf32> to vector<4x128xf32>
    %265 = arith.subf %257, %264 : vector<4x128xf32>
    %266 = arith.mulf %265, %265 : vector<4x128xf32>
    %cst_100 = arith.constant dense<0.000000e+00> : vector<4xf32>
    %267 = vector.multi_reduction <add>, %266, %cst_100 [1] : vector<4x128xf32> to vector<4xf32>
    %268 = vector.shape_cast %267 : vector<4xf32> to vector<4x1xf32>
    %cst_101 = arith.constant 1.280000e+02 : f32
    %269 = vector.broadcast %cst_101 : f32 to vector<4x1xf32>
    %270 = arith.divf %268, %269 : vector<4x1xf32>
    %271 = vector.broadcast %263 : vector<4x1xf32> to vector<4x128xf32>
    %272 = arith.subf %257, %271 : vector<4x128xf32>
    %cst_102 = arith.constant 9.99999974E-6 : f32
    %273 = vector.broadcast %cst_102 : f32 to vector<4x1xf32>
    %274 = arith.addf %270, %273 : vector<4x1xf32>
    %275 = math.rsqrt %274 : vector<4x1xf32>
    %276 = vector.broadcast %275 : vector<4x1xf32> to vector<4x128xf32>
    %277 = arith.mulf %272, %276 : vector<4x128xf32>
    %278 = vector.broadcast %258 : vector<1x128xf32> to vector<4x128xf32>
    %279 = arith.mulf %277, %278 : vector<4x128xf32>
    %280 = vector.broadcast %259 : vector<1x128xf32> to vector<4x128xf32>
    %281 = arith.addf %279, %280 : vector<4x128xf32>
    %282 = arith.truncf %281 : vector<4x128xf32> to vector<4x128xbf16>
    %c0_103 = arith.constant 0 : index
    %c0_104 = arith.constant 0 : index
    %283 = vector.load %arg21[%c0_103, %c0_104] : memref<4x128xbf16, #tpu.memory_space<vmem>>, vector<4x128xbf16>
    tpu.vector_store %arg21[%c0_103, %c0_104], %282 {strides = array<i32>} : memref<4x128xbf16, #tpu.memory_space<vmem>>, vector<4x128xbf16>,
    return
  }
}

module attributes {stable_mosaic.version = 11 : i64} {
  func.func @_neck_up_kernel(%arg0: memref<4x128xbf16, #tpu.memory_space<vmem>>, %arg1: memref<4x128xbf16, #tpu.memory_space<vmem>>, %arg2: memref<4x4xf32, #tpu.memory_space<vmem>>, %arg3: memref<1x128xf32, #tpu.memory_space<vmem>>, %arg4: memref<1x128xf32, #tpu.memory_space<vmem>>, %arg5: memref<128x128xbf16, #tpu.memory_space<vmem>>, %arg6: memref<1x128xf32, #tpu.memory_space<vmem>>, %arg7: memref<128x384xbf16, #tpu.memory_space<vmem>>, %arg8: memref<1x384xf32, #tpu.memory_space<vmem>>, %arg9: memref<128x128xbf16, #tpu.memory_space<vmem>>, %arg10: memref<1x128xf32, #tpu.memory_space<vmem>>, %arg11: memref<128x512xbf16, #tpu.memory_space<vmem>>, %arg12: memref<1x512xf32, #tpu.memory_space<vmem>>, %arg13: memref<512x128xbf16, #tpu.memory_space<vmem>>, %arg14: memref<1x128xf32, #tpu.memory_space<vmem>>, %arg15: memref<1x128xf32, #tpu.memory_space<vmem>>, %arg16: memref<1x128xf32, #tpu.memory_space<vmem>>, %arg17: memref<1x128xf32, #tpu.memory_space<vmem>>, %arg18: memref<1x128xf32, #tpu.memory_space<vmem>>, %arg19: memref<4x128xbf16, #tpu.memory_space<vmem>>) attributes {dimension_semantics = [], scalar_prefetch = 0 : i64, scratch_operands = 0 : i64, tpu.core_type = #tpu.core_type<tc>} {
    %c0 = arith.constant 0 : index
    %c0_0 = arith.constant 0 : index
    %0 = vector.load %arg0[%c0, %c0_0] : memref<4x128xbf16, #tpu.memory_space<vmem>>, vector<4x128xbf16>
    %1 = arith.extf %0 : vector<4x128xbf16> to vector<4x128xf32>
    %c0_1 = arith.constant 0 : index
    %c0_2 = arith.constant 0 : index
    %2 = vector.load %arg2[%c0_1, %c0_2] : memref<4x4xf32, #tpu.memory_space<vmem>>, vector<4x4xf32>
    %3 = arith.truncf %1 : vector<4x128xf32> to vector<4x128xbf16>
    %c0_3 = arith.constant 0 : index
    %c0_4 = arith.constant 0 : index
    %4 = vector.load %arg7[%c0_3, %c0_4] : memref<128x384xbf16, #tpu.memory_space<vmem>>, vector<128x384xbf16>
    %cst = arith.constant dense<0.000000e+00> : vector<4x384xf32>
    %5 = tpu.matmul %3, %4, %cst {dimension_numbers = #tpu.dot_dimension_numbers<[1], [0], [0], [1], [0, 0, 1, 1], [], []>} : vector<4x128xbf16>, vector<128x384xbf16>, vector<4x384xf32> -> vector<4x384xf32>
    %c0_5 = arith.constant 0 : index
    %c0_6 = arith.constant 0 : index
    %6 = vector.load %arg8[%c0_5, %c0_6] : memref<1x384xf32, #tpu.memory_space<vmem>>, vector<1x384xf32>
    %7 = vector.broadcast %6 : vector<1x384xf32> to vector<4x384xf32>
    %8 = arith.addf %5, %7 : vector<4x384xf32>
    %9 = arith.truncf %8 : vector<4x384xf32> to vector<4x384xbf16>
    %10 = vector.extract_strided_slice %9 {offsets = [0, 0], sizes = [4, 16], strides = [1, 1]} : vector<4x384xbf16> to vector<4x16xbf16>
    %11 = vector.extract_strided_slice %9 {offsets = [0, 128], sizes = [4, 16], strides = [1, 1]} : vector<4x384xbf16> to vector<4x16xbf16>
    %12 = vector.extract_strided_slice %9 {offsets = [0, 256], sizes = [4, 16], strides = [1, 1]} : vector<4x384xbf16> to vector<4x16xbf16>
    %cst_7 = arith.constant dense<0.000000e+00> : vector<4x4xf32>
    %13 = tpu.matmul %10, %11, %cst_7 {dimension_numbers = #tpu.dot_dimension_numbers<[1], [1], [0], [0], [0, 0, 1, 0], [], []>} : vector<4x16xbf16>, vector<4x16xbf16>, vector<4x4xf32> -> vector<4x4xf32>
    %cst_8 = arith.constant 2.500000e-01 : f32
    %14 = vector.broadcast %cst_8 : f32 to vector<4x4xf32>
    %15 = arith.mulf %13, %14 : vector<4x4xf32>
    %16 = arith.addf %15, %2 : vector<4x4xf32>
    %cst_9 = arith.constant dense<0xFF800000> : vector<4xf32>
    %17 = vector.multi_reduction <maximumf>, %16, %cst_9 [1] : vector<4x4xf32> to vector<4xf32>
    %18 = vector.shape_cast %17 : vector<4xf32> to vector<4x1xf32>
    %19 = vector.broadcast %18 : vector<4x1xf32> to vector<4x4xf32>
    %20 = arith.subf %16, %19 : vector<4x4xf32>
    %21 = math.exp %20 : vector<4x4xf32>
    %cst_10 = arith.constant dense<0.000000e+00> : vector<4xf32>
    %22 = vector.multi_reduction <add>, %21, %cst_10 [1] : vector<4x4xf32> to vector<4xf32>
    %23 = vector.shape_cast %22 : vector<4xf32> to vector<4x1xf32>
    %24 = tpu.reciprocal %23 {approx = true} : vector<4x1xf32> -> vector<4x1xf32>
    %25 = vector.broadcast %24 : vector<4x1xf32> to vector<4x4xf32>
    %26 = arith.mulf %21, %25 : vector<4x4xf32>
    %27 = arith.truncf %26 : vector<4x4xf32> to vector<4x4xbf16>
    %cst_11 = arith.constant dense<0.000000e+00> : vector<4x16xf32>
    %28 = tpu.matmul %27, %12, %cst_11 {dimension_numbers = #tpu.dot_dimension_numbers<[1], [0], [0], [1], [0, 0, 1, 1], [], []>} : vector<4x4xbf16>, vector<4x16xbf16>, vector<4x16xf32> -> vector<4x16xf32>
    %29 = vector.extract_strided_slice %9 {offsets = [0, 16], sizes = [4, 16], strides = [1, 1]} : vector<4x384xbf16> to vector<4x16xbf16>
    %30 = vector.extract_strided_slice %9 {offsets = [0, 144], sizes = [4, 16], strides = [1, 1]} : vector<4x384xbf16> to vector<4x16xbf16>
    %31 = vector.extract_strided_slice %9 {offsets = [0, 272], sizes = [4, 16], strides = [1, 1]} : vector<4x384xbf16> to vector<4x16xbf16>
    %cst_12 = arith.constant dense<0.000000e+00> : vector<4x4xf32>
    %32 = tpu.matmul %29, %30, %cst_12 {dimension_numbers = #tpu.dot_dimension_numbers<[1], [1], [0], [0], [0, 0, 1, 0], [], []>} : vector<4x16xbf16>, vector<4x16xbf16>, vector<4x4xf32> -> vector<4x4xf32>
    %cst_13 = arith.constant 2.500000e-01 : f32
    %33 = vector.broadcast %cst_13 : f32 to vector<4x4xf32>
    %34 = arith.mulf %32, %33 : vector<4x4xf32>
    %35 = arith.addf %34, %2 : vector<4x4xf32>
    %cst_14 = arith.constant dense<0xFF800000> : vector<4xf32>
    %36 = vector.multi_reduction <maximumf>, %35, %cst_14 [1] : vector<4x4xf32> to vector<4xf32>
    %37 = vector.shape_cast %36 : vector<4xf32> to vector<4x1xf32>
    %38 = vector.broadcast %37 : vector<4x1xf32> to vector<4x4xf32>
    %39 = arith.subf %35, %38 : vector<4x4xf32>
    %40 = math.exp %39 : vector<4x4xf32>
    %cst_15 = arith.constant dense<0.000000e+00> : vector<4xf32>
    %41 = vector.multi_reduction <add>, %40, %cst_15 [1] : vector<4x4xf32> to vector<4xf32>
    %42 = vector.shape_cast %41 : vector<4xf32> to vector<4x1xf32>
    %43 = tpu.reciprocal %42 {approx = true} : vector<4x1xf32> -> vector<4x1xf32>
    %44 = vector.broadcast %43 : vector<4x1xf32> to vector<4x4xf32>
    %45 = arith.mulf %40, %44 : vector<4x4xf32>
    %46 = arith.truncf %45 : vector<4x4xf32> to vector<4x4xbf16>
    %cst_16 = arith.constant dense<0.000000e+00> : vector<4x16xf32>
    %47 = tpu.matmul %46, %31, %cst_16 {dimension_numbers = #tpu.dot_dimension_numbers<[1], [0], [0], [1], [0, 0, 1, 1], [], []>} : vector<4x4xbf16>, vector<4x16xbf16>, vector<4x16xf32> -> vector<4x16xf32>
    %48 = vector.extract_strided_slice %9 {offsets = [0, 32], sizes = [4, 16], strides = [1, 1]} : vector<4x384xbf16> to vector<4x16xbf16>
    %49 = vector.extract_strided_slice %9 {offsets = [0, 160], sizes = [4, 16], strides = [1, 1]} : vector<4x384xbf16> to vector<4x16xbf16>
    %50 = vector.extract_strided_slice %9 {offsets = [0, 288], sizes = [4, 16], strides = [1, 1]} : vector<4x384xbf16> to vector<4x16xbf16>
    %cst_17 = arith.constant dense<0.000000e+00> : vector<4x4xf32>
    %51 = tpu.matmul %48, %49, %cst_17 {dimension_numbers = #tpu.dot_dimension_numbers<[1], [1], [0], [0], [0, 0, 1, 0], [], []>} : vector<4x16xbf16>, vector<4x16xbf16>, vector<4x4xf32> -> vector<4x4xf32>
    %cst_18 = arith.constant 2.500000e-01 : f32
    %52 = vector.broadcast %cst_18 : f32 to vector<4x4xf32>
    %53 = arith.mulf %51, %52 : vector<4x4xf32>
    %54 = arith.addf %53, %2 : vector<4x4xf32>
    %cst_19 = arith.constant dense<0xFF800000> : vector<4xf32>
    %55 = vector.multi_reduction <maximumf>, %54, %cst_19 [1] : vector<4x4xf32> to vector<4xf32>
    %56 = vector.shape_cast %55 : vector<4xf32> to vector<4x1xf32>
    %57 = vector.broadcast %56 : vector<4x1xf32> to vector<4x4xf32>
    %58 = arith.subf %54, %57 : vector<4x4xf32>
    %59 = math.exp %58 : vector<4x4xf32>
    %cst_20 = arith.constant dense<0.000000e+00> : vector<4xf32>
    %60 = vector.multi_reduction <add>, %59, %cst_20 [1] : vector<4x4xf32> to vector<4xf32>
    %61 = vector.shape_cast %60 : vector<4xf32> to vector<4x1xf32>
    %62 = tpu.reciprocal %61 {approx = true} : vector<4x1xf32> -> vector<4x1xf32>
    %63 = vector.broadcast %62 : vector<4x1xf32> to vector<4x4xf32>
    %64 = arith.mulf %59, %63 : vector<4x4xf32>
    %65 = arith.truncf %64 : vector<4x4xf32> to vector<4x4xbf16>
    %cst_21 = arith.constant dense<0.000000e+00> : vector<4x16xf32>
    %66 = tpu.matmul %65, %50, %cst_21 {dimension_numbers = #tpu.dot_dimension_numbers<[1], [0], [0], [1], [0, 0, 1, 1], [], []>} : vector<4x4xbf16>, vector<4x16xbf16>, vector<4x16xf32> -> vector<4x16xf32>
    %67 = vector.extract_strided_slice %9 {offsets = [0, 48], sizes = [4, 16], strides = [1, 1]} : vector<4x384xbf16> to vector<4x16xbf16>
    %68 = vector.extract_strided_slice %9 {offsets = [0, 176], sizes = [4, 16], strides = [1, 1]} : vector<4x384xbf16> to vector<4x16xbf16>
    %69 = vector.extract_strided_slice %9 {offsets = [0, 304], sizes = [4, 16], strides = [1, 1]} : vector<4x384xbf16> to vector<4x16xbf16>
    %cst_22 = arith.constant dense<0.000000e+00> : vector<4x4xf32>
    %70 = tpu.matmul %67, %68, %cst_22 {dimension_numbers = #tpu.dot_dimension_numbers<[1], [1], [0], [0], [0, 0, 1, 0], [], []>} : vector<4x16xbf16>, vector<4x16xbf16>, vector<4x4xf32> -> vector<4x4xf32>
    %cst_23 = arith.constant 2.500000e-01 : f32
    %71 = vector.broadcast %cst_23 : f32 to vector<4x4xf32>
    %72 = arith.mulf %70, %71 : vector<4x4xf32>
    %73 = arith.addf %72, %2 : vector<4x4xf32>
    %cst_24 = arith.constant dense<0xFF800000> : vector<4xf32>
    %74 = vector.multi_reduction <maximumf>, %73, %cst_24 [1] : vector<4x4xf32> to vector<4xf32>
    %75 = vector.shape_cast %74 : vector<4xf32> to vector<4x1xf32>
    %76 = vector.broadcast %75 : vector<4x1xf32> to vector<4x4xf32>
    %77 = arith.subf %73, %76 : vector<4x4xf32>
    %78 = math.exp %77 : vector<4x4xf32>
    %cst_25 = arith.constant dense<0.000000e+00> : vector<4xf32>
    %79 = vector.multi_reduction <add>, %78, %cst_25 [1] : vector<4x4xf32> to vector<4xf32>
    %80 = vector.shape_cast %79 : vector<4xf32> to vector<4x1xf32>
    %81 = tpu.reciprocal %80 {approx = true} : vector<4x1xf32> -> vector<4x1xf32>
    %82 = vector.broadcast %81 : vector<4x1xf32> to vector<4x4xf32>
    %83 = arith.mulf %78, %82 : vector<4x4xf32>
    %84 = arith.truncf %83 : vector<4x4xf32> to vector<4x4xbf16>
    %cst_26 = arith.constant dense<0.000000e+00> : vector<4x16xf32>
    %85 = tpu.matmul %84, %69, %cst_26 {dimension_numbers = #tpu.dot_dimension_numbers<[1], [0], [0], [1], [0, 0, 1, 1], [], []>} : vector<4x4xbf16>, vector<4x16xbf16>, vector<4x16xf32> -> vector<4x16xf32>
    %86 = vector.extract_strided_slice %9 {offsets = [0, 64], sizes = [4, 16], strides = [1, 1]} : vector<4x384xbf16> to vector<4x16xbf16>
    %87 = vector.extract_strided_slice %9 {offsets = [0, 192], sizes = [4, 16], strides = [1, 1]} : vector<4x384xbf16> to vector<4x16xbf16>
    %88 = vector.extract_strided_slice %9 {offsets = [0, 320], sizes = [4, 16], strides = [1, 1]} : vector<4x384xbf16> to vector<4x16xbf16>
    %cst_27 = arith.constant dense<0.000000e+00> : vector<4x4xf32>
    %89 = tpu.matmul %86, %87, %cst_27 {dimension_numbers = #tpu.dot_dimension_numbers<[1], [1], [0], [0], [0, 0, 1, 0], [], []>} : vector<4x16xbf16>, vector<4x16xbf16>, vector<4x4xf32> -> vector<4x4xf32>
    %cst_28 = arith.constant 2.500000e-01 : f32
    %90 = vector.broadcast %cst_28 : f32 to vector<4x4xf32>
    %91 = arith.mulf %89, %90 : vector<4x4xf32>
    %92 = arith.addf %91, %2 : vector<4x4xf32>
    %cst_29 = arith.constant dense<0xFF800000> : vector<4xf32>
    %93 = vector.multi_reduction <maximumf>, %92, %cst_29 [1] : vector<4x4xf32> to vector<4xf32>
    %94 = vector.shape_cast %93 : vector<4xf32> to vector<4x1xf32>
    %95 = vector.broadcast %94 : vector<4x1xf32> to vector<4x4xf32>
    %96 = arith.subf %92, %95 : vector<4x4xf32>
    %97 = math.exp %96 : vector<4x4xf32>
    %cst_30 = arith.constant dense<0.000000e+00> : vector<4xf32>
    %98 = vector.multi_reduction <add>, %97, %cst_30 [1] : vector<4x4xf32> to vector<4xf32>
    %99 = vector.shape_cast %98 : vector<4xf32> to vector<4x1xf32>
    %100 = tpu.reciprocal %99 {approx = true} : vector<4x1xf32> -> vector<4x1xf32>
    %101 = vector.broadcast %100 : vector<4x1xf32> to vector<4x4xf32>
    %102 = arith.mulf %97, %101 : vector<4x4xf32>
    %103 = arith.truncf %102 : vector<4x4xf32> to vector<4x4xbf16>
    %cst_31 = arith.constant dense<0.000000e+00> : vector<4x16xf32>
    %104 = tpu.matmul %103, %88, %cst_31 {dimension_numbers = #tpu.dot_dimension_numbers<[1], [0], [0], [1], [0, 0, 1, 1], [], []>} : vector<4x4xbf16>, vector<4x16xbf16>, vector<4x16xf32> -> vector<4x16xf32>
    %105 = vector.extract_strided_slice %9 {offsets = [0, 80], sizes = [4, 16], strides = [1, 1]} : vector<4x384xbf16> to vector<4x16xbf16>
    %106 = vector.extract_strided_slice %9 {offsets = [0, 208], sizes = [4, 16], strides = [1, 1]} : vector<4x384xbf16> to vector<4x16xbf16>
    %107 = vector.extract_strided_slice %9 {offsets = [0, 336], sizes = [4, 16], strides = [1, 1]} : vector<4x384xbf16> to vector<4x16xbf16>
    %cst_32 = arith.constant dense<0.000000e+00> : vector<4x4xf32>
    %108 = tpu.matmul %105, %106, %cst_32 {dimension_numbers = #tpu.dot_dimension_numbers<[1], [1], [0], [0], [0, 0, 1, 0], [], []>} : vector<4x16xbf16>, vector<4x16xbf16>, vector<4x4xf32> -> vector<4x4xf32>
    %cst_33 = arith.constant 2.500000e-01 : f32
    %109 = vector.broadcast %cst_33 : f32 to vector<4x4xf32>
    %110 = arith.mulf %108, %109 : vector<4x4xf32>
    %111 = arith.addf %110, %2 : vector<4x4xf32>
    %cst_34 = arith.constant dense<0xFF800000> : vector<4xf32>
    %112 = vector.multi_reduction <maximumf>, %111, %cst_34 [1] : vector<4x4xf32> to vector<4xf32>
    %113 = vector.shape_cast %112 : vector<4xf32> to vector<4x1xf32>
    %114 = vector.broadcast %113 : vector<4x1xf32> to vector<4x4xf32>
    %115 = arith.subf %111, %114 : vector<4x4xf32>
    %116 = math.exp %115 : vector<4x4xf32>
    %cst_35 = arith.constant dense<0.000000e+00> : vector<4xf32>
    %117 = vector.multi_reduction <add>, %116, %cst_35 [1] : vector<4x4xf32> to vector<4xf32>
    %118 = vector.shape_cast %117 : vector<4xf32> to vector<4x1xf32>
    %119 = tpu.reciprocal %118 {approx = true} : vector<4x1xf32> -> vector<4x1xf32>
    %120 = vector.broadcast %119 : vector<4x1xf32> to vector<4x4xf32>
    %121 = arith.mulf %116, %120 : vector<4x4xf32>
    %122 = arith.truncf %121 : vector<4x4xf32> to vector<4x4xbf16>
    %cst_36 = arith.constant dense<0.000000e+00> : vector<4x16xf32>
    %123 = tpu.matmul %122, %107, %cst_36 {dimension_numbers = #tpu.dot_dimension_numbers<[1], [0], [0], [1], [0, 0, 1, 1], [], []>} : vector<4x4xbf16>, vector<4x16xbf16>, vector<4x16xf32> -> vector<4x16xf32>
    %124 = vector.extract_strided_slice %9 {offsets = [0, 96], sizes = [4, 16], strides = [1, 1]} : vector<4x384xbf16> to vector<4x16xbf16>
    %125 = vector.extract_strided_slice %9 {offsets = [0, 224], sizes = [4, 16], strides = [1, 1]} : vector<4x384xbf16> to vector<4x16xbf16>
    %126 = vector.extract_strided_slice %9 {offsets = [0, 352], sizes = [4, 16], strides = [1, 1]} : vector<4x384xbf16> to vector<4x16xbf16>
    %cst_37 = arith.constant dense<0.000000e+00> : vector<4x4xf32>
    %127 = tpu.matmul %124, %125, %cst_37 {dimension_numbers = #tpu.dot_dimension_numbers<[1], [1], [0], [0], [0, 0, 1, 0], [], []>} : vector<4x16xbf16>, vector<4x16xbf16>, vector<4x4xf32> -> vector<4x4xf32>
    %cst_38 = arith.constant 2.500000e-01 : f32
    %128 = vector.broadcast %cst_38 : f32 to vector<4x4xf32>
    %129 = arith.mulf %127, %128 : vector<4x4xf32>
    %130 = arith.addf %129, %2 : vector<4x4xf32>
    %cst_39 = arith.constant dense<0xFF800000> : vector<4xf32>
    %131 = vector.multi_reduction <maximumf>, %130, %cst_39 [1] : vector<4x4xf32> to vector<4xf32>
    %132 = vector.shape_cast %131 : vector<4xf32> to vector<4x1xf32>
    %133 = vector.broadcast %132 : vector<4x1xf32> to vector<4x4xf32>
    %134 = arith.subf %130, %133 : vector<4x4xf32>
    %135 = math.exp %134 : vector<4x4xf32>
    %cst_40 = arith.constant dense<0.000000e+00> : vector<4xf32>
    %136 = vector.multi_reduction <add>, %135, %cst_40 [1] : vector<4x4xf32> to vector<4xf32>
    %137 = vector.shape_cast %136 : vector<4xf32> to vector<4x1xf32>
    %138 = tpu.reciprocal %137 {approx = true} : vector<4x1xf32> -> vector<4x1xf32>
    %139 = vector.broadcast %138 : vector<4x1xf32> to vector<4x4xf32>
    %140 = arith.mulf %135, %139 : vector<4x4xf32>
    %141 = arith.truncf %140 : vector<4x4xf32> to vector<4x4xbf16>
    %cst_41 = arith.constant dense<0.000000e+00> : vector<4x16xf32>
    %142 = tpu.matmul %141, %126, %cst_41 {dimension_numbers = #tpu.dot_dimension_numbers<[1], [0], [0], [1], [0, 0, 1, 1], [], []>} : vector<4x4xbf16>, vector<4x16xbf16>, vector<4x16xf32> -> vector<4x16xf32>
    %143 = vector.extract_strided_slice %9 {offsets = [0, 112], sizes = [4, 16], strides = [1, 1]} : vector<4x384xbf16> to vector<4x16xbf16>
    %144 = vector.extract_strided_slice %9 {offsets = [0, 240], sizes = [4, 16], strides = [1, 1]} : vector<4x384xbf16> to vector<4x16xbf16>
    %145 = vector.extract_strided_slice %9 {offsets = [0, 368], sizes = [4, 16], strides = [1, 1]} : vector<4x384xbf16> to vector<4x16xbf16>
    %cst_42 = arith.constant dense<0.000000e+00> : vector<4x4xf32>
    %146 = tpu.matmul %143, %144, %cst_42 {dimension_numbers = #tpu.dot_dimension_numbers<[1], [1], [0], [0], [0, 0, 1, 0], [], []>} : vector<4x16xbf16>, vector<4x16xbf16>, vector<4x4xf32> -> vector<4x4xf32>
    %cst_43 = arith.constant 2.500000e-01 : f32
    %147 = vector.broadcast %cst_43 : f32 to vector<4x4xf32>
    %148 = arith.mulf %146, %147 : vector<4x4xf32>
    %149 = arith.addf %148, %2 : vector<4x4xf32>
    %cst_44 = arith.constant dense<0xFF800000> : vector<4xf32>
    %150 = vector.multi_reduction <maximumf>, %149, %cst_44 [1] : vector<4x4xf32> to vector<4xf32>
    %151 = vector.shape_cast %150 : vector<4xf32> to vector<4x1xf32>
    %152 = vector.broadcast %151 : vector<4x1xf32> to vector<4x4xf32>
    %153 = arith.subf %149, %152 : vector<4x4xf32>
    %154 = math.exp %153 : vector<4x4xf32>
    %cst_45 = arith.constant dense<0.000000e+00> : vector<4xf32>
    %155 = vector.multi_reduction <add>, %154, %cst_45 [1] : vector<4x4xf32> to vector<4xf32>
    %156 = vector.shape_cast %155 : vector<4xf32> to vector<4x1xf32>
    %157 = tpu.reciprocal %156 {approx = true} : vector<4x1xf32> -> vector<4x1xf32>
    %158 = vector.broadcast %157 : vector<4x1xf32> to vector<4x4xf32>
    %159 = arith.mulf %154, %158 : vector<4x4xf32>
    %160 = arith.truncf %159 : vector<4x4xf32> to vector<4x4xbf16>
    %cst_46 = arith.constant dense<0.000000e+00> : vector<4x16xf32>
    %161 = tpu.matmul %160, %145, %cst_46 {dimension_numbers = #tpu.dot_dimension_numbers<[1], [0], [0], [1], [0, 0, 1, 1], [], []>} : vector<4x4xbf16>, vector<4x16xbf16>, vector<4x16xf32> -> vector<4x16xf32>
    %162 = tpu.concatenate %28, %47, %66, %85, %104, %123, %142, %161 in 1 : vector<4x16xf32>, vector<4x16xf32>, vector<4x16xf32>, vector<4x16xf32>, vector<4x16xf32>, vector<4x16xf32>, vector<4x16xf32>, vector<4x16xf32> -> vector<4x128xf32>
    %163 = arith.truncf %162 : vector<4x128xf32> to vector<4x128xbf16>
    %c0_47 = arith.constant 0 : index
    %c0_48 = arith.constant 0 : index
    %164 = vector.load %arg9[%c0_47, %c0_48] : memref<128x128xbf16, #tpu.memory_space<vmem>>, vector<128x128xbf16>
    %cst_49 = arith.constant dense<0.000000e+00> : vector<4x128xf32>
    %165 = tpu.matmul %163, %164, %cst_49 {dimension_numbers = #tpu.dot_dimension_numbers<[1], [0], [0], [1], [0, 0, 1, 1], [], []>} : vector<4x128xbf16>, vector<128x128xbf16>, vector<4x128xf32> -> vector<4x128xf32>
    %c0_50 = arith.constant 0 : index
    %c0_51 = arith.constant 0 : index
    %166 = vector.load %arg10[%c0_50, %c0_51] : memref<1x128xf32, #tpu.memory_space<vmem>>, vector<1x128xf32>
    %167 = vector.broadcast %166 : vector<1x128xf32> to vector<4x128xf32>
    %168 = arith.addf %165, %167 : vector<4x128xf32>
    %169 = arith.addf %1, %168 : vector<4x128xf32>
    %c0_52 = arith.constant 0 : index
    %c0_53 = arith.constant 0 : index
    %170 = vector.load %arg15[%c0_52, %c0_53] : memref<1x128xf32, #tpu.memory_space<vmem>>, vector<1x128xf32>
    %c0_54 = arith.constant 0 : index
    %c0_55 = arith.constant 0 : index
    %171 = vector.load %arg16[%c0_54, %c0_55] : memref<1x128xf32, #tpu.memory_space<vmem>>, vector<1x128xf32>
    %cst_56 = arith.constant dense<0.000000e+00> : vector<4xf32>
    %172 = vector.multi_reduction <add>, %169, %cst_56 [1] : vector<4x128xf32> to vector<4xf32>
    %173 = vector.shape_cast %172 : vector<4xf32> to vector<4x1xf32>
    %cst_57 = arith.constant 1.280000e+02 : f32
    %174 = vector.broadcast %cst_57 : f32 to vector<4x1xf32>
    %175 = arith.divf %173, %174 : vector<4x1xf32>
    %176 = vector.broadcast %175 : vector<4x1xf32> to vector<4x128xf32>
    %177 = arith.subf %169, %176 : vector<4x128xf32>
    %178 = arith.mulf %177, %177 : vector<4x128xf32>
    %cst_58 = arith.constant dense<0.000000e+00> : vector<4xf32>
    %179 = vector.multi_reduction <add>, %178, %cst_58 [1] : vector<4x128xf32> to vector<4xf32>
    %180 = vector.shape_cast %179 : vector<4xf32> to vector<4x1xf32>
    %cst_59 = arith.constant 1.280000e+02 : f32
    %181 = vector.broadcast %cst_59 : f32 to vector<4x1xf32>
    %182 = arith.divf %180, %181 : vector<4x1xf32>
    %183 = vector.broadcast %175 : vector<4x1xf32> to vector<4x128xf32>
    %184 = arith.subf %169, %183 : vector<4x128xf32>
    %cst_60 = arith.constant 9.99999974E-6 : f32
    %185 = vector.broadcast %cst_60 : f32 to vector<4x1xf32>
    %186 = arith.addf %182, %185 : vector<4x1xf32>
    %187 = math.rsqrt %186 : vector<4x1xf32>
    %188 = vector.broadcast %187 : vector<4x1xf32> to vector<4x128xf32>
    %189 = arith.mulf %184, %188 : vector<4x128xf32>
    %190 = vector.broadcast %170 : vector<1x128xf32> to vector<4x128xf32>
    %191 = arith.mulf %189, %190 : vector<4x128xf32>
    %192 = vector.broadcast %171 : vector<1x128xf32> to vector<4x128xf32>
    %193 = arith.addf %191, %192 : vector<4x128xf32>
    %194 = arith.truncf %193 : vector<4x128xf32> to vector<4x128xbf16>
    %c0_61 = arith.constant 0 : index
    %c0_62 = arith.constant 0 : index
    %195 = vector.load %arg11[%c0_61, %c0_62] : memref<128x512xbf16, #tpu.memory_space<vmem>>, vector<128x512xbf16>
    %cst_63 = arith.constant dense<0.000000e+00> : vector<4x512xf32>
    %196 = tpu.matmul %194, %195, %cst_63 {dimension_numbers = #tpu.dot_dimension_numbers<[1], [0], [0], [1], [0, 0, 1, 1], [], []>} : vector<4x128xbf16>, vector<128x512xbf16>, vector<4x512xf32> -> vector<4x512xf32>
    %c0_64 = arith.constant 0 : index
    %c0_65 = arith.constant 0 : index
    %197 = vector.load %arg12[%c0_64, %c0_65] : memref<1x512xf32, #tpu.memory_space<vmem>>, vector<1x512xf32>
    %198 = vector.broadcast %197 : vector<1x512xf32> to vector<4x512xf32>
    %199 = arith.addf %196, %198 : vector<4x512xf32>
    %cst_66 = arith.constant 0.000000e+00 : f32
    %200 = vector.broadcast %cst_66 : f32 to vector<4x512xf32>
    %201 = arith.maximumf %199, %200 : vector<4x512xf32>
    %202 = arith.truncf %201 : vector<4x512xf32> to vector<4x512xbf16>
    %c0_67 = arith.constant 0 : index
    %c0_68 = arith.constant 0 : index
    %203 = vector.load %arg13[%c0_67, %c0_68] : memref<512x128xbf16, #tpu.memory_space<vmem>>, vector<512x128xbf16>
    %cst_69 = arith.constant dense<0.000000e+00> : vector<4x128xf32>
    %204 = tpu.matmul %202, %203, %cst_69 {dimension_numbers = #tpu.dot_dimension_numbers<[1], [0], [0], [1], [0, 0, 1, 1], [], []>} : vector<4x512xbf16>, vector<512x128xbf16>, vector<4x128xf32> -> vector<4x128xf32>
    %c0_70 = arith.constant 0 : index
    %c0_71 = arith.constant 0 : index
    %205 = vector.load %arg14[%c0_70, %c0_71] : memref<1x128xf32, #tpu.memory_space<vmem>>, vector<1x128xf32>
    %206 = vector.broadcast %205 : vector<1x128xf32> to vector<4x128xf32>
    %207 = arith.addf %204, %206 : vector<4x128xf32>
    %208 = arith.addf %193, %207 : vector<4x128xf32>
    %c0_72 = arith.constant 0 : index
    %c0_73 = arith.constant 0 : index
    %209 = vector.load %arg17[%c0_72, %c0_73] : memref<1x128xf32, #tpu.memory_space<vmem>>, vector<1x128xf32>
    %c0_74 = arith.constant 0 : index
    %c0_75 = arith.constant 0 : index
    %210 = vector.load %arg18[%c0_74, %c0_75] : memref<1x128xf32, #tpu.memory_space<vmem>>, vector<1x128xf32>
    %cst_76 = arith.constant dense<0.000000e+00> : vector<4xf32>
    %211 = vector.multi_reduction <add>, %208, %cst_76 [1] : vector<4x128xf32> to vector<4xf32>
    %212 = vector.shape_cast %211 : vector<4xf32> to vector<4x1xf32>
    %cst_77 = arith.constant 1.280000e+02 : f32
    %213 = vector.broadcast %cst_77 : f32 to vector<4x1xf32>
    %214 = arith.divf %212, %213 : vector<4x1xf32>
    %215 = vector.broadcast %214 : vector<4x1xf32> to vector<4x128xf32>
    %216 = arith.subf %208, %215 : vector<4x128xf32>
    %217 = arith.mulf %216, %216 : vector<4x128xf32>
    %cst_78 = arith.constant dense<0.000000e+00> : vector<4xf32>
    %218 = vector.multi_reduction <add>, %217, %cst_78 [1] : vector<4x128xf32> to vector<4xf32>
    %219 = vector.shape_cast %218 : vector<4xf32> to vector<4x1xf32>
    %cst_79 = arith.constant 1.280000e+02 : f32
    %220 = vector.broadcast %cst_79 : f32 to vector<4x1xf32>
    %221 = arith.divf %219, %220 : vector<4x1xf32>
    %222 = vector.broadcast %214 : vector<4x1xf32> to vector<4x128xf32>
    %223 = arith.subf %208, %222 : vector<4x128xf32>
    %cst_80 = arith.constant 9.99999974E-6 : f32
    %224 = vector.broadcast %cst_80 : f32 to vector<4x1xf32>
    %225 = arith.addf %221, %224 : vector<4x1xf32>
    %226 = math.rsqrt %225 : vector<4x1xf32>
    %227 = vector.broadcast %226 : vector<4x1xf32> to vector<4x128xf32>
    %228 = arith.mulf %223, %227 : vector<4x128xf32>
    %229 = vector.broadcast %209 : vector<1x128xf32> to vector<4x128xf32>
    %230 = arith.mulf %228, %229 : vector<4x128xf32>
    %231 = vector.broadcast %210 : vector<1x128xf32> to vector<4x128xf32>
    %232 = arith.addf %230, %231 : vector<4x128xf32>
    %c0_81 = arith.constant 0 : index
    %c0_82 = arith.constant 0 : index
    %233 = vector.load %arg3[%c0_81, %c0_82] : memref<1x128xf32, #tpu.memory_space<vmem>>, vector<1x128xf32>
    %c0_83 = arith.constant 0 : index
    %c0_84 = arith.constant 0 : index
    %234 = vector.load %arg4[%c0_83, %c0_84] : memref<1x128xf32, #tpu.memory_space<vmem>>, vector<1x128xf32>
    %cst_85 = arith.constant dense<0.000000e+00> : vector<4xf32>
    %235 = vector.multi_reduction <add>, %232, %cst_85 [1] : vector<4x128xf32> to vector<4xf32>
    %236 = vector.shape_cast %235 : vector<4xf32> to vector<4x1xf32>
    %cst_86 = arith.constant 1.280000e+02 : f32
    %237 = vector.broadcast %cst_86 : f32 to vector<4x1xf32>
    %238 = arith.divf %236, %237 : vector<4x1xf32>
    %239 = vector.broadcast %238 : vector<4x1xf32> to vector<4x128xf32>
    %240 = arith.subf %232, %239 : vector<4x128xf32>
    %241 = arith.mulf %240, %240 : vector<4x128xf32>
    %cst_87 = arith.constant dense<0.000000e+00> : vector<4xf32>
    %242 = vector.multi_reduction <add>, %241, %cst_87 [1] : vector<4x128xf32> to vector<4xf32>
    %243 = vector.shape_cast %242 : vector<4xf32> to vector<4x1xf32>
    %cst_88 = arith.constant 1.280000e+02 : f32
    %244 = vector.broadcast %cst_88 : f32 to vector<4x1xf32>
    %245 = arith.divf %243, %244 : vector<4x1xf32>
    %246 = vector.broadcast %238 : vector<4x1xf32> to vector<4x128xf32>
    %247 = arith.subf %232, %246 : vector<4x128xf32>
    %cst_89 = arith.constant 9.99999974E-6 : f32
    %248 = vector.broadcast %cst_89 : f32 to vector<4x1xf32>
    %249 = arith.addf %245, %248 : vector<4x1xf32>
    %250 = math.rsqrt %249 : vector<4x1xf32>
    %251 = vector.broadcast %250 : vector<4x1xf32> to vector<4x128xf32>
    %252 = arith.mulf %247, %251 : vector<4x128xf32>
    %253 = vector.broadcast %233 : vector<1x128xf32> to vector<4x128xf32>
    %254 = arith.mulf %252, %253 : vector<4x128xf32>
    %255 = vector.broadcast %234 : vector<1x128xf32> to vector<4x128xf32>
    %256 = arith.addf %254, %255 : vector<4x128xf32>
    %cst_90 = arith.constant 0.000000e+00 : f32
    %257 = vector.broadcast %cst_90 : f32 to vector<4x128xf32>
    %258 = arith.maximumf %256, %257 : vector<4x128xf32>
    %259 = arith.truncf %258 : vector<4x128xf32> to vector<4x128xbf16>
    %c0_91 = arith.constant 0 : index
    %c0_92 = arith.constant 0 : index
    %260 = vector.load %arg5[%c0_91, %c0_92] : memref<128x128xbf16, #tpu.memory_space<vmem>>, vector<128x128xbf16>
    %cst_93 = arith.constant dense<0.000000e+00> : vector<4x128xf32>
    %261 = tpu.matmul %259, %260, %cst_93 {dimension_numbers = #tpu.dot_dimension_numbers<[1], [0], [0], [1], [0, 0, 1, 1], [], []>} : vector<4x128xbf16>, vector<128x128xbf16>, vector<4x128xf32> -> vector<4x128xf32>
    %c0_94 = arith.constant 0 : index
    %c0_95 = arith.constant 0 : index
    %262 = vector.load %arg6[%c0_94, %c0_95] : memref<1x128xf32, #tpu.memory_space<vmem>>, vector<1x128xf32>
    %263 = vector.broadcast %262 : vector<1x128xf32> to vector<4x128xf32>
    %264 = arith.addf %261, %263 : vector<4x128xf32>
    %265 = arith.truncf %264 : vector<4x128xf32> to vector<4x128xbf16>
    %c0_96 = arith.constant 0 : index
    %c0_97 = arith.constant 0 : index
    %266 = vector.load %arg19[%c0_96, %c0_97] : memref<4x128xbf16, #tpu.memory_space<vmem>>, vector<4x128xbf16>
    tpu.vector_store %arg19[%c0_96, %c0_97], %265 {strides = array<i32>} : memref<4x128xbf16, #tpu.memory_space<vmem>>, vector<4x128xbf16>,
    return
  }
}

module attributes {stable_mosaic.version = 11 : i64} {
  func.func @_neck_up_kernel(%arg0: memref<8x64xbf16, #tpu.memory_space<vmem>>, %arg1: memref<8x64xbf16, #tpu.memory_space<vmem>>, %arg2: memref<8x8xf32, #tpu.memory_space<vmem>>, %arg3: memref<1x64xf32, #tpu.memory_space<vmem>>, %arg4: memref<1x64xf32, #tpu.memory_space<vmem>>, %arg5: memref<64x64xbf16, #tpu.memory_space<vmem>>, %arg6: memref<1x64xf32, #tpu.memory_space<vmem>>, %arg7: memref<64x192xbf16, #tpu.memory_space<vmem>>, %arg8: memref<1x192xf32, #tpu.memory_space<vmem>>, %arg9: memref<64x64xbf16, #tpu.memory_space<vmem>>, %arg10: memref<1x64xf32, #tpu.memory_space<vmem>>, %arg11: memref<64x256xbf16, #tpu.memory_space<vmem>>, %arg12: memref<1x256xf32, #tpu.memory_space<vmem>>, %arg13: memref<256x64xbf16, #tpu.memory_space<vmem>>, %arg14: memref<1x64xf32, #tpu.memory_space<vmem>>, %arg15: memref<1x64xf32, #tpu.memory_space<vmem>>, %arg16: memref<1x64xf32, #tpu.memory_space<vmem>>, %arg17: memref<1x64xf32, #tpu.memory_space<vmem>>, %arg18: memref<1x64xf32, #tpu.memory_space<vmem>>, %arg19: memref<8x64xbf16, #tpu.memory_space<vmem>>) attributes {dimension_semantics = [], scalar_prefetch = 0 : i64, scratch_operands = 0 : i64, tpu.core_type = #tpu.core_type<tc>} {
    %c0 = arith.constant 0 : index
    %c0_0 = arith.constant 0 : index
    %0 = vector.load %arg0[%c0, %c0_0] : memref<8x64xbf16, #tpu.memory_space<vmem>>, vector<8x64xbf16>
    %1 = arith.extf %0 : vector<8x64xbf16> to vector<8x64xf32>
    %c0_1 = arith.constant 0 : index
    %c0_2 = arith.constant 0 : index
    %2 = vector.load %arg1[%c0_1, %c0_2] : memref<8x64xbf16, #tpu.memory_space<vmem>>, vector<8x64xbf16>
    %3 = arith.extf %2 : vector<8x64xbf16> to vector<8x64xf32>
    %4 = arith.addf %1, %3 : vector<8x64xf32>
    %c0_3 = arith.constant 0 : index
    %c0_4 = arith.constant 0 : index
    %5 = vector.load %arg2[%c0_3, %c0_4] : memref<8x8xf32, #tpu.memory_space<vmem>>, vector<8x8xf32>
    %6 = arith.truncf %4 : vector<8x64xf32> to vector<8x64xbf16>
    %c0_5 = arith.constant 0 : index
    %c0_6 = arith.constant 0 : index
    %7 = vector.load %arg7[%c0_5, %c0_6] : memref<64x192xbf16, #tpu.memory_space<vmem>>, vector<64x192xbf16>
    %cst = arith.constant dense<0.000000e+00> : vector<8x192xf32>
    %8 = tpu.matmul %6, %7, %cst {dimension_numbers = #tpu.dot_dimension_numbers<[1], [0], [0], [1], [0, 0, 1, 1], [], []>} : vector<8x64xbf16>, vector<64x192xbf16>, vector<8x192xf32> -> vector<8x192xf32>
    %c0_7 = arith.constant 0 : index
    %c0_8 = arith.constant 0 : index
    %9 = vector.load %arg8[%c0_7, %c0_8] : memref<1x192xf32, #tpu.memory_space<vmem>>, vector<1x192xf32>
    %10 = vector.broadcast %9 : vector<1x192xf32> to vector<8x192xf32>
    %11 = arith.addf %8, %10 : vector<8x192xf32>
    %12 = arith.truncf %11 : vector<8x192xf32> to vector<8x192xbf16>
    %13 = vector.extract_strided_slice %12 {offsets = [0, 0], sizes = [8, 16], strides = [1, 1]} : vector<8x192xbf16> to vector<8x16xbf16>
    %14 = vector.extract_strided_slice %12 {offsets = [0, 64], sizes = [8, 16], strides = [1, 1]} : vector<8x192xbf16> to vector<8x16xbf16>
    %15 = vector.extract_strided_slice %12 {offsets = [0, 128], sizes = [8, 16], strides = [1, 1]} : vector<8x192xbf16> to vector<8x16xbf16>
    %cst_9 = arith.constant dense<0.000000e+00> : vector<8x8xf32>
    %16 = tpu.matmul %13, %14, %cst_9 {dimension_numbers = #tpu.dot_dimension_numbers<[1], [1], [0], [0], [0, 0, 1, 0], [], []>} : vector<8x16xbf16>, vector<8x16xbf16>, vector<8x8xf32> -> vector<8x8xf32>
    %cst_10 = arith.constant 2.500000e-01 : f32
    %17 = vector.broadcast %cst_10 : f32 to vector<8x8xf32>
    %18 = arith.mulf %16, %17 : vector<8x8xf32>
    %19 = arith.addf %18, %5 : vector<8x8xf32>
    %cst_11 = arith.constant dense<0xFF800000> : vector<8xf32>
    %20 = vector.multi_reduction <maximumf>, %19, %cst_11 [1] : vector<8x8xf32> to vector<8xf32>
    %21 = vector.shape_cast %20 : vector<8xf32> to vector<8x1xf32>
    %22 = vector.broadcast %21 : vector<8x1xf32> to vector<8x8xf32>
    %23 = arith.subf %19, %22 : vector<8x8xf32>
    %24 = math.exp %23 : vector<8x8xf32>
    %cst_12 = arith.constant dense<0.000000e+00> : vector<8xf32>
    %25 = vector.multi_reduction <add>, %24, %cst_12 [1] : vector<8x8xf32> to vector<8xf32>
    %26 = vector.shape_cast %25 : vector<8xf32> to vector<8x1xf32>
    %27 = tpu.reciprocal %26 {approx = true} : vector<8x1xf32> -> vector<8x1xf32>
    %28 = vector.broadcast %27 : vector<8x1xf32> to vector<8x8xf32>
    %29 = arith.mulf %24, %28 : vector<8x8xf32>
    %30 = arith.truncf %29 : vector<8x8xf32> to vector<8x8xbf16>
    %cst_13 = arith.constant dense<0.000000e+00> : vector<8x16xf32>
    %31 = tpu.matmul %30, %15, %cst_13 {dimension_numbers = #tpu.dot_dimension_numbers<[1], [0], [0], [1], [0, 0, 1, 1], [], []>} : vector<8x8xbf16>, vector<8x16xbf16>, vector<8x16xf32> -> vector<8x16xf32>
    %32 = vector.extract_strided_slice %12 {offsets = [0, 16], sizes = [8, 16], strides = [1, 1]} : vector<8x192xbf16> to vector<8x16xbf16>
    %33 = vector.extract_strided_slice %12 {offsets = [0, 80], sizes = [8, 16], strides = [1, 1]} : vector<8x192xbf16> to vector<8x16xbf16>
    %34 = vector.extract_strided_slice %12 {offsets = [0, 144], sizes = [8, 16], strides = [1, 1]} : vector<8x192xbf16> to vector<8x16xbf16>
    %cst_14 = arith.constant dense<0.000000e+00> : vector<8x8xf32>
    %35 = tpu.matmul %32, %33, %cst_14 {dimension_numbers = #tpu.dot_dimension_numbers<[1], [1], [0], [0], [0, 0, 1, 0], [], []>} : vector<8x16xbf16>, vector<8x16xbf16>, vector<8x8xf32> -> vector<8x8xf32>
    %cst_15 = arith.constant 2.500000e-01 : f32
    %36 = vector.broadcast %cst_15 : f32 to vector<8x8xf32>
    %37 = arith.mulf %35, %36 : vector<8x8xf32>
    %38 = arith.addf %37, %5 : vector<8x8xf32>
    %cst_16 = arith.constant dense<0xFF800000> : vector<8xf32>
    %39 = vector.multi_reduction <maximumf>, %38, %cst_16 [1] : vector<8x8xf32> to vector<8xf32>
    %40 = vector.shape_cast %39 : vector<8xf32> to vector<8x1xf32>
    %41 = vector.broadcast %40 : vector<8x1xf32> to vector<8x8xf32>
    %42 = arith.subf %38, %41 : vector<8x8xf32>
    %43 = math.exp %42 : vector<8x8xf32>
    %cst_17 = arith.constant dense<0.000000e+00> : vector<8xf32>
    %44 = vector.multi_reduction <add>, %43, %cst_17 [1] : vector<8x8xf32> to vector<8xf32>
    %45 = vector.shape_cast %44 : vector<8xf32> to vector<8x1xf32>
    %46 = tpu.reciprocal %45 {approx = true} : vector<8x1xf32> -> vector<8x1xf32>
    %47 = vector.broadcast %46 : vector<8x1xf32> to vector<8x8xf32>
    %48 = arith.mulf %43, %47 : vector<8x8xf32>
    %49 = arith.truncf %48 : vector<8x8xf32> to vector<8x8xbf16>
    %cst_18 = arith.constant dense<0.000000e+00> : vector<8x16xf32>
    %50 = tpu.matmul %49, %34, %cst_18 {dimension_numbers = #tpu.dot_dimension_numbers<[1], [0], [0], [1], [0, 0, 1, 1], [], []>} : vector<8x8xbf16>, vector<8x16xbf16>, vector<8x16xf32> -> vector<8x16xf32>
    %51 = vector.extract_strided_slice %12 {offsets = [0, 32], sizes = [8, 16], strides = [1, 1]} : vector<8x192xbf16> to vector<8x16xbf16>
    %52 = vector.extract_strided_slice %12 {offsets = [0, 96], sizes = [8, 16], strides = [1, 1]} : vector<8x192xbf16> to vector<8x16xbf16>
    %53 = vector.extract_strided_slice %12 {offsets = [0, 160], sizes = [8, 16], strides = [1, 1]} : vector<8x192xbf16> to vector<8x16xbf16>
    %cst_19 = arith.constant dense<0.000000e+00> : vector<8x8xf32>
    %54 = tpu.matmul %51, %52, %cst_19 {dimension_numbers = #tpu.dot_dimension_numbers<[1], [1], [0], [0], [0, 0, 1, 0], [], []>} : vector<8x16xbf16>, vector<8x16xbf16>, vector<8x8xf32> -> vector<8x8xf32>
    %cst_20 = arith.constant 2.500000e-01 : f32
    %55 = vector.broadcast %cst_20 : f32 to vector<8x8xf32>
    %56 = arith.mulf %54, %55 : vector<8x8xf32>
    %57 = arith.addf %56, %5 : vector<8x8xf32>
    %cst_21 = arith.constant dense<0xFF800000> : vector<8xf32>
    %58 = vector.multi_reduction <maximumf>, %57, %cst_21 [1] : vector<8x8xf32> to vector<8xf32>
    %59 = vector.shape_cast %58 : vector<8xf32> to vector<8x1xf32>
    %60 = vector.broadcast %59 : vector<8x1xf32> to vector<8x8xf32>
    %61 = arith.subf %57, %60 : vector<8x8xf32>
    %62 = math.exp %61 : vector<8x8xf32>
    %cst_22 = arith.constant dense<0.000000e+00> : vector<8xf32>
    %63 = vector.multi_reduction <add>, %62, %cst_22 [1] : vector<8x8xf32> to vector<8xf32>
    %64 = vector.shape_cast %63 : vector<8xf32> to vector<8x1xf32>
    %65 = tpu.reciprocal %64 {approx = true} : vector<8x1xf32> -> vector<8x1xf32>
    %66 = vector.broadcast %65 : vector<8x1xf32> to vector<8x8xf32>
    %67 = arith.mulf %62, %66 : vector<8x8xf32>
    %68 = arith.truncf %67 : vector<8x8xf32> to vector<8x8xbf16>
    %cst_23 = arith.constant dense<0.000000e+00> : vector<8x16xf32>
    %69 = tpu.matmul %68, %53, %cst_23 {dimension_numbers = #tpu.dot_dimension_numbers<[1], [0], [0], [1], [0, 0, 1, 1], [], []>} : vector<8x8xbf16>, vector<8x16xbf16>, vector<8x16xf32> -> vector<8x16xf32>
    %70 = vector.extract_strided_slice %12 {offsets = [0, 48], sizes = [8, 16], strides = [1, 1]} : vector<8x192xbf16> to vector<8x16xbf16>
    %71 = vector.extract_strided_slice %12 {offsets = [0, 112], sizes = [8, 16], strides = [1, 1]} : vector<8x192xbf16> to vector<8x16xbf16>
    %72 = vector.extract_strided_slice %12 {offsets = [0, 176], sizes = [8, 16], strides = [1, 1]} : vector<8x192xbf16> to vector<8x16xbf16>
    %cst_24 = arith.constant dense<0.000000e+00> : vector<8x8xf32>
    %73 = tpu.matmul %70, %71, %cst_24 {dimension_numbers = #tpu.dot_dimension_numbers<[1], [1], [0], [0], [0, 0, 1, 0], [], []>} : vector<8x16xbf16>, vector<8x16xbf16>, vector<8x8xf32> -> vector<8x8xf32>
    %cst_25 = arith.constant 2.500000e-01 : f32
    %74 = vector.broadcast %cst_25 : f32 to vector<8x8xf32>
    %75 = arith.mulf %73, %74 : vector<8x8xf32>
    %76 = arith.addf %75, %5 : vector<8x8xf32>
    %cst_26 = arith.constant dense<0xFF800000> : vector<8xf32>
    %77 = vector.multi_reduction <maximumf>, %76, %cst_26 [1] : vector<8x8xf32> to vector<8xf32>
    %78 = vector.shape_cast %77 : vector<8xf32> to vector<8x1xf32>
    %79 = vector.broadcast %78 : vector<8x1xf32> to vector<8x8xf32>
    %80 = arith.subf %76, %79 : vector<8x8xf32>
    %81 = math.exp %80 : vector<8x8xf32>
    %cst_27 = arith.constant dense<0.000000e+00> : vector<8xf32>
    %82 = vector.multi_reduction <add>, %81, %cst_27 [1] : vector<8x8xf32> to vector<8xf32>
    %83 = vector.shape_cast %82 : vector<8xf32> to vector<8x1xf32>
    %84 = tpu.reciprocal %83 {approx = true} : vector<8x1xf32> -> vector<8x1xf32>
    %85 = vector.broadcast %84 : vector<8x1xf32> to vector<8x8xf32>
    %86 = arith.mulf %81, %85 : vector<8x8xf32>
    %87 = arith.truncf %86 : vector<8x8xf32> to vector<8x8xbf16>
    %cst_28 = arith.constant dense<0.000000e+00> : vector<8x16xf32>
    %88 = tpu.matmul %87, %72, %cst_28 {dimension_numbers = #tpu.dot_dimension_numbers<[1], [0], [0], [1], [0, 0, 1, 1], [], []>} : vector<8x8xbf16>, vector<8x16xbf16>, vector<8x16xf32> -> vector<8x16xf32>
    %89 = tpu.concatenate %31, %50, %69, %88 in 1 : vector<8x16xf32>, vector<8x16xf32>, vector<8x16xf32>, vector<8x16xf32> -> vector<8x64xf32>
    %90 = arith.truncf %89 : vector<8x64xf32> to vector<8x64xbf16>
    %c0_29 = arith.constant 0 : index
    %c0_30 = arith.constant 0 : index
    %91 = vector.load %arg9[%c0_29, %c0_30] : memref<64x64xbf16, #tpu.memory_space<vmem>>, vector<64x64xbf16>
    %cst_31 = arith.constant dense<0.000000e+00> : vector<8x64xf32>
    %92 = tpu.matmul %90, %91, %cst_31 {dimension_numbers = #tpu.dot_dimension_numbers<[1], [0], [0], [1], [0, 0, 1, 1], [], []>} : vector<8x64xbf16>, vector<64x64xbf16>, vector<8x64xf32> -> vector<8x64xf32>
    %c0_32 = arith.constant 0 : index
    %c0_33 = arith.constant 0 : index
    %93 = vector.load %arg10[%c0_32, %c0_33] : memref<1x64xf32, #tpu.memory_space<vmem>>, vector<1x64xf32>
    %94 = vector.broadcast %93 : vector<1x64xf32> to vector<8x64xf32>
    %95 = arith.addf %92, %94 : vector<8x64xf32>
    %96 = arith.addf %4, %95 : vector<8x64xf32>
    %c0_34 = arith.constant 0 : index
    %c0_35 = arith.constant 0 : index
    %97 = vector.load %arg15[%c0_34, %c0_35] : memref<1x64xf32, #tpu.memory_space<vmem>>, vector<1x64xf32>
    %c0_36 = arith.constant 0 : index
    %c0_37 = arith.constant 0 : index
    %98 = vector.load %arg16[%c0_36, %c0_37] : memref<1x64xf32, #tpu.memory_space<vmem>>, vector<1x64xf32>
    %cst_38 = arith.constant dense<0.000000e+00> : vector<8xf32>
    %99 = vector.multi_reduction <add>, %96, %cst_38 [1] : vector<8x64xf32> to vector<8xf32>
    %100 = vector.shape_cast %99 : vector<8xf32> to vector<8x1xf32>
    %cst_39 = arith.constant 6.400000e+01 : f32
    %101 = vector.broadcast %cst_39 : f32 to vector<8x1xf32>
    %102 = arith.divf %100, %101 : vector<8x1xf32>
    %103 = vector.broadcast %102 : vector<8x1xf32> to vector<8x64xf32>
    %104 = arith.subf %96, %103 : vector<8x64xf32>
    %105 = arith.mulf %104, %104 : vector<8x64xf32>
    %cst_40 = arith.constant dense<0.000000e+00> : vector<8xf32>
    %106 = vector.multi_reduction <add>, %105, %cst_40 [1] : vector<8x64xf32> to vector<8xf32>
    %107 = vector.shape_cast %106 : vector<8xf32> to vector<8x1xf32>
    %cst_41 = arith.constant 6.400000e+01 : f32
    %108 = vector.broadcast %cst_41 : f32 to vector<8x1xf32>
    %109 = arith.divf %107, %108 : vector<8x1xf32>
    %110 = vector.broadcast %102 : vector<8x1xf32> to vector<8x64xf32>
    %111 = arith.subf %96, %110 : vector<8x64xf32>
    %cst_42 = arith.constant 9.99999974E-6 : f32
    %112 = vector.broadcast %cst_42 : f32 to vector<8x1xf32>
    %113 = arith.addf %109, %112 : vector<8x1xf32>
    %114 = math.rsqrt %113 : vector<8x1xf32>
    %115 = vector.broadcast %114 : vector<8x1xf32> to vector<8x64xf32>
    %116 = arith.mulf %111, %115 : vector<8x64xf32>
    %117 = vector.broadcast %97 : vector<1x64xf32> to vector<8x64xf32>
    %118 = arith.mulf %116, %117 : vector<8x64xf32>
    %119 = vector.broadcast %98 : vector<1x64xf32> to vector<8x64xf32>
    %120 = arith.addf %118, %119 : vector<8x64xf32>
    %121 = arith.truncf %120 : vector<8x64xf32> to vector<8x64xbf16>
    %c0_43 = arith.constant 0 : index
    %c0_44 = arith.constant 0 : index
    %122 = vector.load %arg11[%c0_43, %c0_44] : memref<64x256xbf16, #tpu.memory_space<vmem>>, vector<64x256xbf16>
    %cst_45 = arith.constant dense<0.000000e+00> : vector<8x256xf32>
    %123 = tpu.matmul %121, %122, %cst_45 {dimension_numbers = #tpu.dot_dimension_numbers<[1], [0], [0], [1], [0, 0, 1, 1], [], []>} : vector<8x64xbf16>, vector<64x256xbf16>, vector<8x256xf32> -> vector<8x256xf32>
    %c0_46 = arith.constant 0 : index
    %c0_47 = arith.constant 0 : index
    %124 = vector.load %arg12[%c0_46, %c0_47] : memref<1x256xf32, #tpu.memory_space<vmem>>, vector<1x256xf32>
    %125 = vector.broadcast %124 : vector<1x256xf32> to vector<8x256xf32>
    %126 = arith.addf %123, %125 : vector<8x256xf32>
    %cst_48 = arith.constant 0.000000e+00 : f32
    %127 = vector.broadcast %cst_48 : f32 to vector<8x256xf32>
    %128 = arith.maximumf %126, %127 : vector<8x256xf32>
    %129 = arith.truncf %128 : vector<8x256xf32> to vector<8x256xbf16>
    %c0_49 = arith.constant 0 : index
    %c0_50 = arith.constant 0 : index
    %130 = vector.load %arg13[%c0_49, %c0_50] : memref<256x64xbf16, #tpu.memory_space<vmem>>, vector<256x64xbf16>
    %cst_51 = arith.constant dense<0.000000e+00> : vector<8x64xf32>
    %131 = tpu.matmul %129, %130, %cst_51 {dimension_numbers = #tpu.dot_dimension_numbers<[1], [0], [0], [1], [0, 0, 1, 1], [], []>} : vector<8x256xbf16>, vector<256x64xbf16>, vector<8x64xf32> -> vector<8x64xf32>
    %c0_52 = arith.constant 0 : index
    %c0_53 = arith.constant 0 : index
    %132 = vector.load %arg14[%c0_52, %c0_53] : memref<1x64xf32, #tpu.memory_space<vmem>>, vector<1x64xf32>
    %133 = vector.broadcast %132 : vector<1x64xf32> to vector<8x64xf32>
    %134 = arith.addf %131, %133 : vector<8x64xf32>
    %135 = arith.addf %120, %134 : vector<8x64xf32>
    %c0_54 = arith.constant 0 : index
    %c0_55 = arith.constant 0 : index
    %136 = vector.load %arg17[%c0_54, %c0_55] : memref<1x64xf32, #tpu.memory_space<vmem>>, vector<1x64xf32>
    %c0_56 = arith.constant 0 : index
    %c0_57 = arith.constant 0 : index
    %137 = vector.load %arg18[%c0_56, %c0_57] : memref<1x64xf32, #tpu.memory_space<vmem>>, vector<1x64xf32>
    %cst_58 = arith.constant dense<0.000000e+00> : vector<8xf32>
    %138 = vector.multi_reduction <add>, %135, %cst_58 [1] : vector<8x64xf32> to vector<8xf32>
    %139 = vector.shape_cast %138 : vector<8xf32> to vector<8x1xf32>
    %cst_59 = arith.constant 6.400000e+01 : f32
    %140 = vector.broadcast %cst_59 : f32 to vector<8x1xf32>
    %141 = arith.divf %139, %140 : vector<8x1xf32>
    %142 = vector.broadcast %141 : vector<8x1xf32> to vector<8x64xf32>
    %143 = arith.subf %135, %142 : vector<8x64xf32>
    %144 = arith.mulf %143, %143 : vector<8x64xf32>
    %cst_60 = arith.constant dense<0.000000e+00> : vector<8xf32>
    %145 = vector.multi_reduction <add>, %144, %cst_60 [1] : vector<8x64xf32> to vector<8xf32>
    %146 = vector.shape_cast %145 : vector<8xf32> to vector<8x1xf32>
    %cst_61 = arith.constant 6.400000e+01 : f32
    %147 = vector.broadcast %cst_61 : f32 to vector<8x1xf32>
    %148 = arith.divf %146, %147 : vector<8x1xf32>
    %149 = vector.broadcast %141 : vector<8x1xf32> to vector<8x64xf32>
    %150 = arith.subf %135, %149 : vector<8x64xf32>
    %cst_62 = arith.constant 9.99999974E-6 : f32
    %151 = vector.broadcast %cst_62 : f32 to vector<8x1xf32>
    %152 = arith.addf %148, %151 : vector<8x1xf32>
    %153 = math.rsqrt %152 : vector<8x1xf32>
    %154 = vector.broadcast %153 : vector<8x1xf32> to vector<8x64xf32>
    %155 = arith.mulf %150, %154 : vector<8x64xf32>
    %156 = vector.broadcast %136 : vector<1x64xf32> to vector<8x64xf32>
    %157 = arith.mulf %155, %156 : vector<8x64xf32>
    %158 = vector.broadcast %137 : vector<1x64xf32> to vector<8x64xf32>
    %159 = arith.addf %157, %158 : vector<8x64xf32>
    %c0_63 = arith.constant 0 : index
    %c0_64 = arith.constant 0 : index
    %160 = vector.load %arg3[%c0_63, %c0_64] : memref<1x64xf32, #tpu.memory_space<vmem>>, vector<1x64xf32>
    %c0_65 = arith.constant 0 : index
    %c0_66 = arith.constant 0 : index
    %161 = vector.load %arg4[%c0_65, %c0_66] : memref<1x64xf32, #tpu.memory_space<vmem>>, vector<1x64xf32>
    %cst_67 = arith.constant dense<0.000000e+00> : vector<8xf32>
    %162 = vector.multi_reduction <add>, %159, %cst_67 [1] : vector<8x64xf32> to vector<8xf32>
    %163 = vector.shape_cast %162 : vector<8xf32> to vector<8x1xf32>
    %cst_68 = arith.constant 6.400000e+01 : f32
    %164 = vector.broadcast %cst_68 : f32 to vector<8x1xf32>
    %165 = arith.divf %163, %164 : vector<8x1xf32>
    %166 = vector.broadcast %165 : vector<8x1xf32> to vector<8x64xf32>
    %167 = arith.subf %159, %166 : vector<8x64xf32>
    %168 = arith.mulf %167, %167 : vector<8x64xf32>
    %cst_69 = arith.constant dense<0.000000e+00> : vector<8xf32>
    %169 = vector.multi_reduction <add>, %168, %cst_69 [1] : vector<8x64xf32> to vector<8xf32>
    %170 = vector.shape_cast %169 : vector<8xf32> to vector<8x1xf32>
    %cst_70 = arith.constant 6.400000e+01 : f32
    %171 = vector.broadcast %cst_70 : f32 to vector<8x1xf32>
    %172 = arith.divf %170, %171 : vector<8x1xf32>
    %173 = vector.broadcast %165 : vector<8x1xf32> to vector<8x64xf32>
    %174 = arith.subf %159, %173 : vector<8x64xf32>
    %cst_71 = arith.constant 9.99999974E-6 : f32
    %175 = vector.broadcast %cst_71 : f32 to vector<8x1xf32>
    %176 = arith.addf %172, %175 : vector<8x1xf32>
    %177 = math.rsqrt %176 : vector<8x1xf32>
    %178 = vector.broadcast %177 : vector<8x1xf32> to vector<8x64xf32>
    %179 = arith.mulf %174, %178 : vector<8x64xf32>
    %180 = vector.broadcast %160 : vector<1x64xf32> to vector<8x64xf32>
    %181 = arith.mulf %179, %180 : vector<8x64xf32>
    %182 = vector.broadcast %161 : vector<1x64xf32> to vector<8x64xf32>
    %183 = arith.addf %181, %182 : vector<8x64xf32>
    %cst_72 = arith.constant 0.000000e+00 : f32
    %184 = vector.broadcast %cst_72 : f32 to vector<8x64xf32>
    %185 = arith.maximumf %183, %184 : vector<8x64xf32>
    %186 = arith.truncf %185 : vector<8x64xf32> to vector<8x64xbf16>
    %c0_73 = arith.constant 0 : index
    %c0_74 = arith.constant 0 : index
    %187 = vector.load %arg5[%c0_73, %c0_74] : memref<64x64xbf16, #tpu.memory_space<vmem>>, vector<64x64xbf16>
    %cst_75 = arith.constant dense<0.000000e+00> : vector<8x64xf32>
    %188 = tpu.matmul %186, %187, %cst_75 {dimension_numbers = #tpu.dot_dimension_numbers<[1], [0], [0], [1], [0, 0, 1, 1], [], []>} : vector<8x64xbf16>, vector<64x64xbf16>, vector<8x64xf32> -> vector<8x64xf32>
    %c0_76 = arith.constant 0 : index
    %c0_77 = arith.constant 0 : index
    %189 = vector.load %arg6[%c0_76, %c0_77] : memref<1x64xf32, #tpu.memory_space<vmem>>, vector<1x64xf32>
    %190 = vector.broadcast %189 : vector<1x64xf32> to vector<8x64xf32>
    %191 = arith.addf %188, %190 : vector<8x64xf32>
    %192 = arith.truncf %191 : vector<8x64xf32> to vector<8x64xbf16>
    %c0_78 = arith.constant 0 : index
    %c0_79 = arith.constant 0 : index
    %193 = vector.load %arg19[%c0_78, %c0_79] : memref<8x64xbf16, #tpu.memory_space<vmem>>, vector<8x64xbf16>
    tpu.vector_store %arg19[%c0_78, %c0_79], %192 {strides = array<i32>} : memref<8x64xbf16, #tpu.memory_space<vmem>>, vector<8x64xbf16>,
    return
  }
}

module attributes {stable_mosaic.version = 11 : i64} {
  func.func @_neck_bottom_kernel(%arg0: memref<16x32xbf16, #tpu.memory_space<vmem>>, %arg1: memref<16x32xbf16, #tpu.memory_space<vmem>>, %arg2: memref<16x16xf32, #tpu.memory_space<vmem>>, %arg3: memref<32x128xbf16, #tpu.memory_space<vmem>>, %arg4: memref<1x128xf32, #tpu.memory_space<vmem>>, %arg5: memref<32x96xbf16, #tpu.memory_space<vmem>>, %arg6: memref<1x96xf32, #tpu.memory_space<vmem>>, %arg7: memref<32x32xbf16, #tpu.memory_space<vmem>>, %arg8: memref<1x32xf32, #tpu.memory_space<vmem>>, %arg9: memref<32x128xbf16, #tpu.memory_space<vmem>>, %arg10: memref<1x128xf32, #tpu.memory_space<vmem>>, %arg11: memref<128x32xbf16, #tpu.memory_space<vmem>>, %arg12: memref<1x32xf32, #tpu.memory_space<vmem>>, %arg13: memref<1x32xf32, #tpu.memory_space<vmem>>, %arg14: memref<1x32xf32, #tpu.memory_space<vmem>>, %arg15: memref<1x32xf32, #tpu.memory_space<vmem>>, %arg16: memref<1x32xf32, #tpu.memory_space<vmem>>, %arg17: memref<16x128xf32, #tpu.memory_space<vmem>>) attributes {dimension_semantics = [], scalar_prefetch = 0 : i64, scratch_operands = 0 : i64, tpu.core_type = #tpu.core_type<tc>} {
    %c0 = arith.constant 0 : index
    %c0_0 = arith.constant 0 : index
    %0 = vector.load %arg0[%c0, %c0_0] : memref<16x32xbf16, #tpu.memory_space<vmem>>, vector<16x32xbf16>
    %1 = arith.extf %0 : vector<16x32xbf16> to vector<16x32xf32>
    %c0_1 = arith.constant 0 : index
    %c0_2 = arith.constant 0 : index
    %2 = vector.load %arg1[%c0_1, %c0_2] : memref<16x32xbf16, #tpu.memory_space<vmem>>, vector<16x32xbf16>
    %3 = arith.extf %2 : vector<16x32xbf16> to vector<16x32xf32>
    %4 = arith.addf %1, %3 : vector<16x32xf32>
    %c0_3 = arith.constant 0 : index
    %c0_4 = arith.constant 0 : index
    %5 = vector.load %arg2[%c0_3, %c0_4] : memref<16x16xf32, #tpu.memory_space<vmem>>, vector<16x16xf32>
    %6 = arith.truncf %4 : vector<16x32xf32> to vector<16x32xbf16>
    %c0_5 = arith.constant 0 : index
    %c0_6 = arith.constant 0 : index
    %7 = vector.load %arg5[%c0_5, %c0_6] : memref<32x96xbf16, #tpu.memory_space<vmem>>, vector<32x96xbf16>
    %cst = arith.constant dense<0.000000e+00> : vector<16x96xf32>
    %8 = tpu.matmul %6, %7, %cst {dimension_numbers = #tpu.dot_dimension_numbers<[1], [0], [0], [1], [0, 0, 1, 1], [], []>} : vector<16x32xbf16>, vector<32x96xbf16>, vector<16x96xf32> -> vector<16x96xf32>
    %c0_7 = arith.constant 0 : index
    %c0_8 = arith.constant 0 : index
    %9 = vector.load %arg6[%c0_7, %c0_8] : memref<1x96xf32, #tpu.memory_space<vmem>>, vector<1x96xf32>
    %10 = vector.broadcast %9 : vector<1x96xf32> to vector<16x96xf32>
    %11 = arith.addf %8, %10 : vector<16x96xf32>
    %12 = arith.truncf %11 : vector<16x96xf32> to vector<16x96xbf16>
    %13 = vector.extract_strided_slice %12 {offsets = [0, 0], sizes = [16, 16], strides = [1, 1]} : vector<16x96xbf16> to vector<16x16xbf16>
    %14 = vector.extract_strided_slice %12 {offsets = [0, 32], sizes = [16, 16], strides = [1, 1]} : vector<16x96xbf16> to vector<16x16xbf16>
    %15 = vector.extract_strided_slice %12 {offsets = [0, 64], sizes = [16, 16], strides = [1, 1]} : vector<16x96xbf16> to vector<16x16xbf16>
    %cst_9 = arith.constant dense<0.000000e+00> : vector<16x16xf32>
    %16 = tpu.matmul %13, %14, %cst_9 {dimension_numbers = #tpu.dot_dimension_numbers<[1], [1], [0], [0], [0, 0, 1, 0], [], []>} : vector<16x16xbf16>, vector<16x16xbf16>, vector<16x16xf32> -> vector<16x16xf32>
    %cst_10 = arith.constant 2.500000e-01 : f32
    %17 = vector.broadcast %cst_10 : f32 to vector<16x16xf32>
    %18 = arith.mulf %16, %17 : vector<16x16xf32>
    %19 = arith.addf %18, %5 : vector<16x16xf32>
    %cst_11 = arith.constant dense<0xFF800000> : vector<16xf32>
    %20 = vector.multi_reduction <maximumf>, %19, %cst_11 [1] : vector<16x16xf32> to vector<16xf32>
    %21 = vector.shape_cast %20 : vector<16xf32> to vector<16x1xf32>
    %22 = vector.broadcast %21 : vector<16x1xf32> to vector<16x16xf32>
    %23 = arith.subf %19, %22 : vector<16x16xf32>
    %24 = math.exp %23 : vector<16x16xf32>
    %cst_12 = arith.constant dense<0.000000e+00> : vector<16xf32>
    %25 = vector.multi_reduction <add>, %24, %cst_12 [1] : vector<16x16xf32> to vector<16xf32>
    %26 = vector.shape_cast %25 : vector<16xf32> to vector<16x1xf32>
    %27 = tpu.reciprocal %26 {approx = true} : vector<16x1xf32> -> vector<16x1xf32>
    %28 = vector.broadcast %27 : vector<16x1xf32> to vector<16x16xf32>
    %29 = arith.mulf %24, %28 : vector<16x16xf32>
    %30 = arith.truncf %29 : vector<16x16xf32> to vector<16x16xbf16>
    %cst_13 = arith.constant dense<0.000000e+00> : vector<16x16xf32>
    %31 = tpu.matmul %30, %15, %cst_13 {dimension_numbers = #tpu.dot_dimension_numbers<[1], [0], [0], [1], [0, 0, 1, 1], [], []>} : vector<16x16xbf16>, vector<16x16xbf16>, vector<16x16xf32> -> vector<16x16xf32>
    %32 = vector.extract_strided_slice %12 {offsets = [0, 16], sizes = [16, 16], strides = [1, 1]} : vector<16x96xbf16> to vector<16x16xbf16>
    %33 = vector.extract_strided_slice %12 {offsets = [0, 48], sizes = [16, 16], strides = [1, 1]} : vector<16x96xbf16> to vector<16x16xbf16>
    %34 = vector.extract_strided_slice %12 {offsets = [0, 80], sizes = [16, 16], strides = [1, 1]} : vector<16x96xbf16> to vector<16x16xbf16>
    %cst_14 = arith.constant dense<0.000000e+00> : vector<16x16xf32>
    %35 = tpu.matmul %32, %33, %cst_14 {dimension_numbers = #tpu.dot_dimension_numbers<[1], [1], [0], [0], [0, 0, 1, 0], [], []>} : vector<16x16xbf16>, vector<16x16xbf16>, vector<16x16xf32> -> vector<16x16xf32>
    %cst_15 = arith.constant 2.500000e-01 : f32
    %36 = vector.broadcast %cst_15 : f32 to vector<16x16xf32>
    %37 = arith.mulf %35, %36 : vector<16x16xf32>
    %38 = arith.addf %37, %5 : vector<16x16xf32>
    %cst_16 = arith.constant dense<0xFF800000> : vector<16xf32>
    %39 = vector.multi_reduction <maximumf>, %38, %cst_16 [1] : vector<16x16xf32> to vector<16xf32>
    %40 = vector.shape_cast %39 : vector<16xf32> to vector<16x1xf32>
    %41 = vector.broadcast %40 : vector<16x1xf32> to vector<16x16xf32>
    %42 = arith.subf %38, %41 : vector<16x16xf32>
    %43 = math.exp %42 : vector<16x16xf32>
    %cst_17 = arith.constant dense<0.000000e+00> : vector<16xf32>
    %44 = vector.multi_reduction <add>, %43, %cst_17 [1] : vector<16x16xf32> to vector<16xf32>
    %45 = vector.shape_cast %44 : vector<16xf32> to vector<16x1xf32>
    %46 = tpu.reciprocal %45 {approx = true} : vector<16x1xf32> -> vector<16x1xf32>
    %47 = vector.broadcast %46 : vector<16x1xf32> to vector<16x16xf32>
    %48 = arith.mulf %43, %47 : vector<16x16xf32>
    %49 = arith.truncf %48 : vector<16x16xf32> to vector<16x16xbf16>
    %cst_18 = arith.constant dense<0.000000e+00> : vector<16x16xf32>
    %50 = tpu.matmul %49, %34, %cst_18 {dimension_numbers = #tpu.dot_dimension_numbers<[1], [0], [0], [1], [0, 0, 1, 1], [], []>} : vector<16x16xbf16>, vector<16x16xbf16>, vector<16x16xf32> -> vector<16x16xf32>
    %51 = tpu.concatenate %31, %50 in 1 : vector<16x16xf32>, vector<16x16xf32> -> vector<16x32xf32>
    %52 = arith.truncf %51 : vector<16x32xf32> to vector<16x32xbf16>
    %c0_19 = arith.constant 0 : index
    %c0_20 = arith.constant 0 : index
    %53 = vector.load %arg7[%c0_19, %c0_20] : memref<32x32xbf16, #tpu.memory_space<vmem>>, vector<32x32xbf16>
    %cst_21 = arith.constant dense<0.000000e+00> : vector<16x32xf32>
    %54 = tpu.matmul %52, %53, %cst_21 {dimension_numbers = #tpu.dot_dimension_numbers<[1], [0], [0], [1], [0, 0, 1, 1], [], []>} : vector<16x32xbf16>, vector<32x32xbf16>, vector<16x32xf32> -> vector<16x32xf32>
    %c0_22 = arith.constant 0 : index
    %c0_23 = arith.constant 0 : index
    %55 = vector.load %arg8[%c0_22, %c0_23] : memref<1x32xf32, #tpu.memory_space<vmem>>, vector<1x32xf32>
    %56 = vector.broadcast %55 : vector<1x32xf32> to vector<16x32xf32>
    %57 = arith.addf %54, %56 : vector<16x32xf32>
    %58 = arith.addf %4, %57 : vector<16x32xf32>
    %c0_24 = arith.constant 0 : index
    %c0_25 = arith.constant 0 : index
    %59 = vector.load %arg13[%c0_24, %c0_25] : memref<1x32xf32, #tpu.memory_space<vmem>>, vector<1x32xf32>
    %c0_26 = arith.constant 0 : index
    %c0_27 = arith.constant 0 : index
    %60 = vector.load %arg14[%c0_26, %c0_27] : memref<1x32xf32, #tpu.memory_space<vmem>>, vector<1x32xf32>
    %cst_28 = arith.constant dense<0.000000e+00> : vector<16xf32>
    %61 = vector.multi_reduction <add>, %58, %cst_28 [1] : vector<16x32xf32> to vector<16xf32>
    %62 = vector.shape_cast %61 : vector<16xf32> to vector<16x1xf32>
    %cst_29 = arith.constant 3.200000e+01 : f32
    %63 = vector.broadcast %cst_29 : f32 to vector<16x1xf32>
    %64 = arith.divf %62, %63 : vector<16x1xf32>
    %65 = vector.broadcast %64 : vector<16x1xf32> to vector<16x32xf32>
    %66 = arith.subf %58, %65 : vector<16x32xf32>
    %67 = arith.mulf %66, %66 : vector<16x32xf32>
    %cst_30 = arith.constant dense<0.000000e+00> : vector<16xf32>
    %68 = vector.multi_reduction <add>, %67, %cst_30 [1] : vector<16x32xf32> to vector<16xf32>
    %69 = vector.shape_cast %68 : vector<16xf32> to vector<16x1xf32>
    %cst_31 = arith.constant 3.200000e+01 : f32
    %70 = vector.broadcast %cst_31 : f32 to vector<16x1xf32>
    %71 = arith.divf %69, %70 : vector<16x1xf32>
    %72 = vector.broadcast %64 : vector<16x1xf32> to vector<16x32xf32>
    %73 = arith.subf %58, %72 : vector<16x32xf32>
    %cst_32 = arith.constant 9.99999974E-6 : f32
    %74 = vector.broadcast %cst_32 : f32 to vector<16x1xf32>
    %75 = arith.addf %71, %74 : vector<16x1xf32>
    %76 = math.rsqrt %75 : vector<16x1xf32>
    %77 = vector.broadcast %76 : vector<16x1xf32> to vector<16x32xf32>
    %78 = arith.mulf %73, %77 : vector<16x32xf32>
    %79 = vector.broadcast %59 : vector<1x32xf32> to vector<16x32xf32>
    %80 = arith.mulf %78, %79 : vector<16x32xf32>
    %81 = vector.broadcast %60 : vector<1x32xf32> to vector<16x32xf32>
    %82 = arith.addf %80, %81 : vector<16x32xf32>
    %83 = arith.truncf %82 : vector<16x32xf32> to vector<16x32xbf16>
    %c0_33 = arith.constant 0 : index
    %c0_34 = arith.constant 0 : index
    %84 = vector.load %arg9[%c0_33, %c0_34] : memref<32x128xbf16, #tpu.memory_space<vmem>>, vector<32x128xbf16>
    %cst_35 = arith.constant dense<0.000000e+00> : vector<16x128xf32>
    %85 = tpu.matmul %83, %84, %cst_35 {dimension_numbers = #tpu.dot_dimension_numbers<[1], [0], [0], [1], [0, 0, 1, 1], [], []>} : vector<16x32xbf16>, vector<32x128xbf16>, vector<16x128xf32> -> vector<16x128xf32>
    %c0_36 = arith.constant 0 : index
    %c0_37 = arith.constant 0 : index
    %86 = vector.load %arg10[%c0_36, %c0_37] : memref<1x128xf32, #tpu.memory_space<vmem>>, vector<1x128xf32>
    %87 = vector.broadcast %86 : vector<1x128xf32> to vector<16x128xf32>
    %88 = arith.addf %85, %87 : vector<16x128xf32>
    %cst_38 = arith.constant 0.000000e+00 : f32
    %89 = vector.broadcast %cst_38 : f32 to vector<16x128xf32>
    %90 = arith.maximumf %88, %89 : vector<16x128xf32>
    %91 = arith.truncf %90 : vector<16x128xf32> to vector<16x128xbf16>
    %c0_39 = arith.constant 0 : index
    %c0_40 = arith.constant 0 : index
    %92 = vector.load %arg11[%c0_39, %c0_40] : memref<128x32xbf16, #tpu.memory_space<vmem>>, vector<128x32xbf16>
    %cst_41 = arith.constant dense<0.000000e+00> : vector<16x32xf32>
    %93 = tpu.matmul %91, %92, %cst_41 {dimension_numbers = #tpu.dot_dimension_numbers<[1], [0], [0], [1], [0, 0, 1, 1], [], []>} : vector<16x128xbf16>, vector<128x32xbf16>, vector<16x32xf32> -> vector<16x32xf32>
    %c0_42 = arith.constant 0 : index
    %c0_43 = arith.constant 0 : index
    %94 = vector.load %arg12[%c0_42, %c0_43] : memref<1x32xf32, #tpu.memory_space<vmem>>, vector<1x32xf32>
    %95 = vector.broadcast %94 : vector<1x32xf32> to vector<16x32xf32>
    %96 = arith.addf %93, %95 : vector<16x32xf32>
    %97 = arith.addf %82, %96 : vector<16x32xf32>
    %c0_44 = arith.constant 0 : index
    %c0_45 = arith.constant 0 : index
    %98 = vector.load %arg15[%c0_44, %c0_45] : memref<1x32xf32, #tpu.memory_space<vmem>>, vector<1x32xf32>
    %c0_46 = arith.constant 0 : index
    %c0_47 = arith.constant 0 : index
    %99 = vector.load %arg16[%c0_46, %c0_47] : memref<1x32xf32, #tpu.memory_space<vmem>>, vector<1x32xf32>
    %cst_48 = arith.constant dense<0.000000e+00> : vector<16xf32>
    %100 = vector.multi_reduction <add>, %97, %cst_48 [1] : vector<16x32xf32> to vector<16xf32>
    %101 = vector.shape_cast %100 : vector<16xf32> to vector<16x1xf32>
    %cst_49 = arith.constant 3.200000e+01 : f32
    %102 = vector.broadcast %cst_49 : f32 to vector<16x1xf32>
    %103 = arith.divf %101, %102 : vector<16x1xf32>
    %104 = vector.broadcast %103 : vector<16x1xf32> to vector<16x32xf32>
    %105 = arith.subf %97, %104 : vector<16x32xf32>
    %106 = arith.mulf %105, %105 : vector<16x32xf32>
    %cst_50 = arith.constant dense<0.000000e+00> : vector<16xf32>
    %107 = vector.multi_reduction <add>, %106, %cst_50 [1] : vector<16x32xf32> to vector<16xf32>
    %108 = vector.shape_cast %107 : vector<16xf32> to vector<16x1xf32>
    %cst_51 = arith.constant 3.200000e+01 : f32
    %109 = vector.broadcast %cst_51 : f32 to vector<16x1xf32>
    %110 = arith.divf %108, %109 : vector<16x1xf32>
    %111 = vector.broadcast %103 : vector<16x1xf32> to vector<16x32xf32>
    %112 = arith.subf %97, %111 : vector<16x32xf32>
    %cst_52 = arith.constant 9.99999974E-6 : f32
    %113 = vector.broadcast %cst_52 : f32 to vector<16x1xf32>
    %114 = arith.addf %110, %113 : vector<16x1xf32>
    %115 = math.rsqrt %114 : vector<16x1xf32>
    %116 = vector.broadcast %115 : vector<16x1xf32> to vector<16x32xf32>
    %117 = arith.mulf %112, %116 : vector<16x32xf32>
    %118 = vector.broadcast %98 : vector<1x32xf32> to vector<16x32xf32>
    %119 = arith.mulf %117, %118 : vector<16x32xf32>
    %120 = vector.broadcast %99 : vector<1x32xf32> to vector<16x32xf32>
    %121 = arith.addf %119, %120 : vector<16x32xf32>
    %122 = arith.truncf %121 : vector<16x32xf32> to vector<16x32xbf16>
    %c0_53 = arith.constant 0 : index
    %c0_54 = arith.constant 0 : index
    %123 = vector.load %arg3[%c0_53, %c0_54] : memref<32x128xbf16, #tpu.memory_space<vmem>>, vector<32x128xbf16>
    %cst_55 = arith.constant dense<0.000000e+00> : vector<16x128xf32>
    %124 = tpu.matmul %122, %123, %cst_55 {dimension_numbers = #tpu.dot_dimension_numbers<[1], [0], [0], [1], [0, 0, 1, 1], [], []>} : vector<16x32xbf16>, vector<32x128xbf16>, vector<16x128xf32> -> vector<16x128xf32>
    %c0_56 = arith.constant 0 : index
    %c0_57 = arith.constant 0 : index
    %125 = vector.load %arg4[%c0_56, %c0_57] : memref<1x128xf32, #tpu.memory_space<vmem>>, vector<1x128xf32>
    %126 = vector.broadcast %125 : vector<1x128xf32> to vector<16x128xf32>
    %127 = arith.addf %124, %126 : vector<16x128xf32>
    %c0_58 = arith.constant 0 : index
    %c0_59 = arith.constant 0 : index
    %128 = vector.load %arg17[%c0_58, %c0_59] : memref<16x128xf32, #tpu.memory_space<vmem>>, vector<16x128xf32>
    tpu.vector_store %arg17[%c0_58, %c0_59], %127 {strides = array<i32>} : memref<16x128xf32, #tpu.memory_space<vmem>>, vector<16x128xf32>,
    return
  }
}

</mosaic_0001>

<llo_original>
// kernel: forward.6
$region0: #{forward.6}
  #allocation0 [shape = 'u32[]', space=smem, size = 0x4, offset = 0x4, fixed_abs, tag = 'smem constant byte address 0x4 - core index']
  #allocation1 [shape = 'u32[144,128]{1,0:T(1,128)}', space=vmem, size = 0x12000, scoped, tag = 'internal scratch']
  %s0 = inlined_call_operand.vmem [shape: f32[16,32], index: 0, kind: input, shape index: {}]
  %s1 = inlined_call_operand.vmem [shape: f32[16,16], index: 1, kind: input, shape index: {}]
  %s2 = inlined_call_operand.vmem [shape: bf16[32,96], index: 2, kind: input, shape index: {}]
  %s3 = inlined_call_operand.vmem [shape: f32[1,96], index: 3, kind: input, shape index: {}]
  %s4 = inlined_call_operand.vmem [shape: bf16[32,32], index: 4, kind: input, shape index: {}]
  %s5 = inlined_call_operand.vmem [shape: f32[1,32], index: 5, kind: input, shape index: {}]
  %s6 = inlined_call_operand.vmem [shape: bf16[32,128], index: 6, kind: input, shape index: {}]
  %s7 = inlined_call_operand.vmem [shape: f32[1,128], index: 7, kind: input, shape index: {}]
  %s8 = inlined_call_operand.vmem [shape: bf16[128,32], index: 8, kind: input, shape index: {}]
  %s9 = inlined_call_operand.vmem [shape: f32[1,32], index: 9, kind: input, shape index: {}]
  %s10 = inlined_call_operand.vmem [shape: f32[1,32], index: 10, kind: input, shape index: {}]
  %s11 = inlined_call_operand.vmem [shape: f32[1,32], index: 11, kind: input, shape index: {}]
  %s12 = inlined_call_operand.vmem [shape: f32[1,32], index: 12, kind: input, shape index: {}]
  %s13 = inlined_call_operand.vmem [shape: f32[1,32], index: 13, kind: input, shape index: {}]
  %s14 = inlined_call_operand.vmem [shape: bf16[16,32], index: 14, kind: output, shape index: {}]
  %s15 = sld [smem:[#allocation0]]
  $region66: #{forward.6} parent=0
    _
  %s17 = ssub.s32 1, %s15
  %s18 = scalar_select 0, %s17, %s15
  // Predicated region
  $region2: #{forward.6} parent=0 // pred_check
    _
  $region3: #{forward.6} parent=0 // pred_check_branch
    %20 = sbr.rel (0) target = $region5
  $region4: #{forward.6} parent=0 // pred_region
    _
  $region5: #{forward.6} parent=0 // pred_fallthru
    _
  // Predicated region
  $region6: #{forward.6} parent=0 // pred_check
    _
  $region7: #{forward.6} parent=0 // pred_check_branch
    %22 = sbr.rel (0) target = $region9
  $region8: #{forward.6} parent=0 // pred_region
    _
  $region9: #{forward.6} parent=0 // pred_fallthru
    _
  // Predicated region
  $region10: #{forward.6} parent=0 // pred_check
    _
  $region11: #{forward.6} parent=0 // pred_check_branch
    %24 = sbr.rel (0) target = $region13
  $region12: #{forward.6} parent=0 // pred_region
    _
  $region13: #{forward.6} parent=0 // pred_fallthru
    _
  // Predicated region
  $region14: #{forward.6} parent=0 // pred_check
    _
  $region15: #{forward.6} parent=0 // pred_check_branch
    %26 = sbr.rel (0) target = $region17
  $region16: #{forward.6} parent=0 // pred_region
    _
  $region17: #{forward.6} parent=0 // pred_fallthru
    _
  // Predicated region
  $region18: #{forward.6} parent=0 // pred_check
    _
  $region19: #{forward.6} parent=0 // pred_check_branch
    %28 = sbr.rel (0) target = $region21
  $region20: #{forward.6} parent=0 // pred_region
    _
  $region21: #{forward.6} parent=0 // pred_fallthru
    _
  // Predicated region
  $region22: #{forward.6} parent=0 // pred_check
    _
  $region23: #{forward.6} parent=0 // pred_check_branch
    %30 = sbr.rel (0) target = $region25
  $region24: #{forward.6} parent=0 // pred_region
    _
  $region25: #{forward.6} parent=0 // pred_fallthru
    _
  // Predicated region
  $region26: #{forward.6} parent=0 // pred_check
    _
  $region27: #{forward.6} parent=0 // pred_check_branch
    %32 = sbr.rel (0) target = $region29
  $region28: #{forward.6} parent=0 // pred_region
    _
  $region29: #{forward.6} parent=0 // pred_fallthru
    _
  // Predicated region
  $region30: #{forward.6} parent=0 // pred_check
    _
  $region31: #{forward.6} parent=0 // pred_check_branch
    %34 = sbr.rel (0) target = $region33
  $region32: #{forward.6} parent=0 // pred_region
    _
  $region33: #{forward.6} parent=0 // pred_fallthru
    _
  // Predicated region
  $region34: #{forward.6} parent=0 // pred_check
    _
  $region35: #{forward.6} parent=0 // pred_check_branch
    %36 = sbr.rel (0) target = $region37
  $region36: #{forward.6} parent=0 // pred_region
    _
  $region37: #{forward.6} parent=0 // pred_fallthru
    _
  // Predicated region
  $region38: #{forward.6} parent=0 // pred_check
    _
  $region39: #{forward.6} parent=0 // pred_check_branch
    %38 = sbr.rel (0) target = $region41
  $region40: #{forward.6} parent=0 // pred_region
    _
  $region41: #{forward.6} parent=0 // pred_fallthru
    _
  // Predicated region
  $region42: #{forward.6} parent=0 // pred_check
    _
  $region43: #{forward.6} parent=0 // pred_check_branch
    %40 = sbr.rel (0) target = $region45
  $region44: #{forward.6} parent=0 // pred_region
    _
  $region45: #{forward.6} parent=0 // pred_fallthru
    _
  // Predicated region
  $region46: #{forward.6} parent=0 // pred_check
    _
  $region47: #{forward.6} parent=0 // pred_check_branch
    %42 = sbr.rel (0) target = $region49
  $region48: #{forward.6} parent=0 // pred_region
    _
  $region49: #{forward.6} parent=0 // pred_fallthru
    _
  // Predicated region
  $region50: #{forward.6} parent=0 // pred_check
    _
  $region51: #{forward.6} parent=0 // pred_check_branch
    %44 = sbr.rel (0) target = $region53
  $region52: #{forward.6} parent=0 // pred_region
    _
  $region53: #{forward.6} parent=0 // pred_fallthru
    _
  // Predicated region
  $region54: #{forward.6} parent=0 // pred_check
    _
  $region55: #{forward.6} parent=0 // pred_check_branch
    %46 = sbr.rel (0) target = $region57
  $region56: #{forward.6} parent=0 // pred_region
    _
  $region57: #{forward.6} parent=0 // pred_fallthru
    _
  %v48 = vld [vmem:[%s0] sm:$0xff]
  %v49 = vld [vmem:[%s0 + $0x8] sm:$0xff]
  %v50 = vld [vmem:[%s1] sm:$0xff]
  %v51 = vld [vmem:[%s1 + $0x8] sm:$0xff]
  %v52 = vpack.c.bf16 %v49, %v48
  %v53 = vld [vmem:[%s2] sm:$0xf]
  %v54 = vld [vmem:[%s2 + $0x4] sm:$0xf]
  %v55 = vld [vmem:[%s2 + $0x8] sm:$0xf]
  %v56 = vld [vmem:[%s2 + $0xc] sm:$0xf]
  %v57 = vld [vmem:[%s3] sm:$0x1]
  %v59 = vlaneseq
  %v60 = vshrl.u32 %v59, 7
  %v61 = vsub.s32 0, %v60
  %v62 = vrot.slane %v57, %v61
  %v68 = vunpack.c.l.b16 %v53
  %v69 = vunpack.c.l.b16 %v54
  %v70 = vunpack.c.l.b16 %v55
  %v71 = vunpack.c.l.b16 %v56
  %v72 = vpack.c.b16 %v69, %v68
  %v73 = vpack.c.b16 %v71, %v70
  %vm76 = vcmask 261120
  %v78 = vsel %vm76, %v52, 0
  %80 = vmatprep.subr.bf16.mxu0 0
  %81 = vmatpush1.bf16.msra.mxu0 %v72
  %82 = vmatprep.subr.bf16.mxu0 0
  %83 = vmatpush1.bf16.msra.mxu0 %v73
  %84 = vmatprep.subr.bf16.mxu0 0
  %85 = vmatpush1.bf16.msra.mxu0 0
  %86 = vmatprep.subr.bf16.mxu0 0
  %87 = vmatpush1.bf16.msra.mxu0 0
  %88 = vmatprep.subr.bf16.mxu0 0
  %89 = vmatpush1.bf16.msra.mxu0 0
  %90 = vmatprep.subr.bf16.mxu0 0
  %91 = vmatpush1.bf16.msra.mxu0 0
  %92 = vmatprep.subr.bf16.mxu0 0
  %93 = vmatpush1.bf16.msra.mxu0 0
  %94 = vmatprep.subr.bf16.mxu0 0
  %95 = vmatpush1.bf16.msra.mxu0 0
  %96 = vmatprep.subr.bf16.mxu0 0
  %97 = vmatpush1.bf16.msra.mxu0 0
  %98 = vmatprep.subr.bf16.mxu0 0
  %99 = vmatpush1.bf16.msra.mxu0 0
  %100 = vmatprep.subr.bf16.mxu0 0
  %101 = vmatpush1.bf16.msra.mxu0 0
  %102 = vmatprep.subr.bf16.mxu0 0
  %103 = vmatpush1.bf16.msra.mxu0 0
  %104 = vmatprep.subr.bf16.mxu0 0
  %105 = vmatpush1.bf16.msra.mxu0 0
  %106 = vmatprep.subr.bf16.mxu0 0
  %107 = vmatpush1.bf16.msra.mxu0 0
  %108 = vmatprep.subr.bf16.mxu0 0
  %109 = vmatpush1.bf16.msra.mxu0 0
  %110 = vmatprep.subr.bf16.mxu0 0
  %111 = vmatpush1.bf16.msra.mxu0 0
  %112 = vmatprep.mubr.bf16.mxu0 0
  %113 = vmatmul.mubr.bf16.gmra.mrb[0].mxu0 %v78
  %v114 = vpop.f32.mrb[0].mxu0
  %v115 = vadd.f32 %v62, %v114
  %v116 = vpop.f32.mrb[0].mxu0
  %v117 = vpop.f32.mrb[0].mxu0
  %v118 = vadd.f32 %v62, %v117
  %v119 = vpop.f32.mrb[0].mxu0
  %120 = vdwg.mxu0
  %v121 = vpack.c.bf16 %v118, %v115
  %123 = vrot.lane.b32.xlu0 %v121, 96
  %v124 = vpop.permute.xlu0 %123
  %vm125 = vcmask 130048
  %v127 = vsel %vm125, %v121, 0
  %v130 = vsel %vm125, %v124, 0
  %132 = vmatprep.subr.bf16.mxu0 0
  %133 = vmatpush1.bf16.xpose.msra.mxu0 %v130
  %134 = vmatprep.subr.bf16.mxu0 0
  %135 = vmatpush1.bf16.xpose.msra.mxu0 0
  %136 = vmatprep.subr.bf16.mxu0 0
  %137 = vmatpush1.bf16.xpose.msra.mxu0 0
  %138 = vmatprep.subr.bf16.mxu0 0
  %139 = vmatpush1.bf16.xpose.msra.mxu0 0
  %140 = vmatprep.subr.bf16.mxu0 0
  %141 = vmatpush1.bf16.xpose.msra.mxu0 0
  %142 = vmatprep.subr.bf16.mxu0 0
  %143 = vmatpush1.bf16.xpose.msra.mxu0 0
  %144 = vmatprep.subr.bf16.mxu0 0
  %145 = vmatpush1.bf16.xpose.msra.mxu0 0
  %146 = vmatprep.subr.bf16.mxu0 0
  %147 = vmatpush1.bf16.xpose.msra.mxu0 0
  %148 = vmatprep.subr.bf16.mxu0 0
  %149 = vmatpush1.bf16.xpose.msra.mxu0 0
  %150 = vmatprep.subr.bf16.mxu0 0
  %151 = vmatpush1.bf16.xpose.msra.mxu0 0
  %152 = vmatprep.subr.bf16.mxu0 0
  %153 = vmatpush1.bf16.xpose.msra.mxu0 0
  %154 = vmatprep.subr.bf16.mxu0 0
  %155 = vmatpush1.bf16.xpose.msra.mxu0 0
  %156 = vmatprep.subr.bf16.mxu0 0
  %157 = vmatpush1.bf16.xpose.msra.mxu0 0
  %158 = vmatprep.subr.bf16.mxu0 0
  %159 = vmatpush1.bf16.xpose.msra.mxu0 0
  %160 = vmatprep.subr.bf16.mxu0 0
  %161 = vmatpush1.bf16.xpose.msra.mxu0 0
  %162 = vmatprep.subr.bf16.mxu0 0
  %163 = vmatpush1.bf16.xpose.msra.mxu0 0
  %164 = vmatprep.mubr.bf16.mxu0 0
  %165 = vmatmul.mubr.bf16.gmra.mrb[0].mxu0 %v127
  %v166 = vpop.f32.mrb[0].mxu0
  %v167 = vadd.f32 0.0, %v166
  %v168 = vpop.f32.mrb[0].mxu0
  %v169 = vpop.f32.mrb[0].mxu0
  %v170 = vadd.f32 0.0, %v169
  %v171 = vpop.f32.mrb[0].mxu0
  %172 = vdwg.mxu0
  %v173 = vmul.f32 %v167, 0.25
  %v174 = vmul.f32 %v170, 0.25
  %v175 = vadd.f32 %v173, %v50
  %v176 = vadd.f32 %v174, %v51
  %v177 = vsel %vm125, %v175, -inf
  %178 = vmax.xlane.f32.xlu0 %v177
  %v179 = vpop.xlane.xlu0 %178
  %v180 = vsel %vm125, %v176, -inf
  %181 = vmax.xlane.f32.xlu0 %v180
  %v182 = vpop.xlane.xlu0 %181
  %v183 = vsub.f32 %v175, %v179
  %v184 = vsub.f32 %v176, %v182
  %v185 = vmul.f32 %v183, 1.442695
  %v186 = vpow.pop %v185
  %v187 = vmul.f32 %v184, 1.442695
  %v188 = vpow.pop %v187
  %v189 = vsel %vm125, %v186, 0.0
  %190 = vadd.xlane.f32.xlu0 %v189
  %v191 = vpop.xlane.xlu0 %190
  %v192 = vsel %vm125, %v188, 0.0
  %193 = vadd.xlane.f32.xlu0 %v192
  %v194 = vpop.xlane.xlu0 %193
  %v195 = vrcp.pop %v191
  %v196 = vrcp.pop %v194
  %v197 = vmul.f32 %v186, %v195
  %v198 = vmul.f32 %v188, %v196
  %v199 = vpack.c.bf16 %v198, %v197
  %200 = vrot.lane.b32.xlu0 %v121, 64
  %v201 = vpop.permute.xlu0 %200
  %v204 = vsel %vm125, %v199, 0
  %206 = vmatprep.subr.bf16.mxu0 0
  %207 = vmatpush1.bf16.msra.mxu0 %v201
  %208 = vmatprep.subr.bf16.mxu0 0
  %209 = vmatpush1.bf16.msra.mxu0 0
  %210 = vmatprep.subr.bf16.mxu0 0
  %211 = vmatpush1.bf16.msra.mxu0 0
  %212 = vmatprep.subr.bf16.mxu0 0
  %213 = vmatpush1.bf16.msra.mxu0 0
  %214 = vmatprep.subr.bf16.mxu0 0
  %215 = vmatpush1.bf16.msra.mxu0 0
  %216 = vmatprep.subr.bf16.mxu0 0
  %217 = vmatpush1.bf16.msra.mxu0 0
  %218 = vmatprep.subr.bf16.mxu0 0
  %219 = vmatpush1.bf16.msra.mxu0 0
  %220 = vmatprep.subr.bf16.mxu0 0
  %221 = vmatpush1.bf16.msra.mxu0 0
  %222 = vmatprep.subr.bf16.mxu0 0
  %223 = vmatpush1.bf16.msra.mxu0 0
  %224 = vmatprep.subr.bf16.mxu0 0
  %225 = vmatpush1.bf16.msra.mxu0 0
  %226 = vmatprep.subr.bf16.mxu0 0
  %227 = vmatpush1.bf16.msra.mxu0 0
  %228 = vmatprep.subr.bf16.mxu0 0
  %229 = vmatpush1.bf16.msra.mxu0 0
  %230 = vmatprep.subr.bf16.mxu0 0
  %231 = vmatpush1.bf16.msra.mxu0 0
  %232 = vmatprep.subr.bf16.mxu0 0
  %233 = vmatpush1.bf16.msra.mxu0 0
  %234 = vmatprep.subr.bf16.mxu0 0
  %235 = vmatpush1.bf16.msra.mxu0 0
  %236 = vmatprep.subr.bf16.mxu0 0
  %237 = vmatpush1.bf16.msra.mxu0 0
  %238 = vmatprep.mubr.bf16.mxu0 0
  %239 = vmatmul.mubr.bf16.gmra.mrb[0].mxu0 %v204
  %v240 = vpop.f32.mrb[0].mxu0
  %v241 = vadd.f32 0.0, %v240
  %v242 = vpop.f32.mrb[0].mxu0
  %v243 = vpop.f32.mrb[0].mxu0
  %v244 = vadd.f32 0.0, %v243
  %v245 = vpop.f32.mrb[0].mxu0
  %246 = vdwg.mxu0
  %247 = vrot.lane.b32.xlu0 %v121, 112
  %v248 = vpop.permute.xlu0 %247
  %249 = vrot.lane.b32.xlu0 %v121, 80
  %v250 = vpop.permute.xlu0 %249
  %v252 = vsel %vm125, %v248, 0
  %v255 = vsel %vm125, %v250, 0
  %257 = vmatprep.subr.bf16.mxu0 0
  %258 = vmatpush1.bf16.xpose.msra.mxu0 %v255
  %259 = vmatprep.subr.bf16.mxu0 0
  %260 = vmatpush1.bf16.xpose.msra.mxu0 0
  %261 = vmatprep.subr.bf16.mxu0 0
  %262 = vmatpush1.bf16.xpose.msra.mxu0 0
  %263 = vmatprep.subr.bf16.mxu0 0
  %264 = vmatpush1.bf16.xpose.msra.mxu0 0
  %265 = vmatprep.subr.bf16.mxu0 0
  %266 = vmatpush1.bf16.xpose.msra.mxu0 0
  %267 = vmatprep.subr.bf16.mxu0 0
  %268 = vmatpush1.bf16.xpose.msra.mxu0 0
  %269 = vmatprep.subr.bf16.mxu0 0
  %270 = vmatpush1.bf16.xpose.msra.mxu0 0
  %271 = vmatprep.subr.bf16.mxu0 0
  %272 = vmatpush1.bf16.xpose.msra.mxu0 0
  %273 = vmatprep.subr.bf16.mxu0 0
  %274 = vmatpush1.bf16.xpose.msra.mxu0 0
  %275 = vmatprep.subr.bf16.mxu0 0
  %276 = vmatpush1.bf16.xpose.msra.mxu0 0
  %277 = vmatprep.subr.bf16.mxu0 0
  %278 = vmatpush1.bf16.xpose.msra.mxu0 0
  %279 = vmatprep.subr.bf16.mxu0 0
  %280 = vmatpush1.bf16.xpose.msra.mxu0 0
  %281 = vmatprep.subr.bf16.mxu0 0
  %282 = vmatpush1.bf16.xpose.msra.mxu0 0
  %283 = vmatprep.subr.bf16.mxu0 0
  %284 = vmatpush1.bf16.xpose.msra.mxu0 0
  %285 = vmatprep.subr.bf16.mxu0 0
  %286 = vmatpush1.bf16.xpose.msra.mxu0 0
  %287 = vmatprep.subr.bf16.mxu0 0
  %288 = vmatpush1.bf16.xpose.msra.mxu0 0
  %289 = vmatprep.mubr.bf16.mxu0 0
  %290 = vmatmul.mubr.bf16.gmra.mrb[0].mxu0 %v252
  %v291 = vpop.f32.mrb[0].mxu0
  %v292 = vadd.f32 0.0, %v291
  %v293 = vpop.f32.mrb[0].mxu0
  %v294 = vpop.f32.mrb[0].mxu0
  %v295 = vadd.f32 0.0, %v294
  %v296 = vpop.f32.mrb[0].mxu0
  %297 = vdwg.mxu0
  %v298 = vmul.f32 %v292, 0.25
  %v299 = vmul.f32 %v295, 0.25
  %v300 = vadd.f32 %v298, %v50
  %v301 = vadd.f32 %v299, %v51
  %v302 = vsel %vm125, %v300, -inf
  %303 = vmax.xlane.f32.xlu0 %v302
  %v304 = vpop.xlane.xlu0 %303
  %v305 = vsel %vm125, %v301, -inf
  %306 = vmax.xlane.f32.xlu0 %v305
  %v307 = vpop.xlane.xlu0 %306
  %v308 = vsub.f32 %v300, %v304
  %v309 = vsub.f32 %v301, %v307
  %v310 = vmul.f32 %v308, 1.442695
  %v311 = vpow.pop %v310
  %v312 = vmul.f32 %v309, 1.442695
  %v313 = vpow.pop %v312
  %v314 = vsel %vm125, %v311, 0.0
  %315 = vadd.xlane.f32.xlu0 %v314
  %v316 = vpop.xlane.xlu0 %315
  %v317 = vsel %vm125, %v313, 0.0
  %318 = vadd.xlane.f32.xlu0 %v317
  %v319 = vpop.xlane.xlu0 %318
  %v320 = vrcp.pop %v316
  %v321 = vrcp.pop %v319
  %v322 = vmul.f32 %v311, %v320
  %v323 = vmul.f32 %v313, %v321
  %v324 = vpack.c.bf16 %v323, %v322
  %325 = vrot.lane.b32.xlu0 %v121, 48
  %v326 = vpop.permute.xlu0 %325
  %v329 = vsel %vm125, %v324, 0
  %331 = vmatprep.subr.bf16.mxu0 0
  %332 = vmatpush1.bf16.msra.mxu0 %v326
  %333 = vmatprep.subr.bf16.mxu0 0
  %334 = vmatpush1.bf16.msra.mxu0 0
  %335 = vmatprep.subr.bf16.mxu0 0
  %336 = vmatpush1.bf16.msra.mxu0 0
  %337 = vmatprep.subr.bf16.mxu0 0
  %338 = vmatpush1.bf16.msra.mxu0 0
  %339 = vmatprep.subr.bf16.mxu0 0
  %340 = vmatpush1.bf16.msra.mxu0 0
  %341 = vmatprep.subr.bf16.mxu0 0
  %342 = vmatpush1.bf16.msra.mxu0 0
  %343 = vmatprep.subr.bf16.mxu0 0
  %344 = vmatpush1.bf16.msra.mxu0 0
  %345 = vmatprep.subr.bf16.mxu0 0
  %346 = vmatpush1.bf16.msra.mxu0 0
  %347 = vmatprep.subr.bf16.mxu0 0
  %348 = vmatpush1.bf16.msra.mxu0 0
  %349 = vmatprep.subr.bf16.mxu0 0
  %350 = vmatpush1.bf16.msra.mxu0 0
  %351 = vmatprep.subr.bf16.mxu0 0
  %352 = vmatpush1.bf16.msra.mxu0 0
  %353 = vmatprep.subr.bf16.mxu0 0
  %354 = vmatpush1.bf16.msra.mxu0 0
  %355 = vmatprep.subr.bf16.mxu0 0
  %356 = vmatpush1.bf16.msra.mxu0 0
  %357 = vmatprep.subr.bf16.mxu0 0
  %358 = vmatpush1.bf16.msra.mxu0 0
  %359 = vmatprep.subr.bf16.mxu0 0
  %360 = vmatpush1.bf16.msra.mxu0 0
  %361 = vmatprep.subr.bf16.mxu0 0
  %362 = vmatpush1.bf16.msra.mxu0 0
  %363 = vmatprep.mubr.bf16.mxu0 0
  %364 = vmatmul.mubr.bf16.gmra.mrb[0].mxu0 %v329
  %v365 = vpop.f32.mrb[0].mxu0
  %v366 = vadd.f32 0.0, %v365
  %v367 = vpop.f32.mrb[0].mxu0
  %v368 = vpop.f32.mrb[0].mxu0
  %v369 = vadd.f32 0.0, %v368
  %v370 = vpop.f32.mrb[0].mxu0
  %371 = vdwg.mxu0
  %374 = vrot.lane.b32.xlu0 %v366, 16
  %v375 = vpop.permute.xlu0 %374
  %376 = vrot.lane.b32.xlu0 %v369, 16
  %v377 = vpop.permute.xlu0 %376
  %v380 = vsel %vm125, %v241, %v375
  %v381 = vsel %vm125, %v244, %v377
  %v382 = vpack.c.bf16 %v381, %v380
  %v383 = vld [vmem:[%s4] sm:$0xf]
  %v384 = vld [vmem:[%s4 + $0x4] sm:$0xf]
  %v385 = vld [vmem:[%s4 + $0x8] sm:$0xf]
  %v386 = vld [vmem:[%s4 + $0xc] sm:$0xf]
  %v387 = vld [vmem:[%s5] sm:$0x1]
  %v389 = vlaneseq
  %v390 = vshrl.u32 %v389, 7
  %v391 = vsub.s32 0, %v390
  %v392 = vrot.slane %v387, %v391
  %v398 = vunpack.c.l.b16 %v383
  %v399 = vunpack.c.l.b16 %v384
  %v400 = vunpack.c.l.b16 %v385
  %v401 = vunpack.c.l.b16 %v386
  %v402 = vpack.c.b16 %v399, %v398
  %v403 = vpack.c.b16 %v401, %v400
  %v407 = vsel %vm76, %v382, 0
  %409 = vmatprep.subr.bf16.mxu0 0
  %410 = vmatpush1.bf16.msra.mxu0 %v402
  %411 = vmatprep.subr.bf16.mxu0 0
  %412 = vmatpush1.bf16.msra.mxu0 %v403
  %413 = vmatprep.subr.bf16.mxu0 0
  %414 = vmatpush1.bf16.msra.mxu0 0
  %415 = vmatprep.subr.bf16.mxu0 0
  %416 = vmatpush1.bf16.msra.mxu0 0
  %417 = vmatprep.subr.bf16.mxu0 0
  %418 = vmatpush1.bf16.msra.mxu0 0
  %419 = vmatprep.subr.bf16.mxu0 0
  %420 = vmatpush1.bf16.msra.mxu0 0
  %421 = vmatprep.subr.bf16.mxu0 0
  %422 = vmatpush1.bf16.msra.mxu0 0
  %423 = vmatprep.subr.bf16.mxu0 0
  %424 = vmatpush1.bf16.msra.mxu0 0
  %425 = vmatprep.subr.bf16.mxu0 0
  %426 = vmatpush1.bf16.msra.mxu0 0
  %427 = vmatprep.subr.bf16.mxu0 0
  %428 = vmatpush1.bf16.msra.mxu0 0
  %429 = vmatprep.subr.bf16.mxu0 0
  %430 = vmatpush1.bf16.msra.mxu0 0
  %431 = vmatprep.subr.bf16.mxu0 0
  %432 = vmatpush1.bf16.msra.mxu0 0
  %433 = vmatprep.subr.bf16.mxu0 0
  %434 = vmatpush1.bf16.msra.mxu0 0
  %435 = vmatprep.subr.bf16.mxu0 0
  %436 = vmatpush1.bf16.msra.mxu0 0
  %437 = vmatprep.subr.bf16.mxu0 0
  %438 = vmatpush1.bf16.msra.mxu0 0
  %439 = vmatprep.subr.bf16.mxu0 0
  %440 = vmatpush1.bf16.msra.mxu0 0
  %441 = vmatprep.mubr.bf16.mxu0 0
  %442 = vmatmul.mubr.bf16.gmra.mrb[0].mxu0 %v407
  %v443 = vpop.f32.mrb[0].mxu0
  %v444 = vadd.f32 %v392, %v443
  %v445 = vpop.f32.mrb[0].mxu0
  %v446 = vpop.f32.mrb[0].mxu0
  %v447 = vadd.f32 %v392, %v446
  %v448 = vpop.f32.mrb[0].mxu0
  %449 = vdwg.mxu0
  %v450 = vadd.f32 %v48, %v444
  %v451 = vadd.f32 %v49, %v447
  %v452 = vld [vmem:[%s10] sm:$0x1]
  %v453 = vld [vmem:[%s11] sm:$0x1]
  %v454 = vsel %vm76, %v450, 0.0
  %455 = vadd.xlane.f32.xlu0 %v454
  %v456 = vpop.xlane.xlu0 %455
  %v457 = vsel %vm76, %v451, 0.0
  %458 = vadd.xlane.f32.xlu0 %v457
  %v459 = vpop.xlane.xlu0 %458
  %v460 = vrcp.pop 32.0
  %v461 = vmul.f32 %v456, %v460
  %v462 = vmul.f32 %v459, %v460
  %v463 = vsub.f32 %v450, %v461
  %v464 = vsub.f32 %v451, %v462
  %v465 = vmul.f32 %v463, %v463
  %v466 = vmul.f32 %v464, %v464
  %v467 = vsel %vm76, %v465, 0.0
  %468 = vadd.xlane.f32.xlu0 %v467
  %v469 = vpop.xlane.xlu0 %468
  %v470 = vsel %vm76, %v466, 0.0
  %471 = vadd.xlane.f32.xlu0 %v470
  %v472 = vpop.xlane.xlu0 %471
  %v473 = vmul.f32 %v469, %v460
  %v474 = vmul.f32 %v472, %v460
  %v475 = vadd.f32 %v473, 1e-05
  %v476 = vadd.f32 %v474, 1e-05
  %v477 = vrsqrt.pop %v475
  %v478 = vrsqrt.pop %v476
  %v479 = vmul.f32 %v463, %v477
  %v480 = vmul.f32 %v464, %v478
  %v482 = vlaneseq
  %v483 = vshrl.u32 %v482, 7
  %v484 = vsub.s32 0, %v483
  %v485 = vrot.slane %v452, %v484
  %v487 = vmul.f32 %v479, %v485
  %v488 = vmul.f32 %v480, %v485
  %v490 = vlaneseq
  %v491 = vshrl.u32 %v490, 7
  %v492 = vsub.s32 0, %v491
  %v493 = vrot.slane %v453, %v492
  %v495 = vadd.f32 %v487, %v493
  %v496 = vadd.f32 %v488, %v493
  %v497 = vpack.c.bf16 %v496, %v495
  %v498 = vld [vmem:[%s6] sm:$0xf]
  %v499 = vld [vmem:[%s6 + $0x4] sm:$0xf]
  %v500 = vld [vmem:[%s6 + $0x8] sm:$0xf]
  %v501 = vld [vmem:[%s6 + $0xc] sm:$0xf]
  %v502 = vld [vmem:[%s7] sm:$0x1]
  %v504 = vlaneseq
  %v505 = vshrl.u32 %v504, 7
  %v506 = vsub.s32 0, %v505
  %v507 = vrot.slane %v502, %v506
  %v513 = vunpack.c.l.b16 %v498
  %v514 = vunpack.c.l.b16 %v499
  %v515 = vunpack.c.l.b16 %v500
  %v516 = vunpack.c.l.b16 %v501
  %v517 = vpack.c.b16 %v514, %v513
  %v518 = vpack.c.b16 %v516, %v515
  %v522 = vsel %vm76, %v497, 0
  %524 = vmatprep.subr.bf16.mxu0 0
  %525 = vmatpush1.bf16.msra.mxu0 %v517
  %526 = vmatprep.subr.bf16.mxu0 0
  %527 = vmatpush1.bf16.msra.mxu0 %v518
  %528 = vmatprep.subr.bf16.mxu0 0
  %529 = vmatpush1.bf16.msra.mxu0 0
  %530 = vmatprep.subr.bf16.mxu0 0
  %531 = vmatpush1.bf16.msra.mxu0 0
  %532 = vmatprep.subr.bf16.mxu0 0
  %533 = vmatpush1.bf16.msra.mxu0 0
  %534 = vmatprep.subr.bf16.mxu0 0
  %535 = vmatpush1.bf16.msra.mxu0 0
  %536 = vmatprep.subr.bf16.mxu0 0
  %537 = vmatpush1.bf16.msra.mxu0 0
  %538 = vmatprep.subr.bf16.mxu0 0
  %539 = vmatpush1.bf16.msra.mxu0 0
  %540 = vmatprep.subr.bf16.mxu0 0
  %541 = vmatpush1.bf16.msra.mxu0 0
  %542 = vmatprep.subr.bf16.mxu0 0
  %543 = vmatpush1.bf16.msra.mxu0 0
  %544 = vmatprep.subr.bf16.mxu0 0
  %545 = vmatpush1.bf16.msra.mxu0 0
  %546 = vmatprep.subr.bf16.mxu0 0
  %547 = vmatpush1.bf16.msra.mxu0 0
  %548 = vmatprep.subr.bf16.mxu0 0
  %549 = vmatpush1.bf16.msra.mxu0 0
  %550 = vmatprep.subr.bf16.mxu0 0
  %551 = vmatpush1.bf16.msra.mxu0 0
  %552 = vmatprep.subr.bf16.mxu0 0
  %553 = vmatpush1.bf16.msra.mxu0 0
  %554 = vmatprep.subr.bf16.mxu0 0
  %555 = vmatpush1.bf16.msra.mxu0 0
  %556 = vmatprep.mubr.bf16.mxu0 0
  %557 = vmatmul.mubr.bf16.gmra.mrb[0].mxu0 %v522
  %v558 = vpop.f32.mrb[0].mxu0
  %v559 = vadd.f32 %v507, %v558
  %v560 = vpop.f32.mrb[0].mxu0
  %v561 = vpop.f32.mrb[0].mxu0
  %v562 = vadd.f32 %v507, %v561
  %v563 = vpop.f32.mrb[0].mxu0
  %564 = vdwg.mxu0
  %v565 = vmax.f32 %v559, 0.0
  %v566 = vmax.f32 %v562, 0.0
  %v567 = vpack.c.bf16 %v566, %v565
  %v568 = vld [vmem:[%s8] sm:$0xf]
  %v569 = vld [vmem:[%s8 + $0x4] sm:$0xf]
  %v570 = vld [vmem:[%s8 + $0x8] sm:$0xf]
  %v571 = vld [vmem:[%s8 + $0xc] sm:$0xf]
  %v572 = vld [vmem:[%s8 + $0x10] sm:$0xf]
  %v573 = vld [vmem:[%s8 + $0x14] sm:$0xf]
  %v574 = vld [vmem:[%s8 + $0x18] sm:$0xf]
  %v575 = vld [vmem:[%s8 + $0x1c] sm:$0xf]
  %v576 = vld [vmem:[%s8 + $0x20] sm:$0xf]
  %v577 = vld [vmem:[%s8 + $0x24] sm:$0xf]
  %v578 = vld [vmem:[%s8 + $0x28] sm:$0xf]
  %v579 = vld [vmem:[%s8 + $0x2c] sm:$0xf]
  %v580 = vld [vmem:[%s8 + $0x30] sm:$0xf]
  %v581 = vld [vmem:[%s8 + $0x34] sm:$0xf]
  %v582 = vld [vmem:[%s8 + $0x38] sm:$0xf]
  %v583 = vld [vmem:[%s8 + $0x3c] sm:$0xf]
  %v584 = vld [vmem:[%s9] sm:$0x1]
  %v586 = vlaneseq
  %v587 = vshrl.u32 %v586, 7
  %v588 = vsub.s32 0, %v587
  %v589 = vrot.slane %v584, %v588
  %v607 = vunpack.c.l.b16 %v568
  %v608 = vunpack.c.l.b16 %v569
  %v609 = vunpack.c.l.b16 %v570
  %v610 = vunpack.c.l.b16 %v571
  %v611 = vunpack.c.l.b16 %v572
  %v612 = vunpack.c.l.b16 %v573
  %v613 = vunpack.c.l.b16 %v574
  %v614 = vunpack.c.l.b16 %v575
  %v615 = vunpack.c.l.b16 %v576
  %v616 = vunpack.c.l.b16 %v577
  %v617 = vunpack.c.l.b16 %v578
  %v618 = vunpack.c.l.b16 %v579
  %v619 = vunpack.c.l.b16 %v580
  %v620 = vunpack.c.l.b16 %v581
  %v621 = vunpack.c.l.b16 %v582
  %v622 = vunpack.c.l.b16 %v583
  %v623 = vpack.c.b16 %v608, %v607
  %v624 = vpack.c.b16 %v610, %v609
  %v625 = vpack.c.b16 %v612, %v611
  %v626 = vpack.c.b16 %v614, %v613
  %v627 = vpack.c.b16 %v616, %v615
  %v628 = vpack.c.b16 %v618, %v617
  %v629 = vpack.c.b16 %v620, %v619
  %v630 = vpack.c.b16 %v622, %v621
  %639 = vmatprep.subr.bf16.mxu0 0
  %640 = vmatpush1.bf16.msra.mxu0 %v623
  %641 = vmatprep.subr.bf16.mxu0 0
  %642 = vmatpush1.bf16.msra.mxu0 %v624
  %643 = vmatprep.subr.bf16.mxu0 0
  %644 = vmatpush1.bf16.msra.mxu0 %v625
  %645 = vmatprep.subr.bf16.mxu0 0
  %646 = vmatpush1.bf16.msra.mxu0 %v626
  %647 = vmatprep.subr.bf16.mxu0 0
  %648 = vmatpush1.bf16.msra.mxu0 %v627
  %649 = vmatprep.subr.bf16.mxu0 0
  %650 = vmatpush1.bf16.msra.mxu0 %v628
  %651 = vmatprep.subr.bf16.mxu0 0
  %652 = vmatpush1.bf16.msra.mxu0 %v629
  %653 = vmatprep.subr.bf16.mxu0 0
  %654 = vmatpush1.bf16.msra.mxu0 %v630
  %655 = vmatprep.subr.bf16.mxu0 0
  %656 = vmatpush1.bf16.msra.mxu0 0
  %657 = vmatprep.subr.bf16.mxu0 0
  %658 = vmatpush1.bf16.msra.mxu0 0
  %659 = vmatprep.subr.bf16.mxu0 0
  %660 = vmatpush1.bf16.msra.mxu0 0
  %661 = vmatprep.subr.bf16.mxu0 0
  %662 = vmatpush1.bf16.msra.mxu0 0
  %663 = vmatprep.subr.bf16.mxu0 0
  %664 = vmatpush1.bf16.msra.mxu0 0
  %665 = vmatprep.subr.bf16.mxu0 0
  %666 = vmatpush1.bf16.msra.mxu0 0
  %667 = vmatprep.subr.bf16.mxu0 0
  %668 = vmatpush1.bf16.msra.mxu0 0
  %669 = vmatprep.subr.bf16.mxu0 0
  %670 = vmatpush1.bf16.msra.mxu0 0
  %671 = vmatprep.mubr.bf16.mxu0 0
  %672 = vmatmul.mubr.bf16.gmra.mrb[0].mxu0 %v567
  %v673 = vpop.f32.mrb[0].mxu0
  %v674 = vadd.f32 %v589, %v673
  %v675 = vpop.f32.mrb[0].mxu0
  %v676 = vpop.f32.mrb[0].mxu0
  %v677 = vadd.f32 %v589, %v676
  %v678 = vpop.f32.mrb[0].mxu0
  %679 = vdwg.mxu0
  %v680 = vadd.f32 %v495, %v674
  %v681 = vadd.f32 %v496, %v677
  %v682 = vld [vmem:[%s12] sm:$0x1]
  %v683 = vld [vmem:[%s13] sm:$0x1]
  %v684 = vsel %vm76, %v680, 0.0
  %685 = vadd.xlane.f32.xlu0 %v684
  %v686 = vpop.xlane.xlu0 %685
  %v687 = vsel %vm76, %v681, 0.0
  %688 = vadd.xlane.f32.xlu0 %v687
  %v689 = vpop.xlane.xlu0 %688
  %v690 = vmul.f32 %v686, %v460
  %v691 = vmul.f32 %v689, %v460
  %v692 = vsub.f32 %v680, %v690
  %v693 = vsub.f32 %v681, %v691
  %v694 = vmul.f32 %v692, %v692
  %v695 = vmul.f32 %v693, %v693
  %v696 = vsel %vm76, %v694, 0.0
  %697 = vadd.xlane.f32.xlu0 %v696
  %v698 = vpop.xlane.xlu0 %697
  %v699 = vsel %vm76, %v695, 0.0
  %700 = vadd.xlane.f32.xlu0 %v699
  %v701 = vpop.xlane.xlu0 %700
  %v702 = vmul.f32 %v698, %v460
  %v703 = vmul.f32 %v701, %v460
  %v704 = vadd.f32 %v702, 1e-05
  %v705 = vadd.f32 %v703, 1e-05
  %v706 = vrsqrt.pop %v704
  %v707 = vrsqrt.pop %v705
  %v708 = vmul.f32 %v692, %v706
  %v709 = vmul.f32 %v693, %v707
  %v711 = vlaneseq
  %v712 = vshrl.u32 %v711, 7
  %v713 = vsub.s32 0, %v712
  %v714 = vrot.slane %v682, %v713
  %v716 = vmul.f32 %v708, %v714
  %v717 = vmul.f32 %v709, %v714
  %v719 = vlaneseq
  %v720 = vshrl.u32 %v719, 7
  %v721 = vsub.s32 0, %v720
  %v722 = vrot.slane %v683, %v721
  %v724 = vadd.f32 %v716, %v722
  %v725 = vadd.f32 %v717, %v722
  %v726 = vpack.c.bf16 %v725, %v724
  %v728 = vunpack.c.l.b16 %v726
  %v729 = vunpack.c.h.b16 %v726
  %v730 = vpack.c.b16 %v728, %v728
  %v731 = vpack.c.b16 %v729, %v729
  %vm734 = vcmask 257024
  %735 = vst.msk [vmem:[%s14] sm:$0xf] %vm734, %v730
  %736 = vst.msk [vmem:[%s14 + $0x4] sm:$0xf] %vm734, %v731
  // Predicated region
  $region58: #{forward.6} parent=0 // pred_check
    _
  $region59: #{forward.6} parent=0 // pred_check_branch
    %738 = sbr.rel (0) target = $region61
  $region60: #{forward.6} parent=0 // pred_region
    _
  $region61: #{forward.6} parent=0 // pred_fallthru
    _
  // Predicated region
  $region62: #{forward.6} parent=0 // pred_check
    _
  $region63: #{forward.6} parent=0 // pred_check_branch
    %740 = sbr.rel (0) target = $region65
  $region64: #{forward.6} parent=0 // pred_region
    _
  $region65: #{forward.6} parent=0 // pred_fallthru
    _

// kernel: forward.7
$region0: #{forward.7}
  #allocation0 [shape = 'u32[]', space=smem, size = 0x4, offset = 0x4, fixed_abs, tag = 'smem constant byte address 0x4 - core index']
  #allocation1 [shape = 'u32[144,128]{1,0:T(1,128)}', space=vmem, size = 0x12000, scoped, tag = 'internal scratch']
  %s0 = inlined_call_operand.vmem [shape: bf16[8,64], index: 0, kind: input, shape index: {}]
  %s1 = inlined_call_operand.vmem [shape: f32[8,8], index: 1, kind: input, shape index: {}]
  %s2 = inlined_call_operand.vmem [shape: f32[8,1], index: 2, kind: input, shape index: {}]
  %s3 = inlined_call_operand.vmem [shape: f32[8,1], index: 3, kind: input, shape index: {}]
  %s4 = inlined_call_operand.vmem [shape: bf16[96,64], index: 4, kind: input, shape index: {}]
  %s5 = inlined_call_operand.vmem [shape: f32[1,64], index: 5, kind: input, shape index: {}]
  %s6 = inlined_call_operand.vmem [shape: f32[1,64], index: 6, kind: input, shape index: {}]
  %s7 = inlined_call_operand.vmem [shape: f32[1,64], index: 7, kind: input, shape index: {}]
  %s8 = inlined_call_operand.vmem [shape: f32[8,64], index: 8, kind: input, shape index: {}]
  %s9 = inlined_call_operand.vmem [shape: bf16[64,192], index: 9, kind: input, shape index: {}]
  %s10 = inlined_call_operand.vmem [shape: f32[1,192], index: 10, kind: input, shape index: {}]
  %s11 = inlined_call_operand.vmem [shape: bf16[64,64], index: 11, kind: input, shape index: {}]
  %s12 = inlined_call_operand.vmem [shape: f32[1,64], index: 12, kind: input, shape index: {}]
  %s13 = inlined_call_operand.vmem [shape: bf16[64,256], index: 13, kind: input, shape index: {}]
  %s14 = inlined_call_operand.vmem [shape: f32[1,256], index: 14, kind: input, shape index: {}]
  %s15 = inlined_call_operand.vmem [shape: bf16[256,64], index: 15, kind: input, shape index: {}]
  %s16 = inlined_call_operand.vmem [shape: f32[1,64], index: 16, kind: input, shape index: {}]
  %s17 = inlined_call_operand.hbm [shape: f32[1,64], index: 17, kind: input, shape index: {}]
  %s18 = inlined_call_operand.hbm [shape: f32[1,64], index: 18, kind: input, shape index: {}]
  %s19 = inlined_call_operand.hbm [shape: f32[1,64], index: 19, kind: input, shape index: {}]
  %s20 = inlined_call_operand.hbm [shape: f32[1,64], index: 20, kind: input, shape index: {}]
  %s21 = inlined_call_operand.vmem [shape: bf16[8,64], index: 21, kind: output, shape index: {}]
  %s22 = sld [smem:[#allocation0]]
  $region110: #{forward.7} parent=0
    _
  %s24 = ssub.s32 1, %s22
  %s25 = scalar_select 0, %s24, %s22
  $region1: #{forward.7} parent=0
    #allocation2 [shape = 'u8[512]{0}', space=vmem, size = 0x400, scoped, tag = 'input window, operand 17, single buffered']
    #allocation3 [shape = 's32[1]{0}', space=sflag, size = 0x4, scoped, tag = 'scoped memory for forward.7']
    #allocation4 [shape = 'u8[512]{0}', space=vmem, size = 0x400, scoped, tag = 'input window, operand 18, single buffered']
    #allocation5 [shape = 's32[1]{0}', space=sflag, size = 0x4, scoped, tag = 'scoped memory for forward.7']
    #allocation6 [shape = 'u8[512]{0}', space=vmem, size = 0x400, scoped, tag = 'input window, operand 19, single buffered']
    #allocation7 [shape = 'u8[512]{0}', space=vmem, size = 0x400, scoped, tag = 'input window, operand 20, single buffered']
    #allocation8 [shape = 's32[1]{0}', space=sflag, size = 0x4, scoped, tag = 'scoped memory for forward.7']
    %26 = vsyncpa [#allocation3], 0
    %27 = vsyncpa [#allocation5], 0
    %28 = vsyncpa [#allocation8], 0
    // Predicated region
    $region2: #{forward.7} parent=1 // pred_check
      _
    $region3: #{forward.7} parent=1 // pred_check_branch
      %30 = sbr.rel (0) target = $region5
    $region4: #{forward.7} parent=1 // pred_region
      _
    $region5: #{forward.7} parent=1 // pred_fallthru
      _
    // Predicated region
    $region6: #{forward.7} parent=1 // pred_check
      _
    $region7: #{forward.7} parent=1 // pred_check_branch
      %32 = sbr.rel (0) target = $region9
    $region8: #{forward.7} parent=1 // pred_region
      _
    $region9: #{forward.7} parent=1 // pred_fallthru
      _
    // Predicated region
    $region10: #{forward.7} parent=1 // pred_check
      _
    $region11: #{forward.7} parent=1 // pred_check_branch
      %34 = sbr.rel (0) target = $region13
    $region12: #{forward.7} parent=1 // pred_region
      _
    $region13: #{forward.7} parent=1 // pred_fallthru
      _
    // Predicated region
    $region14: #{forward.7} parent=1 // pred_check
      _
    $region15: #{forward.7} parent=1 // pred_check_branch
      %36 = sbr.rel (0) target = $region17
    $region16: #{forward.7} parent=1 // pred_region
      _
    $region17: #{forward.7} parent=1 // pred_fallthru
      _
    // Predicated region
    $region18: #{forward.7} parent=1 // pred_check
      _
    $region19: #{forward.7} parent=1 // pred_check_branch
      %38 = sbr.rel (0) target = $region21
    $region20: #{forward.7} parent=1 // pred_region
      _
    $region21: #{forward.7} parent=1 // pred_fallthru
      _
    // Predicated region
    $region22: #{forward.7} parent=1 // pred_check
      _
    $region23: #{forward.7} parent=1 // pred_check_branch
      %40 = sbr.rel (0) target = $region25
    $region24: #{forward.7} parent=1 // pred_region
      _
    $region25: #{forward.7} parent=1 // pred_fallthru
      _
    // Predicated region
    $region26: #{forward.7} parent=1 // pred_check
      _
    $region27: #{forward.7} parent=1 // pred_check_branch
      %42 = sbr.rel (0) target = $region29
    $region28: #{forward.7} parent=1 // pred_region
      _
    $region29: #{forward.7} parent=1 // pred_fallthru
      _
    // Predicated region
    $region30: #{forward.7} parent=1 // pred_check
      _
    $region31: #{forward.7} parent=1 // pred_check_branch
      %44 = sbr.rel (0) target = $region33
    $region32: #{forward.7} parent=1 // pred_region
      _
    $region33: #{forward.7} parent=1 // pred_fallthru
      _
    // Predicated region
    $region34: #{forward.7} parent=1 // pred_check
      _
    $region35: #{forward.7} parent=1 // pred_check_branch
      %46 = sbr.rel (0) target = $region37
    $region36: #{forward.7} parent=1 // pred_region
      _
    $region37: #{forward.7} parent=1 // pred_fallthru
      _
    // Predicated region
    $region38: #{forward.7} parent=1 // pred_check
      _
    $region39: #{forward.7} parent=1 // pred_check_branch
      %48 = sbr.rel (0) target = $region41
    $region40: #{forward.7} parent=1 // pred_region
      _
    $region41: #{forward.7} parent=1 // pred_fallthru
      _
    // Predicated region
    $region42: #{forward.7} parent=1 // pred_check
      _
    $region43: #{forward.7} parent=1 // pred_check_branch
      %50 = sbr.rel (0) target = $region45
    $region44: #{forward.7} parent=1 // pred_region
      _
    $region45: #{forward.7} parent=1 // pred_fallthru
      _
    // Predicated region
    $region46: #{forward.7} parent=1 // pred_check
      _
    $region47: #{forward.7} parent=1 // pred_check_branch
      %52 = sbr.rel (0) target = $region49
    $region48: #{forward.7} parent=1 // pred_region
      _
    $region49: #{forward.7} parent=1 // pred_fallthru
      _
    // Predicated region
    $region50: #{forward.7} parent=1 // pred_check
      _
    $region51: #{forward.7} parent=1 // pred_check_branch
      %54 = sbr.rel (0) target = $region53
    $region52: #{forward.7} parent=1 // pred_region
      _
    $region53: #{forward.7} parent=1 // pred_fallthru
      _
    // Predicated region
    $region54: #{forward.7} parent=1 // pred_check
      _
    $region55: #{forward.7} parent=1 // pred_check_branch
      %56 = sbr.rel (0) target = $region57
    $region56: #{forward.7} parent=1 // pred_region
      _
    $region57: #{forward.7} parent=1 // pred_fallthru
      _
    // Predicated region
    $region58: #{forward.7} parent=1 // pred_check
      _
    $region59: #{forward.7} parent=1 // pred_check_branch
      %58 = sbr.rel (0) target = $region61
    $region60: #{forward.7} parent=1 // pred_region
      _
    $region61: #{forward.7} parent=1 // pred_fallthru
      _
    // Predicated region
    $region62: #{forward.7} parent=1 // pred_check
      _
    $region63: #{forward.7} parent=1 // pred_check_branch
      %60 = sbr.rel (0) target = $region65
    $region64: #{forward.7} parent=1 // pred_region
      _
    $region65: #{forward.7} parent=1 // pred_fallthru
      _
    // Predicated region
    $region66: #{forward.7} parent=1 // pred_check
      _
    $region67: #{forward.7} parent=1 // pred_check_branch
      %62 = sbr.rel (0) target = $region69
    $region68: #{forward.7} parent=1 // pred_region
      _
    $region69: #{forward.7} parent=1 // pred_fallthru
      _
    // Predicated region
    $region70: #{forward.7} parent=1 // pred_check
      _
    $region71: #{forward.7} parent=1 // pred_check_branch
      %64 = sbr.rel (0) target = $region73
    $region72: #{forward.7} parent=1 // pred_region
      %s66 = ssub.s32 16, 16
      %67 = vsyncadd [#allocation3], %s66
      %s69 = sshll.u32 [#allocation2], 4
      %s70 = int_to_ptr.vmem [resolvable:$true] %s69
      %72 = dma.hbm_to_vmem [thread:$0]  %s17, 16, %s70, [#allocation3]
    $region73: #{forward.7} parent=1 // pred_fallthru
      _
    // Predicated region
    $region74: #{forward.7} parent=1 // pred_check
      _
    $region75: #{forward.7} parent=1 // pred_check_branch
      %74 = sbr.rel (0) target = $region77
    $region76: #{forward.7} parent=1 // pred_region
      %s76 = ssub.s32 16, 16
      %77 = vsyncadd [#allocation5], %s76
      %s79 = sshll.u32 [#allocation4], 4
      %s80 = int_to_ptr.vmem [resolvable:$true] %s79
      %82 = dma.hbm_to_vmem [thread:$0]  %s18, 16, %s80, [#allocation5]
    $region77: #{forward.7} parent=1 // pred_fallthru
      _
    // Predicated region
    $region78: #{forward.7} parent=1 // pred_check
      _
    $region79: #{forward.7} parent=1 // pred_check_branch
      %84 = sbr.rel (0) target = $region81
    $region80: #{forward.7} parent=1 // pred_region
      %s86 = ssub.s32 16, 16
      %87 = vsyncadd [#allocation5], %s86
      %s89 = sshll.u32 [#allocation6], 4
      %s90 = int_to_ptr.vmem [resolvable:$true] %s89
      %92 = dma.hbm_to_vmem [thread:$0]  %s19, 16, %s90, [#allocation5]
    $region81: #{forward.7} parent=1 // pred_fallthru
      _
    // Predicated region
    $region82: #{forward.7} parent=1 // pred_check
      _
    $region83: #{forward.7} parent=1 // pred_check_branch
      %94 = sbr.rel (0) target = $region85
    $region84: #{forward.7} parent=1 // pred_region
      %s96 = ssub.s32 16, 16
      %97 = vsyncadd [#allocation8], %s96
      %s99 = sshll.u32 [#allocation7], 4
      %s100 = int_to_ptr.vmem [resolvable:$true] %s99
      %102 = dma.hbm_to_vmem [thread:$0]  %s20, 16, %s100, [#allocation8]
    $region85: #{forward.7} parent=1 // pred_fallthru
      _
    // Predicated region
    $region86: #{forward.7} parent=1 // pred_check
      _
    $region87: #{forward.7} parent=1 // pred_check_branch
      %104 = sbr.rel (0) target = $region89
    $region88: #{forward.7} parent=1 // pred_region
      %105 = dma.done [#allocation3], 16
    $region89: #{forward.7} parent=1 // pred_fallthru
      _
    // Predicated region
    $region90: #{forward.7} parent=1 // pred_check
      _
    $region91: #{forward.7} parent=1 // pred_check_branch
      %107 = sbr.rel (0) target = $region93
    $region92: #{forward.7} parent=1 // pred_region
      %108 = dma.done [#allocation5], 16
    $region93: #{forward.7} parent=1 // pred_fallthru
      _
    // Predicated region
    $region94: #{forward.7} parent=1 // pred_check
      _
    $region95: #{forward.7} parent=1 // pred_check_branch
      %110 = sbr.rel (0) target = $region97
    $region96: #{forward.7} parent=1 // pred_region
      %111 = dma.done [#allocation5], 16
    $region97: #{forward.7} parent=1 // pred_fallthru
      _
    // Predicated region
    $region98: #{forward.7} parent=1 // pred_check
      _
    $region99: #{forward.7} parent=1 // pred_check_branch
      %113 = sbr.rel (0) target = $region101
    $region100: #{forward.7} parent=1 // pred_region
      %114 = dma.done [#allocation8], 16
    $region101: #{forward.7} parent=1 // pred_fallthru
      _
    %v116 = vld [vmem:[%s0] sm:$0xf]
    %v117 = vunpack.c.l.bf16 %v116
    %119 = vrot.lane.b32.xlu0 %v117, 96
    %v120 = vpop.permute.xlu0 %119
    %v122 = vmax.f32 %v117, %v120
    %v124 = vrot.slane %v122, 7
    %vm126 = vcmask 1040384
    %v127 = vsel %vm126, 0.0, %v124
    %v128 = vld [vmem:[%s2] sm:$0xff]
    %130 = vset.pattern.permute.xlu0 0
    %131 = vperm.xlu0 %130, %v128
    %v132 = vpop.permute.xlu0 %131
    %v134 = vmul.f32 %v127, %v132
    %v135 = vrot.slane %v122, 1
    %vm137 = vcmask 1046528
    %v138 = vsel %vm137, %v135, 0.0
    %v139 = vld [vmem:[%s3] sm:$0xff]
    %141 = vset.pattern.permute.xlu0 0
    %142 = vperm.xlu0 %141, %v139
    %v143 = vpop.permute.xlu0 %142
    %v145 = vmul.f32 %v138, %v143
    %146 = vrot.lane.b32.xlu0 %v122, 32
    %v147 = vpop.permute.xlu0 %146
    %150 = vrot.lane.b32.xlu0 %v145, 64
    %v151 = vpop.permute.xlu0 %150
    %vm153 = vcmask 261120
    %v154 = vsel %vm153, %v134, %v147
    %vm155 = vcmask 523264
    %v156 = vsel %vm155, %v154, %v151
    %v157 = vpack.c.bf16 %v156, %v156
    %v158 = vld [vmem:[%s4] sm:$0xf]
    %v159 = vld [vmem:[%s4 + $0x4] sm:$0xf]
    %v160 = vld [vmem:[%s4 + $0x8] sm:$0xf]
    %v161 = vld [vmem:[%s4 + $0xc] sm:$0xf]
    %v162 = vld [vmem:[%s4 + $0x10] sm:$0xf]
    %v163 = vld [vmem:[%s4 + $0x14] sm:$0xf]
    %v164 = vld [vmem:[%s4 + $0x18] sm:$0xf]
    %v165 = vld [vmem:[%s4 + $0x1c] sm:$0xf]
    %v166 = vld [vmem:[%s4 + $0x20] sm:$0xf]
    %v167 = vld [vmem:[%s4 + $0x24] sm:$0xf]
    %v168 = vld [vmem:[%s4 + $0x28] sm:$0xf]
    %v169 = vld [vmem:[%s4 + $0x2c] sm:$0xf]
    %v170 = vld [vmem:[%s5] sm:$0x1]
    %v172 = vlaneseq
    %v173 = vshrl.u32 %v172, 7
    %v174 = vsub.s32 0, %v173
    %v175 = vrot.slane %v170, %v174
    %v189 = vunpack.c.l.b16 %v158
    %v190 = vunpack.c.l.b16 %v159
    %v191 = vunpack.c.l.b16 %v160
    %v192 = vunpack.c.l.b16 %v161
    %v193 = vunpack.c.l.b16 %v162
    %v194 = vunpack.c.l.b16 %v163
    %v195 = vunpack.c.l.b16 %v164
    %v196 = vunpack.c.l.b16 %v165
    %v197 = vunpack.c.l.b16 %v166
    %v198 = vunpack.c.l.b16 %v167
    %v199 = vunpack.c.l.b16 %v168
    %v200 = vunpack.c.l.b16 %v169
    %v201 = vpack.c.b16 %v190, %v189
    %v202 = vpack.c.b16 %v192, %v191
    %v203 = vpack.c.b16 %v194, %v193
    %v204 = vpack.c.b16 %v196, %v195
    %v205 = vpack.c.b16 %v198, %v197
    %v206 = vpack.c.b16 %v200, %v199
    %vm213 = vcmask 785408
    %v215 = vsel %vm213, %v157, 0
    %217 = vmatprep.subr.bf16.mxu0 0
    %218 = vmatpush1.bf16.msra.mxu0 %v201
    %219 = vmatprep.subr.bf16.mxu0 0
    %220 = vmatpush1.bf16.msra.mxu0 %v202
    %221 = vmatprep.subr.bf16.mxu0 0
    %222 = vmatpush1.bf16.msra.mxu0 %v203
    %223 = vmatprep.subr.bf16.mxu0 0
    %224 = vmatpush1.bf16.msra.mxu0 %v204
    %225 = vmatprep.subr.bf16.mxu0 0
    %226 = vmatpush1.bf16.msra.mxu0 %v205
    %227 = vmatprep.subr.bf16.mxu0 0
    %228 = vmatpush1.bf16.msra.mxu0 %v206
    %229 = vmatprep.subr.bf16.mxu0 0
    %230 = vmatpush1.bf16.msra.mxu0 0
    %231 = vmatprep.subr.bf16.mxu0 0
    %232 = vmatpush1.bf16.msra.mxu0 0
    %233 = vmatprep.subr.bf16.mxu0 0
    %234 = vmatpush1.bf16.msra.mxu0 0
    %235 = vmatprep.subr.bf16.mxu0 0
    %236 = vmatpush1.bf16.msra.mxu0 0
    %237 = vmatprep.subr.bf16.mxu0 0
    %238 = vmatpush1.bf16.msra.mxu0 0
    %239 = vmatprep.subr.bf16.mxu0 0
    %240 = vmatpush1.bf16.msra.mxu0 0
    %241 = vmatprep.subr.bf16.mxu0 0
    %242 = vmatpush1.bf16.msra.mxu0 0
    %243 = vmatprep.subr.bf16.mxu0 0
    %244 = vmatpush1.bf16.msra.mxu0 0
    %245 = vmatprep.subr.bf16.mxu0 0
    %246 = vmatpush1.bf16.msra.mxu0 0
    %247 = vmatprep.subr.bf16.mxu0 0
    %248 = vmatpush1.bf16.msra.mxu0 0
    %249 = vmatprep.mubr.bf16.mxu0 0
    %250 = vmatmul.mubr.bf16.gmra.mrb[0].mxu0 %v215
    %v251 = vpop.f32.mrb[0].mxu0
    %v252 = vadd.f32 %v175, %v251
    %v253 = vpop.f32.mrb[0].mxu0
    %v254 = vpop.f32.mrb[0].mxu0
    %v255 = vpop.f32.mrb[0].mxu0
    %256 = vdwg.mxu0
    %v257 = vmax.f32 %v252, 0.0
    %v258 = vld [vmem:[%s6] sm:$0x1]
    %v259 = vld [vmem:[%s7] sm:$0x1]
    %v260 = vsel %vm155, %v257, 0.0
    %261 = vadd.xlane.f32.xlu0 %v260
    %v262 = vpop.xlane.xlu0 %261
    %v263 = vrcp.pop 64.0
    %v264 = vmul.f32 %v262, %v263
    %v265 = vsub.f32 %v257, %v264
    %v266 = vmul.f32 %v265, %v265
    %v267 = vsel %vm155, %v266, 0.0
    %268 = vadd.xlane.f32.xlu0 %v267
    %v269 = vpop.xlane.xlu0 %268
    %v270 = vmul.f32 %v269, %v263
    %v271 = vadd.f32 %v270, 1e-05
    %v272 = vrsqrt.pop %v271
    %v273 = vmul.f32 %v265, %v272
    %v275 = vlaneseq
    %v276 = vshrl.u32 %v275, 7
    %v277 = vsub.s32 0, %v276
    %v278 = vrot.slane %v258, %v277
    %v280 = vmul.f32 %v273, %v278
    %v282 = vlaneseq
    %v283 = vshrl.u32 %v282, 7
    %v284 = vsub.s32 0, %v283
    %v285 = vrot.slane %v259, %v284
    %v287 = vadd.f32 %v280, %v285
    %v288 = vld [vmem:[%s8] sm:$0xff]
    %v289 = vadd.f32 %v287, %v288
    %v290 = vld [vmem:[%s1] sm:$0xff]
    %v291 = vpack.c.bf16 %v289, %v289
    %v292 = vld [vmem:[%s9] sm:$0xff]
    %v293 = vld [vmem:[%s9 + $0x8] sm:$0xff]
    %v294 = vld [vmem:[%s9 + $0x10] sm:$0xff]
    %v295 = vld [vmem:[%s9 + $0x18] sm:$0xff]
    %v296 = vld [vmem:[%s9 + $0x20] sm:$0xff]
    %v297 = vld [vmem:[%s9 + $0x28] sm:$0xff]
    %v298 = vld [vmem:[%s9 + $0x30] sm:$0xff]
    %v299 = vld [vmem:[%s9 + $0x38] sm:$0xff]
    %v300 = vld [vmem:[%s10] sm:$0x3]
    %v302 = vlaneseq
    %v303 = vshrl.u32 %v302, 7
    %v304 = vsub.s32 0, %v303
    %v305 = vrot.slane %v300, %v304
    %v306 = vlaneseq
    %v307 = vshrl.u32 %v306, 7
    %v308 = vsub.s32 1, %v307
    %v309 = vrot.slane %v300, %v308
    %v320 = vunpack.c.l.b16 %v292
    %v321 = vunpack.c.h.b16 %v292
    %v322 = vunpack.c.l.b16 %v293
    %v323 = vunpack.c.h.b16 %v293
    %v324 = vunpack.c.l.b16 %v294
    %v325 = vunpack.c.h.b16 %v294
    %v326 = vunpack.c.l.b16 %v295
    %v327 = vunpack.c.h.b16 %v295
    %v328 = vunpack.c.l.b16 %v296
    %v329 = vunpack.c.h.b16 %v296
    %v330 = vunpack.c.l.b16 %v297
    %v331 = vunpack.c.h.b16 %v297
    %v332 = vunpack.c.l.b16 %v298
    %v333 = vunpack.c.h.b16 %v298
    %v334 = vunpack.c.l.b16 %v299
    %v335 = vunpack.c.h.b16 %v299
    %v336 = vpack.c.b16 %v322, %v320
    %v337 = vpack.c.b16 %v323, %v321
    %v338 = vpack.c.b16 %v326, %v324
    %v339 = vpack.c.b16 %v327, %v325
    %v340 = vpack.c.b16 %v330, %v328
    %v341 = vpack.c.b16 %v331, %v329
    %v342 = vpack.c.b16 %v334, %v332
    %v343 = vpack.c.b16 %v335, %v333
    %v353 = vsel %vm155, %v291, 0
    %355 = vmatprep.subr.bf16.mxu0 %v337
    %356 = vmatpush1.bf16.msra.mxu0 %v336
    %357 = vmatprep.subr.bf16.mxu0 %v339
    %358 = vmatpush1.bf16.msra.mxu0 %v338
    %359 = vmatprep.subr.bf16.mxu0 %v341
    %360 = vmatpush1.bf16.msra.mxu0 %v340
    %361 = vmatprep.subr.bf16.mxu0 %v343
    %362 = vmatpush1.bf16.msra.mxu0 %v342
    %363 = vmatprep.subr.bf16.mxu0 0
    %364 = vmatpush1.bf16.msra.mxu0 0
    %365 = vmatprep.subr.bf16.mxu0 0
    %366 = vmatpush1.bf16.msra.mxu0 0
    %367 = vmatprep.subr.bf16.mxu0 0
    %368 = vmatpush1.bf16.msra.mxu0 0
    %369 = vmatprep.subr.bf16.mxu0 0
    %370 = vmatpush1.bf16.msra.mxu0 0
    %371 = vmatprep.subr.bf16.mxu0 0
    %372 = vmatpush1.bf16.msra.mxu0 0
    %373 = vmatprep.subr.bf16.mxu0 0
    %374 = vmatpush1.bf16.msra.mxu0 0
    %375 = vmatprep.subr.bf16.mxu0 0
    %376 = vmatpush1.bf16.msra.mxu0 0
    %377 = vmatprep.subr.bf16.mxu0 0
    %378 = vmatpush1.bf16.msra.mxu0 0
    %379 = vmatprep.subr.bf16.mxu0 0
    %380 = vmatpush1.bf16.msra.mxu0 0
    %381 = vmatprep.subr.bf16.mxu0 0
    %382 = vmatpush1.bf16.msra.mxu0 0
    %383 = vmatprep.subr.bf16.mxu0 0
    %384 = vmatpush1.bf16.msra.mxu0 0
    %385 = vmatprep.subr.bf16.mxu0 0
    %386 = vmatpush1.bf16.msra.mxu0 0
    %387 = vmatprep.mubr.bf16.mxu0 0
    %388 = vmatmul.mubr.bf16.gmra.mrb[0].mxu0 %v353
    %v389 = vpop.f32.mrb[0].mxu0
    %v390 = vadd.f32 %v305, %v389
    %v391 = vpop.f32.mrb[0].mxu0
    %v392 = vadd.f32 %v309, %v391
    %v393 = vpop.f32.mrb[0].mxu0
    %v394 = vpop.f32.mrb[0].mxu0
    %395 = vdwg.mxu0
    %v396 = vpack.c.bf16 %v390, %v390
    %v397 = vpack.c.bf16 %v392, %v392
    %399 = vrot.lane.b32.xlu0 %v396, 64
    %v400 = vpop.permute.xlu0 %399
    %vm401 = vcmask 130048
    %v403 = vsel %vm401, %v396, 0
    %v406 = vsel %vm401, %v400, 0
    %408 = vmatprep.subr.bf16.mxu0 0
    %409 = vmatpush1.bf16.xpose.msra.mxu0 %v406
    %410 = vmatprep.subr.bf16.mxu0 0
    %411 = vmatpush1.bf16.xpose.msra.mxu0 0
    %412 = vmatprep.subr.bf16.mxu0 0
    %413 = vmatpush1.bf16.xpose.msra.mxu0 0
    %414 = vmatprep.subr.bf16.mxu0 0
    %415 = vmatpush1.bf16.xpose.msra.mxu0 0
    %416 = vmatprep.subr.bf16.mxu0 0
    %417 = vmatpush1.bf16.xpose.msra.mxu0 0
    %418 = vmatprep.subr.bf16.mxu0 0
    %419 = vmatpush1.bf16.xpose.msra.mxu0 0
    %420 = vmatprep.subr.bf16.mxu0 0
    %421 = vmatpush1.bf16.xpose.msra.mxu0 0
    %422 = vmatprep.subr.bf16.mxu0 0
    %423 = vmatpush1.bf16.xpose.msra.mxu0 0
    %424 = vmatprep.subr.bf16.mxu0 0
    %425 = vmatpush1.bf16.xpose.msra.mxu0 0
    %426 = vmatprep.subr.bf16.mxu0 0
    %427 = vmatpush1.bf16.xpose.msra.mxu0 0
    %428 = vmatprep.subr.bf16.mxu0 0
    %429 = vmatpush1.bf16.xpose.msra.mxu0 0
    %430 = vmatprep.subr.bf16.mxu0 0
    %431 = vmatpush1.bf16.xpose.msra.mxu0 0
    %432 = vmatprep.subr.bf16.mxu0 0
    %433 = vmatpush1.bf16.xpose.msra.mxu0 0
    %434 = vmatprep.subr.bf16.mxu0 0
    %435 = vmatpush1.bf16.xpose.msra.mxu0 0
    %436 = vmatprep.subr.bf16.mxu0 0
    %437 = vmatpush1.bf16.xpose.msra.mxu0 0
    %438 = vmatprep.subr.bf16.mxu0 0
    %439 = vmatpush1.bf16.xpose.msra.mxu0 0
    %440 = vmatprep.mubr.bf16.mxu0 0
    %441 = vmatmul.mubr.bf16.gmra.mrb[0].mxu0 %v403
    %v442 = vpop.f32.mrb[0].mxu0
    %v443 = vadd.f32 0.0, %v442
    %v444 = vpop.f32.mrb[0].mxu0
    %v445 = vpop.f32.mrb[0].mxu0
    %v446 = vpop.f32.mrb[0].mxu0
    %447 = vdwg.mxu0
    %v448 = vmul.f32 %v443, 0.25
    %v449 = vadd.f32 %v448, %v290
    %vm450 = vcmask 64512
    %v451 = vsel %vm450, %v449, -inf
    %452 = vmax.xlane.f32.xlu0 %v451
    %v453 = vpop.xlane.xlu0 %452
    %v454 = vsub.f32 %v449, %v453
    %v455 = vmul.f32 %v454, 1.442695
    %v456 = vpow.pop %v455
    %v457 = vsel %vm450, %v456, 0.0
    %458 = vadd.xlane.f32.xlu0 %v457
    %v459 = vpop.xlane.xlu0 %458
    %v460 = vrcp.pop %v459
    %v461 = vmul.f32 %v456, %v460
    %v462 = vpack.c.bf16 %v461, %v461
    %v464 = vsel %vm450, %v462, 0
    %vm466 = vcmask 1043456
    %v468 = vsel %vm466, %v397, 0
    %470 = vmatprep.subr.bf16.mxu0 0
    %471 = vmatpush1.bf16.msra.mxu0 %v468
    %472 = vmatprep.subr.bf16.mxu0 0
    %473 = vmatpush1.bf16.msra.mxu0 0
    %474 = vmatprep.subr.bf16.mxu0 0
    %475 = vmatpush1.bf16.msra.mxu0 0
    %476 = vmatprep.subr.bf16.mxu0 0
    %477 = vmatpush1.bf16.msra.mxu0 0
    %478 = vmatprep.subr.bf16.mxu0 0
    %479 = vmatpush1.bf16.msra.mxu0 0
    %480 = vmatprep.subr.bf16.mxu0 0
    %481 = vmatpush1.bf16.msra.mxu0 0
    %482 = vmatprep.subr.bf16.mxu0 0
    %483 = vmatpush1.bf16.msra.mxu0 0
    %484 = vmatprep.subr.bf16.mxu0 0
    %485 = vmatpush1.bf16.msra.mxu0 0
    %486 = vmatprep.subr.bf16.mxu0 0
    %487 = vmatpush1.bf16.msra.mxu0 0
    %488 = vmatprep.subr.bf16.mxu0 0
    %489 = vmatpush1.bf16.msra.mxu0 0
    %490 = vmatprep.subr.bf16.mxu0 0
    %491 = vmatpush1.bf16.msra.mxu0 0
    %492 = vmatprep.subr.bf16.mxu0 0
    %493 = vmatpush1.bf16.msra.mxu0 0
    %494 = vmatprep.subr.bf16.mxu0 0
    %495 = vmatpush1.bf16.msra.mxu0 0
    %496 = vmatprep.subr.bf16.mxu0 0
    %497 = vmatpush1.bf16.msra.mxu0 0
    %498 = vmatprep.subr.bf16.mxu0 0
    %499 = vmatpush1.bf16.msra.mxu0 0
    %500 = vmatprep.subr.bf16.mxu0 0
    %501 = vmatpush1.bf16.msra.mxu0 0
    %502 = vmatprep.mubr.bf16.mxu0 0
    %503 = vmatmul.mubr.bf16.gmra.mrb[0].mxu0 %v464
    %v504 = vpop.f32.mrb[0].mxu0
    %v505 = vadd.f32 0.0, %v504
    %v506 = vpop.f32.mrb[0].mxu0
    %v507 = vpop.f32.mrb[0].mxu0
    %v508 = vpop.f32.mrb[0].mxu0
    %509 = vdwg.mxu0
    %510 = vrot.lane.b32.xlu0 %v396, 112
    %v511 = vpop.permute.xlu0 %510
    %512 = vrot.lane.b32.xlu0 %v396, 48
    %v513 = vpop.permute.xlu0 %512
    %v515 = vsel %vm401, %v511, 0
    %v518 = vsel %vm401, %v513, 0
    %520 = vmatprep.subr.bf16.mxu0 0
    %521 = vmatpush1.bf16.xpose.msra.mxu0 %v518
    %522 = vmatprep.subr.bf16.mxu0 0
    %523 = vmatpush1.bf16.xpose.msra.mxu0 0
    %524 = vmatprep.subr.bf16.mxu0 0
    %525 = vmatpush1.bf16.xpose.msra.mxu0 0
    %526 = vmatprep.subr.bf16.mxu0 0
    %527 = vmatpush1.bf16.xpose.msra.mxu0 0
    %528 = vmatprep.subr.bf16.mxu0 0
    %529 = vmatpush1.bf16.xpose.msra.mxu0 0
    %530 = vmatprep.subr.bf16.mxu0 0
    %531 = vmatpush1.bf16.xpose.msra.mxu0 0
    %532 = vmatprep.subr.bf16.mxu0 0
    %533 = vmatpush1.bf16.xpose.msra.mxu0 0
    %534 = vmatprep.subr.bf16.mxu0 0
    %535 = vmatpush1.bf16.xpose.msra.mxu0 0
    %536 = vmatprep.subr.bf16.mxu0 0
    %537 = vmatpush1.bf16.xpose.msra.mxu0 0
    %538 = vmatprep.subr.bf16.mxu0 0
    %539 = vmatpush1.bf16.xpose.msra.mxu0 0
    %540 = vmatprep.subr.bf16.mxu0 0
    %541 = vmatpush1.bf16.xpose.msra.mxu0 0
    %542 = vmatprep.subr.bf16.mxu0 0
    %543 = vmatpush1.bf16.xpose.msra.mxu0 0
    %544 = vmatprep.subr.bf16.mxu0 0
    %545 = vmatpush1.bf16.xpose.msra.mxu0 0
    %546 = vmatprep.subr.bf16.mxu0 0
    %547 = vmatpush1.bf16.xpose.msra.mxu0 0
    %548 = vmatprep.subr.bf16.mxu0 0
    %549 = vmatpush1.bf16.xpose.msra.mxu0 0
    %550 = vmatprep.subr.bf16.mxu0 0
    %551 = vmatpush1.bf16.xpose.msra.mxu0 0
    %552 = vmatprep.mubr.bf16.mxu0 0
    %553 = vmatmul.mubr.bf16.gmra.mrb[0].mxu0 %v515
    %v554 = vpop.f32.mrb[0].mxu0
    %v555 = vadd.f32 0.0, %v554
    %v556 = vpop.f32.mrb[0].mxu0
    %v557 = vpop.f32.mrb[0].mxu0
    %v558 = vpop.f32.mrb[0].mxu0
    %559 = vdwg.mxu0
    %v560 = vmul.f32 %v555, 0.25
    %v561 = vadd.f32 %v560, %v290
    %v562 = vsel %vm450, %v561, -inf
    %563 = vmax.xlane.f32.xlu0 %v562
    %v564 = vpop.xlane.xlu0 %563
    %v565 = vsub.f32 %v561, %v564
    %v566 = vmul.f32 %v565, 1.442695
    %v567 = vpow.pop %v566
    %v568 = vsel %vm450, %v567, 0.0
    %569 = vadd.xlane.f32.xlu0 %v568
    %v570 = vpop.xlane.xlu0 %569
    %v571 = vrcp.pop %v570
    %v572 = vmul.f32 %v567, %v571
    %v573 = vpack.c.bf16 %v572, %v572
    %575 = vrot.lane.b32.xlu0 %v397, 112
    %v576 = vpop.permute.xlu0 %575
    %v578 = vsel %vm450, %v573, 0
    %v581 = vsel %vm466, %v576, 0
    %583 = vmatprep.subr.bf16.mxu0 0
    %584 = vmatpush1.bf16.msra.mxu0 %v581
    %585 = vmatprep.subr.bf16.mxu0 0
    %586 = vmatpush1.bf16.msra.mxu0 0
    %587 = vmatprep.subr.bf16.mxu0 0
    %588 = vmatpush1.bf16.msra.mxu0 0
    %589 = vmatprep.subr.bf16.mxu0 0
    %590 = vmatpush1.bf16.msra.mxu0 0
    %591 = vmatprep.subr.bf16.mxu0 0
    %592 = vmatpush1.bf16.msra.mxu0 0
    %593 = vmatprep.subr.bf16.mxu0 0
    %594 = vmatpush1.bf16.msra.mxu0 0
    %595 = vmatprep.subr.bf16.mxu0 0
    %596 = vmatpush1.bf16.msra.mxu0 0
    %597 = vmatprep.subr.bf16.mxu0 0
    %598 = vmatpush1.bf16.msra.mxu0 0
    %599 = vmatprep.subr.bf16.mxu0 0
    %600 = vmatpush1.bf16.msra.mxu0 0
    %601 = vmatprep.subr.bf16.mxu0 0
    %602 = vmatpush1.bf16.msra.mxu0 0
    %603 = vmatprep.subr.bf16.mxu0 0
    %604 = vmatpush1.bf16.msra.mxu0 0
    %605 = vmatprep.subr.bf16.mxu0 0
    %606 = vmatpush1.bf16.msra.mxu0 0
    %607 = vmatprep.subr.bf16.mxu0 0
    %608 = vmatpush1.bf16.msra.mxu0 0
    %609 = vmatprep.subr.bf16.mxu0 0
    %610 = vmatpush1.bf16.msra.mxu0 0
    %611 = vmatprep.subr.bf16.mxu0 0
    %612 = vmatpush1.bf16.msra.mxu0 0
    %613 = vmatprep.subr.bf16.mxu0 0
    %614 = vmatpush1.bf16.msra.mxu0 0
    %615 = vmatprep.mubr.bf16.mxu0 0
    %616 = vmatmul.mubr.bf16.gmra.mrb[0].mxu0 %v578
    %v617 = vpop.f32.mrb[0].mxu0
    %v618 = vadd.f32 0.0, %v617
    %v619 = vpop.f32.mrb[0].mxu0
    %v620 = vpop.f32.mrb[0].mxu0
    %v621 = vpop.f32.mrb[0].mxu0
    %622 = vdwg.mxu0
    %623 = vrot.lane.b32.xlu0 %v396, 96
    %v624 = vpop.permute.xlu0 %623
    %625 = vrot.lane.b32.xlu0 %v396, 32
    %v626 = vpop.permute.xlu0 %625
    %v628 = vsel %vm401, %v624, 0
    %v631 = vsel %vm401, %v626, 0
    %633 = vmatprep.subr.bf16.mxu0 0
    %634 = vmatpush1.bf16.xpose.msra.mxu0 %v631
    %635 = vmatprep.subr.bf16.mxu0 0
    %636 = vmatpush1.bf16.xpose.msra.mxu0 0
    %637 = vmatprep.subr.bf16.mxu0 0
    %638 = vmatpush1.bf16.xpose.msra.mxu0 0
    %639 = vmatprep.subr.bf16.mxu0 0
    %640 = vmatpush1.bf16.xpose.msra.mxu0 0
    %641 = vmatprep.subr.bf16.mxu0 0
    %642 = vmatpush1.bf16.xpose.msra.mxu0 0
    %643 = vmatprep.subr.bf16.mxu0 0
    %644 = vmatpush1.bf16.xpose.msra.mxu0 0
    %645 = vmatprep.subr.bf16.mxu0 0
    %646 = vmatpush1.bf16.xpose.msra.mxu0 0
    %647 = vmatprep.subr.bf16.mxu0 0
    %648 = vmatpush1.bf16.xpose.msra.mxu0 0
    %649 = vmatprep.subr.bf16.mxu0 0
    %650 = vmatpush1.bf16.xpose.msra.mxu0 0
    %651 = vmatprep.subr.bf16.mxu0 0
    %652 = vmatpush1.bf16.xpose.msra.mxu0 0
    %653 = vmatprep.subr.bf16.mxu0 0
    %654 = vmatpush1.bf16.xpose.msra.mxu0 0
    %655 = vmatprep.subr.bf16.mxu0 0
    %656 = vmatpush1.bf16.xpose.msra.mxu0 0
    %657 = vmatprep.subr.bf16.mxu0 0
    %658 = vmatpush1.bf16.xpose.msra.mxu0 0
    %659 = vmatprep.subr.bf16.mxu0 0
    %660 = vmatpush1.bf16.xpose.msra.mxu0 0
    %661 = vmatprep.subr.bf16.mxu0 0
    %662 = vmatpush1.bf16.xpose.msra.mxu0 0
    %663 = vmatprep.subr.bf16.mxu0 0
    %664 = vmatpush1.bf16.xpose.msra.mxu0 0
    %665 = vmatprep.mubr.bf16.mxu0 0
    %666 = vmatmul.mubr.bf16.gmra.mrb[0].mxu0 %v628
    %v667 = vpop.f32.mrb[0].mxu0
    %v668 = vadd.f32 0.0, %v667
    %v669 = vpop.f32.mrb[0].mxu0
    %v670 = vpop.f32.mrb[0].mxu0
    %v671 = vpop.f32.mrb[0].mxu0
    %672 = vdwg.mxu0
    %v673 = vmul.f32 %v668, 0.25
    %v674 = vadd.f32 %v673, %v290
    %v675 = vsel %vm450, %v674, -inf
    %676 = vmax.xlane.f32.xlu0 %v675
    %v677 = vpop.xlane.xlu0 %676
    %v678 = vsub.f32 %v674, %v677
    %v679 = vmul.f32 %v678, 1.442695
    %v680 = vpow.pop %v679
    %v681 = vsel %vm450, %v680, 0.0
    %682 = vadd.xlane.f32.xlu0 %v681
    %v683 = vpop.xlane.xlu0 %682
    %v684 = vrcp.pop %v683
    %v685 = vmul.f32 %v680, %v684
    %v686 = vpack.c.bf16 %v685, %v685
    %687 = vrot.lane.b32.xlu0 %v397, 96
    %v688 = vpop.permute.xlu0 %687
    %v690 = vsel %vm450, %v686, 0
    %v693 = vsel %vm466, %v688, 0
    %695 = vmatprep.subr.bf16.mxu0 0
    %696 = vmatpush1.bf16.msra.mxu0 %v693
    %697 = vmatprep.subr.bf16.mxu0 0
    %698 = vmatpush1.bf16.msra.mxu0 0
    %699 = vmatprep.subr.bf16.mxu0 0
    %700 = vmatpush1.bf16.msra.mxu0 0
    %701 = vmatprep.subr.bf16.mxu0 0
    %702 = vmatpush1.bf16.msra.mxu0 0
    %703 = vmatprep.subr.bf16.mxu0 0
    %704 = vmatpush1.bf16.msra.mxu0 0
    %705 = vmatprep.subr.bf16.mxu0 0
    %706 = vmatpush1.bf16.msra.mxu0 0
    %707 = vmatprep.subr.bf16.mxu0 0
    %708 = vmatpush1.bf16.msra.mxu0 0
    %709 = vmatprep.subr.bf16.mxu0 0
    %710 = vmatpush1.bf16.msra.mxu0 0
    %711 = vmatprep.subr.bf16.mxu0 0
    %712 = vmatpush1.bf16.msra.mxu0 0
    %713 = vmatprep.subr.bf16.mxu0 0
    %714 = vmatpush1.bf16.msra.mxu0 0
    %715 = vmatprep.subr.bf16.mxu0 0
    %716 = vmatpush1.bf16.msra.mxu0 0
    %717 = vmatprep.subr.bf16.mxu0 0
    %718 = vmatpush1.bf16.msra.mxu0 0
    %719 = vmatprep.subr.bf16.mxu0 0
    %720 = vmatpush1.bf16.msra.mxu0 0
    %721 = vmatprep.subr.bf16.mxu0 0
    %722 = vmatpush1.bf16.msra.mxu0 0
    %723 = vmatprep.subr.bf16.mxu0 0
    %724 = vmatpush1.bf16.msra.mxu0 0
    %725 = vmatprep.subr.bf16.mxu0 0
    %726 = vmatpush1.bf16.msra.mxu0 0
    %727 = vmatprep.mubr.bf16.mxu0 0
    %728 = vmatmul.mubr.bf16.gmra.mrb[0].mxu0 %v690
    %v729 = vpop.f32.mrb[0].mxu0
    %v730 = vadd.f32 0.0, %v729
    %v731 = vpop.f32.mrb[0].mxu0
    %v732 = vpop.f32.mrb[0].mxu0
    %v733 = vpop.f32.mrb[0].mxu0
    %734 = vdwg.mxu0
    %735 = vrot.lane.b32.xlu0 %v396, 80
    %v736 = vpop.permute.xlu0 %735
    %737 = vrot.lane.b32.xlu0 %v396, 16
    %v738 = vpop.permute.xlu0 %737
    %v740 = vsel %vm401, %v736, 0
    %v743 = vsel %vm401, %v738, 0
    %745 = vmatprep.subr.bf16.mxu0 0
    %746 = vmatpush1.bf16.xpose.msra.mxu0 %v743
    %747 = vmatprep.subr.bf16.mxu0 0
    %748 = vmatpush1.bf16.xpose.msra.mxu0 0
    %749 = vmatprep.subr.bf16.mxu0 0
    %750 = vmatpush1.bf16.xpose.msra.mxu0 0
    %751 = vmatprep.subr.bf16.mxu0 0
    %752 = vmatpush1.bf16.xpose.msra.mxu0 0
    %753 = vmatprep.subr.bf16.mxu0 0
    %754 = vmatpush1.bf16.xpose.msra.mxu0 0
    %755 = vmatprep.subr.bf16.mxu0 0
    %756 = vmatpush1.bf16.xpose.msra.mxu0 0
    %757 = vmatprep.subr.bf16.mxu0 0
    %758 = vmatpush1.bf16.xpose.msra.mxu0 0
    %759 = vmatprep.subr.bf16.mxu0 0
    %760 = vmatpush1.bf16.xpose.msra.mxu0 0
    %761 = vmatprep.subr.bf16.mxu0 0
    %762 = vmatpush1.bf16.xpose.msra.mxu0 0
    %763 = vmatprep.subr.bf16.mxu0 0
    %764 = vmatpush1.bf16.xpose.msra.mxu0 0
    %765 = vmatprep.subr.bf16.mxu0 0
    %766 = vmatpush1.bf16.xpose.msra.mxu0 0
    %767 = vmatprep.subr.bf16.mxu0 0
    %768 = vmatpush1.bf16.xpose.msra.mxu0 0
    %769 = vmatprep.subr.bf16.mxu0 0
    %770 = vmatpush1.bf16.xpose.msra.mxu0 0
    %771 = vmatprep.subr.bf16.mxu0 0
    %772 = vmatpush1.bf16.xpose.msra.mxu0 0
    %773 = vmatprep.subr.bf16.mxu0 0
    %774 = vmatpush1.bf16.xpose.msra.mxu0 0
    %775 = vmatprep.subr.bf16.mxu0 0
    %776 = vmatpush1.bf16.xpose.msra.mxu0 0
    %777 = vmatprep.mubr.bf16.mxu0 0
    %778 = vmatmul.mubr.bf16.gmra.mrb[0].mxu0 %v740
    %v779 = vpop.f32.mrb[0].mxu0
    %v780 = vadd.f32 0.0, %v779
    %v781 = vpop.f32.mrb[0].mxu0
    %v782 = vpop.f32.mrb[0].mxu0
    %v783 = vpop.f32.mrb[0].mxu0
    %784 = vdwg.mxu0
    %v785 = vmul.f32 %v780, 0.25
    %v786 = vadd.f32 %v785, %v290
    %v787 = vsel %vm450, %v786, -inf
    %788 = vmax.xlane.f32.xlu0 %v787
    %v789 = vpop.xlane.xlu0 %788
    %v790 = vsub.f32 %v786, %v789
    %v791 = vmul.f32 %v790, 1.442695
    %v792 = vpow.pop %v791
    %v793 = vsel %vm450, %v792, 0.0
    %794 = vadd.xlane.f32.xlu0 %v793
    %v795 = vpop.xlane.xlu0 %794
    %v796 = vrcp.pop %v795
    %v797 = vmul.f32 %v792, %v796
    %v798 = vpack.c.bf16 %v797, %v797
    %799 = vrot.lane.b32.xlu0 %v397, 80
    %v800 = vpop.permute.xlu0 %799
    %v802 = vsel %vm450, %v798, 0
    %v805 = vsel %vm466, %v800, 0
    %807 = vmatprep.subr.bf16.mxu0 0
    %808 = vmatpush1.bf16.msra.mxu0 %v805
    %809 = vmatprep.subr.bf16.mxu0 0
    %810 = vmatpush1.bf16.msra.mxu0 0
    %811 = vmatprep.subr.bf16.mxu0 0
    %812 = vmatpush1.bf16.msra.mxu0 0
    %813 = vmatprep.subr.bf16.mxu0 0
    %814 = vmatpush1.bf16.msra.mxu0 0
    %815 = vmatprep.subr.bf16.mxu0 0
    %816 = vmatpush1.bf16.msra.mxu0 0
    %817 = vmatprep.subr.bf16.mxu0 0
    %818 = vmatpush1.bf16.msra.mxu0 0
    %819 = vmatprep.subr.bf16.mxu0 0
    %820 = vmatpush1.bf16.msra.mxu0 0
    %821 = vmatprep.subr.bf16.mxu0 0
    %822 = vmatpush1.bf16.msra.mxu0 0
    %823 = vmatprep.subr.bf16.mxu0 0
    %824 = vmatpush1.bf16.msra.mxu0 0
    %825 = vmatprep.subr.bf16.mxu0 0
    %826 = vmatpush1.bf16.msra.mxu0 0
    %827 = vmatprep.subr.bf16.mxu0 0
    %828 = vmatpush1.bf16.msra.mxu0 0
    %829 = vmatprep.subr.bf16.mxu0 0
    %830 = vmatpush1.bf16.msra.mxu0 0
    %831 = vmatprep.subr.bf16.mxu0 0
    %832 = vmatpush1.bf16.msra.mxu0 0
    %833 = vmatprep.subr.bf16.mxu0 0
    %834 = vmatpush1.bf16.msra.mxu0 0
    %835 = vmatprep.subr.bf16.mxu0 0
    %836 = vmatpush1.bf16.msra.mxu0 0
    %837 = vmatprep.subr.bf16.mxu0 0
    %838 = vmatpush1.bf16.msra.mxu0 0
    %839 = vmatprep.mubr.bf16.mxu0 0
    %840 = vmatmul.mubr.bf16.gmra.mrb[0].mxu0 %v802
    %v841 = vpop.f32.mrb[0].mxu0
    %v842 = vadd.f32 0.0, %v841
    %v843 = vpop.f32.mrb[0].mxu0
    %v844 = vpop.f32.mrb[0].mxu0
    %v845 = vpop.f32.mrb[0].mxu0
    %846 = vdwg.mxu0
    %848 = vrot.lane.b32.xlu0 %v618, 16
    %v849 = vpop.permute.xlu0 %848
    %852 = vrot.lane.b32.xlu0 %v730, 32
    %v853 = vpop.permute.xlu0 %852
    %856 = vrot.lane.b32.xlu0 %v842, 48
    %v857 = vpop.permute.xlu0 %856
    %v859 = vsel %vm401, %v505, %v849
    %v860 = vsel %vm153, %v859, %v853
    %vm861 = vcmask 392192
    %v862 = vsel %vm861, %v860, %v857
    %v863 = vpack.c.bf16 %v862, %v862
    %v864 = vld [vmem:[%s11] sm:$0xf]
    %v865 = vld [vmem:[%s11 + $0x4] sm:$0xf]
    %v866 = vld [vmem:[%s11 + $0x8] sm:$0xf]
    %v867 = vld [vmem:[%s11 + $0xc] sm:$0xf]
    %v868 = vld [vmem:[%s11 + $0x10] sm:$0xf]
    %v869 = vld [vmem:[%s11 + $0x14] sm:$0xf]
    %v870 = vld [vmem:[%s11 + $0x18] sm:$0xf]
    %v871 = vld [vmem:[%s11 + $0x1c] sm:$0xf]
    %v872 = vld [vmem:[%s12] sm:$0x1]
    %v874 = vlaneseq
    %v875 = vshrl.u32 %v874, 7
    %v876 = vsub.s32 0, %v875
    %v877 = vrot.slane %v872, %v876
    %v887 = vunpack.c.l.b16 %v864
    %v888 = vunpack.c.l.b16 %v865
    %v889 = vunpack.c.l.b16 %v866
    %v890 = vunpack.c.l.b16 %v867
    %v891 = vunpack.c.l.b16 %v868
    %v892 = vunpack.c.l.b16 %v869
    %v893 = vunpack.c.l.b16 %v870
    %v894 = vunpack.c.l.b16 %v871
    %v895 = vpack.c.b16 %v888, %v887
    %v896 = vpack.c.b16 %v890, %v889
    %v897 = vpack.c.b16 %v892, %v891
    %v898 = vpack.c.b16 %v894, %v893
    %v904 = vsel %vm155, %v863, 0
    %906 = vmatprep.subr.bf16.mxu0 0
    %907 = vmatpush1.bf16.msra.mxu0 %v895
    %908 = vmatprep.subr.bf16.mxu0 0
    %909 = vmatpush1.bf16.msra.mxu0 %v896
    %910 = vmatprep.subr.bf16.mxu0 0
    %911 = vmatpush1.bf16.msra.mxu0 %v897
    %912 = vmatprep.subr.bf16.mxu0 0
    %913 = vmatpush1.bf16.msra.mxu0 %v898
    %914 = vmatprep.subr.bf16.mxu0 0
    %915 = vmatpush1.bf16.msra.mxu0 0
    %916 = vmatprep.subr.bf16.mxu0 0
    %917 = vmatpush1.bf16.msra.mxu0 0
    %918 = vmatprep.subr.bf16.mxu0 0
    %919 = vmatpush1.bf16.msra.mxu0 0
    %920 = vmatprep.subr.bf16.mxu0 0
    %921 = vmatpush1.bf16.msra.mxu0 0
    %922 = vmatprep.subr.bf16.mxu0 0
    %923 = vmatpush1.bf16.msra.mxu0 0
    %924 = vmatprep.subr.bf16.mxu0 0
    %925 = vmatpush1.bf16.msra.mxu0 0
    %926 = vmatprep.subr.bf16.mxu0 0
    %927 = vmatpush1.bf16.msra.mxu0 0
    %928 = vmatprep.subr.bf16.mxu0 0
    %929 = vmatpush1.bf16.msra.mxu0 0
    %930 = vmatprep.subr.bf16.mxu0 0
    %931 = vmatpush1.bf16.msra.mxu0 0
    %932 = vmatprep.subr.bf16.mxu0 0
    %933 = vmatpush1.bf16.msra.mxu0 0
    %934 = vmatprep.subr.bf16.mxu0 0
    %935 = vmatpush1.bf16.msra.mxu0 0
    %936 = vmatprep.subr.bf16.mxu0 0
    %937 = vmatpush1.bf16.msra.mxu0 0
    %938 = vmatprep.mubr.bf16.mxu0 0
    %939 = vmatmul.mubr.bf16.gmra.mrb[0].mxu0 %v904
    %v940 = vpop.f32.mrb[0].mxu0
    %v941 = vadd.f32 %v877, %v940
    %v942 = vpop.f32.mrb[0].mxu0
    %v943 = vpop.f32.mrb[0].mxu0
    %v944 = vpop.f32.mrb[0].mxu0
    %945 = vdwg.mxu0
    %v946 = vadd.f32 %v289, %v941
    %v947 = vld [vmem:[#allocation2] sm:$0x1]
    %v948 = vld [vmem:[#allocation4] sm:$0x1]
    %v949 = vsel %vm155, %v946, 0.0
    %950 = vadd.xlane.f32.xlu0 %v949
    %v951 = vpop.xlane.xlu0 %950
    %v952 = vmul.f32 %v951, %v263
    %v953 = vsub.f32 %v946, %v952
    %v954 = vmul.f32 %v953, %v953
    %v955 = vsel %vm155, %v954, 0.0
    %956 = vadd.xlane.f32.xlu0 %v955
    %v957 = vpop.xlane.xlu0 %956
    %v958 = vmul.f32 %v957, %v263
    %v959 = vadd.f32 %v958, 1e-05
    %v960 = vrsqrt.pop %v959
    %v961 = vmul.f32 %v953, %v960
    %v963 = vlaneseq
    %v964 = vshrl.u32 %v963, 7
    %v965 = vsub.s32 0, %v964
    %v966 = vrot.slane %v947, %v965
    %v968 = vmul.f32 %v961, %v966
    %v970 = vlaneseq
    %v971 = vshrl.u32 %v970, 7
    %v972 = vsub.s32 0, %v971
    %v973 = vrot.slane %v948, %v972
    %v975 = vadd.f32 %v968, %v973
    %v976 = vpack.c.bf16 %v975, %v975
    %v977 = vld [vmem:[%s13] sm:$0xff]
    %v978 = vld [vmem:[%s13 + $0x8] sm:$0xff]
    %v979 = vld [vmem:[%s13 + $0x10] sm:$0xff]
    %v980 = vld [vmem:[%s13 + $0x18] sm:$0xff]
    %v981 = vld [vmem:[%s13 + $0x20] sm:$0xff]
    %v982 = vld [vmem:[%s13 + $0x28] sm:$0xff]
    %v983 = vld [vmem:[%s13 + $0x30] sm:$0xff]
    %v984 = vld [vmem:[%s13 + $0x38] sm:$0xff]
    %v985 = vld [vmem:[%s14] sm:$0x3]
    %v987 = vlaneseq
    %v988 = vshrl.u32 %v987, 7
    %v989 = vsub.s32 0, %v988
    %v990 = vrot.slane %v985, %v989
    %v991 = vlaneseq
    %v992 = vshrl.u32 %v991, 7
    %v993 = vsub.s32 1, %v992
    %v994 = vrot.slane %v985, %v993
    %v1005 = vunpack.c.l.b16 %v977
    %v1006 = vunpack.c.h.b16 %v977
    %v1007 = vunpack.c.l.b16 %v978
    %v1008 = vunpack.c.h.b16 %v978
    %v1009 = vunpack.c.l.b16 %v979
    %v1010 = vunpack.c.h.b16 %v979
    %v1011 = vunpack.c.l.b16 %v980
    %v1012 = vunpack.c.h.b16 %v980
    %v1013 = vunpack.c.l.b16 %v981
    %v1014 = vunpack.c.h.b16 %v981
    %v1015 = vunpack.c.l.b16 %v982
    %v1016 = vunpack.c.h.b16 %v982
    %v1017 = vunpack.c.l.b16 %v983
    %v1018 = vunpack.c.h.b16 %v983
    %v1019 = vunpack.c.l.b16 %v984
    %v1020 = vunpack.c.h.b16 %v984
    %v1021 = vpack.c.b16 %v1007, %v1005
    %v1022 = vpack.c.b16 %v1008, %v1006
    %v1023 = vpack.c.b16 %v1011, %v1009
    %v1024 = vpack.c.b16 %v1012, %v1010
    %v1025 = vpack.c.b16 %v1015, %v1013
    %v1026 = vpack.c.b16 %v1016, %v1014
    %v1027 = vpack.c.b16 %v1019, %v1017
    %v1028 = vpack.c.b16 %v1020, %v1018
    %v1038 = vsel %vm155, %v976, 0
    %1040 = vmatprep.subr.bf16.mxu0 %v1022
    %1041 = vmatpush1.bf16.msra.mxu0 %v1021
    %1042 = vmatprep.subr.bf16.mxu0 %v1024
    %1043 = vmatpush1.bf16.msra.mxu0 %v1023
    %1044 = vmatprep.subr.bf16.mxu0 %v1026
    %1045 = vmatpush1.bf16.msra.mxu0 %v1025
    %1046 = vmatprep.subr.bf16.mxu0 %v1028
    %1047 = vmatpush1.bf16.msra.mxu0 %v1027
    %1048 = vmatprep.subr.bf16.mxu0 0
    %1049 = vmatpush1.bf16.msra.mxu0 0
    %1050 = vmatprep.subr.bf16.mxu0 0
    %1051 = vmatpush1.bf16.msra.mxu0 0
    %1052 = vmatprep.subr.bf16.mxu0 0
    %1053 = vmatpush1.bf16.msra.mxu0 0
    %1054 = vmatprep.subr.bf16.mxu0 0
    %1055 = vmatpush1.bf16.msra.mxu0 0
    %1056 = vmatprep.subr.bf16.mxu0 0
    %1057 = vmatpush1.bf16.msra.mxu0 0
    %1058 = vmatprep.subr.bf16.mxu0 0
    %1059 = vmatpush1.bf16.msra.mxu0 0
    %1060 = vmatprep.subr.bf16.mxu0 0
    %1061 = vmatpush1.bf16.msra.mxu0 0
    %1062 = vmatprep.subr.bf16.mxu0 0
    %1063 = vmatpush1.bf16.msra.mxu0 0
    %1064 = vmatprep.subr.bf16.mxu0 0
    %1065 = vmatpush1.bf16.msra.mxu0 0
    %1066 = vmatprep.subr.bf16.mxu0 0
    %1067 = vmatpush1.bf16.msra.mxu0 0
    %1068 = vmatprep.subr.bf16.mxu0 0
    %1069 = vmatpush1.bf16.msra.mxu0 0
    %1070 = vmatprep.subr.bf16.mxu0 0
    %1071 = vmatpush1.bf16.msra.mxu0 0
    %1072 = vmatprep.mubr.bf16.mxu0 0
    %1073 = vmatmul.mubr.bf16.gmra.mrb[0].mxu0 %v1038
    %v1074 = vpop.f32.mrb[0].mxu0
    %v1075 = vadd.f32 %v990, %v1074
    %v1076 = vpop.f32.mrb[0].mxu0
    %v1077 = vadd.f32 %v994, %v1076
    %v1078 = vpop.f32.mrb[0].mxu0
    %v1079 = vpop.f32.mrb[0].mxu0
    %1080 = vdwg.mxu0
    %v1081 = vmax.f32 %v1075, 0.0
    %v1082 = vmax.f32 %v1077, 0.0
    %v1083 = vpack.c.bf16 %v1081, %v1081
    %v1084 = vpack.c.bf16 %v1082, %v1082
    %v1085 = vld [vmem:[%s15] sm:$0xf]
    %v1086 = vld [vmem:[%s15 + $0x4] sm:$0xf]
    %v1087 = vld [vmem:[%s15 + $0x8] sm:$0xf]
    %v1088 = vld [vmem:[%s15 + $0xc] sm:$0xf]
    %v1089 = vld [vmem:[%s15 + $0x10] sm:$0xf]
    %v1090 = vld [vmem:[%s15 + $0x14] sm:$0xf]
    %v1091 = vld [vmem:[%s15 + $0x18] sm:$0xf]
    %v1092 = vld [vmem:[%s15 + $0x1c] sm:$0xf]
    %v1093 = vld [vmem:[%s15 + $0x20] sm:$0xf]
    %v1094 = vld [vmem:[%s15 + $0x24] sm:$0xf]
    %v1095 = vld [vmem:[%s15 + $0x28] sm:$0xf]
    %v1096 = vld [vmem:[%s15 + $0x2c] sm:$0xf]
    %v1097 = vld [vmem:[%s15 + $0x30] sm:$0xf]
    %v1098 = vld [vmem:[%s15 + $0x34] sm:$0xf]
    %v1099 = vld [vmem:[%s15 + $0x38] sm:$0xf]
    %v1100 = vld [vmem:[%s15 + $0x3c] sm:$0xf]
    %v1101 = vld [vmem:[%s15 + $0x40] sm:$0xf]
    %v1102 = vld [vmem:[%s15 + $0x44] sm:$0xf]
    %v1103 = vld [vmem:[%s15 + $0x48] sm:$0xf]
    %v1104 = vld [vmem:[%s15 + $0x4c] sm:$0xf]
    %v1105 = vld [vmem:[%s15 + $0x50] sm:$0xf]
    %v1106 = vld [vmem:[%s15 + $0x54] sm:$0xf]
    %v1107 = vld [vmem:[%s15 + $0x58] sm:$0xf]
    %v1108 = vld [vmem:[%s15 + $0x5c] sm:$0xf]
    %v1109 = vld [vmem:[%s15 + $0x60] sm:$0xf]
    %v1110 = vld [vmem:[%s15 + $0x64] sm:$0xf]
    %v1111 = vld [vmem:[%s15 + $0x68] sm:$0xf]
    %v1112 = vld [vmem:[%s15 + $0x6c] sm:$0xf]
    %v1113 = vld [vmem:[%s15 + $0x70] sm:$0xf]
    %v1114 = vld [vmem:[%s15 + $0x74] sm:$0xf]
    %v1115 = vld [vmem:[%s15 + $0x78] sm:$0xf]
    %v1116 = vld [vmem:[%s15 + $0x7c] sm:$0xf]
    %v1117 = vld [vmem:[%s16] sm:$0x1]
    %v1119 = vlaneseq
    %v1120 = vshrl.u32 %v1119, 7
    %v1121 = vsub.s32 0, %v1120
    %v1122 = vrot.slane %v1117, %v1121
    %v1156 = vunpack.c.l.b16 %v1085
    %v1157 = vunpack.c.l.b16 %v1086
    %v1158 = vunpack.c.l.b16 %v1087
    %v1159 = vunpack.c.l.b16 %v1088
    %v1160 = vunpack.c.l.b16 %v1089
    %v1161 = vunpack.c.l.b16 %v1090
    %v1162 = vunpack.c.l.b16 %v1091
    %v1163 = vunpack.c.l.b16 %v1092
    %v1164 = vunpack.c.l.b16 %v1093
    %v1165 = vunpack.c.l.b16 %v1094
    %v1166 = vunpack.c.l.b16 %v1095
    %v1167 = vunpack.c.l.b16 %v1096
    %v1168 = vunpack.c.l.b16 %v1097
    %v1169 = vunpack.c.l.b16 %v1098
    %v1170 = vunpack.c.l.b16 %v1099
    %v1171 = vunpack.c.l.b16 %v1100
    %v1172 = vunpack.c.l.b16 %v1101
    %v1173 = vunpack.c.l.b16 %v1102
    %v1174 = vunpack.c.l.b16 %v1103
    %v1175 = vunpack.c.l.b16 %v1104
    %v1176 = vunpack.c.l.b16 %v1105
    %v1177 = vunpack.c.l.b16 %v1106
    %v1178 = vunpack.c.l.b16 %v1107
    %v1179 = vunpack.c.l.b16 %v1108
    %v1180 = vunpack.c.l.b16 %v1109
    %v1181 = vunpack.c.l.b16 %v1110
    %v1182 = vunpack.c.l.b16 %v1111
    %v1183 = vunpack.c.l.b16 %v1112
    %v1184 = vunpack.c.l.b16 %v1113
    %v1185 = vunpack.c.l.b16 %v1114
    %v1186 = vunpack.c.l.b16 %v1115
    %v1187 = vunpack.c.l.b16 %v1116
    %v1188 = vpack.c.b16 %v1157, %v1156
    %v1189 = vpack.c.b16 %v1159, %v1158
    %v1190 = vpack.c.b16 %v1161, %v1160
    %v1191 = vpack.c.b16 %v1163, %v1162
    %v1192 = vpack.c.b16 %v1165, %v1164
    %v1193 = vpack.c.b16 %v1167, %v1166
    %v1194 = vpack.c.b16 %v1169, %v1168
    %v1195 = vpack.c.b16 %v1171, %v1170
    %v1196 = vpack.c.b16 %v1173, %v1172
    %v1197 = vpack.c.b16 %v1175, %v1174
    %v1198 = vpack.c.b16 %v1177, %v1176
    %v1199 = vpack.c.b16 %v1179, %v1178
    %v1200 = vpack.c.b16 %v1181, %v1180
    %v1201 = vpack.c.b16 %v1183, %v1182
    %v1202 = vpack.c.b16 %v1185, %v1184
    %v1203 = vpack.c.b16 %v1187, %v1186
    %1220 = vmatprep.subr.bf16.mxu0 0
    %1221 = vmatpush1.bf16.msra.mxu0 %v1188
    %1222 = vmatprep.subr.bf16.mxu0 0
    %1223 = vmatpush1.bf16.msra.mxu0 %v1189
    %1224 = vmatprep.subr.bf16.mxu0 0
    %1225 = vmatpush1.bf16.msra.mxu0 %v1190
    %1226 = vmatprep.subr.bf16.mxu0 0
    %1227 = vmatpush1.bf16.msra.mxu0 %v1191
    %1228 = vmatprep.subr.bf16.mxu0 0
    %1229 = vmatpush1.bf16.msra.mxu0 %v1192
    %1230 = vmatprep.subr.bf16.mxu0 0
    %1231 = vmatpush1.bf16.msra.mxu0 %v1193
    %1232 = vmatprep.subr.bf16.mxu0 0
    %1233 = vmatpush1.bf16.msra.mxu0 %v1194
    %1234 = vmatprep.subr.bf16.mxu0 0
    %1235 = vmatpush1.bf16.msra.mxu0 %v1195
    %1236 = vmatprep.subr.bf16.mxu0 0
    %1237 = vmatpush1.bf16.msra.mxu0 %v1196
    %1238 = vmatprep.subr.bf16.mxu0 0
    %1239 = vmatpush1.bf16.msra.mxu0 %v1197
    %1240 = vmatprep.subr.bf16.mxu0 0
    %1241 = vmatpush1.bf16.msra.mxu0 %v1198
    %1242 = vmatprep.subr.bf16.mxu0 0
    %1243 = vmatpush1.bf16.msra.mxu0 %v1199
    %1244 = vmatprep.subr.bf16.mxu0 0
    %1245 = vmatpush1.bf16.msra.mxu0 %v1200
    %1246 = vmatprep.subr.bf16.mxu0 0
    %1247 = vmatpush1.bf16.msra.mxu0 %v1201
    %1248 = vmatprep.subr.bf16.mxu0 0
    %1249 = vmatpush1.bf16.msra.mxu0 %v1202
    %1250 = vmatprep.subr.bf16.mxu0 0
    %1251 = vmatpush1.bf16.msra.mxu0 %v1203
    %1252 = vmatprep.mubr.bf16.mxu0 %v1084
    %1253 = vmatmul.mubr.bf16.gmra.mrb[0].mxu0 %v1083
    %v1254 = vpop.f32.mrb[0].mxu0
    %v1255 = vadd.f32 %v1122, %v1254
    %v1256 = vpop.f32.mrb[0].mxu0
    %v1257 = vpop.f32.mrb[0].mxu0
    %v1258 = vpop.f32.mrb[0].mxu0
    %1259 = vdwg.mxu0
    %v1260 = vadd.f32 %v975, %v1255
    %v1261 = vld [vmem:[#allocation6] sm:$0x1]
    %v1262 = vld [vmem:[#allocation7] sm:$0x1]
    %v1263 = vsel %vm155, %v1260, 0.0
    %1264 = vadd.xlane.f32.xlu0 %v1263
    %v1265 = vpop.xlane.xlu0 %1264
    %v1266 = vmul.f32 %v1265, %v263
    %v1267 = vsub.f32 %v1260, %v1266
    %v1268 = vmul.f32 %v1267, %v1267
    %v1269 = vsel %vm155, %v1268, 0.0
    %1270 = vadd.xlane.f32.xlu0 %v1269
    %v1271 = vpop.xlane.xlu0 %1270
    %v1272 = vmul.f32 %v1271, %v263
    %v1273 = vadd.f32 %v1272, 1e-05
    %v1274 = vrsqrt.pop %v1273
    %v1275 = vmul.f32 %v1267, %v1274
    %v1277 = vlaneseq
    %v1278 = vshrl.u32 %v1277, 7
    %v1279 = vsub.s32 0, %v1278
    %v1280 = vrot.slane %v1261, %v1279
    %v1282 = vmul.f32 %v1275, %v1280
    %v1284 = vlaneseq
    %v1285 = vshrl.u32 %v1284, 7
    %v1286 = vsub.s32 0, %v1285
    %v1287 = vrot.slane %v1262, %v1286
    %v1289 = vadd.f32 %v1282, %v1287
    %v1290 = vpack.c.bf16 %v1289, %v1289
    %vm1291 = vcmask 519168
    %1292 = vst.msk [vmem:[%s21] sm:$0xf] %vm1291, %v1290
    // Predicated region
    $region102: #{forward.7} parent=1 // pred_check
      _
    $region103: #{forward.7} parent=1 // pred_check_branch
      %1294 = sbr.rel (0) target = $region105
    $region104: #{forward.7} parent=1 // pred_region
      _
    $region105: #{forward.7} parent=1 // pred_fallthru
      _
    // Predicated region
    $region106: #{forward.7} parent=1 // pred_check
      _
    $region107: #{forward.7} parent=1 // pred_check_branch
      %1296 = sbr.rel (0) target = $region109
    $region108: #{forward.7} parent=1 // pred_region
      _
    $region109: #{forward.7} parent=1 // pred_fallthru
      _
    %1297 = vsyncpa [#allocation3], 1
    %1298 = vsyncpa [#allocation5], 1
    %1299 = vsyncpa [#allocation8], 1

// kernel: forward.9
$region0: #{forward.9}
  #allocation0 [shape = 'u32[]', space=smem, size = 0x4, offset = 0x4, fixed_abs, tag = 'smem constant byte address 0x4 - core index']
  #allocation1 [shape = 'u32[144,128]{1,0:T(1,128)}', space=vmem, size = 0x12000, scoped, tag = 'internal scratch']
  %s0 = inlined_call_operand.vmem [shape: bf16[4,128], index: 0, kind: input, shape index: {}, may-alias: {0,1}]
  %s1 = inlined_call_operand.vmem [shape: bf16[4,128], index: 1, kind: input, shape index: {}, may-alias: {0,1}]
  %s2 = inlined_call_operand.vmem [shape: f32[4,4], index: 2, kind: input, shape index: {}]
  %s3 = inlined_call_operand.vmem [shape: f32[1,128], index: 3, kind: input, shape index: {}]
  %s4 = inlined_call_operand.vmem [shape: f32[1,128], index: 4, kind: input, shape index: {}]
  %s5 = inlined_call_operand.vmem [shape: bf16[128,128], index: 5, kind: input, shape index: {}]
  %s6 = inlined_call_operand.vmem [shape: f32[1,128], index: 6, kind: input, shape index: {}]
  %s7 = inlined_call_operand.vmem [shape: bf16[128,384], index: 7, kind: input, shape index: {}]
  %s8 = inlined_call_operand.vmem [shape: f32[1,384], index: 8, kind: input, shape index: {}]
  %s9 = inlined_call_operand.vmem [shape: bf16[128,128], index: 9, kind: input, shape index: {}]
  %s10 = inlined_call_operand.vmem [shape: f32[1,128], index: 10, kind: input, shape index: {}]
  %s11 = inlined_call_operand.vmem [shape: bf16[128,512], index: 11, kind: input, shape index: {}]
  %s12 = inlined_call_operand.vmem [shape: f32[1,512], index: 12, kind: input, shape index: {}]
  %s13 = inlined_call_operand.vmem [shape: bf16[512,128], index: 13, kind: input, shape index: {}]
  %s14 = inlined_call_operand.vmem [shape: f32[1,128], index: 14, kind: input, shape index: {}]
  %s15 = inlined_call_operand.vmem [shape: f32[1,128], index: 15, kind: input, shape index: {}]
  %s16 = inlined_call_operand.vmem [shape: f32[1,128], index: 16, kind: input, shape index: {}]
  %s17 = inlined_call_operand.vmem [shape: f32[1,128], index: 17, kind: input, shape index: {}]
  %s18 = inlined_call_operand.vmem [shape: f32[1,128], index: 18, kind: input, shape index: {}]
  %s19 = inlined_call_operand.vmem [shape: bf16[4,128], index: 19, kind: output, shape index: {}]
  %s20 = sld [smem:[#allocation0]]
  $region86: #{forward.9} parent=0
    _
  %s22 = ssub.s32 1, %s20
  %s23 = scalar_select 0, %s22, %s20
  // Predicated region
  $region2: #{forward.9} parent=0 // pred_check
    _
  $region3: #{forward.9} parent=0 // pred_check_branch
    %25 = sbr.rel (0) target = $region5
  $region4: #{forward.9} parent=0 // pred_region
    _
  $region5: #{forward.9} parent=0 // pred_fallthru
    _
  // Predicated region
  $region6: #{forward.9} parent=0 // pred_check
    _
  $region7: #{forward.9} parent=0 // pred_check_branch
    %27 = sbr.rel (0) target = $region9
  $region8: #{forward.9} parent=0 // pred_region
    _
  $region9: #{forward.9} parent=0 // pred_fallthru
    _
  // Predicated region
  $region10: #{forward.9} parent=0 // pred_check
    _
  $region11: #{forward.9} parent=0 // pred_check_branch
    %29 = sbr.rel (0) target = $region13
  $region12: #{forward.9} parent=0 // pred_region
    _
  $region13: #{forward.9} parent=0 // pred_fallthru
    _
  // Predicated region
  $region14: #{forward.9} parent=0 // pred_check
    _
  $region15: #{forward.9} parent=0 // pred_check_branch
    %31 = sbr.rel (0) target = $region17
  $region16: #{forward.9} parent=0 // pred_region
    _
  $region17: #{forward.9} parent=0 // pred_fallthru
    _
  // Predicated region
  $region18: #{forward.9} parent=0 // pred_check
    _
  $region19: #{forward.9} parent=0 // pred_check_branch
    %33 = sbr.rel (0) target = $region21
  $region20: #{forward.9} parent=0 // pred_region
    _
  $region21: #{forward.9} parent=0 // pred_fallthru
    _
  // Predicated region
  $region22: #{forward.9} parent=0 // pred_check
    _
  $region23: #{forward.9} parent=0 // pred_check_branch
    %35 = sbr.rel (0) target = $region25
  $region24: #{forward.9} parent=0 // pred_region
    _
  $region25: #{forward.9} parent=0 // pred_fallthru
    _
  // Predicated region
  $region26: #{forward.9} parent=0 // pred_check
    _
  $region27: #{forward.9} parent=0 // pred_check_branch
    %37 = sbr.rel (0) target = $region29
  $region28: #{forward.9} parent=0 // pred_region
    _
  $region29: #{forward.9} parent=0 // pred_fallthru
    _
  // Predicated region
  $region30: #{forward.9} parent=0 // pred_check
    _
  $region31: #{forward.9} parent=0 // pred_check_branch
    %39 = sbr.rel (0) target = $region33
  $region32: #{forward.9} parent=0 // pred_region
    _
  $region33: #{forward.9} parent=0 // pred_fallthru
    _
  // Predicated region
  $region34: #{forward.9} parent=0 // pred_check
    _
  $region35: #{forward.9} parent=0 // pred_check_branch
    %41 = sbr.rel (0) target = $region37
  $region36: #{forward.9} parent=0 // pred_region
    _
  $region37: #{forward.9} parent=0 // pred_fallthru
    _
  // Predicated region
  $region38: #{forward.9} parent=0 // pred_check
    _
  $region39: #{forward.9} parent=0 // pred_check_branch
    %43 = sbr.rel (0) target = $region41
  $region40: #{forward.9} parent=0 // pred_region
    _
  $region41: #{forward.9} parent=0 // pred_fallthru
    _
  // Predicated region
  $region42: #{forward.9} parent=0 // pred_check
    _
  $region43: #{forward.9} parent=0 // pred_check_branch
    %45 = sbr.rel (0) target = $region45
  $region44: #{forward.9} parent=0 // pred_region
    _
  $region45: #{forward.9} parent=0 // pred_fallthru
    _
  // Predicated region
  $region46: #{forward.9} parent=0 // pred_check
    _
  $region47: #{forward.9} parent=0 // pred_check_branch
    %47 = sbr.rel (0) target = $region49
  $region48: #{forward.9} parent=0 // pred_region
    _
  $region49: #{forward.9} parent=0 // pred_fallthru
    _
  // Predicated region
  $region50: #{forward.9} parent=0 // pred_check
    _
  $region51: #{forward.9} parent=0 // pred_check_branch
    %49 = sbr.rel (0) target = $region53
  $region52: #{forward.9} parent=0 // pred_region
    _
  $region53: #{forward.9} parent=0 // pred_fallthru
    _
  // Predicated region
  $region54: #{forward.9} parent=0 // pred_check
    _
  $region55: #{forward.9} parent=0 // pred_check_branch
    %51 = sbr.rel (0) target = $region57
  $region56: #{forward.9} parent=0 // pred_region
    _
  $region57: #{forward.9} parent=0 // pred_fallthru
    _
  // Predicated region
  $region58: #{forward.9} parent=0 // pred_check
    _
  $region59: #{forward.9} parent=0 // pred_check_branch
    %53 = sbr.rel (0) target = $region61
  $region60: #{forward.9} parent=0 // pred_region
    _
  $region61: #{forward.9} parent=0 // pred_fallthru
    _
  // Predicated region
  $region62: #{forward.9} parent=0 // pred_check
    _
  $region63: #{forward.9} parent=0 // pred_check_branch
    %55 = sbr.rel (0) target = $region65
  $region64: #{forward.9} parent=0 // pred_region
    _
  $region65: #{forward.9} parent=0 // pred_fallthru
    _
  // Predicated region
  $region66: #{forward.9} parent=0 // pred_check
    _
  $region67: #{forward.9} parent=0 // pred_check_branch
    %57 = sbr.rel (0) target = $region69
  $region68: #{forward.9} parent=0 // pred_region
    _
  $region69: #{forward.9} parent=0 // pred_fallthru
    _
  // Predicated region
  $region70: #{forward.9} parent=0 // pred_check
    _
  $region71: #{forward.9} parent=0 // pred_check_branch
    %59 = sbr.rel (0) target = $region73
  $region72: #{forward.9} parent=0 // pred_region
    _
  $region73: #{forward.9} parent=0 // pred_fallthru
    _
  // Predicated region
  $region74: #{forward.9} parent=0 // pred_check
    _
  $region75: #{forward.9} parent=0 // pred_check_branch
    %61 = sbr.rel (0) target = $region77
  $region76: #{forward.9} parent=0 // pred_region
    _
  $region77: #{forward.9} parent=0 // pred_fallthru
    _
  %v63 = vld [vmem:[%s0] sm:$0x3]
  %v64 = vunpack.c.l.bf16 %v63
  %v65 = vld [vmem:[%s2] sm:$0xf]
  %v66 = vld [vmem:[%s7] sm:$0xff]
  %v67 = vld [vmem:[%s7 + $0x8] sm:$0xf]
  %v68 = vld [vmem:[%s7 + $0xc] sm:$0xff]
  %v69 = vld [vmem:[%s7 + $0x14] sm:$0xf]
  %v70 = vld [vmem:[%s7 + $0x18] sm:$0xff]
  %v71 = vld [vmem:[%s7 + $0x20] sm:$0xf]
  %v72 = vld [vmem:[%s7 + $0x24] sm:$0xff]
  %v73 = vld [vmem:[%s7 + $0x2c] sm:$0xf]
  %v74 = vld [vmem:[%s7 + $0x30] sm:$0xff]
  %v75 = vld [vmem:[%s7 + $0x38] sm:$0xf]
  %v76 = vld [vmem:[%s7 + $0x3c] sm:$0xff]
  %v77 = vld [vmem:[%s7 + $0x44] sm:$0xf]
  %v78 = vld [vmem:[%s7 + $0x48] sm:$0xff]
  %v79 = vld [vmem:[%s7 + $0x50] sm:$0xf]
  %v80 = vld [vmem:[%s7 + $0x54] sm:$0xff]
  %v81 = vld [vmem:[%s7 + $0x5c] sm:$0xf]
  %v82 = vld [vmem:[%s7 + $0x60] sm:$0xff]
  %v83 = vld [vmem:[%s7 + $0x68] sm:$0xf]
  %v84 = vld [vmem:[%s7 + $0x6c] sm:$0xff]
  %v85 = vld [vmem:[%s7 + $0x74] sm:$0xf]
  %v86 = vld [vmem:[%s7 + $0x78] sm:$0xff]
  %v87 = vld [vmem:[%s7 + $0x80] sm:$0xf]
  %v88 = vld [vmem:[%s7 + $0x84] sm:$0xff]
  %v89 = vld [vmem:[%s7 + $0x8c] sm:$0xf]
  %v90 = vld [vmem:[%s7 + $0x90] sm:$0xff]
  %v91 = vld [vmem:[%s7 + $0x98] sm:$0xf]
  %v92 = vld [vmem:[%s7 + $0x9c] sm:$0xff]
  %v93 = vld [vmem:[%s7 + $0xa4] sm:$0xf]
  %v94 = vld [vmem:[%s7 + $0xa8] sm:$0xff]
  %v95 = vld [vmem:[%s7 + $0xb0] sm:$0xf]
  %v96 = vld [vmem:[%s7 + $0xb4] sm:$0xff]
  %v97 = vld [vmem:[%s7 + $0xbc] sm:$0xf]
  %v98 = vld [vmem:[%s8] sm:$0x7]
  %v100 = vlaneseq
  %v101 = vshrl.u32 %v100, 7
  %v102 = vsub.s32 0, %v101
  %v103 = vrot.slane %v98, %v102
  %v104 = vlaneseq
  %v105 = vshrl.u32 %v104, 7
  %v106 = vsub.s32 1, %v105
  %v107 = vrot.slane %v98, %v106
  %v108 = vlaneseq
  %v109 = vshrl.u32 %v108, 7
  %v110 = vsub.s32 2, %v109
  %v111 = vrot.slane %v98, %v110
  %v147 = vunpack.c.l.b16 %v66
  %v148 = vunpack.c.h.b16 %v66
  %v149 = vunpack.c.l.b16 %v67
  %v150 = vunpack.c.l.b16 %v68
  %v151 = vunpack.c.h.b16 %v68
  %v152 = vunpack.c.l.b16 %v69
  %v153 = vunpack.c.l.b16 %v70
  %v154 = vunpack.c.h.b16 %v70
  %v155 = vunpack.c.l.b16 %v71
  %v156 = vunpack.c.l.b16 %v72
  %v157 = vunpack.c.h.b16 %v72
  %v158 = vunpack.c.l.b16 %v73
  %v159 = vunpack.c.l.b16 %v74
  %v160 = vunpack.c.h.b16 %v74
  %v161 = vunpack.c.l.b16 %v75
  %v162 = vunpack.c.l.b16 %v76
  %v163 = vunpack.c.h.b16 %v76
  %v164 = vunpack.c.l.b16 %v77
  %v165 = vunpack.c.l.b16 %v78
  %v166 = vunpack.c.h.b16 %v78
  %v167 = vunpack.c.l.b16 %v79
  %v168 = vunpack.c.l.b16 %v80
  %v169 = vunpack.c.h.b16 %v80
  %v170 = vunpack.c.l.b16 %v81
  %v171 = vunpack.c.l.b16 %v82
  %v172 = vunpack.c.h.b16 %v82
  %v173 = vunpack.c.l.b16 %v83
  %v174 = vunpack.c.l.b16 %v84
  %v175 = vunpack.c.h.b16 %v84
  %v176 = vunpack.c.l.b16 %v85
  %v177 = vunpack.c.l.b16 %v86
  %v178 = vunpack.c.h.b16 %v86
  %v179 = vunpack.c.l.b16 %v87
  %v180 = vunpack.c.l.b16 %v88
  %v181 = vunpack.c.h.b16 %v88
  %v182 = vunpack.c.l.b16 %v89
  %v183 = vunpack.c.l.b16 %v90
  %v184 = vunpack.c.h.b16 %v90
  %v185 = vunpack.c.l.b16 %v91
  %v186 = vunpack.c.l.b16 %v92
  %v187 = vunpack.c.h.b16 %v92
  %v188 = vunpack.c.l.b16 %v93
  %v189 = vunpack.c.l.b16 %v94
  %v190 = vunpack.c.h.b16 %v94
  %v191 = vunpack.c.l.b16 %v95
  %v192 = vunpack.c.l.b16 %v96
  %v193 = vunpack.c.h.b16 %v96
  %v194 = vunpack.c.l.b16 %v97
  %v195 = vpack.c.b16 %v150, %v147
  %v196 = vpack.c.b16 %v151, %v148
  %v197 = vpack.c.b16 %v152, %v149
  %v198 = vpack.c.b16 %v156, %v153
  %v199 = vpack.c.b16 %v157, %v154
  %v200 = vpack.c.b16 %v158, %v155
  %v201 = vpack.c.b16 %v162, %v159
  %v202 = vpack.c.b16 %v163, %v160
  %v203 = vpack.c.b16 %v164, %v161
  %v204 = vpack.c.b16 %v168, %v165
  %v205 = vpack.c.b16 %v169, %v166
  %v206 = vpack.c.b16 %v170, %v167
  %v207 = vpack.c.b16 %v174, %v171
  %v208 = vpack.c.b16 %v175, %v172
  %v209 = vpack.c.b16 %v176, %v173
  %v210 = vpack.c.b16 %v180, %v177
  %v211 = vpack.c.b16 %v181, %v178
  %v212 = vpack.c.b16 %v182, %v179
  %v213 = vpack.c.b16 %v186, %v183
  %v214 = vpack.c.b16 %v187, %v184
  %v215 = vpack.c.b16 %v188, %v185
  %v216 = vpack.c.b16 %v192, %v189
  %v217 = vpack.c.b16 %v193, %v190
  %v218 = vpack.c.b16 %v194, %v191
  %243 = vmatprep.subr.bf16.mxu0 %v196
  %244 = vmatpush1.bf16.msra.mxu0 %v195
  %245 = vmatprep.subr.bf16.mxu0 %v199
  %246 = vmatpush1.bf16.msra.mxu0 %v198
  %247 = vmatprep.subr.bf16.mxu0 %v202
  %248 = vmatpush1.bf16.msra.mxu0 %v201
  %249 = vmatprep.subr.bf16.mxu0 %v205
  %250 = vmatpush1.bf16.msra.mxu0 %v204
  %251 = vmatprep.subr.bf16.mxu0 %v208
  %252 = vmatpush1.bf16.msra.mxu0 %v207
  %253 = vmatprep.subr.bf16.mxu0 %v211
  %254 = vmatpush1.bf16.msra.mxu0 %v210
  %255 = vmatprep.subr.bf16.mxu0 %v214
  %256 = vmatpush1.bf16.msra.mxu0 %v213
  %257 = vmatprep.subr.bf16.mxu0 %v217
  %258 = vmatpush1.bf16.msra.mxu0 %v216
  %259 = vmatprep.subr.bf16.mxu0 0
  %260 = vmatpush1.bf16.msra.mxu0 0
  %261 = vmatprep.subr.bf16.mxu0 0
  %262 = vmatpush1.bf16.msra.mxu0 0
  %263 = vmatprep.subr.bf16.mxu0 0
  %264 = vmatpush1.bf16.msra.mxu0 0
  %265 = vmatprep.subr.bf16.mxu0 0
  %266 = vmatpush1.bf16.msra.mxu0 0
  %267 = vmatprep.subr.bf16.mxu0 0
  %268 = vmatpush1.bf16.msra.mxu0 0
  %269 = vmatprep.subr.bf16.mxu0 0
  %270 = vmatpush1.bf16.msra.mxu0 0
  %271 = vmatprep.subr.bf16.mxu0 0
  %272 = vmatpush1.bf16.msra.mxu0 0
  %273 = vmatprep.subr.bf16.mxu0 0
  %274 = vmatpush1.bf16.msra.mxu0 0
  %275 = vmatprep.mubr.bf16.mxu0 0
  %276 = vmatmul.mubr.bf16.gmra.mrb[0].mxu0 %v63
  %v277 = vpop.f32.mrb[0].mxu0
  %v278 = vadd.f32 %v103, %v277
  %v279 = vpop.f32.mrb[0].mxu0
  %v280 = vadd.f32 %v107, %v279
  %v281 = vpop.f32.mrb[0].mxu0
  %v282 = vpop.f32.mrb[0].mxu0
  %283 = vdwg.mxu0
  %284 = vmatprep.subr.bf16.mxu0 0
  %285 = vmatpush1.bf16.msra.mxu0 %v197
  %286 = vmatprep.subr.bf16.mxu0 0
  %287 = vmatpush1.bf16.msra.mxu0 %v200
  %288 = vmatprep.subr.bf16.mxu0 0
  %289 = vmatpush1.bf16.msra.mxu0 %v203
  %290 = vmatprep.subr.bf16.mxu0 0
  %291 = vmatpush1.bf16.msra.mxu0 %v206
  %292 = vmatprep.subr.bf16.mxu0 0
  %293 = vmatpush1.bf16.msra.mxu0 %v209
  %294 = vmatprep.subr.bf16.mxu0 0
  %295 = vmatpush1.bf16.msra.mxu0 %v212
  %296 = vmatprep.subr.bf16.mxu0 0
  %297 = vmatpush1.bf16.msra.mxu0 %v215
  %298 = vmatprep.subr.bf16.mxu0 0
  %299 = vmatpush1.bf16.msra.mxu0 %v218
  %300 = vmatprep.subr.bf16.mxu0 0
  %301 = vmatpush1.bf16.msra.mxu0 0
  %302 = vmatprep.subr.bf16.mxu0 0
  %303 = vmatpush1.bf16.msra.mxu0 0
  %304 = vmatprep.subr.bf16.mxu0 0
  %305 = vmatpush1.bf16.msra.mxu0 0
  %306 = vmatprep.subr.bf16.mxu0 0
  %307 = vmatpush1.bf16.msra.mxu0 0
  %308 = vmatprep.subr.bf16.mxu0 0
  %309 = vmatpush1.bf16.msra.mxu0 0
  %310 = vmatprep.subr.bf16.mxu0 0
  %311 = vmatpush1.bf16.msra.mxu0 0
  %312 = vmatprep.subr.bf16.mxu0 0
  %313 = vmatpush1.bf16.msra.mxu0 0
  %314 = vmatprep.subr.bf16.mxu0 0
  %315 = vmatpush1.bf16.msra.mxu0 0
  %316 = vmatprep.mubr.bf16.mxu0 0
  %317 = vmatmul.mubr.bf16.gmra.mrb[0].mxu0 %v63
  %v318 = vpop.f32.mrb[0].mxu0
  %v319 = vadd.f32 %v111, %v318
  %v320 = vpop.f32.mrb[0].mxu0
  %v321 = vpop.f32.mrb[0].mxu0
  %v322 = vpop.f32.mrb[0].mxu0
  %323 = vdwg.mxu0
  %v324 = vpack.c.bf16 %v278, %v278
  %v325 = vpack.c.bf16 %v280, %v280
  %v326 = vpack.c.bf16 %v319, %v319
  %vm327 = vcmask 130048
  %v329 = vsel %vm327, %v324, 0
  %v332 = vsel %vm327, %v325, 0
  %334 = vmatprep.subr.bf16.mxu0 0
  %335 = vmatpush1.bf16.xpose.msra.mxu0 %v332
  %336 = vmatprep.subr.bf16.mxu0 0
  %337 = vmatpush1.bf16.xpose.msra.mxu0 0
  %338 = vmatprep.subr.bf16.mxu0 0
  %339 = vmatpush1.bf16.xpose.msra.mxu0 0
  %340 = vmatprep.subr.bf16.mxu0 0
  %341 = vmatpush1.bf16.xpose.msra.mxu0 0
  %342 = vmatprep.subr.bf16.mxu0 0
  %343 = vmatpush1.bf16.xpose.msra.mxu0 0
  %344 = vmatprep.subr.bf16.mxu0 0
  %345 = vmatpush1.bf16.xpose.msra.mxu0 0
  %346 = vmatprep.subr.bf16.mxu0 0
  %347 = vmatpush1.bf16.xpose.msra.mxu0 0
  %348 = vmatprep.subr.bf16.mxu0 0
  %349 = vmatpush1.bf16.xpose.msra.mxu0 0
  %350 = vmatprep.subr.bf16.mxu0 0
  %351 = vmatpush1.bf16.xpose.msra.mxu0 0
  %352 = vmatprep.subr.bf16.mxu0 0
  %353 = vmatpush1.bf16.xpose.msra.mxu0 0
  %354 = vmatprep.subr.bf16.mxu0 0
  %355 = vmatpush1.bf16.xpose.msra.mxu0 0
  %356 = vmatprep.subr.bf16.mxu0 0
  %357 = vmatpush1.bf16.xpose.msra.mxu0 0
  %358 = vmatprep.subr.bf16.mxu0 0
  %359 = vmatpush1.bf16.xpose.msra.mxu0 0
  %360 = vmatprep.subr.bf16.mxu0 0
  %361 = vmatpush1.bf16.xpose.msra.mxu0 0
  %362 = vmatprep.subr.bf16.mxu0 0
  %363 = vmatpush1.bf16.xpose.msra.mxu0 0
  %364 = vmatprep.subr.bf16.mxu0 0
  %365 = vmatpush1.bf16.xpose.msra.mxu0 0
  %366 = vmatprep.mubr.bf16.mxu0 0
  %367 = vmatmul.mubr.bf16.gmra.mrb[0].mxu0 %v329
  %v368 = vpop.f32.mrb[0].mxu0
  %v369 = vadd.f32 0.0, %v368
  %v370 = vpop.f32.mrb[0].mxu0
  %v371 = vpop.f32.mrb[0].mxu0
  %v372 = vpop.f32.mrb[0].mxu0
  %373 = vdwg.mxu0
  %v374 = vmul.f32 %v369, 0.25
  %v375 = vadd.f32 %v374, %v65
  %vm376 = vcmask 27648
  %v377 = vsel %vm376, %v375, -inf
  %378 = vmax.xlane.f32.xlu0 %v377
  %v379 = vpop.xlane.xlu0 %378
  %v380 = vsub.f32 %v375, %v379
  %v381 = vmul.f32 %v380, 1.442695
  %v382 = vpow.pop %v381
  %v383 = vsel %vm376, %v382, 0.0
  %384 = vadd.xlane.f32.xlu0 %v383
  %v385 = vpop.xlane.xlu0 %384
  %v386 = vrcp.pop %v385
  %v387 = vmul.f32 %v382, %v386
  %v388 = vpack.c.bf16 %v387, %v387
  %vm389 = vcmask 31744
  %v391 = vsel %vm389, %v388, 0
  %vm393 = vcmask 1041408
  %v395 = vsel %vm393, %v326, 0
  %397 = vmatprep.subr.bf16.mxu0 0
  %398 = vmatpush1.bf16.msra.mxu0 %v395
  %399 = vmatprep.subr.bf16.mxu0 0
  %400 = vmatpush1.bf16.msra.mxu0 0
  %401 = vmatprep.subr.bf16.mxu0 0
  %402 = vmatpush1.bf16.msra.mxu0 0
  %403 = vmatprep.subr.bf16.mxu0 0
  %404 = vmatpush1.bf16.msra.mxu0 0
  %405 = vmatprep.subr.bf16.mxu0 0
  %406 = vmatpush1.bf16.msra.mxu0 0
  %407 = vmatprep.subr.bf16.mxu0 0
  %408 = vmatpush1.bf16.msra.mxu0 0
  %409 = vmatprep.subr.bf16.mxu0 0
  %410 = vmatpush1.bf16.msra.mxu0 0
  %411 = vmatprep.subr.bf16.mxu0 0
  %412 = vmatpush1.bf16.msra.mxu0 0
  %413 = vmatprep.subr.bf16.mxu0 0
  %414 = vmatpush1.bf16.msra.mxu0 0
  %415 = vmatprep.subr.bf16.mxu0 0
  %416 = vmatpush1.bf16.msra.mxu0 0
  %417 = vmatprep.subr.bf16.mxu0 0
  %418 = vmatpush1.bf16.msra.mxu0 0
  %419 = vmatprep.subr.bf16.mxu0 0
  %420 = vmatpush1.bf16.msra.mxu0 0
  %421 = vmatprep.subr.bf16.mxu0 0
  %422 = vmatpush1.bf16.msra.mxu0 0
  %423 = vmatprep.subr.bf16.mxu0 0
  %424 = vmatpush1.bf16.msra.mxu0 0
  %425 = vmatprep.subr.bf16.mxu0 0
  %426 = vmatpush1.bf16.msra.mxu0 0
  %427 = vmatprep.subr.bf16.mxu0 0
  %428 = vmatpush1.bf16.msra.mxu0 0
  %429 = vmatprep.mubr.bf16.mxu0 0
  %430 = vmatmul.mubr.bf16.gmra.mrb[0].mxu0 %v391
  %v431 = vpop.f32.mrb[0].mxu0
  %v432 = vadd.f32 0.0, %v431
  %v433 = vpop.f32.mrb[0].mxu0
  %v434 = vpop.f32.mrb[0].mxu0
  %v435 = vpop.f32.mrb[0].mxu0
  %436 = vdwg.mxu0
  %438 = vrot.lane.b32.xlu0 %v324, 112
  %v439 = vpop.permute.xlu0 %438
  %441 = vrot.lane.b32.xlu0 %v325, 112
  %v442 = vpop.permute.xlu0 %441
  %v444 = vsel %vm327, %v439, 0
  %v447 = vsel %vm327, %v442, 0
  %449 = vmatprep.subr.bf16.mxu0 0
  %450 = vmatpush1.bf16.xpose.msra.mxu0 %v447
  %451 = vmatprep.subr.bf16.mxu0 0
  %452 = vmatpush1.bf16.xpose.msra.mxu0 0
  %453 = vmatprep.subr.bf16.mxu0 0
  %454 = vmatpush1.bf16.xpose.msra.mxu0 0
  %455 = vmatprep.subr.bf16.mxu0 0
  %456 = vmatpush1.bf16.xpose.msra.mxu0 0
  %457 = vmatprep.subr.bf16.mxu0 0
  %458 = vmatpush1.bf16.xpose.msra.mxu0 0
  %459 = vmatprep.subr.bf16.mxu0 0
  %460 = vmatpush1.bf16.xpose.msra.mxu0 0
  %461 = vmatprep.subr.bf16.mxu0 0
  %462 = vmatpush1.bf16.xpose.msra.mxu0 0
  %463 = vmatprep.subr.bf16.mxu0 0
  %464 = vmatpush1.bf16.xpose.msra.mxu0 0
  %465 = vmatprep.subr.bf16.mxu0 0
  %466 = vmatpush1.bf16.xpose.msra.mxu0 0
  %467 = vmatprep.subr.bf16.mxu0 0
  %468 = vmatpush1.bf16.xpose.msra.mxu0 0
  %469 = vmatprep.subr.bf16.mxu0 0
  %470 = vmatpush1.bf16.xpose.msra.mxu0 0
  %471 = vmatprep.subr.bf16.mxu0 0
  %472 = vmatpush1.bf16.xpose.msra.mxu0 0
  %473 = vmatprep.subr.bf16.mxu0 0
  %474 = vmatpush1.bf16.xpose.msra.mxu0 0
  %475 = vmatprep.subr.bf16.mxu0 0
  %476 = vmatpush1.bf16.xpose.msra.mxu0 0
  %477 = vmatprep.subr.bf16.mxu0 0
  %478 = vmatpush1.bf16.xpose.msra.mxu0 0
  %479 = vmatprep.subr.bf16.mxu0 0
  %480 = vmatpush1.bf16.xpose.msra.mxu0 0
  %481 = vmatprep.mubr.bf16.mxu0 0
  %482 = vmatmul.mubr.bf16.gmra.mrb[0].mxu0 %v444
  %v483 = vpop.f32.mrb[0].mxu0
  %v484 = vadd.f32 0.0, %v483
  %v485 = vpop.f32.mrb[0].mxu0
  %v486 = vpop.f32.mrb[0].mxu0
  %v487 = vpop.f32.mrb[0].mxu0
  %488 = vdwg.mxu0
  %v489 = vmul.f32 %v484, 0.25
  %v490 = vadd.f32 %v489, %v65
  %v491 = vsel %vm376, %v490, -inf
  %492 = vmax.xlane.f32.xlu0 %v491
  %v493 = vpop.xlane.xlu0 %492
  %v494 = vsub.f32 %v490, %v493
  %v495 = vmul.f32 %v494, 1.442695
  %v496 = vpow.pop %v495
  %v497 = vsel %vm376, %v496, 0.0
  %498 = vadd.xlane.f32.xlu0 %v497
  %v499 = vpop.xlane.xlu0 %498
  %v500 = vrcp.pop %v499
  %v501 = vmul.f32 %v496, %v500
  %v502 = vpack.c.bf16 %v501, %v501
  %504 = vrot.lane.b32.xlu0 %v326, 112
  %v505 = vpop.permute.xlu0 %504
  %v507 = vsel %vm389, %v502, 0
  %v510 = vsel %vm393, %v505, 0
  %512 = vmatprep.subr.bf16.mxu0 0
  %513 = vmatpush1.bf16.msra.mxu0 %v510
  %514 = vmatprep.subr.bf16.mxu0 0
  %515 = vmatpush1.bf16.msra.mxu0 0
  %516 = vmatprep.subr.bf16.mxu0 0
  %517 = vmatpush1.bf16.msra.mxu0 0
  %518 = vmatprep.subr.bf16.mxu0 0
  %519 = vmatpush1.bf16.msra.mxu0 0
  %520 = vmatprep.subr.bf16.mxu0 0
  %521 = vmatpush1.bf16.msra.mxu0 0
  %522 = vmatprep.subr.bf16.mxu0 0
  %523 = vmatpush1.bf16.msra.mxu0 0
  %524 = vmatprep.subr.bf16.mxu0 0
  %525 = vmatpush1.bf16.msra.mxu0 0
  %526 = vmatprep.subr.bf16.mxu0 0
  %527 = vmatpush1.bf16.msra.mxu0 0
  %528 = vmatprep.subr.bf16.mxu0 0
  %529 = vmatpush1.bf16.msra.mxu0 0
  %530 = vmatprep.subr.bf16.mxu0 0
  %531 = vmatpush1.bf16.msra.mxu0 0
  %532 = vmatprep.subr.bf16.mxu0 0
  %533 = vmatpush1.bf16.msra.mxu0 0
  %534 = vmatprep.subr.bf16.mxu0 0
  %535 = vmatpush1.bf16.msra.mxu0 0
  %536 = vmatprep.subr.bf16.mxu0 0
  %537 = vmatpush1.bf16.msra.mxu0 0
  %538 = vmatprep.subr.bf16.mxu0 0
  %539 = vmatpush1.bf16.msra.mxu0 0
  %540 = vmatprep.subr.bf16.mxu0 0
  %541 = vmatpush1.bf16.msra.mxu0 0
  %542 = vmatprep.subr.bf16.mxu0 0
  %543 = vmatpush1.bf16.msra.mxu0 0
  %544 = vmatprep.mubr.bf16.mxu0 0
  %545 = vmatmul.mubr.bf16.gmra.mrb[0].mxu0 %v507
  %v546 = vpop.f32.mrb[0].mxu0
  %v547 = vadd.f32 0.0, %v546
  %v548 = vpop.f32.mrb[0].mxu0
  %v549 = vpop.f32.mrb[0].mxu0
  %v550 = vpop.f32.mrb[0].mxu0
  %551 = vdwg.mxu0
  %552 = vrot.lane.b32.xlu0 %v324, 96
  %v553 = vpop.permute.xlu0 %552
  %554 = vrot.lane.b32.xlu0 %v325, 96
  %v555 = vpop.permute.xlu0 %554
  %v557 = vsel %vm327, %v553, 0
  %v560 = vsel %vm327, %v555, 0
  %562 = vmatprep.subr.bf16.mxu0 0
  %563 = vmatpush1.bf16.xpose.msra.mxu0 %v560
  %564 = vmatprep.subr.bf16.mxu0 0
  %565 = vmatpush1.bf16.xpose.msra.mxu0 0
  %566 = vmatprep.subr.bf16.mxu0 0
  %567 = vmatpush1.bf16.xpose.msra.mxu0 0
  %568 = vmatprep.subr.bf16.mxu0 0
  %569 = vmatpush1.bf16.xpose.msra.mxu0 0
  %570 = vmatprep.subr.bf16.mxu0 0
  %571 = vmatpush1.bf16.xpose.msra.mxu0 0
  %572 = vmatprep.subr.bf16.mxu0 0
  %573 = vmatpush1.bf16.xpose.msra.mxu0 0
  %574 = vmatprep.subr.bf16.mxu0 0
  %575 = vmatpush1.bf16.xpose.msra.mxu0 0
  %576 = vmatprep.subr.bf16.mxu0 0
  %577 = vmatpush1.bf16.xpose.msra.mxu0 0
  %578 = vmatprep.subr.bf16.mxu0 0
  %579 = vmatpush1.bf16.xpose.msra.mxu0 0
  %580 = vmatprep.subr.bf16.mxu0 0
  %581 = vmatpush1.bf16.xpose.msra.mxu0 0
  %582 = vmatprep.subr.bf16.mxu0 0
  %583 = vmatpush1.bf16.xpose.msra.mxu0 0
  %584 = vmatprep.subr.bf16.mxu0 0
  %585 = vmatpush1.bf16.xpose.msra.mxu0 0
  %586 = vmatprep.subr.bf16.mxu0 0
  %587 = vmatpush1.bf16.xpose.msra.mxu0 0
  %588 = vmatprep.subr.bf16.mxu0 0
  %589 = vmatpush1.bf16.xpose.msra.mxu0 0
  %590 = vmatprep.subr.bf16.mxu0 0
  %591 = vmatpush1.bf16.xpose.msra.mxu0 0
  %592 = vmatprep.subr.bf16.mxu0 0
  %593 = vmatpush1.bf16.xpose.msra.mxu0 0
  %594 = vmatprep.mubr.bf16.mxu0 0
  %595 = vmatmul.mubr.bf16.gmra.mrb[0].mxu0 %v557
  %v596 = vpop.f32.mrb[0].mxu0
  %v597 = vadd.f32 0.0, %v596
  %v598 = vpop.f32.mrb[0].mxu0
  %v599 = vpop.f32.mrb[0].mxu0
  %v600 = vpop.f32.mrb[0].mxu0
  %601 = vdwg.mxu0
  %v602 = vmul.f32 %v597, 0.25
  %v603 = vadd.f32 %v602, %v65
  %v604 = vsel %vm376, %v603, -inf
  %605 = vmax.xlane.f32.xlu0 %v604
  %v606 = vpop.xlane.xlu0 %605
  %v607 = vsub.f32 %v603, %v606
  %v608 = vmul.f32 %v607, 1.442695
  %v609 = vpow.pop %v608
  %v610 = vsel %vm376, %v609, 0.0
  %611 = vadd.xlane.f32.xlu0 %v610
  %v612 = vpop.xlane.xlu0 %611
  %v613 = vrcp.pop %v612
  %v614 = vmul.f32 %v609, %v613
  %v615 = vpack.c.bf16 %v614, %v614
  %616 = vrot.lane.b32.xlu0 %v326, 96
  %v617 = vpop.permute.xlu0 %616
  %v619 = vsel %vm389, %v615, 0
  %v622 = vsel %vm393, %v617, 0
  %624 = vmatprep.subr.bf16.mxu0 0
  %625 = vmatpush1.bf16.msra.mxu0 %v622
  %626 = vmatprep.subr.bf16.mxu0 0
  %627 = vmatpush1.bf16.msra.mxu0 0
  %628 = vmatprep.subr.bf16.mxu0 0
  %629 = vmatpush1.bf16.msra.mxu0 0
  %630 = vmatprep.subr.bf16.mxu0 0
  %631 = vmatpush1.bf16.msra.mxu0 0
  %632 = vmatprep.subr.bf16.mxu0 0
  %633 = vmatpush1.bf16.msra.mxu0 0
  %634 = vmatprep.subr.bf16.mxu0 0
  %635 = vmatpush1.bf16.msra.mxu0 0
  %636 = vmatprep.subr.bf16.mxu0 0
  %637 = vmatpush1.bf16.msra.mxu0 0
  %638 = vmatprep.subr.bf16.mxu0 0
  %639 = vmatpush1.bf16.msra.mxu0 0
  %640 = vmatprep.subr.bf16.mxu0 0
  %641 = vmatpush1.bf16.msra.mxu0 0
  %642 = vmatprep.subr.bf16.mxu0 0
  %643 = vmatpush1.bf16.msra.mxu0 0
  %644 = vmatprep.subr.bf16.mxu0 0
  %645 = vmatpush1.bf16.msra.mxu0 0
  %646 = vmatprep.subr.bf16.mxu0 0
  %647 = vmatpush1.bf16.msra.mxu0 0
  %648 = vmatprep.subr.bf16.mxu0 0
  %649 = vmatpush1.bf16.msra.mxu0 0
  %650 = vmatprep.subr.bf16.mxu0 0
  %651 = vmatpush1.bf16.msra.mxu0 0
  %652 = vmatprep.subr.bf16.mxu0 0
  %653 = vmatpush1.bf16.msra.mxu0 0
  %654 = vmatprep.subr.bf16.mxu0 0
  %655 = vmatpush1.bf16.msra.mxu0 0
  %656 = vmatprep.mubr.bf16.mxu0 0
  %657 = vmatmul.mubr.bf16.gmra.mrb[0].mxu0 %v619
  %v658 = vpop.f32.mrb[0].mxu0
  %v659 = vadd.f32 0.0, %v658
  %v660 = vpop.f32.mrb[0].mxu0
  %v661 = vpop.f32.mrb[0].mxu0
  %v662 = vpop.f32.mrb[0].mxu0
  %663 = vdwg.mxu0
  %664 = vrot.lane.b32.xlu0 %v324, 80
  %v665 = vpop.permute.xlu0 %664
  %666 = vrot.lane.b32.xlu0 %v325, 80
  %v667 = vpop.permute.xlu0 %666
  %v669 = vsel %vm327, %v665, 0
  %v672 = vsel %vm327, %v667, 0
  %674 = vmatprep.subr.bf16.mxu0 0
  %675 = vmatpush1.bf16.xpose.msra.mxu0 %v672
  %676 = vmatprep.subr.bf16.mxu0 0
  %677 = vmatpush1.bf16.xpose.msra.mxu0 0
  %678 = vmatprep.subr.bf16.mxu0 0
  %679 = vmatpush1.bf16.xpose.msra.mxu0 0
  %680 = vmatprep.subr.bf16.mxu0 0
  %681 = vmatpush1.bf16.xpose.msra.mxu0 0
  %682 = vmatprep.subr.bf16.mxu0 0
  %683 = vmatpush1.bf16.xpose.msra.mxu0 0
  %684 = vmatprep.subr.bf16.mxu0 0
  %685 = vmatpush1.bf16.xpose.msra.mxu0 0
  %686 = vmatprep.subr.bf16.mxu0 0
  %687 = vmatpush1.bf16.xpose.msra.mxu0 0
  %688 = vmatprep.subr.bf16.mxu0 0
  %689 = vmatpush1.bf16.xpose.msra.mxu0 0
  %690 = vmatprep.subr.bf16.mxu0 0
  %691 = vmatpush1.bf16.xpose.msra.mxu0 0
  %692 = vmatprep.subr.bf16.mxu0 0
  %693 = vmatpush1.bf16.xpose.msra.mxu0 0
  %694 = vmatprep.subr.bf16.mxu0 0
  %695 = vmatpush1.bf16.xpose.msra.mxu0 0
  %696 = vmatprep.subr.bf16.mxu0 0
  %697 = vmatpush1.bf16.xpose.msra.mxu0 0
  %698 = vmatprep.subr.bf16.mxu0 0
  %699 = vmatpush1.bf16.xpose.msra.mxu0 0
  %700 = vmatprep.subr.bf16.mxu0 0
  %701 = vmatpush1.bf16.xpose.msra.mxu0 0
  %702 = vmatprep.subr.bf16.mxu0 0
  %703 = vmatpush1.bf16.xpose.msra.mxu0 0
  %704 = vmatprep.subr.bf16.mxu0 0
  %705 = vmatpush1.bf16.xpose.msra.mxu0 0
  %706 = vmatprep.mubr.bf16.mxu0 0
  %707 = vmatmul.mubr.bf16.gmra.mrb[0].mxu0 %v669
  %v708 = vpop.f32.mrb[0].mxu0
  %v709 = vadd.f32 0.0, %v708
  %v710 = vpop.f32.mrb[0].mxu0
  %v711 = vpop.f32.mrb[0].mxu0
  %v712 = vpop.f32.mrb[0].mxu0
  %713 = vdwg.mxu0
  %v714 = vmul.f32 %v709, 0.25
  %v715 = vadd.f32 %v714, %v65
  %v716 = vsel %vm376, %v715, -inf
  %717 = vmax.xlane.f32.xlu0 %v716
  %v718 = vpop.xlane.xlu0 %717
  %v719 = vsub.f32 %v715, %v718
  %v720 = vmul.f32 %v719, 1.442695
  %v721 = vpow.pop %v720
  %v722 = vsel %vm376, %v721, 0.0
  %723 = vadd.xlane.f32.xlu0 %v722
  %v724 = vpop.xlane.xlu0 %723
  %v725 = vrcp.pop %v724
  %v726 = vmul.f32 %v721, %v725
  %v727 = vpack.c.bf16 %v726, %v726
  %728 = vrot.lane.b32.xlu0 %v326, 80
  %v729 = vpop.permute.xlu0 %728
  %v731 = vsel %vm389, %v727, 0
  %v734 = vsel %vm393, %v729, 0
  %736 = vmatprep.subr.bf16.mxu0 0
  %737 = vmatpush1.bf16.msra.mxu0 %v734
  %738 = vmatprep.subr.bf16.mxu0 0
  %739 = vmatpush1.bf16.msra.mxu0 0
  %740 = vmatprep.subr.bf16.mxu0 0
  %741 = vmatpush1.bf16.msra.mxu0 0
  %742 = vmatprep.subr.bf16.mxu0 0
  %743 = vmatpush1.bf16.msra.mxu0 0
  %744 = vmatprep.subr.bf16.mxu0 0
  %745 = vmatpush1.bf16.msra.mxu0 0
  %746 = vmatprep.subr.bf16.mxu0 0
  %747 = vmatpush1.bf16.msra.mxu0 0
  %748 = vmatprep.subr.bf16.mxu0 0
  %749 = vmatpush1.bf16.msra.mxu0 0
  %750 = vmatprep.subr.bf16.mxu0 0
  %751 = vmatpush1.bf16.msra.mxu0 0
  %752 = vmatprep.subr.bf16.mxu0 0
  %753 = vmatpush1.bf16.msra.mxu0 0
  %754 = vmatprep.subr.bf16.mxu0 0
  %755 = vmatpush1.bf16.msra.mxu0 0
  %756 = vmatprep.subr.bf16.mxu0 0
  %757 = vmatpush1.bf16.msra.mxu0 0
  %758 = vmatprep.subr.bf16.mxu0 0
  %759 = vmatpush1.bf16.msra.mxu0 0
  %760 = vmatprep.subr.bf16.mxu0 0
  %761 = vmatpush1.bf16.msra.mxu0 0
  %762 = vmatprep.subr.bf16.mxu0 0
  %763 = vmatpush1.bf16.msra.mxu0 0
  %764 = vmatprep.subr.bf16.mxu0 0
  %765 = vmatpush1.bf16.msra.mxu0 0
  %766 = vmatprep.subr.bf16.mxu0 0
  %767 = vmatpush1.bf16.msra.mxu0 0
  %768 = vmatprep.mubr.bf16.mxu0 0
  %769 = vmatmul.mubr.bf16.gmra.mrb[0].mxu0 %v731
  %v770 = vpop.f32.mrb[0].mxu0
  %v771 = vadd.f32 0.0, %v770
  %v772 = vpop.f32.mrb[0].mxu0
  %v773 = vpop.f32.mrb[0].mxu0
  %v774 = vpop.f32.mrb[0].mxu0
  %775 = vdwg.mxu0
  %776 = vrot.lane.b32.xlu0 %v324, 64
  %v777 = vpop.permute.xlu0 %776
  %778 = vrot.lane.b32.xlu0 %v325, 64
  %v779 = vpop.permute.xlu0 %778
  %v781 = vsel %vm327, %v777, 0
  %v784 = vsel %vm327, %v779, 0
  %786 = vmatprep.subr.bf16.mxu0 0
  %787 = vmatpush1.bf16.xpose.msra.mxu0 %v784
  %788 = vmatprep.subr.bf16.mxu0 0
  %789 = vmatpush1.bf16.xpose.msra.mxu0 0
  %790 = vmatprep.subr.bf16.mxu0 0
  %791 = vmatpush1.bf16.xpose.msra.mxu0 0
  %792 = vmatprep.subr.bf16.mxu0 0
  %793 = vmatpush1.bf16.xpose.msra.mxu0 0
  %794 = vmatprep.subr.bf16.mxu0 0
  %795 = vmatpush1.bf16.xpose.msra.mxu0 0
  %796 = vmatprep.subr.bf16.mxu0 0
  %797 = vmatpush1.bf16.xpose.msra.mxu0 0
  %798 = vmatprep.subr.bf16.mxu0 0
  %799 = vmatpush1.bf16.xpose.msra.mxu0 0
  %800 = vmatprep.subr.bf16.mxu0 0
  %801 = vmatpush1.bf16.xpose.msra.mxu0 0
  %802 = vmatprep.subr.bf16.mxu0 0
  %803 = vmatpush1.bf16.xpose.msra.mxu0 0
  %804 = vmatprep.subr.bf16.mxu0 0
  %805 = vmatpush1.bf16.xpose.msra.mxu0 0
  %806 = vmatprep.subr.bf16.mxu0 0
  %807 = vmatpush1.bf16.xpose.msra.mxu0 0
  %808 = vmatprep.subr.bf16.mxu0 0
  %809 = vmatpush1.bf16.xpose.msra.mxu0 0
  %810 = vmatprep.subr.bf16.mxu0 0
  %811 = vmatpush1.bf16.xpose.msra.mxu0 0
  %812 = vmatprep.subr.bf16.mxu0 0
  %813 = vmatpush1.bf16.xpose.msra.mxu0 0
  %814 = vmatprep.subr.bf16.mxu0 0
  %815 = vmatpush1.bf16.xpose.msra.mxu0 0
  %816 = vmatprep.subr.bf16.mxu0 0
  %817 = vmatpush1.bf16.xpose.msra.mxu0 0
  %818 = vmatprep.mubr.bf16.mxu0 0
  %819 = vmatmul.mubr.bf16.gmra.mrb[0].mxu0 %v781
  %v820 = vpop.f32.mrb[0].mxu0
  %v821 = vadd.f32 0.0, %v820
  %v822 = vpop.f32.mrb[0].mxu0
  %v823 = vpop.f32.mrb[0].mxu0
  %v824 = vpop.f32.mrb[0].mxu0
  %825 = vdwg.mxu0
  %v826 = vmul.f32 %v821, 0.25
  %v827 = vadd.f32 %v826, %v65
  %v828 = vsel %vm376, %v827, -inf
  %829 = vmax.xlane.f32.xlu0 %v828
  %v830 = vpop.xlane.xlu0 %829
  %v831 = vsub.f32 %v827, %v830
  %v832 = vmul.f32 %v831, 1.442695
  %v833 = vpow.pop %v832
  %v834 = vsel %vm376, %v833, 0.0
  %835 = vadd.xlane.f32.xlu0 %v834
  %v836 = vpop.xlane.xlu0 %835
  %v837 = vrcp.pop %v836
  %v838 = vmul.f32 %v833, %v837
  %v839 = vpack.c.bf16 %v838, %v838
  %840 = vrot.lane.b32.xlu0 %v326, 64
  %v841 = vpop.permute.xlu0 %840
  %v843 = vsel %vm389, %v839, 0
  %v846 = vsel %vm393, %v841, 0
  %848 = vmatprep.subr.bf16.mxu0 0
  %849 = vmatpush1.bf16.msra.mxu0 %v846
  %850 = vmatprep.subr.bf16.mxu0 0
  %851 = vmatpush1.bf16.msra.mxu0 0
  %852 = vmatprep.subr.bf16.mxu0 0
  %853 = vmatpush1.bf16.msra.mxu0 0
  %854 = vmatprep.subr.bf16.mxu0 0
  %855 = vmatpush1.bf16.msra.mxu0 0
  %856 = vmatprep.subr.bf16.mxu0 0
  %857 = vmatpush1.bf16.msra.mxu0 0
  %858 = vmatprep.subr.bf16.mxu0 0
  %859 = vmatpush1.bf16.msra.mxu0 0
  %860 = vmatprep.subr.bf16.mxu0 0
  %861 = vmatpush1.bf16.msra.mxu0 0
  %862 = vmatprep.subr.bf16.mxu0 0
  %863 = vmatpush1.bf16.msra.mxu0 0
  %864 = vmatprep.subr.bf16.mxu0 0
  %865 = vmatpush1.bf16.msra.mxu0 0
  %866 = vmatprep.subr.bf16.mxu0 0
  %867 = vmatpush1.bf16.msra.mxu0 0
  %868 = vmatprep.subr.bf16.mxu0 0
  %869 = vmatpush1.bf16.msra.mxu0 0
  %870 = vmatprep.subr.bf16.mxu0 0
  %871 = vmatpush1.bf16.msra.mxu0 0
  %872 = vmatprep.subr.bf16.mxu0 0
  %873 = vmatpush1.bf16.msra.mxu0 0
  %874 = vmatprep.subr.bf16.mxu0 0
  %875 = vmatpush1.bf16.msra.mxu0 0
  %876 = vmatprep.subr.bf16.mxu0 0
  %877 = vmatpush1.bf16.msra.mxu0 0
  %878 = vmatprep.subr.bf16.mxu0 0
  %879 = vmatpush1.bf16.msra.mxu0 0
  %880 = vmatprep.mubr.bf16.mxu0 0
  %881 = vmatmul.mubr.bf16.gmra.mrb[0].mxu0 %v843
  %v882 = vpop.f32.mrb[0].mxu0
  %v883 = vadd.f32 0.0, %v882
  %v884 = vpop.f32.mrb[0].mxu0
  %v885 = vpop.f32.mrb[0].mxu0
  %v886 = vpop.f32.mrb[0].mxu0
  %887 = vdwg.mxu0
  %888 = vrot.lane.b32.xlu0 %v324, 48
  %v889 = vpop.permute.xlu0 %888
  %890 = vrot.lane.b32.xlu0 %v325, 48
  %v891 = vpop.permute.xlu0 %890
  %v893 = vsel %vm327, %v889, 0
  %v896 = vsel %vm327, %v891, 0
  %898 = vmatprep.subr.bf16.mxu0 0
  %899 = vmatpush1.bf16.xpose.msra.mxu0 %v896
  %900 = vmatprep.subr.bf16.mxu0 0
  %901 = vmatpush1.bf16.xpose.msra.mxu0 0
  %902 = vmatprep.subr.bf16.mxu0 0
  %903 = vmatpush1.bf16.xpose.msra.mxu0 0
  %904 = vmatprep.subr.bf16.mxu0 0
  %905 = vmatpush1.bf16.xpose.msra.mxu0 0
  %906 = vmatprep.subr.bf16.mxu0 0
  %907 = vmatpush1.bf16.xpose.msra.mxu0 0
  %908 = vmatprep.subr.bf16.mxu0 0
  %909 = vmatpush1.bf16.xpose.msra.mxu0 0
  %910 = vmatprep.subr.bf16.mxu0 0
  %911 = vmatpush1.bf16.xpose.msra.mxu0 0
  %912 = vmatprep.subr.bf16.mxu0 0
  %913 = vmatpush1.bf16.xpose.msra.mxu0 0
  %914 = vmatprep.subr.bf16.mxu0 0
  %915 = vmatpush1.bf16.xpose.msra.mxu0 0
  %916 = vmatprep.subr.bf16.mxu0 0
  %917 = vmatpush1.bf16.xpose.msra.mxu0 0
  %918 = vmatprep.subr.bf16.mxu0 0
  %919 = vmatpush1.bf16.xpose.msra.mxu0 0
  %920 = vmatprep.subr.bf16.mxu0 0
  %921 = vmatpush1.bf16.xpose.msra.mxu0 0
  %922 = vmatprep.subr.bf16.mxu0 0
  %923 = vmatpush1.bf16.xpose.msra.mxu0 0
  %924 = vmatprep.subr.bf16.mxu0 0
  %925 = vmatpush1.bf16.xpose.msra.mxu0 0
  %926 = vmatprep.subr.bf16.mxu0 0
  %927 = vmatpush1.bf16.xpose.msra.mxu0 0
  %928 = vmatprep.subr.bf16.mxu0 0
  %929 = vmatpush1.bf16.xpose.msra.mxu0 0
  %930 = vmatprep.mubr.bf16.mxu0 0
  %931 = vmatmul.mubr.bf16.gmra.mrb[0].mxu0 %v893
  %v932 = vpop.f32.mrb[0].mxu0
  %v933 = vadd.f32 0.0, %v932
  %v934 = vpop.f32.mrb[0].mxu0
  %v935 = vpop.f32.mrb[0].mxu0
  %v936 = vpop.f32.mrb[0].mxu0
  %937 = vdwg.mxu0
  %v938 = vmul.f32 %v933, 0.25
  %v939 = vadd.f32 %v938, %v65
  %v940 = vsel %vm376, %v939, -inf
  %941 = vmax.xlane.f32.xlu0 %v940
  %v942 = vpop.xlane.xlu0 %941
  %v943 = vsub.f32 %v939, %v942
  %v944 = vmul.f32 %v943, 1.442695
  %v945 = vpow.pop %v944
  %v946 = vsel %vm376, %v945, 0.0
  %947 = vadd.xlane.f32.xlu0 %v946
  %v948 = vpop.xlane.xlu0 %947
  %v949 = vrcp.pop %v948
  %v950 = vmul.f32 %v945, %v949
  %v951 = vpack.c.bf16 %v950, %v950
  %952 = vrot.lane.b32.xlu0 %v326, 48
  %v953 = vpop.permute.xlu0 %952
  %v955 = vsel %vm389, %v951, 0
  %v958 = vsel %vm393, %v953, 0
  %960 = vmatprep.subr.bf16.mxu0 0
  %961 = vmatpush1.bf16.msra.mxu0 %v958
  %962 = vmatprep.subr.bf16.mxu0 0
  %963 = vmatpush1.bf16.msra.mxu0 0
  %964 = vmatprep.subr.bf16.mxu0 0
  %965 = vmatpush1.bf16.msra.mxu0 0
  %966 = vmatprep.subr.bf16.mxu0 0
  %967 = vmatpush1.bf16.msra.mxu0 0
  %968 = vmatprep.subr.bf16.mxu0 0
  %969 = vmatpush1.bf16.msra.mxu0 0
  %970 = vmatprep.subr.bf16.mxu0 0
  %971 = vmatpush1.bf16.msra.mxu0 0
  %972 = vmatprep.subr.bf16.mxu0 0
  %973 = vmatpush1.bf16.msra.mxu0 0
  %974 = vmatprep.subr.bf16.mxu0 0
  %975 = vmatpush1.bf16.msra.mxu0 0
  %976 = vmatprep.subr.bf16.mxu0 0
  %977 = vmatpush1.bf16.msra.mxu0 0
  %978 = vmatprep.subr.bf16.mxu0 0
  %979 = vmatpush1.bf16.msra.mxu0 0
  %980 = vmatprep.subr.bf16.mxu0 0
  %981 = vmatpush1.bf16.msra.mxu0 0
  %982 = vmatprep.subr.bf16.mxu0 0
  %983 = vmatpush1.bf16.msra.mxu0 0
  %984 = vmatprep.subr.bf16.mxu0 0
  %985 = vmatpush1.bf16.msra.mxu0 0
  %986 = vmatprep.subr.bf16.mxu0 0
  %987 = vmatpush1.bf16.msra.mxu0 0
  %988 = vmatprep.subr.bf16.mxu0 0
  %989 = vmatpush1.bf16.msra.mxu0 0
  %990 = vmatprep.subr.bf16.mxu0 0
  %991 = vmatpush1.bf16.msra.mxu0 0
  %992 = vmatprep.mubr.bf16.mxu0 0
  %993 = vmatmul.mubr.bf16.gmra.mrb[0].mxu0 %v955
  %v994 = vpop.f32.mrb[0].mxu0
  %v995 = vadd.f32 0.0, %v994
  %v996 = vpop.f32.mrb[0].mxu0
  %v997 = vpop.f32.mrb[0].mxu0
  %v998 = vpop.f32.mrb[0].mxu0
  %999 = vdwg.mxu0
  %1000 = vrot.lane.b32.xlu0 %v324, 32
  %v1001 = vpop.permute.xlu0 %1000
  %1002 = vrot.lane.b32.xlu0 %v325, 32
  %v1003 = vpop.permute.xlu0 %1002
  %v1005 = vsel %vm327, %v1001, 0
  %v1008 = vsel %vm327, %v1003, 0
  %1010 = vmatprep.subr.bf16.mxu0 0
  %1011 = vmatpush1.bf16.xpose.msra.mxu0 %v1008
  %1012 = vmatprep.subr.bf16.mxu0 0
  %1013 = vmatpush1.bf16.xpose.msra.mxu0 0
  %1014 = vmatprep.subr.bf16.mxu0 0
  %1015 = vmatpush1.bf16.xpose.msra.mxu0 0
  %1016 = vmatprep.subr.bf16.mxu0 0
  %1017 = vmatpush1.bf16.xpose.msra.mxu0 0
  %1018 = vmatprep.subr.bf16.mxu0 0
  %1019 = vmatpush1.bf16.xpose.msra.mxu0 0
  %1020 = vmatprep.subr.bf16.mxu0 0
  %1021 = vmatpush1.bf16.xpose.msra.mxu0 0
  %1022 = vmatprep.subr.bf16.mxu0 0
  %1023 = vmatpush1.bf16.xpose.msra.mxu0 0
  %1024 = vmatprep.subr.bf16.mxu0 0
  %1025 = vmatpush1.bf16.xpose.msra.mxu0 0
  %1026 = vmatprep.subr.bf16.mxu0 0
  %1027 = vmatpush1.bf16.xpose.msra.mxu0 0
  %1028 = vmatprep.subr.bf16.mxu0 0
  %1029 = vmatpush1.bf16.xpose.msra.mxu0 0
  %1030 = vmatprep.subr.bf16.mxu0 0
  %1031 = vmatpush1.bf16.xpose.msra.mxu0 0
  %1032 = vmatprep.subr.bf16.mxu0 0
  %1033 = vmatpush1.bf16.xpose.msra.mxu0 0
  %1034 = vmatprep.subr.bf16.mxu0 0
  %1035 = vmatpush1.bf16.xpose.msra.mxu0 0
  %1036 = vmatprep.subr.bf16.mxu0 0
  %1037 = vmatpush1.bf16.xpose.msra.mxu0 0
  %1038 = vmatprep.subr.bf16.mxu0 0
  %1039 = vmatpush1.bf16.xpose.msra.mxu0 0
  %1040 = vmatprep.subr.bf16.mxu0 0
  %1041 = vmatpush1.bf16.xpose.msra.mxu0 0
  %1042 = vmatprep.mubr.bf16.mxu0 0
  %1043 = vmatmul.mubr.bf16.gmra.mrb[0].mxu0 %v1005
  %v1044 = vpop.f32.mrb[0].mxu0
  %v1045 = vadd.f32 0.0, %v1044
  %v1046 = vpop.f32.mrb[0].mxu0
  %v1047 = vpop.f32.mrb[0].mxu0
  %v1048 = vpop.f32.mrb[0].mxu0
  %1049 = vdwg.mxu0
  %v1050 = vmul.f32 %v1045, 0.25
  %v1051 = vadd.f32 %v1050, %v65
  %v1052 = vsel %vm376, %v1051, -inf
  %1053 = vmax.xlane.f32.xlu0 %v1052
  %v1054 = vpop.xlane.xlu0 %1053
  %v1055 = vsub.f32 %v1051, %v1054
  %v1056 = vmul.f32 %v1055, 1.442695
  %v1057 = vpow.pop %v1056
  %v1058 = vsel %vm376, %v1057, 0.0
  %1059 = vadd.xlane.f32.xlu0 %v1058
  %v1060 = vpop.xlane.xlu0 %1059
  %v1061 = vrcp.pop %v1060
  %v1062 = vmul.f32 %v1057, %v1061
  %v1063 = vpack.c.bf16 %v1062, %v1062
  %1064 = vrot.lane.b32.xlu0 %v326, 32
  %v1065 = vpop.permute.xlu0 %1064
  %v1067 = vsel %vm389, %v1063, 0
  %v1070 = vsel %vm393, %v1065, 0
  %1072 = vmatprep.subr.bf16.mxu0 0
  %1073 = vmatpush1.bf16.msra.mxu0 %v1070
  %1074 = vmatprep.subr.bf16.mxu0 0
  %1075 = vmatpush1.bf16.msra.mxu0 0
  %1076 = vmatprep.subr.bf16.mxu0 0
  %1077 = vmatpush1.bf16.msra.mxu0 0
  %1078 = vmatprep.subr.bf16.mxu0 0
  %1079 = vmatpush1.bf16.msra.mxu0 0
  %1080 = vmatprep.subr.bf16.mxu0 0
  %1081 = vmatpush1.bf16.msra.mxu0 0
  %1082 = vmatprep.subr.bf16.mxu0 0
  %1083 = vmatpush1.bf16.msra.mxu0 0
  %1084 = vmatprep.subr.bf16.mxu0 0
  %1085 = vmatpush1.bf16.msra.mxu0 0
  %1086 = vmatprep.subr.bf16.mxu0 0
  %1087 = vmatpush1.bf16.msra.mxu0 0
  %1088 = vmatprep.subr.bf16.mxu0 0
  %1089 = vmatpush1.bf16.msra.mxu0 0
  %1090 = vmatprep.subr.bf16.mxu0 0
  %1091 = vmatpush1.bf16.msra.mxu0 0
  %1092 = vmatprep.subr.bf16.mxu0 0
  %1093 = vmatpush1.bf16.msra.mxu0 0
  %1094 = vmatprep.subr.bf16.mxu0 0
  %1095 = vmatpush1.bf16.msra.mxu0 0
  %1096 = vmatprep.subr.bf16.mxu0 0
  %1097 = vmatpush1.bf16.msra.mxu0 0
  %1098 = vmatprep.subr.bf16.mxu0 0
  %1099 = vmatpush1.bf16.msra.mxu0 0
  %1100 = vmatprep.subr.bf16.mxu0 0
  %1101 = vmatpush1.bf16.msra.mxu0 0
  %1102 = vmatprep.subr.bf16.mxu0 0
  %1103 = vmatpush1.bf16.msra.mxu0 0
  %1104 = vmatprep.mubr.bf16.mxu0 0
  %1105 = vmatmul.mubr.bf16.gmra.mrb[0].mxu0 %v1067
  %v1106 = vpop.f32.mrb[0].mxu0
  %v1107 = vadd.f32 0.0, %v1106
  %v1108 = vpop.f32.mrb[0].mxu0
  %v1109 = vpop.f32.mrb[0].mxu0
  %v1110 = vpop.f32.mrb[0].mxu0
  %1111 = vdwg.mxu0
  %1112 = vrot.lane.b32.xlu0 %v324, 16
  %v1113 = vpop.permute.xlu0 %1112
  %1114 = vrot.lane.b32.xlu0 %v325, 16
  %v1115 = vpop.permute.xlu0 %1114
  %v1117 = vsel %vm327, %v1113, 0
  %v1120 = vsel %vm327, %v1115, 0
  %1122 = vmatprep.subr.bf16.mxu0 0
  %1123 = vmatpush1.bf16.xpose.msra.mxu0 %v1120
  %1124 = vmatprep.subr.bf16.mxu0 0
  %1125 = vmatpush1.bf16.xpose.msra.mxu0 0
  %1126 = vmatprep.subr.bf16.mxu0 0
  %1127 = vmatpush1.bf16.xpose.msra.mxu0 0
  %1128 = vmatprep.subr.bf16.mxu0 0
  %1129 = vmatpush1.bf16.xpose.msra.mxu0 0
  %1130 = vmatprep.subr.bf16.mxu0 0
  %1131 = vmatpush1.bf16.xpose.msra.mxu0 0
  %1132 = vmatprep.subr.bf16.mxu0 0
  %1133 = vmatpush1.bf16.xpose.msra.mxu0 0
  %1134 = vmatprep.subr.bf16.mxu0 0
  %1135 = vmatpush1.bf16.xpose.msra.mxu0 0
  %1136 = vmatprep.subr.bf16.mxu0 0
  %1137 = vmatpush1.bf16.xpose.msra.mxu0 0
  %1138 = vmatprep.subr.bf16.mxu0 0
  %1139 = vmatpush1.bf16.xpose.msra.mxu0 0
  %1140 = vmatprep.subr.bf16.mxu0 0
  %1141 = vmatpush1.bf16.xpose.msra.mxu0 0
  %1142 = vmatprep.subr.bf16.mxu0 0
  %1143 = vmatpush1.bf16.xpose.msra.mxu0 0
  %1144 = vmatprep.subr.bf16.mxu0 0
  %1145 = vmatpush1.bf16.xpose.msra.mxu0 0
  %1146 = vmatprep.subr.bf16.mxu0 0
  %1147 = vmatpush1.bf16.xpose.msra.mxu0 0
  %1148 = vmatprep.subr.bf16.mxu0 0
  %1149 = vmatpush1.bf16.xpose.msra.mxu0 0
  %1150 = vmatprep.subr.bf16.mxu0 0
  %1151 = vmatpush1.bf16.xpose.msra.mxu0 0
  %1152 = vmatprep.subr.bf16.mxu0 0
  %1153 = vmatpush1.bf16.xpose.msra.mxu0 0
  %1154 = vmatprep.mubr.bf16.mxu0 0
  %1155 = vmatmul.mubr.bf16.gmra.mrb[0].mxu0 %v1117
  %v1156 = vpop.f32.mrb[0].mxu0
  %v1157 = vadd.f32 0.0, %v1156
  %v1158 = vpop.f32.mrb[0].mxu0
  %v1159 = vpop.f32.mrb[0].mxu0
  %v1160 = vpop.f32.mrb[0].mxu0
  %1161 = vdwg.mxu0
  %v1162 = vmul.f32 %v1157, 0.25
  %v1163 = vadd.f32 %v1162, %v65
  %v1164 = vsel %vm376, %v1163, -inf
  %1165 = vmax.xlane.f32.xlu0 %v1164
  %v1166 = vpop.xlane.xlu0 %1165
  %v1167 = vsub.f32 %v1163, %v1166
  %v1168 = vmul.f32 %v1167, 1.442695
  %v1169 = vpow.pop %v1168
  %v1170 = vsel %vm376, %v1169, 0.0
  %1171 = vadd.xlane.f32.xlu0 %v1170
  %v1172 = vpop.xlane.xlu0 %1171
  %v1173 = vrcp.pop %v1172
  %v1174 = vmul.f32 %v1169, %v1173
  %v1175 = vpack.c.bf16 %v1174, %v1174
  %1176 = vrot.lane.b32.xlu0 %v326, 16
  %v1177 = vpop.permute.xlu0 %1176
  %v1179 = vsel %vm389, %v1175, 0
  %v1182 = vsel %vm393, %v1177, 0
  %1184 = vmatprep.subr.bf16.mxu0 0
  %1185 = vmatpush1.bf16.msra.mxu0 %v1182
  %1186 = vmatprep.subr.bf16.mxu0 0
  %1187 = vmatpush1.bf16.msra.mxu0 0
  %1188 = vmatprep.subr.bf16.mxu0 0
  %1189 = vmatpush1.bf16.msra.mxu0 0
  %1190 = vmatprep.subr.bf16.mxu0 0
  %1191 = vmatpush1.bf16.msra.mxu0 0
  %1192 = vmatprep.subr.bf16.mxu0 0
  %1193 = vmatpush1.bf16.msra.mxu0 0
  %1194 = vmatprep.subr.bf16.mxu0 0
  %1195 = vmatpush1.bf16.msra.mxu0 0
  %1196 = vmatprep.subr.bf16.mxu0 0
  %1197 = vmatpush1.bf16.msra.mxu0 0
  %1198 = vmatprep.subr.bf16.mxu0 0
  %1199 = vmatpush1.bf16.msra.mxu0 0
  %1200 = vmatprep.subr.bf16.mxu0 0
  %1201 = vmatpush1.bf16.msra.mxu0 0
  %1202 = vmatprep.subr.bf16.mxu0 0
  %1203 = vmatpush1.bf16.msra.mxu0 0
  %1204 = vmatprep.subr.bf16.mxu0 0
  %1205 = vmatpush1.bf16.msra.mxu0 0
  %1206 = vmatprep.subr.bf16.mxu0 0
  %1207 = vmatpush1.bf16.msra.mxu0 0
  %1208 = vmatprep.subr.bf16.mxu0 0
  %1209 = vmatpush1.bf16.msra.mxu0 0
  %1210 = vmatprep.subr.bf16.mxu0 0
  %1211 = vmatpush1.bf16.msra.mxu0 0
  %1212 = vmatprep.subr.bf16.mxu0 0
  %1213 = vmatpush1.bf16.msra.mxu0 0
  %1214 = vmatprep.subr.bf16.mxu0 0
  %1215 = vmatpush1.bf16.msra.mxu0 0
  %1216 = vmatprep.mubr.bf16.mxu0 0
  %1217 = vmatmul.mubr.bf16.gmra.mrb[0].mxu0 %v1179
  %v1218 = vpop.f32.mrb[0].mxu0
  %v1219 = vadd.f32 0.0, %v1218
  %v1220 = vpop.f32.mrb[0].mxu0
  %v1221 = vpop.f32.mrb[0].mxu0
  %v1222 = vpop.f32.mrb[0].mxu0
  %1223 = vdwg.mxu0
  %1225 = vrot.lane.b32.xlu0 %v547, 16
  %v1226 = vpop.permute.xlu0 %1225
  %1229 = vrot.lane.b32.xlu0 %v659, 32
  %v1230 = vpop.permute.xlu0 %1229
  %1233 = vrot.lane.b32.xlu0 %v771, 48
  %v1234 = vpop.permute.xlu0 %1233
  %1237 = vrot.lane.b32.xlu0 %v883, 64
  %v1238 = vpop.permute.xlu0 %1237
  %1241 = vrot.lane.b32.xlu0 %v995, 80
  %v1242 = vpop.permute.xlu0 %1241
  %1245 = vrot.lane.b32.xlu0 %v1107, 96
  %v1246 = vpop.permute.xlu0 %1245
  %1249 = vrot.lane.b32.xlu0 %v1219, 112
  %v1250 = vpop.permute.xlu0 %1249
  %v1252 = vsel %vm327, %v432, %v1226
  %vm1253 = vcmask 261120
  %v1254 = vsel %vm1253, %v1252, %v1230
  %vm1255 = vcmask 392192
  %v1256 = vsel %vm1255, %v1254, %v1234
  %vm1257 = vcmask 523264
  %v1258 = vsel %vm1257, %v1256, %v1238
  %vm1259 = vcmask 654336
  %v1260 = vsel %vm1259, %v1258, %v1242
  %vm1261 = vcmask 785408
  %v1262 = vsel %vm1261, %v1260, %v1246
  %vm1263 = vcmask 916480
  %v1264 = vsel %vm1263, %v1262, %v1250
  %v1265 = vpack.c.bf16 %v1264, %v1264
  %v1266 = vld [vmem:[%s9] sm:$0xf]
  %v1267 = vld [vmem:[%s9 + $0x4] sm:$0xf]
  %v1268 = vld [vmem:[%s9 + $0x8] sm:$0xf]
  %v1269 = vld [vmem:[%s9 + $0xc] sm:$0xf]
  %v1270 = vld [vmem:[%s9 + $0x10] sm:$0xf]
  %v1271 = vld [vmem:[%s9 + $0x14] sm:$0xf]
  %v1272 = vld [vmem:[%s9 + $0x18] sm:$0xf]
  %v1273 = vld [vmem:[%s9 + $0x1c] sm:$0xf]
  %v1274 = vld [vmem:[%s9 + $0x20] sm:$0xf]
  %v1275 = vld [vmem:[%s9 + $0x24] sm:$0xf]
  %v1276 = vld [vmem:[%s9 + $0x28] sm:$0xf]
  %v1277 = vld [vmem:[%s9 + $0x2c] sm:$0xf]
  %v1278 = vld [vmem:[%s9 + $0x30] sm:$0xf]
  %v1279 = vld [vmem:[%s9 + $0x34] sm:$0xf]
  %v1280 = vld [vmem:[%s9 + $0x38] sm:$0xf]
  %v1281 = vld [vmem:[%s9 + $0x3c] sm:$0xf]
  %v1282 = vld [vmem:[%s10] sm:$0x1]
  %v1284 = vlaneseq
  %v1285 = vshrl.u32 %v1284, 7
  %v1286 = vsub.s32 0, %v1285
  %v1287 = vrot.slane %v1282, %v1286
  %v1305 = vunpack.c.l.b16 %v1266
  %v1306 = vunpack.c.l.b16 %v1267
  %v1307 = vunpack.c.l.b16 %v1268
  %v1308 = vunpack.c.l.b16 %v1269
  %v1309 = vunpack.c.l.b16 %v1270
  %v1310 = vunpack.c.l.b16 %v1271
  %v1311 = vunpack.c.l.b16 %v1272
  %v1312 = vunpack.c.l.b16 %v1273
  %v1313 = vunpack.c.l.b16 %v1274
  %v1314 = vunpack.c.l.b16 %v1275
  %v1315 = vunpack.c.l.b16 %v1276
  %v1316 = vunpack.c.l.b16 %v1277
  %v1317 = vunpack.c.l.b16 %v1278
  %v1318 = vunpack.c.l.b16 %v1279
  %v1319 = vunpack.c.l.b16 %v1280
  %v1320 = vunpack.c.l.b16 %v1281
  %v1321 = vpack.c.b16 %v1306, %v1305
  %v1322 = vpack.c.b16 %v1308, %v1307
  %v1323 = vpack.c.b16 %v1310, %v1309
  %v1324 = vpack.c.b16 %v1312, %v1311
  %v1325 = vpack.c.b16 %v1314, %v1313
  %v1326 = vpack.c.b16 %v1316, %v1315
  %v1327 = vpack.c.b16 %v1318, %v1317
  %v1328 = vpack.c.b16 %v1320, %v1319
  %1337 = vmatprep.subr.bf16.mxu0 0
  %1338 = vmatpush1.bf16.msra.mxu0 %v1321
  %1339 = vmatprep.subr.bf16.mxu0 0
  %1340 = vmatpush1.bf16.msra.mxu0 %v1322
  %1341 = vmatprep.subr.bf16.mxu0 0
  %1342 = vmatpush1.bf16.msra.mxu0 %v1323
  %1343 = vmatprep.subr.bf16.mxu0 0
  %1344 = vmatpush1.bf16.msra.mxu0 %v1324
  %1345 = vmatprep.subr.bf16.mxu0 0
  %1346 = vmatpush1.bf16.msra.mxu0 %v1325
  %1347 = vmatprep.subr.bf16.mxu0 0
  %1348 = vmatpush1.bf16.msra.mxu0 %v1326
  %1349 = vmatprep.subr.bf16.mxu0 0
  %1350 = vmatpush1.bf16.msra.mxu0 %v1327
  %1351 = vmatprep.subr.bf16.mxu0 0
  %1352 = vmatpush1.bf16.msra.mxu0 %v1328
  %1353 = vmatprep.subr.bf16.mxu0 0
  %1354 = vmatpush1.bf16.msra.mxu0 0
  %1355 = vmatprep.subr.bf16.mxu0 0
  %1356 = vmatpush1.bf16.msra.mxu0 0
  %1357 = vmatprep.subr.bf16.mxu0 0
  %1358 = vmatpush1.bf16.msra.mxu0 0
  %1359 = vmatprep.subr.bf16.mxu0 0
  %1360 = vmatpush1.bf16.msra.mxu0 0
  %1361 = vmatprep.subr.bf16.mxu0 0
  %1362 = vmatpush1.bf16.msra.mxu0 0
  %1363 = vmatprep.subr.bf16.mxu0 0
  %1364 = vmatpush1.bf16.msra.mxu0 0
  %1365 = vmatprep.subr.bf16.mxu0 0
  %1366 = vmatpush1.bf16.msra.mxu0 0
  %1367 = vmatprep.subr.bf16.mxu0 0
  %1368 = vmatpush1.bf16.msra.mxu0 0
  %1369 = vmatprep.mubr.bf16.mxu0 0
  %1370 = vmatmul.mubr.bf16.gmra.mrb[0].mxu0 %v1265
  %v1371 = vpop.f32.mrb[0].mxu0
  %v1372 = vadd.f32 %v1287, %v1371
  %v1373 = vpop.f32.mrb[0].mxu0
  %v1374 = vpop.f32.mrb[0].mxu0
  %v1375 = vpop.f32.mrb[0].mxu0
  %1376 = vdwg.mxu0
  %v1377 = vadd.f32 %v64, %v1372
  %v1378 = vld [vmem:[%s15] sm:$0x1]
  %v1379 = vld [vmem:[%s16] sm:$0x1]
  %vm1380 = vcmask 1043456
  %v1381 = vsel %vm1380, %v1377, 0.0
  %1382 = vadd.xlane.f32.xlu0 %v1381
  %v1383 = vpop.xlane.xlu0 %1382
  %v1384 = vrcp.pop 128.0
  %v1385 = vmul.f32 %v1383, %v1384
  %v1386 = vsub.f32 %v1377, %v1385
  %v1387 = vmul.f32 %v1386, %v1386
  %v1388 = vsel %vm1380, %v1387, 0.0
  %1389 = vadd.xlane.f32.xlu0 %v1388
  %v1390 = vpop.xlane.xlu0 %1389
  %v1391 = vmul.f32 %v1390, %v1384
  %v1392 = vadd.f32 %v1391, 1e-05
  %v1393 = vrsqrt.pop %v1392
  %v1394 = vmul.f32 %v1386, %v1393
  %v1396 = vlaneseq
  %v1397 = vshrl.u32 %v1396, 7
  %v1398 = vsub.s32 0, %v1397
  %v1399 = vrot.slane %v1378, %v1398
  %v1401 = vmul.f32 %v1394, %v1399
  %v1403 = vlaneseq
  %v1404 = vshrl.u32 %v1403, 7
  %v1405 = vsub.s32 0, %v1404
  %v1406 = vrot.slane %v1379, %v1405
  %v1408 = vadd.f32 %v1401, %v1406
  %v1409 = vpack.c.bf16 %v1408, %v1408
  %v1410 = vld [vmem:[%s11] sm:$0xff]
  %v1411 = vld [vmem:[%s11 + $0x8] sm:$0xff]
  %v1412 = vld [vmem:[%s11 + $0x10] sm:$0xff]
  %v1413 = vld [vmem:[%s11 + $0x18] sm:$0xff]
  %v1414 = vld [vmem:[%s11 + $0x20] sm:$0xff]
  %v1415 = vld [vmem:[%s11 + $0x28] sm:$0xff]
  %v1416 = vld [vmem:[%s11 + $0x30] sm:$0xff]
  %v1417 = vld [vmem:[%s11 + $0x38] sm:$0xff]
  %v1418 = vld [vmem:[%s11 + $0x40] sm:$0xff]
  %v1419 = vld [vmem:[%s11 + $0x48] sm:$0xff]
  %v1420 = vld [vmem:[%s11 + $0x50] sm:$0xff]
  %v1421 = vld [vmem:[%s11 + $0x58] sm:$0xff]
  %v1422 = vld [vmem:[%s11 + $0x60] sm:$0xff]
  %v1423 = vld [vmem:[%s11 + $0x68] sm:$0xff]
  %v1424 = vld [vmem:[%s11 + $0x70] sm:$0xff]
  %v1425 = vld [vmem:[%s11 + $0x78] sm:$0xff]
  %v1426 = vld [vmem:[%s11 + $0x80] sm:$0xff]
  %v1427 = vld [vmem:[%s11 + $0x88] sm:$0xff]
  %v1428 = vld [vmem:[%s11 + $0x90] sm:$0xff]
  %v1429 = vld [vmem:[%s11 + $0x98] sm:$0xff]
  %v1430 = vld [vmem:[%s11 + $0xa0] sm:$0xff]
  %v1431 = vld [vmem:[%s11 + $0xa8] sm:$0xff]
  %v1432 = vld [vmem:[%s11 + $0xb0] sm:$0xff]
  %v1433 = vld [vmem:[%s11 + $0xb8] sm:$0xff]
  %v1434 = vld [vmem:[%s11 + $0xc0] sm:$0xff]
  %v1435 = vld [vmem:[%s11 + $0xc8] sm:$0xff]
  %v1436 = vld [vmem:[%s11 + $0xd0] sm:$0xff]
  %v1437 = vld [vmem:[%s11 + $0xd8] sm:$0xff]
  %v1438 = vld [vmem:[%s11 + $0xe0] sm:$0xff]
  %v1439 = vld [vmem:[%s11 + $0xe8] sm:$0xff]
  %v1440 = vld [vmem:[%s11 + $0xf0] sm:$0xff]
  %v1441 = vld [vmem:[%s11 + $0xf8] sm:$0xff]
  %v1442 = vld [vmem:[%s12] sm:$0xf]
  %v1444 = vlaneseq
  %v1445 = vshrl.u32 %v1444, 7
  %v1446 = vsub.s32 0, %v1445
  %v1447 = vrot.slane %v1442, %v1446
  %v1448 = vlaneseq
  %v1449 = vshrl.u32 %v1448, 7
  %v1450 = vsub.s32 1, %v1449
  %v1451 = vrot.slane %v1442, %v1450
  %v1452 = vlaneseq
  %v1453 = vshrl.u32 %v1452, 7
  %v1454 = vsub.s32 2, %v1453
  %v1455 = vrot.slane %v1442, %v1454
  %v1456 = vlaneseq
  %v1457 = vshrl.u32 %v1456, 7
  %v1458 = vsub.s32 3, %v1457
  %v1459 = vrot.slane %v1442, %v1458
  %v1496 = vunpack.c.l.b16 %v1410
  %v1497 = vunpack.c.h.b16 %v1410
  %v1498 = vunpack.c.l.b16 %v1411
  %v1499 = vunpack.c.h.b16 %v1411
  %v1500 = vunpack.c.l.b16 %v1412
  %v1501 = vunpack.c.h.b16 %v1412
  %v1502 = vunpack.c.l.b16 %v1413
  %v1503 = vunpack.c.h.b16 %v1413
  %v1504 = vunpack.c.l.b16 %v1414
  %v1505 = vunpack.c.h.b16 %v1414
  %v1506 = vunpack.c.l.b16 %v1415
  %v1507 = vunpack.c.h.b16 %v1415
  %v1508 = vunpack.c.l.b16 %v1416
  %v1509 = vunpack.c.h.b16 %v1416
  %v1510 = vunpack.c.l.b16 %v1417
  %v1511 = vunpack.c.h.b16 %v1417
  %v1512 = vunpack.c.l.b16 %v1418
  %v1513 = vunpack.c.h.b16 %v1418
  %v1514 = vunpack.c.l.b16 %v1419
  %v1515 = vunpack.c.h.b16 %v1419
  %v1516 = vunpack.c.l.b16 %v1420
  %v1517 = vunpack.c.h.b16 %v1420
  %v1518 = vunpack.c.l.b16 %v1421
  %v1519 = vunpack.c.h.b16 %v1421
  %v1520 = vunpack.c.l.b16 %v1422
  %v1521 = vunpack.c.h.b16 %v1422
  %v1522 = vunpack.c.l.b16 %v1423
  %v1523 = vunpack.c.h.b16 %v1423
  %v1524 = vunpack.c.l.b16 %v1424
  %v1525 = vunpack.c.h.b16 %v1424
  %v1526 = vunpack.c.l.b16 %v1425
  %v1527 = vunpack.c.h.b16 %v1425
  %v1528 = vunpack.c.l.b16 %v1426
  %v1529 = vunpack.c.h.b16 %v1426
  %v1530 = vunpack.c.l.b16 %v1427
  %v1531 = vunpack.c.h.b16 %v1427
  %v1532 = vunpack.c.l.b16 %v1428
  %v1533 = vunpack.c.h.b16 %v1428
  %v1534 = vunpack.c.l.b16 %v1429
  %v1535 = vunpack.c.h.b16 %v1429
  %v1536 = vunpack.c.l.b16 %v1430
  %v1537 = vunpack.c.h.b16 %v1430
  %v1538 = vunpack.c.l.b16 %v1431
  %v1539 = vunpack.c.h.b16 %v1431
  %v1540 = vunpack.c.l.b16 %v1432
  %v1541 = vunpack.c.h.b16 %v1432
  %v1542 = vunpack.c.l.b16 %v1433
  %v1543 = vunpack.c.h.b16 %v1433
  %v1544 = vunpack.c.l.b16 %v1434
  %v1545 = vunpack.c.h.b16 %v1434
  %v1546 = vunpack.c.l.b16 %v1435
  %v1547 = vunpack.c.h.b16 %v1435
  %v1548 = vunpack.c.l.b16 %v1436
  %v1549 = vunpack.c.h.b16 %v1436
  %v1550 = vunpack.c.l.b16 %v1437
  %v1551 = vunpack.c.h.b16 %v1437
  %v1552 = vunpack.c.l.b16 %v1438
  %v1553 = vunpack.c.h.b16 %v1438
  %v1554 = vunpack.c.l.b16 %v1439
  %v1555 = vunpack.c.h.b16 %v1439
  %v1556 = vunpack.c.l.b16 %v1440
  %v1557 = vunpack.c.h.b16 %v1440
  %v1558 = vunpack.c.l.b16 %v1441
  %v1559 = vunpack.c.h.b16 %v1441
  %v1560 = vpack.c.b16 %v1500, %v1496
  %v1561 = vpack.c.b16 %v1501, %v1497
  %v1562 = vpack.c.b16 %v1502, %v1498
  %v1563 = vpack.c.b16 %v1503, %v1499
  %v1564 = vpack.c.b16 %v1508, %v1504
  %v1565 = vpack.c.b16 %v1509, %v1505
  %v1566 = vpack.c.b16 %v1510, %v1506
  %v1567 = vpack.c.b16 %v1511, %v1507
  %v1568 = vpack.c.b16 %v1516, %v1512
  %v1569 = vpack.c.b16 %v1517, %v1513
  %v1570 = vpack.c.b16 %v1518, %v1514
  %v1571 = vpack.c.b16 %v1519, %v1515
  %v1572 = vpack.c.b16 %v1524, %v1520
  %v1573 = vpack.c.b16 %v1525, %v1521
  %v1574 = vpack.c.b16 %v1526, %v1522
  %v1575 = vpack.c.b16 %v1527, %v1523
  %v1576 = vpack.c.b16 %v1532, %v1528
  %v1577 = vpack.c.b16 %v1533, %v1529
  %v1578 = vpack.c.b16 %v1534, %v1530
  %v1579 = vpack.c.b16 %v1535, %v1531
  %v1580 = vpack.c.b16 %v1540, %v1536
  %v1581 = vpack.c.b16 %v1541, %v1537
  %v1582 = vpack.c.b16 %v1542, %v1538
  %v1583 = vpack.c.b16 %v1543, %v1539
  %v1584 = vpack.c.b16 %v1548, %v1544
  %v1585 = vpack.c.b16 %v1549, %v1545
  %v1586 = vpack.c.b16 %v1550, %v1546
  %v1587 = vpack.c.b16 %v1551, %v1547
  %v1588 = vpack.c.b16 %v1556, %v1552
  %v1589 = vpack.c.b16 %v1557, %v1553
  %v1590 = vpack.c.b16 %v1558, %v1554
  %v1591 = vpack.c.b16 %v1559, %v1555
  %1624 = vmatprep.subr.bf16.mxu0 %v1561
  %1625 = vmatpush1.bf16.msra.mxu0 %v1560
  %1626 = vmatprep.subr.bf16.mxu0 %v1565
  %1627 = vmatpush1.bf16.msra.mxu0 %v1564
  %1628 = vmatprep.subr.bf16.mxu0 %v1569
  %1629 = vmatpush1.bf16.msra.mxu0 %v1568
  %1630 = vmatprep.subr.bf16.mxu0 %v1573
  %1631 = vmatpush1.bf16.msra.mxu0 %v1572
  %1632 = vmatprep.subr.bf16.mxu0 %v1577
  %1633 = vmatpush1.bf16.msra.mxu0 %v1576
  %1634 = vmatprep.subr.bf16.mxu0 %v1581
  %1635 = vmatpush1.bf16.msra.mxu0 %v1580
  %1636 = vmatprep.subr.bf16.mxu0 %v1585
  %1637 = vmatpush1.bf16.msra.mxu0 %v1584
  %1638 = vmatprep.subr.bf16.mxu0 %v1589
  %1639 = vmatpush1.bf16.msra.mxu0 %v1588
  %1640 = vmatprep.subr.bf16.mxu0 0
  %1641 = vmatpush1.bf16.msra.mxu0 0
  %1642 = vmatprep.subr.bf16.mxu0 0
  %1643 = vmatpush1.bf16.msra.mxu0 0
  %1644 = vmatprep.subr.bf16.mxu0 0
  %1645 = vmatpush1.bf16.msra.mxu0 0
  %1646 = vmatprep.subr.bf16.mxu0 0
  %1647 = vmatpush1.bf16.msra.mxu0 0
  %1648 = vmatprep.subr.bf16.mxu0 0
  %1649 = vmatpush1.bf16.msra.mxu0 0
  %1650 = vmatprep.subr.bf16.mxu0 0
  %1651 = vmatpush1.bf16.msra.mxu0 0
  %1652 = vmatprep.subr.bf16.mxu0 0
  %1653 = vmatpush1.bf16.msra.mxu0 0
  %1654 = vmatprep.subr.bf16.mxu0 0
  %1655 = vmatpush1.bf16.msra.mxu0 0
  %1656 = vmatprep.mubr.bf16.mxu0 0
  %1657 = vmatmul.mubr.bf16.gmra.mrb[0].mxu0 %v1409
  %v1658 = vpop.f32.mrb[0].mxu0
  %v1659 = vadd.f32 %v1447, %v1658
  %v1660 = vpop.f32.mrb[0].mxu0
  %v1661 = vadd.f32 %v1451, %v1660
  %v1662 = vpop.f32.mrb[0].mxu0
  %v1663 = vpop.f32.mrb[0].mxu0
  %1664 = vdwg.mxu0
  %1665 = vmatprep.subr.bf16.mxu0 %v1563
  %1666 = vmatpush1.bf16.msra.mxu0 %v1562
  %1667 = vmatprep.subr.bf16.mxu0 %v1567
  %1668 = vmatpush1.bf16.msra.mxu0 %v1566
  %1669 = vmatprep.subr.bf16.mxu0 %v1571
  %1670 = vmatpush1.bf16.msra.mxu0 %v1570
  %1671 = vmatprep.subr.bf16.mxu0 %v1575
  %1672 = vmatpush1.bf16.msra.mxu0 %v1574
  %1673 = vmatprep.subr.bf16.mxu0 %v1579
  %1674 = vmatpush1.bf16.msra.mxu0 %v1578
  %1675 = vmatprep.subr.bf16.mxu0 %v1583
  %1676 = vmatpush1.bf16.msra.mxu0 %v1582
  %1677 = vmatprep.subr.bf16.mxu0 %v1587
  %1678 = vmatpush1.bf16.msra.mxu0 %v1586
  %1679 = vmatprep.subr.bf16.mxu0 %v1591
  %1680 = vmatpush1.bf16.msra.mxu0 %v1590
  %1681 = vmatprep.subr.bf16.mxu0 0
  %1682 = vmatpush1.bf16.msra.mxu0 0
  %1683 = vmatprep.subr.bf16.mxu0 0
  %1684 = vmatpush1.bf16.msra.mxu0 0
  %1685 = vmatprep.subr.bf16.mxu0 0
  %1686 = vmatpush1.bf16.msra.mxu0 0
  %1687 = vmatprep.subr.bf16.mxu0 0
  %1688 = vmatpush1.bf16.msra.mxu0 0
  %1689 = vmatprep.subr.bf16.mxu0 0
  %1690 = vmatpush1.bf16.msra.mxu0 0
  %1691 = vmatprep.subr.bf16.mxu0 0
  %1692 = vmatpush1.bf16.msra.mxu0 0
  %1693 = vmatprep.subr.bf16.mxu0 0
  %1694 = vmatpush1.bf16.msra.mxu0 0
  %1695 = vmatprep.subr.bf16.mxu0 0
  %1696 = vmatpush1.bf16.msra.mxu0 0
  %1697 = vmatprep.mubr.bf16.mxu0 0
  %1698 = vmatmul.mubr.bf16.gmra.mrb[0].mxu0 %v1409
  %v1699 = vpop.f32.mrb[0].mxu0
  %v1700 = vadd.f32 %v1455, %v1699
  %v1701 = vpop.f32.mrb[0].mxu0
  %v1702 = vadd.f32 %v1459, %v1701
  %v1703 = vpop.f32.mrb[0].mxu0
  %v1704 = vpop.f32.mrb[0].mxu0
  %1705 = vdwg.mxu0
  %v1706 = vmax.f32 %v1659, 0.0
  %v1707 = vmax.f32 %v1661, 0.0
  %v1708 = vmax.f32 %v1700, 0.0
  %v1709 = vmax.f32 %v1702, 0.0
  %v1710 = vpack.c.bf16 %v1706, %v1706
  %v1711 = vpack.c.bf16 %v1707, %v1707
  %v1712 = vpack.c.bf16 %v1708, %v1708
  %v1713 = vpack.c.bf16 %v1709, %v1709
  %v1714 = vld [vmem:[%s13] sm:$0xf]
  %v1715 = vld [vmem:[%s13 + $0x4] sm:$0xf]
  %v1716 = vld [vmem:[%s13 + $0x8] sm:$0xf]
  %v1717 = vld [vmem:[%s13 + $0xc] sm:$0xf]
  %v1718 = vld [vmem:[%s13 + $0x10] sm:$0xf]
  %v1719 = vld [vmem:[%s13 + $0x14] sm:$0xf]
  %v1720 = vld [vmem:[%s13 + $0x18] sm:$0xf]
  %v1721 = vld [vmem:[%s13 + $0x1c] sm:$0xf]
  %v1722 = vld [vmem:[%s13 + $0x20] sm:$0xf]
  %v1723 = vld [vmem:[%s13 + $0x24] sm:$0xf]
  %v1724 = vld [vmem:[%s13 + $0x28] sm:$0xf]
  %v1725 = vld [vmem:[%s13 + $0x2c] sm:$0xf]
  %v1726 = vld [vmem:[%s13 + $0x30] sm:$0xf]
  %v1727 = vld [vmem:[%s13 + $0x34] sm:$0xf]
  %v1728 = vld [vmem:[%s13 + $0x38] sm:$0xf]
  %v1729 = vld [vmem:[%s13 + $0x3c] sm:$0xf]
  %v1730 = vld [vmem:[%s13 + $0x40] sm:$0xf]
  %v1731 = vld [vmem:[%s13 + $0x44] sm:$0xf]
  %v1732 = vld [vmem:[%s13 + $0x48] sm:$0xf]
  %v1733 = vld [vmem:[%s13 + $0x4c] sm:$0xf]
  %v1734 = vld [vmem:[%s13 + $0x50] sm:$0xf]
  %v1735 = vld [vmem:[%s13 + $0x54] sm:$0xf]
  %v1736 = vld [vmem:[%s13 + $0x58] sm:$0xf]
  %v1737 = vld [vmem:[%s13 + $0x5c] sm:$0xf]
  %v1738 = vld [vmem:[%s13 + $0x60] sm:$0xf]
  %v1739 = vld [vmem:[%s13 + $0x64] sm:$0xf]
  %v1740 = vld [vmem:[%s13 + $0x68] sm:$0xf]
  %v1741 = vld [vmem:[%s13 + $0x6c] sm:$0xf]
  %v1742 = vld [vmem:[%s13 + $0x70] sm:$0xf]
  %v1743 = vld [vmem:[%s13 + $0x74] sm:$0xf]
  %v1744 = vld [vmem:[%s13 + $0x78] sm:$0xf]
  %v1745 = vld [vmem:[%s13 + $0x7c] sm:$0xf]
  %v1746 = vld [vmem:[%s13 + $0x80] sm:$0xf]
  %v1747 = vld [vmem:[%s13 + $0x84] sm:$0xf]
  %v1748 = vld [vmem:[%s13 + $0x88] sm:$0xf]
  %v1749 = vld [vmem:[%s13 + $0x8c] sm:$0xf]
  %v1750 = vld [vmem:[%s13 + $0x90] sm:$0xf]
  %v1751 = vld [vmem:[%s13 + $0x94] sm:$0xf]
  %v1752 = vld [vmem:[%s13 + $0x98] sm:$0xf]
  %v1753 = vld [vmem:[%s13 + $0x9c] sm:$0xf]
  %v1754 = vld [vmem:[%s13 + $0xa0] sm:$0xf]
  %v1755 = vld [vmem:[%s13 + $0xa4] sm:$0xf]
  %v1756 = vld [vmem:[%s13 + $0xa8] sm:$0xf]
  %v1757 = vld [vmem:[%s13 + $0xac] sm:$0xf]
  %v1758 = vld [vmem:[%s13 + $0xb0] sm:$0xf]
  %v1759 = vld [vmem:[%s13 + $0xb4] sm:$0xf]
  %v1760 = vld [vmem:[%s13 + $0xb8] sm:$0xf]
  %v1761 = vld [vmem:[%s13 + $0xbc] sm:$0xf]
  %v1762 = vld [vmem:[%s13 + $0xc0] sm:$0xf]
  %v1763 = vld [vmem:[%s13 + $0xc4] sm:$0xf]
  %v1764 = vld [vmem:[%s13 + $0xc8] sm:$0xf]
  %v1765 = vld [vmem:[%s13 + $0xcc] sm:$0xf]
  %v1766 = vld [vmem:[%s13 + $0xd0] sm:$0xf]
  %v1767 = vld [vmem:[%s13 + $0xd4] sm:$0xf]
  %v1768 = vld [vmem:[%s13 + $0xd8] sm:$0xf]
  %v1769 = vld [vmem:[%s13 + $0xdc] sm:$0xf]
  %v1770 = vld [vmem:[%s13 + $0xe0] sm:$0xf]
  %v1771 = vld [vmem:[%s13 + $0xe4] sm:$0xf]
  %v1772 = vld [vmem:[%s13 + $0xe8] sm:$0xf]
  %v1773 = vld [vmem:[%s13 + $0xec] sm:$0xf]
  %v1774 = vld [vmem:[%s13 + $0xf0] sm:$0xf]
  %v1775 = vld [vmem:[%s13 + $0xf4] sm:$0xf]
  %v1776 = vld [vmem:[%s13 + $0xf8] sm:$0xf]
  %v1777 = vld [vmem:[%s13 + $0xfc] sm:$0xf]
  %v1778 = vld [vmem:[%s14] sm:$0x1]
  %v1780 = vlaneseq
  %v1781 = vshrl.u32 %v1780, 7
  %v1782 = vsub.s32 0, %v1781
  %v1783 = vrot.slane %v1778, %v1782
  %v1849 = vunpack.c.l.b16 %v1714
  %v1850 = vunpack.c.l.b16 %v1715
  %v1851 = vunpack.c.l.b16 %v1716
  %v1852 = vunpack.c.l.b16 %v1717
  %v1853 = vunpack.c.l.b16 %v1718
  %v1854 = vunpack.c.l.b16 %v1719
  %v1855 = vunpack.c.l.b16 %v1720
  %v1856 = vunpack.c.l.b16 %v1721
  %v1857 = vunpack.c.l.b16 %v1722
  %v1858 = vunpack.c.l.b16 %v1723
  %v1859 = vunpack.c.l.b16 %v1724
  %v1860 = vunpack.c.l.b16 %v1725
  %v1861 = vunpack.c.l.b16 %v1726
  %v1862 = vunpack.c.l.b16 %v1727
  %v1863 = vunpack.c.l.b16 %v1728
  %v1864 = vunpack.c.l.b16 %v1729
  %v1865 = vunpack.c.l.b16 %v1730
  %v1866 = vunpack.c.l.b16 %v1731
  %v1867 = vunpack.c.l.b16 %v1732
  %v1868 = vunpack.c.l.b16 %v1733
  %v1869 = vunpack.c.l.b16 %v1734
  %v1870 = vunpack.c.l.b16 %v1735
  %v1871 = vunpack.c.l.b16 %v1736
  %v1872 = vunpack.c.l.b16 %v1737
  %v1873 = vunpack.c.l.b16 %v1738
  %v1874 = vunpack.c.l.b16 %v1739
  %v1875 = vunpack.c.l.b16 %v1740
  %v1876 = vunpack.c.l.b16 %v1741
  %v1877 = vunpack.c.l.b16 %v1742
  %v1878 = vunpack.c.l.b16 %v1743
  %v1879 = vunpack.c.l.b16 %v1744
  %v1880 = vunpack.c.l.b16 %v1745
  %v1881 = vunpack.c.l.b16 %v1746
  %v1882 = vunpack.c.l.b16 %v1747
  %v1883 = vunpack.c.l.b16 %v1748
  %v1884 = vunpack.c.l.b16 %v1749
  %v1885 = vunpack.c.l.b16 %v1750
  %v1886 = vunpack.c.l.b16 %v1751
  %v1887 = vunpack.c.l.b16 %v1752
  %v1888 = vunpack.c.l.b16 %v1753
  %v1889 = vunpack.c.l.b16 %v1754
  %v1890 = vunpack.c.l.b16 %v1755
  %v1891 = vunpack.c.l.b16 %v1756
  %v1892 = vunpack.c.l.b16 %v1757
  %v1893 = vunpack.c.l.b16 %v1758
  %v1894 = vunpack.c.l.b16 %v1759
  %v1895 = vunpack.c.l.b16 %v1760
  %v1896 = vunpack.c.l.b16 %v1761
  %v1897 = vunpack.c.l.b16 %v1762
  %v1898 = vunpack.c.l.b16 %v1763
  %v1899 = vunpack.c.l.b16 %v1764
  %v1900 = vunpack.c.l.b16 %v1765
  %v1901 = vunpack.c.l.b16 %v1766
  %v1902 = vunpack.c.l.b16 %v1767
  %v1903 = vunpack.c.l.b16 %v1768
  %v1904 = vunpack.c.l.b16 %v1769
  %v1905 = vunpack.c.l.b16 %v1770
  %v1906 = vunpack.c.l.b16 %v1771
  %v1907 = vunpack.c.l.b16 %v1772
  %v1908 = vunpack.c.l.b16 %v1773
  %v1909 = vunpack.c.l.b16 %v1774
  %v1910 = vunpack.c.l.b16 %v1775
  %v1911 = vunpack.c.l.b16 %v1776
  %v1912 = vunpack.c.l.b16 %v1777
  %v1913 = vpack.c.b16 %v1850, %v1849
  %v1914 = vpack.c.b16 %v1852, %v1851
  %v1915 = vpack.c.b16 %v1854, %v1853
  %v1916 = vpack.c.b16 %v1856, %v1855
  %v1917 = vpack.c.b16 %v1858, %v1857
  %v1918 = vpack.c.b16 %v1860, %v1859
  %v1919 = vpack.c.b16 %v1862, %v1861
  %v1920 = vpack.c.b16 %v1864, %v1863
  %v1921 = vpack.c.b16 %v1866, %v1865
  %v1922 = vpack.c.b16 %v1868, %v1867
  %v1923 = vpack.c.b16 %v1870, %v1869
  %v1924 = vpack.c.b16 %v1872, %v1871
  %v1925 = vpack.c.b16 %v1874, %v1873
  %v1926 = vpack.c.b16 %v1876, %v1875
  %v1927 = vpack.c.b16 %v1878, %v1877
  %v1928 = vpack.c.b16 %v1880, %v1879
  %v1929 = vpack.c.b16 %v1882, %v1881
  %v1930 = vpack.c.b16 %v1884, %v1883
  %v1931 = vpack.c.b16 %v1886, %v1885
  %v1932 = vpack.c.b16 %v1888, %v1887
  %v1933 = vpack.c.b16 %v1890, %v1889
  %v1934 = vpack.c.b16 %v1892, %v1891
  %v1935 = vpack.c.b16 %v1894, %v1893
  %v1936 = vpack.c.b16 %v1896, %v1895
  %v1937 = vpack.c.b16 %v1898, %v1897
  %v1938 = vpack.c.b16 %v1900, %v1899
  %v1939 = vpack.c.b16 %v1902, %v1901
  %v1940 = vpack.c.b16 %v1904, %v1903
  %v1941 = vpack.c.b16 %v1906, %v1905
  %v1942 = vpack.c.b16 %v1908, %v1907
  %v1943 = vpack.c.b16 %v1910, %v1909
  %v1944 = vpack.c.b16 %v1912, %v1911
  %1977 = vmatprep.subr.bf16.mxu0 0
  %1978 = vmatpush1.bf16.msra.mxu0 %v1913
  %1979 = vmatprep.subr.bf16.mxu0 0
  %1980 = vmatpush1.bf16.msra.mxu0 %v1914
  %1981 = vmatprep.subr.bf16.mxu0 0
  %1982 = vmatpush1.bf16.msra.mxu0 %v1915
  %1983 = vmatprep.subr.bf16.mxu0 0
  %1984 = vmatpush1.bf16.msra.mxu0 %v1916
  %1985 = vmatprep.subr.bf16.mxu0 0
  %1986 = vmatpush1.bf16.msra.mxu0 %v1917
  %1987 = vmatprep.subr.bf16.mxu0 0
  %1988 = vmatpush1.bf16.msra.mxu0 %v1918
  %1989 = vmatprep.subr.bf16.mxu0 0
  %1990 = vmatpush1.bf16.msra.mxu0 %v1919
  %1991 = vmatprep.subr.bf16.mxu0 0
  %1992 = vmatpush1.bf16.msra.mxu0 %v1920
  %1993 = vmatprep.subr.bf16.mxu0 0
  %1994 = vmatpush1.bf16.msra.mxu0 %v1921
  %1995 = vmatprep.subr.bf16.mxu0 0
  %1996 = vmatpush1.bf16.msra.mxu0 %v1922
  %1997 = vmatprep.subr.bf16.mxu0 0
  %1998 = vmatpush1.bf16.msra.mxu0 %v1923
  %1999 = vmatprep.subr.bf16.mxu0 0
  %2000 = vmatpush1.bf16.msra.mxu0 %v1924
  %2001 = vmatprep.subr.bf16.mxu0 0
  %2002 = vmatpush1.bf16.msra.mxu0 %v1925
  %2003 = vmatprep.subr.bf16.mxu0 0
  %2004 = vmatpush1.bf16.msra.mxu0 %v1926
  %2005 = vmatprep.subr.bf16.mxu0 0
  %2006 = vmatpush1.bf16.msra.mxu0 %v1927
  %2007 = vmatprep.subr.bf16.mxu0 0
  %2008 = vmatpush1.bf16.msra.mxu0 %v1928
  %2009 = vmatprep.mubr.bf16.mxu0 %v1711
  %2010 = vmatmul.mubr.bf16.gmra.mrb[0].mxu0 %v1710
  %v2011 = vpop.f32.mrb[0].mxu0
  %v2012 = vadd.f32 %v1783, %v2011
  %v2013 = vpop.f32.mrb[0].mxu0
  %v2014 = vpop.f32.mrb[0].mxu0
  %v2015 = vpop.f32.mrb[0].mxu0
  %2016 = vdwg.mxu0
  %2017 = vmatprep.subr.bf16.mxu0 0
  %2018 = vmatpush1.bf16.msra.mxu0 %v1929
  %2019 = vmatprep.subr.bf16.mxu0 0
  %2020 = vmatpush1.bf16.msra.mxu0 %v1930
  %2021 = vmatprep.subr.bf16.mxu0 0
  %2022 = vmatpush1.bf16.msra.mxu0 %v1931
  %2023 = vmatprep.subr.bf16.mxu0 0
  %2024 = vmatpush1.bf16.msra.mxu0 %v1932
  %2025 = vmatprep.subr.bf16.mxu0 0
  %2026 = vmatpush1.bf16.msra.mxu0 %v1933
  %2027 = vmatprep.subr.bf16.mxu0 0
  %2028 = vmatpush1.bf16.msra.mxu0 %v1934
  %2029 = vmatprep.subr.bf16.mxu0 0
  %2030 = vmatpush1.bf16.msra.mxu0 %v1935
  %2031 = vmatprep.subr.bf16.mxu0 0
  %2032 = vmatpush1.bf16.msra.mxu0 %v1936
  %2033 = vmatprep.subr.bf16.mxu0 0
  %2034 = vmatpush1.bf16.msra.mxu0 %v1937
  %2035 = vmatprep.subr.bf16.mxu0 0
  %2036 = vmatpush1.bf16.msra.mxu0 %v1938
  %2037 = vmatprep.subr.bf16.mxu0 0
  %2038 = vmatpush1.bf16.msra.mxu0 %v1939
  %2039 = vmatprep.subr.bf16.mxu0 0
  %2040 = vmatpush1.bf16.msra.mxu0 %v1940
  %2041 = vmatprep.subr.bf16.mxu0 0
  %2042 = vmatpush1.bf16.msra.mxu0 %v1941
  %2043 = vmatprep.subr.bf16.mxu0 0
  %2044 = vmatpush1.bf16.msra.mxu0 %v1942
  %2045 = vmatprep.subr.bf16.mxu0 0
  %2046 = vmatpush1.bf16.msra.mxu0 %v1943
  %2047 = vmatprep.subr.bf16.mxu0 0
  %2048 = vmatpush1.bf16.msra.mxu0 %v1944
  %2049 = vmatprep.mubr.bf16.mxu0 %v1713
  %2050 = vmatmul.mubr.bf16.gmra.mrb[0].mxu0 %v1712
  %v2051 = vpop.f32.mrb[0].mxu0
  %v2052 = vadd.f32 %v2012, %v2051
  %v2053 = vpop.f32.mrb[0].mxu0
  %v2054 = vpop.f32.mrb[0].mxu0
  %v2055 = vpop.f32.mrb[0].mxu0
  %2056 = vdwg.mxu0
  %v2057 = vadd.f32 %v1408, %v2052
  %v2058 = vld [vmem:[%s17] sm:$0x1]
  %v2059 = vld [vmem:[%s18] sm:$0x1]
  %v2060 = vsel %vm1380, %v2057, 0.0
  %2061 = vadd.xlane.f32.xlu0 %v2060
  %v2062 = vpop.xlane.xlu0 %2061
  %v2063 = vmul.f32 %v2062, %v1384
  %v2064 = vsub.f32 %v2057, %v2063
  %v2065 = vmul.f32 %v2064, %v2064
  %v2066 = vsel %vm1380, %v2065, 0.0
  %2067 = vadd.xlane.f32.xlu0 %v2066
  %v2068 = vpop.xlane.xlu0 %2067
  %v2069 = vmul.f32 %v2068, %v1384
  %v2070 = vadd.f32 %v2069, 1e-05
  %v2071 = vrsqrt.pop %v2070
  %v2072 = vmul.f32 %v2064, %v2071
  %v2074 = vlaneseq
  %v2075 = vshrl.u32 %v2074, 7
  %v2076 = vsub.s32 0, %v2075
  %v2077 = vrot.slane %v2058, %v2076
  %v2079 = vmul.f32 %v2072, %v2077
  %v2081 = vlaneseq
  %v2082 = vshrl.u32 %v2081, 7
  %v2083 = vsub.s32 0, %v2082
  %v2084 = vrot.slane %v2059, %v2083
  %v2086 = vadd.f32 %v2079, %v2084
  %v2087 = vld [vmem:[%s3] sm:$0x1]
  %v2088 = vld [vmem:[%s4] sm:$0x1]
  %v2089 = vsel %vm1380, %v2086, 0.0
  %2090 = vadd.xlane.f32.xlu0 %v2089
  %v2091 = vpop.xlane.xlu0 %2090
  %v2092 = vmul.f32 %v2091, %v1384
  %v2093 = vsub.f32 %v2086, %v2092
  %v2094 = vmul.f32 %v2093, %v2093
  %v2095 = vsel %vm1380, %v2094, 0.0
  %2096 = vadd.xlane.f32.xlu0 %v2095
  %v2097 = vpop.xlane.xlu0 %2096
  %v2098 = vmul.f32 %v2097, %v1384
  %v2099 = vadd.f32 %v2098, 1e-05
  %v2100 = vrsqrt.pop %v2099
  %v2101 = vmul.f32 %v2093, %v2100
  %v2103 = vlaneseq
  %v2104 = vshrl.u32 %v2103, 7
  %v2105 = vsub.s32 0, %v2104
  %v2106 = vrot.slane %v2087, %v2105
  %v2108 = vmul.f32 %v2101, %v2106
  %v2110 = vlaneseq
  %v2111 = vshrl.u32 %v2110, 7
  %v2112 = vsub.s32 0, %v2111
  %v2113 = vrot.slane %v2088, %v2112
  %v2115 = vadd.f32 %v2108, %v2113
  %v2116 = vmax.f32 %v2115, 0.0
  %v2117 = vpack.c.bf16 %v2116, %v2116
  %v2118 = vld [vmem:[%s5] sm:$0xf]
  %v2119 = vld [vmem:[%s5 + $0x4] sm:$0xf]
  %v2120 = vld [vmem:[%s5 + $0x8] sm:$0xf]
  %v2121 = vld [vmem:[%s5 + $0xc] sm:$0xf]
  %v2122 = vld [vmem:[%s5 + $0x10] sm:$0xf]
  %v2123 = vld [vmem:[%s5 + $0x14] sm:$0xf]
  %v2124 = vld [vmem:[%s5 + $0x18] sm:$0xf]
  %v2125 = vld [vmem:[%s5 + $0x1c] sm:$0xf]
  %v2126 = vld [vmem:[%s5 + $0x20] sm:$0xf]
  %v2127 = vld [vmem:[%s5 + $0x24] sm:$0xf]
  %v2128 = vld [vmem:[%s5 + $0x28] sm:$0xf]
  %v2129 = vld [vmem:[%s5 + $0x2c] sm:$0xf]
  %v2130 = vld [vmem:[%s5 + $0x30] sm:$0xf]
  %v2131 = vld [vmem:[%s5 + $0x34] sm:$0xf]
  %v2132 = vld [vmem:[%s5 + $0x38] sm:$0xf]
  %v2133 = vld [vmem:[%s5 + $0x3c] sm:$0xf]
  %v2134 = vld [vmem:[%s6] sm:$0x1]
  %v2136 = vlaneseq
  %v2137 = vshrl.u32 %v2136, 7
  %v2138 = vsub.s32 0, %v2137
  %v2139 = vrot.slane %v2134, %v2138
  %v2157 = vunpack.c.l.b16 %v2118
  %v2158 = vunpack.c.l.b16 %v2119
  %v2159 = vunpack.c.l.b16 %v2120
  %v2160 = vunpack.c.l.b16 %v2121
  %v2161 = vunpack.c.l.b16 %v2122
  %v2162 = vunpack.c.l.b16 %v2123
  %v2163 = vunpack.c.l.b16 %v2124
  %v2164 = vunpack.c.l.b16 %v2125
  %v2165 = vunpack.c.l.b16 %v2126
  %v2166 = vunpack.c.l.b16 %v2127
  %v2167 = vunpack.c.l.b16 %v2128
  %v2168 = vunpack.c.l.b16 %v2129
  %v2169 = vunpack.c.l.b16 %v2130
  %v2170 = vunpack.c.l.b16 %v2131
  %v2171 = vunpack.c.l.b16 %v2132
  %v2172 = vunpack.c.l.b16 %v2133
  %v2173 = vpack.c.b16 %v2158, %v2157
  %v2174 = vpack.c.b16 %v2160, %v2159
  %v2175 = vpack.c.b16 %v2162, %v2161
  %v2176 = vpack.c.b16 %v2164, %v2163
  %v2177 = vpack.c.b16 %v2166, %v2165
  %v2178 = vpack.c.b16 %v2168, %v2167
  %v2179 = vpack.c.b16 %v2170, %v2169
  %v2180 = vpack.c.b16 %v2172, %v2171
  %2189 = vmatprep.subr.bf16.mxu0 0
  %2190 = vmatpush1.bf16.msra.mxu0 %v2173
  %2191 = vmatprep.subr.bf16.mxu0 0
  %2192 = vmatpush1.bf16.msra.mxu0 %v2174
  %2193 = vmatprep.subr.bf16.mxu0 0
  %2194 = vmatpush1.bf16.msra.mxu0 %v2175
  %2195 = vmatprep.subr.bf16.mxu0 0
  %2196 = vmatpush1.bf16.msra.mxu0 %v2176
  %2197 = vmatprep.subr.bf16.mxu0 0
  %2198 = vmatpush1.bf16.msra.mxu0 %v2177
  %2199 = vmatprep.subr.bf16.mxu0 0
  %2200 = vmatpush1.bf16.msra.mxu0 %v2178
  %2201 = vmatprep.subr.bf16.mxu0 0
  %2202 = vmatpush1.bf16.msra.mxu0 %v2179
  %2203 = vmatprep.subr.bf16.mxu0 0
  %2204 = vmatpush1.bf16.msra.mxu0 %v2180
  %2205 = vmatprep.subr.bf16.mxu0 0
  %2206 = vmatpush1.bf16.msra.mxu0 0
  %2207 = vmatprep.subr.bf16.mxu0 0
  %2208 = vmatpush1.bf16.msra.mxu0 0
  %2209 = vmatprep.subr.bf16.mxu0 0
  %2210 = vmatpush1.bf16.msra.mxu0 0
  %2211 = vmatprep.subr.bf16.mxu0 0
  %2212 = vmatpush1.bf16.msra.mxu0 0
  %2213 = vmatprep.subr.bf16.mxu0 0
  %2214 = vmatpush1.bf16.msra.mxu0 0
  %2215 = vmatprep.subr.bf16.mxu0 0
  %2216 = vmatpush1.bf16.msra.mxu0 0
  %2217 = vmatprep.subr.bf16.mxu0 0
  %2218 = vmatpush1.bf16.msra.mxu0 0
  %2219 = vmatprep.subr.bf16.mxu0 0
  %2220 = vmatpush1.bf16.msra.mxu0 0
  %2221 = vmatprep.mubr.bf16.mxu0 0
  %2222 = vmatmul.mubr.bf16.gmra.mrb[0].mxu0 %v2117
  %v2223 = vpop.f32.mrb[0].mxu0
  %v2224 = vadd.f32 %v2139, %v2223
  %v2225 = vpop.f32.mrb[0].mxu0
  %v2226 = vpop.f32.mrb[0].mxu0
  %v2227 = vpop.f32.mrb[0].mxu0
  %2228 = vdwg.mxu0
  %v2229 = vpack.c.bf16 %v2224, %v2224
  %2230 = vst [vmem:[%s19] sm:$0x3] %v2229
  // Predicated region
  $region78: #{forward.9} parent=0 // pred_check
    _
  $region79: #{forward.9} parent=0 // pred_check_branch
    %2232 = sbr.rel (0) target = $region81
  $region80: #{forward.9} parent=0 // pred_region
    _
  $region81: #{forward.9} parent=0 // pred_fallthru
    _
  // Predicated region
  $region82: #{forward.9} parent=0 // pred_check
    _
  $region83: #{forward.9} parent=0 // pred_check_branch
    %2234 = sbr.rel (0) target = $region85
  $region84: #{forward.9} parent=0 // pred_region
    _
  $region85: #{forward.9} parent=0 // pred_fallthru
    _

// kernel: forward.8
$region0: #{forward.8}
  #allocation0 [shape = 'u32[]', space=smem, size = 0x4, offset = 0x4, fixed_abs, tag = 'smem constant byte address 0x4 - core index']
  #allocation1 [shape = 'u32[144,128]{1,0:T(1,128)}', space=vmem, size = 0x12000, scoped, tag = 'internal scratch']
  %s0 = inlined_call_operand.vmem [shape: bf16[4,128], index: 0, kind: input, shape index: {}]
  %s1 = inlined_call_operand.vmem [shape: f32[4,4], index: 1, kind: input, shape index: {}]
  %s2 = inlined_call_operand.vmem [shape: f32[4,1], index: 2, kind: input, shape index: {}]
  %s3 = inlined_call_operand.vmem [shape: f32[4,1], index: 3, kind: input, shape index: {}]
  %s4 = inlined_call_operand.vmem [shape: bf16[192,128], index: 4, kind: input, shape index: {}]
  %s5 = inlined_call_operand.hbm [shape: f32[1,128], index: 5, kind: input, shape index: {}]
  %s6 = inlined_call_operand.hbm [shape: f32[1,128], index: 6, kind: input, shape index: {}]
  %s7 = inlined_call_operand.hbm [shape: f32[1,128], index: 7, kind: input, shape index: {}]
  %s8 = inlined_call_operand.vmem [shape: f32[4,128], index: 8, kind: input, shape index: {}]
  %s9 = inlined_call_operand.vmem [shape: bf16[128,384], index: 9, kind: input, shape index: {}]
  %s10 = inlined_call_operand.vmem [shape: f32[1,384], index: 10, kind: input, shape index: {}]
  %s11 = inlined_call_operand.vmem [shape: bf16[128,128], index: 11, kind: input, shape index: {}]
  %s12 = inlined_call_operand.hbm [shape: f32[1,128], index: 12, kind: input, shape index: {}]
  %s13 = inlined_call_operand.vmem [shape: bf16[128,512], index: 13, kind: input, shape index: {}]
  %s14 = inlined_call_operand.vmem [shape: f32[1,512], index: 14, kind: input, shape index: {}]
  %s15 = inlined_call_operand.vmem [shape: bf16[512,128], index: 15, kind: input, shape index: {}]
  %s16 = inlined_call_operand.hbm [shape: f32[1,128], index: 16, kind: input, shape index: {}]
  %s17 = inlined_call_operand.hbm [shape: f32[1,128], index: 17, kind: input, shape index: {}]
  %s18 = inlined_call_operand.hbm [shape: f32[1,128], index: 18, kind: input, shape index: {}]
  %s19 = inlined_call_operand.hbm [shape: f32[1,128], index: 19, kind: input, shape index: {}]
  %s20 = inlined_call_operand.hbm [shape: f32[1,128], index: 20, kind: input, shape index: {}]
  %s21 = inlined_call_operand.vmem [shape: bf16[4,128], index: 21, kind: output, shape index: {}]
  %s22 = sld [smem:[#allocation0]]
  $region130: #{forward.8} parent=0
    _
  %s24 = ssub.s32 1, %s22
  %s25 = scalar_select 0, %s24, %s22
  $region1: #{forward.8} parent=0
    #allocation2 [shape = 'u8[512]{0}', space=vmem, size = 0x400, scoped, tag = 'input window, operand 5, single buffered']
    #allocation3 [shape = 's32[1]{0}', space=sflag, size = 0x4, scoped, tag = 'scoped memory for forward.8']
    #allocation4 [shape = 'u8[512]{0}', space=vmem, size = 0x400, scoped, tag = 'input window, operand 6, single buffered']
    #allocation5 [shape = 's32[1]{0}', space=sflag, size = 0x4, scoped, tag = 'scoped memory for forward.8']
    #allocation6 [shape = 'u8[512]{0}', space=vmem, size = 0x400, scoped, tag = 'input window, operand 7, single buffered']
    #allocation7 [shape = 'u8[512]{0}', space=vmem, size = 0x400, scoped, tag = 'input window, operand 12, single buffered']
    #allocation8 [shape = 's32[1]{0}', space=sflag, size = 0x4, scoped, tag = 'scoped memory for forward.8']
    #allocation9 [shape = 'u8[512]{0}', space=vmem, size = 0x400, scoped, tag = 'input window, operand 16, single buffered']
    #allocation10 [shape = 'u8[512]{0}', space=vmem, size = 0x400, scoped, tag = 'input window, operand 17, single buffered']
    #allocation11 [shape = 's32[1]{0}', space=sflag, size = 0x4, scoped, tag = 'scoped memory for forward.8']
    #allocation12 [shape = 'u8[512]{0}', space=vmem, size = 0x400, scoped, tag = 'input window, operand 18, single buffered']
    #allocation13 [shape = 'u8[512]{0}', space=vmem, size = 0x400, scoped, tag = 'input window, operand 19, single buffered']
    #allocation14 [shape = 's32[1]{0}', space=sflag, size = 0x4, scoped, tag = 'scoped memory for forward.8']
    #allocation15 [shape = 'u8[512]{0}', space=vmem, size = 0x400, scoped, tag = 'input window, operand 20, single buffered']
    %26 = vsyncpa [#allocation3], 0
    %27 = vsyncpa [#allocation5], 0
    %28 = vsyncpa [#allocation8], 0
    %29 = vsyncpa [#allocation11], 0
    %30 = vsyncpa [#allocation14], 0
    // Predicated region
    $region2: #{forward.8} parent=1 // pred_check
      _
    $region3: #{forward.8} parent=1 // pred_check_branch
      %32 = sbr.rel (0) target = $region5
    $region4: #{forward.8} parent=1 // pred_region
      _
    $region5: #{forward.8} parent=1 // pred_fallthru
      _
    // Predicated region
    $region6: #{forward.8} parent=1 // pred_check
      _
    $region7: #{forward.8} parent=1 // pred_check_branch
      %34 = sbr.rel (0) target = $region9
    $region8: #{forward.8} parent=1 // pred_region
      _
    $region9: #{forward.8} parent=1 // pred_fallthru
      _
    // Predicated region
    $region10: #{forward.8} parent=1 // pred_check
      _
    $region11: #{forward.8} parent=1 // pred_check_branch
      %36 = sbr.rel (0) target = $region13
    $region12: #{forward.8} parent=1 // pred_region
      _
    $region13: #{forward.8} parent=1 // pred_fallthru
      _
    // Predicated region
    $region14: #{forward.8} parent=1 // pred_check
      _
    $region15: #{forward.8} parent=1 // pred_check_branch
      %38 = sbr.rel (0) target = $region17
    $region16: #{forward.8} parent=1 // pred_region
      _
    $region17: #{forward.8} parent=1 // pred_fallthru
      _
    // Predicated region
    $region18: #{forward.8} parent=1 // pred_check
      _
    $region19: #{forward.8} parent=1 // pred_check_branch
      %40 = sbr.rel (0) target = $region21
    $region20: #{forward.8} parent=1 // pred_region
      _
    $region21: #{forward.8} parent=1 // pred_fallthru
      _
    // Predicated region
    $region22: #{forward.8} parent=1 // pred_check
      _
    $region23: #{forward.8} parent=1 // pred_check_branch
      %42 = sbr.rel (0) target = $region25
    $region24: #{forward.8} parent=1 // pred_region
      %s44 = ssub.s32 16, 16
      %45 = vsyncadd [#allocation3], %s44
      %s47 = sshll.u32 [#allocation2], 4
      %s48 = int_to_ptr.vmem [resolvable:$true] %s47
      %50 = dma.hbm_to_vmem [thread:$0]  %s5, 16, %s48, [#allocation3]
    $region25: #{forward.8} parent=1 // pred_fallthru
      _
    // Predicated region
    $region26: #{forward.8} parent=1 // pred_check
      _
    $region27: #{forward.8} parent=1 // pred_check_branch
      %52 = sbr.rel (0) target = $region29
    $region28: #{forward.8} parent=1 // pred_region
      %s54 = ssub.s32 16, 16
      %55 = vsyncadd [#allocation5], %s54
      %s57 = sshll.u32 [#allocation4], 4
      %s58 = int_to_ptr.vmem [resolvable:$true] %s57
      %60 = dma.hbm_to_vmem [thread:$0]  %s6, 16, %s58, [#allocation5]
    $region29: #{forward.8} parent=1 // pred_fallthru
      _
    // Predicated region
    $region30: #{forward.8} parent=1 // pred_check
      _
    $region31: #{forward.8} parent=1 // pred_check_branch
      %62 = sbr.rel (0) target = $region33
    $region32: #{forward.8} parent=1 // pred_region
      %s64 = ssub.s32 16, 16
      %65 = vsyncadd [#allocation5], %s64
      %s67 = sshll.u32 [#allocation6], 4
      %s68 = int_to_ptr.vmem [resolvable:$true] %s67
      %70 = dma.hbm_to_vmem [thread:$0]  %s7, 16, %s68, [#allocation5]
    $region33: #{forward.8} parent=1 // pred_fallthru
      _
    // Predicated region
    $region34: #{forward.8} parent=1 // pred_check
      _
    $region35: #{forward.8} parent=1 // pred_check_branch
      %72 = sbr.rel (0) target = $region37
    $region36: #{forward.8} parent=1 // pred_region
      _
    $region37: #{forward.8} parent=1 // pred_fallthru
      _
    // Predicated region
    $region38: #{forward.8} parent=1 // pred_check
      _
    $region39: #{forward.8} parent=1 // pred_check_branch
      %74 = sbr.rel (0) target = $region41
    $region40: #{forward.8} parent=1 // pred_region
      _
    $region41: #{forward.8} parent=1 // pred_fallthru
      _
    // Predicated region
    $region42: #{forward.8} parent=1 // pred_check
      _
    $region43: #{forward.8} parent=1 // pred_check_branch
      %76 = sbr.rel (0) target = $region45
    $region44: #{forward.8} parent=1 // pred_region
      _
    $region45: #{forward.8} parent=1 // pred_fallthru
      _
    // Predicated region
    $region46: #{forward.8} parent=1 // pred_check
      _
    $region47: #{forward.8} parent=1 // pred_check_branch
      %78 = sbr.rel (0) target = $region49
    $region48: #{forward.8} parent=1 // pred_region
      _
    $region49: #{forward.8} parent=1 // pred_fallthru
      _
    // Predicated region
    $region50: #{forward.8} parent=1 // pred_check
      _
    $region51: #{forward.8} parent=1 // pred_check_branch
      %80 = sbr.rel (0) target = $region53
    $region52: #{forward.8} parent=1 // pred_region
      %s82 = ssub.s32 16, 16
      %83 = vsyncadd [#allocation8], %s82
      %s85 = sshll.u32 [#allocation7], 4
      %s86 = int_to_ptr.vmem [resolvable:$true] %s85
      %88 = dma.hbm_to_vmem [thread:$0]  %s12, 16, %s86, [#allocation8]
    $region53: #{forward.8} parent=1 // pred_fallthru
      _
    // Predicated region
    $region54: #{forward.8} parent=1 // pred_check
      _
    $region55: #{forward.8} parent=1 // pred_check_branch
      %90 = sbr.rel (0) target = $region57
    $region56: #{forward.8} parent=1 // pred_region
      _
    $region57: #{forward.8} parent=1 // pred_fallthru
      _
    // Predicated region
    $region58: #{forward.8} parent=1 // pred_check
      _
    $region59: #{forward.8} parent=1 // pred_check_branch
      %92 = sbr.rel (0) target = $region61
    $region60: #{forward.8} parent=1 // pred_region
      _
    $region61: #{forward.8} parent=1 // pred_fallthru
      _
    // Predicated region
    $region62: #{forward.8} parent=1 // pred_check
      _
    $region63: #{forward.8} parent=1 // pred_check_branch
      %94 = sbr.rel (0) target = $region65
    $region64: #{forward.8} parent=1 // pred_region
      _
    $region65: #{forward.8} parent=1 // pred_fallthru
      _
    // Predicated region
    $region66: #{forward.8} parent=1 // pred_check
      _
    $region67: #{forward.8} parent=1 // pred_check_branch
      %96 = sbr.rel (0) target = $region69
    $region68: #{forward.8} parent=1 // pred_region
      %s98 = ssub.s32 16, 16
      %99 = vsyncadd [#allocation8], %s98
      %s101 = sshll.u32 [#allocation9], 4
      %s102 = int_to_ptr.vmem [resolvable:$true] %s101
      %104 = dma.hbm_to_vmem [thread:$0]  %s16, 16, %s102, [#allocation8]
    $region69: #{forward.8} parent=1 // pred_fallthru
      _
    // Predicated region
    $region70: #{forward.8} parent=1 // pred_check
      _
    $region71: #{forward.8} parent=1 // pred_check_branch
      %106 = sbr.rel (0) target = $region73
    $region72: #{forward.8} parent=1 // pred_region
      %s108 = ssub.s32 16, 16
      %109 = vsyncadd [#allocation11], %s108
      %s111 = sshll.u32 [#allocation10], 4
      %s112 = int_to_ptr.vmem [resolvable:$true] %s111
      %114 = dma.hbm_to_vmem [thread:$0]  %s17, 16, %s112, [#allocation11]
    $region73: #{forward.8} parent=1 // pred_fallthru
      _
    // Predicated region
    $region74: #{forward.8} parent=1 // pred_check
      _
    $region75: #{forward.8} parent=1 // pred_check_branch
      %116 = sbr.rel (0) target = $region77
    $region76: #{forward.8} parent=1 // pred_region
      %s118 = ssub.s32 16, 16
      %119 = vsyncadd [#allocation11], %s118
      %s121 = sshll.u32 [#allocation12], 4
      %s122 = int_to_ptr.vmem [resolvable:$true] %s121
      %124 = dma.hbm_to_vmem [thread:$0]  %s18, 16, %s122, [#allocation11]
    $region77: #{forward.8} parent=1 // pred_fallthru
      _
    // Predicated region
    $region78: #{forward.8} parent=1 // pred_check
      _
    $region79: #{forward.8} parent=1 // pred_check_branch
      %126 = sbr.rel (0) target = $region81
    $region80: #{forward.8} parent=1 // pred_region
      %s128 = ssub.s32 16, 16
      %129 = vsyncadd [#allocation14], %s128
      %s131 = sshll.u32 [#allocation13], 4
      %s132 = int_to_ptr.vmem [resolvable:$true] %s131
      %134 = dma.hbm_to_vmem [thread:$0]  %s19, 16, %s132, [#allocation14]
    $region81: #{forward.8} parent=1 // pred_fallthru
      _
    // Predicated region
    $region82: #{forward.8} parent=1 // pred_check
      _
    $region83: #{forward.8} parent=1 // pred_check_branch
      %136 = sbr.rel (0) target = $region85
    $region84: #{forward.8} parent=1 // pred_region
      %s138 = ssub.s32 16, 16
      %139 = vsyncadd [#allocation14], %s138
      %s141 = sshll.u32 [#allocation15], 4
      %s142 = int_to_ptr.vmem [resolvable:$true] %s141
      %144 = dma.hbm_to_vmem [thread:$0]  %s20, 16, %s142, [#allocation14]
    $region85: #{forward.8} parent=1 // pred_fallthru
      _
    // Predicated region
    $region86: #{forward.8} parent=1 // pred_check
      _
    $region87: #{forward.8} parent=1 // pred_check_branch
      %146 = sbr.rel (0) target = $region89
    $region88: #{forward.8} parent=1 // pred_region
      %147 = dma.done [#allocation3], 16
    $region89: #{forward.8} parent=1 // pred_fallthru
      _
    // Predicated region
    $region90: #{forward.8} parent=1 // pred_check
      _
    $region91: #{forward.8} parent=1 // pred_check_branch
      %149 = sbr.rel (0) target = $region93
    $region92: #{forward.8} parent=1 // pred_region
      %150 = dma.done [#allocation5], 16
    $region93: #{forward.8} parent=1 // pred_fallthru
      _
    // Predicated region
    $region94: #{forward.8} parent=1 // pred_check
      _
    $region95: #{forward.8} parent=1 // pred_check_branch
      %152 = sbr.rel (0) target = $region97
    $region96: #{forward.8} parent=1 // pred_region
      %153 = dma.done [#allocation5], 16
    $region97: #{forward.8} parent=1 // pred_fallthru
      _
    // Predicated region
    $region98: #{forward.8} parent=1 // pred_check
      _
    $region99: #{forward.8} parent=1 // pred_check_branch
      %155 = sbr.rel (0) target = $region101
    $region100: #{forward.8} parent=1 // pred_region
      %156 = dma.done [#allocation8], 16
    $region101: #{forward.8} parent=1 // pred_fallthru
      _
    // Predicated region
    $region102: #{forward.8} parent=1 // pred_check
      _
    $region103: #{forward.8} parent=1 // pred_check_branch
      %158 = sbr.rel (0) target = $region105
    $region104: #{forward.8} parent=1 // pred_region
      %159 = dma.done [#allocation8], 16
    $region105: #{forward.8} parent=1 // pred_fallthru
      _
    // Predicated region
    $region106: #{forward.8} parent=1 // pred_check
      _
    $region107: #{forward.8} parent=1 // pred_check_branch
      %161 = sbr.rel (0) target = $region109
    $region108: #{forward.8} parent=1 // pred_region
      %162 = dma.done [#allocation11], 16
    $region109: #{forward.8} parent=1 // pred_fallthru
      _
    // Predicated region
    $region110: #{forward.8} parent=1 // pred_check
      _
    $region111: #{forward.8} parent=1 // pred_check_branch
      %164 = sbr.rel (0) target = $region113
    $region112: #{forward.8} parent=1 // pred_region
      %165 = dma.done [#allocation11], 16
    $region113: #{forward.8} parent=1 // pred_fallthru
      _
    // Predicated region
    $region114: #{forward.8} parent=1 // pred_check
      _
    $region115: #{forward.8} parent=1 // pred_check_branch
      %167 = sbr.rel (0) target = $region117
    $region116: #{forward.8} parent=1 // pred_region
      %168 = dma.done [#allocation14], 16
    $region117: #{forward.8} parent=1 // pred_fallthru
      _
    // Predicated region
    $region118: #{forward.8} parent=1 // pred_check
      _
    $region119: #{forward.8} parent=1 // pred_check_branch
      %170 = sbr.rel (0) target = $region121
    $region120: #{forward.8} parent=1 // pred_region
      %171 = dma.done [#allocation14], 16
    $region121: #{forward.8} parent=1 // pred_fallthru
      _
    %v173 = vld [vmem:[%s0] sm:$0x3]
    %v174 = vunpack.c.l.bf16 %v173
    %176 = vrot.lane.b32.xlu0 %v174, 64
    %v177 = vpop.permute.xlu0 %176
    %v179 = vmax.f32 %v174, %v177
    %v181 = vrot.slane %v179, 7
    %vm183 = vcmask 1040384
    %v184 = vsel %vm183, 0.0, %v181
    %v185 = vld [vmem:[%s2] sm:$0xf]
    %187 = vset.pattern.permute.xlu0 0
    %188 = vperm.xlu0 %187, %v185
    %v189 = vpop.permute.xlu0 %188
    %v191 = vmul.f32 %v184, %v189
    %v192 = vrot.slane %v179, 1
    %vm194 = vcmask 1042432
    %v195 = vsel %vm194, %v192, 0.0
    %v196 = vld [vmem:[%s3] sm:$0xf]
    %198 = vset.pattern.permute.xlu0 0
    %199 = vperm.xlu0 %198, %v196
    %v200 = vpop.permute.xlu0 %199
    %v202 = vmul.f32 %v195, %v200
    %203 = vrot.lane.b32.xlu0 %v179, 64
    %v204 = vpop.permute.xlu0 %203
    %vm206 = vcmask 523264
    %v207 = vsel %vm206, %v191, %v204
    %v208 = vpack.c.bf16 %v207, %v207
    %v209 = vpack.c.bf16 %v202, %v202
    %v210 = vld [vmem:[%s4] sm:$0xf]
    %v211 = vld [vmem:[%s4 + $0x4] sm:$0xf]
    %v212 = vld [vmem:[%s4 + $0x8] sm:$0xf]
    %v213 = vld [vmem:[%s4 + $0xc] sm:$0xf]
    %v214 = vld [vmem:[%s4 + $0x10] sm:$0xf]
    %v215 = vld [vmem:[%s4 + $0x14] sm:$0xf]
    %v216 = vld [vmem:[%s4 + $0x18] sm:$0xf]
    %v217 = vld [vmem:[%s4 + $0x1c] sm:$0xf]
    %v218 = vld [vmem:[%s4 + $0x20] sm:$0xf]
    %v219 = vld [vmem:[%s4 + $0x24] sm:$0xf]
    %v220 = vld [vmem:[%s4 + $0x28] sm:$0xf]
    %v221 = vld [vmem:[%s4 + $0x2c] sm:$0xf]
    %v222 = vld [vmem:[%s4 + $0x30] sm:$0xf]
    %v223 = vld [vmem:[%s4 + $0x34] sm:$0xf]
    %v224 = vld [vmem:[%s4 + $0x38] sm:$0xf]
    %v225 = vld [vmem:[%s4 + $0x3c] sm:$0xf]
    %v226 = vld [vmem:[%s4 + $0x40] sm:$0xf]
    %v227 = vld [vmem:[%s4 + $0x44] sm:$0xf]
    %v228 = vld [vmem:[%s4 + $0x48] sm:$0xf]
    %v229 = vld [vmem:[%s4 + $0x4c] sm:$0xf]
    %v230 = vld [vmem:[%s4 + $0x50] sm:$0xf]
    %v231 = vld [vmem:[%s4 + $0x54] sm:$0xf]
    %v232 = vld [vmem:[%s4 + $0x58] sm:$0xf]
    %v233 = vld [vmem:[%s4 + $0x5c] sm:$0xf]
    %v234 = vld [vmem:[#allocation2] sm:$0x1]
    %v236 = vlaneseq
    %v237 = vshrl.u32 %v236, 7
    %v238 = vsub.s32 0, %v237
    %v239 = vrot.slane %v234, %v238
    %v265 = vunpack.c.l.b16 %v210
    %v266 = vunpack.c.l.b16 %v211
    %v267 = vunpack.c.l.b16 %v212
    %v268 = vunpack.c.l.b16 %v213
    %v269 = vunpack.c.l.b16 %v214
    %v270 = vunpack.c.l.b16 %v215
    %v271 = vunpack.c.l.b16 %v216
    %v272 = vunpack.c.l.b16 %v217
    %v273 = vunpack.c.l.b16 %v218
    %v274 = vunpack.c.l.b16 %v219
    %v275 = vunpack.c.l.b16 %v220
    %v276 = vunpack.c.l.b16 %v221
    %v277 = vunpack.c.l.b16 %v222
    %v278 = vunpack.c.l.b16 %v223
    %v279 = vunpack.c.l.b16 %v224
    %v280 = vunpack.c.l.b16 %v225
    %v281 = vunpack.c.l.b16 %v226
    %v282 = vunpack.c.l.b16 %v227
    %v283 = vunpack.c.l.b16 %v228
    %v284 = vunpack.c.l.b16 %v229
    %v285 = vunpack.c.l.b16 %v230
    %v286 = vunpack.c.l.b16 %v231
    %v287 = vunpack.c.l.b16 %v232
    %v288 = vunpack.c.l.b16 %v233
    %v289 = vpack.c.b16 %v266, %v265
    %v290 = vpack.c.b16 %v268, %v267
    %v291 = vpack.c.b16 %v270, %v269
    %v292 = vpack.c.b16 %v272, %v271
    %v293 = vpack.c.b16 %v274, %v273
    %v294 = vpack.c.b16 %v276, %v275
    %v295 = vpack.c.b16 %v278, %v277
    %v296 = vpack.c.b16 %v280, %v279
    %v297 = vpack.c.b16 %v282, %v281
    %v298 = vpack.c.b16 %v284, %v283
    %v299 = vpack.c.b16 %v286, %v285
    %v300 = vpack.c.b16 %v288, %v287
    %v314 = vsel %vm206, %v209, 0
    %316 = vmatprep.subr.bf16.mxu0 0
    %317 = vmatpush1.bf16.msra.mxu0 %v289
    %318 = vmatprep.subr.bf16.mxu0 0
    %319 = vmatpush1.bf16.msra.mxu0 %v290
    %320 = vmatprep.subr.bf16.mxu0 0
    %321 = vmatpush1.bf16.msra.mxu0 %v291
    %322 = vmatprep.subr.bf16.mxu0 0
    %323 = vmatpush1.bf16.msra.mxu0 %v292
    %324 = vmatprep.subr.bf16.mxu0 0
    %325 = vmatpush1.bf16.msra.mxu0 %v293
    %326 = vmatprep.subr.bf16.mxu0 0
    %327 = vmatpush1.bf16.msra.mxu0 %v294
    %328 = vmatprep.subr.bf16.mxu0 0
    %329 = vmatpush1.bf16.msra.mxu0 %v295
    %330 = vmatprep.subr.bf16.mxu0 0
    %331 = vmatpush1.bf16.msra.mxu0 %v296
    %332 = vmatprep.subr.bf16.mxu0 0
    %333 = vmatpush1.bf16.msra.mxu0 %v297
    %334 = vmatprep.subr.bf16.mxu0 0
    %335 = vmatpush1.bf16.msra.mxu0 %v298
    %336 = vmatprep.subr.bf16.mxu0 0
    %337 = vmatpush1.bf16.msra.mxu0 %v299
    %338 = vmatprep.subr.bf16.mxu0 0
    %339 = vmatpush1.bf16.msra.mxu0 %v300
    %340 = vmatprep.subr.bf16.mxu0 0
    %341 = vmatpush1.bf16.msra.mxu0 0
    %342 = vmatprep.subr.bf16.mxu0 0
    %343 = vmatpush1.bf16.msra.mxu0 0
    %344 = vmatprep.subr.bf16.mxu0 0
    %345 = vmatpush1.bf16.msra.mxu0 0
    %346 = vmatprep.subr.bf16.mxu0 0
    %347 = vmatpush1.bf16.msra.mxu0 0
    %348 = vmatprep.mubr.bf16.mxu0 %v314
    %349 = vmatmul.mubr.bf16.gmra.mrb[0].mxu0 %v208
    %v350 = vpop.f32.mrb[0].mxu0
    %v351 = vadd.f32 %v239, %v350
    %v352 = vpop.f32.mrb[0].mxu0
    %v353 = vpop.f32.mrb[0].mxu0
    %v354 = vpop.f32.mrb[0].mxu0
    %355 = vdwg.mxu0
    %v356 = vmax.f32 %v351, 0.0
    %v357 = vld [vmem:[#allocation4] sm:$0x1]
    %v358 = vld [vmem:[#allocation6] sm:$0x1]
    %vm359 = vcmask 1043456
    %v360 = vsel %vm359, %v356, 0.0
    %361 = vadd.xlane.f32.xlu0 %v360
    %v362 = vpop.xlane.xlu0 %361
    %v363 = vrcp.pop 128.0
    %v364 = vmul.f32 %v362, %v363
    %v365 = vsub.f32 %v356, %v364
    %v366 = vmul.f32 %v365, %v365
    %v367 = vsel %vm359, %v366, 0.0
    %368 = vadd.xlane.f32.xlu0 %v367
    %v369 = vpop.xlane.xlu0 %368
    %v370 = vmul.f32 %v369, %v363
    %v371 = vadd.f32 %v370, 1e-05
    %v372 = vrsqrt.pop %v371
    %v373 = vmul.f32 %v365, %v372
    %v375 = vlaneseq
    %v376 = vshrl.u32 %v375, 7
    %v377 = vsub.s32 0, %v376
    %v378 = vrot.slane %v357, %v377
    %v380 = vmul.f32 %v373, %v378
    %v382 = vlaneseq
    %v383 = vshrl.u32 %v382, 7
    %v384 = vsub.s32 0, %v383
    %v385 = vrot.slane %v358, %v384
    %v387 = vadd.f32 %v380, %v385
    %v388 = vld [vmem:[%s8] sm:$0xf]
    %v389 = vadd.f32 %v387, %v388
    %v390 = vld [vmem:[%s1] sm:$0xf]
    %v391 = vpack.c.bf16 %v389, %v389
    %v392 = vld [vmem:[%s9] sm:$0xff]
    %v393 = vld [vmem:[%s9 + $0x8] sm:$0xf]
    %v394 = vld [vmem:[%s9 + $0xc] sm:$0xff]
    %v395 = vld [vmem:[%s9 + $0x14] sm:$0xf]
    %v396 = vld [vmem:[%s9 + $0x18] sm:$0xff]
    %v397 = vld [vmem:[%s9 + $0x20] sm:$0xf]
    %v398 = vld [vmem:[%s9 + $0x24] sm:$0xff]
    %v399 = vld [vmem:[%s9 + $0x2c] sm:$0xf]
    %v400 = vld [vmem:[%s9 + $0x30] sm:$0xff]
    %v401 = vld [vmem:[%s9 + $0x38] sm:$0xf]
    %v402 = vld [vmem:[%s9 + $0x3c] sm:$0xff]
    %v403 = vld [vmem:[%s9 + $0x44] sm:$0xf]
    %v404 = vld [vmem:[%s9 + $0x48] sm:$0xff]
    %v405 = vld [vmem:[%s9 + $0x50] sm:$0xf]
    %v406 = vld [vmem:[%s9 + $0x54] sm:$0xff]
    %v407 = vld [vmem:[%s9 + $0x5c] sm:$0xf]
    %v408 = vld [vmem:[%s9 + $0x60] sm:$0xff]
    %v409 = vld [vmem:[%s9 + $0x68] sm:$0xf]
    %v410 = vld [vmem:[%s9 + $0x6c] sm:$0xff]
    %v411 = vld [vmem:[%s9 + $0x74] sm:$0xf]
    %v412 = vld [vmem:[%s9 + $0x78] sm:$0xff]
    %v413 = vld [vmem:[%s9 + $0x80] sm:$0xf]
    %v414 = vld [vmem:[%s9 + $0x84] sm:$0xff]
    %v415 = vld [vmem:[%s9 + $0x8c] sm:$0xf]
    %v416 = vld [vmem:[%s9 + $0x90] sm:$0xff]
    %v417 = vld [vmem:[%s9 + $0x98] sm:$0xf]
    %v418 = vld [vmem:[%s9 + $0x9c] sm:$0xff]
    %v419 = vld [vmem:[%s9 + $0xa4] sm:$0xf]
    %v420 = vld [vmem:[%s9 + $0xa8] sm:$0xff]
    %v421 = vld [vmem:[%s9 + $0xb0] sm:$0xf]
    %v422 = vld [vmem:[%s9 + $0xb4] sm:$0xff]
    %v423 = vld [vmem:[%s9 + $0xbc] sm:$0xf]
    %v424 = vld [vmem:[%s10] sm:$0x7]
    %v426 = vlaneseq
    %v427 = vshrl.u32 %v426, 7
    %v428 = vsub.s32 0, %v427
    %v429 = vrot.slane %v424, %v428
    %v430 = vlaneseq
    %v431 = vshrl.u32 %v430, 7
    %v432 = vsub.s32 1, %v431
    %v433 = vrot.slane %v424, %v432
    %v434 = vlaneseq
    %v435 = vshrl.u32 %v434, 7
    %v436 = vsub.s32 2, %v435
    %v437 = vrot.slane %v424, %v436
    %v473 = vunpack.c.l.b16 %v392
    %v474 = vunpack.c.h.b16 %v392
    %v475 = vunpack.c.l.b16 %v393
    %v476 = vunpack.c.l.b16 %v394
    %v477 = vunpack.c.h.b16 %v394
    %v478 = vunpack.c.l.b16 %v395
    %v479 = vunpack.c.l.b16 %v396
    %v480 = vunpack.c.h.b16 %v396
    %v481 = vunpack.c.l.b16 %v397
    %v482 = vunpack.c.l.b16 %v398
    %v483 = vunpack.c.h.b16 %v398
    %v484 = vunpack.c.l.b16 %v399
    %v485 = vunpack.c.l.b16 %v400
    %v486 = vunpack.c.h.b16 %v400
    %v487 = vunpack.c.l.b16 %v401
    %v488 = vunpack.c.l.b16 %v402
    %v489 = vunpack.c.h.b16 %v402
    %v490 = vunpack.c.l.b16 %v403
    %v491 = vunpack.c.l.b16 %v404
    %v492 = vunpack.c.h.b16 %v404
    %v493 = vunpack.c.l.b16 %v405
    %v494 = vunpack.c.l.b16 %v406
    %v495 = vunpack.c.h.b16 %v406
    %v496 = vunpack.c.l.b16 %v407
    %v497 = vunpack.c.l.b16 %v408
    %v498 = vunpack.c.h.b16 %v408
    %v499 = vunpack.c.l.b16 %v409
    %v500 = vunpack.c.l.b16 %v410
    %v501 = vunpack.c.h.b16 %v410
    %v502 = vunpack.c.l.b16 %v411
    %v503 = vunpack.c.l.b16 %v412
    %v504 = vunpack.c.h.b16 %v412
    %v505 = vunpack.c.l.b16 %v413
    %v506 = vunpack.c.l.b16 %v414
    %v507 = vunpack.c.h.b16 %v414
    %v508 = vunpack.c.l.b16 %v415
    %v509 = vunpack.c.l.b16 %v416
    %v510 = vunpack.c.h.b16 %v416
    %v511 = vunpack.c.l.b16 %v417
    %v512 = vunpack.c.l.b16 %v418
    %v513 = vunpack.c.h.b16 %v418
    %v514 = vunpack.c.l.b16 %v419
    %v515 = vunpack.c.l.b16 %v420
    %v516 = vunpack.c.h.b16 %v420
    %v517 = vunpack.c.l.b16 %v421
    %v518 = vunpack.c.l.b16 %v422
    %v519 = vunpack.c.h.b16 %v422
    %v520 = vunpack.c.l.b16 %v423
    %v521 = vpack.c.b16 %v476, %v473
    %v522 = vpack.c.b16 %v477, %v474
    %v523 = vpack.c.b16 %v478, %v475
    %v524 = vpack.c.b16 %v482, %v479
    %v525 = vpack.c.b16 %v483, %v480
    %v526 = vpack.c.b16 %v484, %v481
    %v527 = vpack.c.b16 %v488, %v485
    %v528 = vpack.c.b16 %v489, %v486
    %v529 = vpack.c.b16 %v490, %v487
    %v530 = vpack.c.b16 %v494, %v491
    %v531 = vpack.c.b16 %v495, %v492
    %v532 = vpack.c.b16 %v496, %v493
    %v533 = vpack.c.b16 %v500, %v497
    %v534 = vpack.c.b16 %v501, %v498
    %v535 = vpack.c.b16 %v502, %v499
    %v536 = vpack.c.b16 %v506, %v503
    %v537 = vpack.c.b16 %v507, %v504
    %v538 = vpack.c.b16 %v508, %v505
    %v539 = vpack.c.b16 %v512, %v509
    %v540 = vpack.c.b16 %v513, %v510
    %v541 = vpack.c.b16 %v514, %v511
    %v542 = vpack.c.b16 %v518, %v515
    %v543 = vpack.c.b16 %v519, %v516
    %v544 = vpack.c.b16 %v520, %v517
    %569 = vmatprep.subr.bf16.mxu0 %v522
    %570 = vmatpush1.bf16.msra.mxu0 %v521
    %571 = vmatprep.subr.bf16.mxu0 %v525
    %572 = vmatpush1.bf16.msra.mxu0 %v524
    %573 = vmatprep.subr.bf16.mxu0 %v528
    %574 = vmatpush1.bf16.msra.mxu0 %v527
    %575 = vmatprep.subr.bf16.mxu0 %v531
    %576 = vmatpush1.bf16.msra.mxu0 %v530
    %577 = vmatprep.subr.bf16.mxu0 %v534
    %578 = vmatpush1.bf16.msra.mxu0 %v533
    %579 = vmatprep.subr.bf16.mxu0 %v537
    %580 = vmatpush1.bf16.msra.mxu0 %v536
    %581 = vmatprep.subr.bf16.mxu0 %v540
    %582 = vmatpush1.bf16.msra.mxu0 %v539
    %583 = vmatprep.subr.bf16.mxu0 %v543
    %584 = vmatpush1.bf16.msra.mxu0 %v542
    %585 = vmatprep.subr.bf16.mxu0 0
    %586 = vmatpush1.bf16.msra.mxu0 0
    %587 = vmatprep.subr.bf16.mxu0 0
    %588 = vmatpush1.bf16.msra.mxu0 0
    %589 = vmatprep.subr.bf16.mxu0 0
    %590 = vmatpush1.bf16.msra.mxu0 0
    %591 = vmatprep.subr.bf16.mxu0 0
    %592 = vmatpush1.bf16.msra.mxu0 0
    %593 = vmatprep.subr.bf16.mxu0 0
    %594 = vmatpush1.bf16.msra.mxu0 0
    %595 = vmatprep.subr.bf16.mxu0 0
    %596 = vmatpush1.bf16.msra.mxu0 0
    %597 = vmatprep.subr.bf16.mxu0 0
    %598 = vmatpush1.bf16.msra.mxu0 0
    %599 = vmatprep.subr.bf16.mxu0 0
    %600 = vmatpush1.bf16.msra.mxu0 0
    %601 = vmatprep.mubr.bf16.mxu0 0
    %602 = vmatmul.mubr.bf16.gmra.mrb[0].mxu0 %v391
    %v603 = vpop.f32.mrb[0].mxu0
    %v604 = vadd.f32 %v429, %v603
    %v605 = vpop.f32.mrb[0].mxu0
    %v606 = vadd.f32 %v433, %v605
    %v607 = vpop.f32.mrb[0].mxu0
    %v608 = vpop.f32.mrb[0].mxu0
    %609 = vdwg.mxu0
    %610 = vmatprep.subr.bf16.mxu0 0
    %611 = vmatpush1.bf16.msra.mxu0 %v523
    %612 = vmatprep.subr.bf16.mxu0 0
    %613 = vmatpush1.bf16.msra.mxu0 %v526
    %614 = vmatprep.subr.bf16.mxu0 0
    %615 = vmatpush1.bf16.msra.mxu0 %v529
    %616 = vmatprep.subr.bf16.mxu0 0
    %617 = vmatpush1.bf16.msra.mxu0 %v532
    %618 = vmatprep.subr.bf16.mxu0 0
    %619 = vmatpush1.bf16.msra.mxu0 %v535
    %620 = vmatprep.subr.bf16.mxu0 0
    %621 = vmatpush1.bf16.msra.mxu0 %v538
    %622 = vmatprep.subr.bf16.mxu0 0
    %623 = vmatpush1.bf16.msra.mxu0 %v541
    %624 = vmatprep.subr.bf16.mxu0 0
    %625 = vmatpush1.bf16.msra.mxu0 %v544
    %626 = vmatprep.subr.bf16.mxu0 0
    %627 = vmatpush1.bf16.msra.mxu0 0
    %628 = vmatprep.subr.bf16.mxu0 0
    %629 = vmatpush1.bf16.msra.mxu0 0
    %630 = vmatprep.subr.bf16.mxu0 0
    %631 = vmatpush1.bf16.msra.mxu0 0
    %632 = vmatprep.subr.bf16.mxu0 0
    %633 = vmatpush1.bf16.msra.mxu0 0
    %634 = vmatprep.subr.bf16.mxu0 0
    %635 = vmatpush1.bf16.msra.mxu0 0
    %636 = vmatprep.subr.bf16.mxu0 0
    %637 = vmatpush1.bf16.msra.mxu0 0
    %638 = vmatprep.subr.bf16.mxu0 0
    %639 = vmatpush1.bf16.msra.mxu0 0
    %640 = vmatprep.subr.bf16.mxu0 0
    %641 = vmatpush1.bf16.msra.mxu0 0
    %642 = vmatprep.mubr.bf16.mxu0 0
    %643 = vmatmul.mubr.bf16.gmra.mrb[0].mxu0 %v391
    %v644 = vpop.f32.mrb[0].mxu0
    %v645 = vadd.f32 %v437, %v644
    %v646 = vpop.f32.mrb[0].mxu0
    %v647 = vpop.f32.mrb[0].mxu0
    %v648 = vpop.f32.mrb[0].mxu0
    %649 = vdwg.mxu0
    %v650 = vpack.c.bf16 %v604, %v604
    %v651 = vpack.c.bf16 %v606, %v606
    %v652 = vpack.c.bf16 %v645, %v645
    %vm653 = vcmask 130048
    %v655 = vsel %vm653, %v650, 0
    %v658 = vsel %vm653, %v651, 0
    %660 = vmatprep.subr.bf16.mxu0 0
    %661 = vmatpush1.bf16.xpose.msra.mxu0 %v658
    %662 = vmatprep.subr.bf16.mxu0 0
    %663 = vmatpush1.bf16.xpose.msra.mxu0 0
    %664 = vmatprep.subr.bf16.mxu0 0
    %665 = vmatpush1.bf16.xpose.msra.mxu0 0
    %666 = vmatprep.subr.bf16.mxu0 0
    %667 = vmatpush1.bf16.xpose.msra.mxu0 0
    %668 = vmatprep.subr.bf16.mxu0 0
    %669 = vmatpush1.bf16.xpose.msra.mxu0 0
    %670 = vmatprep.subr.bf16.mxu0 0
    %671 = vmatpush1.bf16.xpose.msra.mxu0 0
    %672 = vmatprep.subr.bf16.mxu0 0
    %673 = vmatpush1.bf16.xpose.msra.mxu0 0
    %674 = vmatprep.subr.bf16.mxu0 0
    %675 = vmatpush1.bf16.xpose.msra.mxu0 0
    %676 = vmatprep.subr.bf16.mxu0 0
    %677 = vmatpush1.bf16.xpose.msra.mxu0 0
    %678 = vmatprep.subr.bf16.mxu0 0
    %679 = vmatpush1.bf16.xpose.msra.mxu0 0
    %680 = vmatprep.subr.bf16.mxu0 0
    %681 = vmatpush1.bf16.xpose.msra.mxu0 0
    %682 = vmatprep.subr.bf16.mxu0 0
    %683 = vmatpush1.bf16.xpose.msra.mxu0 0
    %684 = vmatprep.subr.bf16.mxu0 0
    %685 = vmatpush1.bf16.xpose.msra.mxu0 0
    %686 = vmatprep.subr.bf16.mxu0 0
    %687 = vmatpush1.bf16.xpose.msra.mxu0 0
    %688 = vmatprep.subr.bf16.mxu0 0
    %689 = vmatpush1.bf16.xpose.msra.mxu0 0
    %690 = vmatprep.subr.bf16.mxu0 0
    %691 = vmatpush1.bf16.xpose.msra.mxu0 0
    %692 = vmatprep.mubr.bf16.mxu0 0
    %693 = vmatmul.mubr.bf16.gmra.mrb[0].mxu0 %v655
    %v694 = vpop.f32.mrb[0].mxu0
    %v695 = vadd.f32 0.0, %v694
    %v696 = vpop.f32.mrb[0].mxu0
    %v697 = vpop.f32.mrb[0].mxu0
    %v698 = vpop.f32.mrb[0].mxu0
    %699 = vdwg.mxu0
    %v700 = vmul.f32 %v695, 0.25
    %v701 = vadd.f32 %v700, %v390
    %vm702 = vcmask 27648
    %v703 = vsel %vm702, %v701, -inf
    %704 = vmax.xlane.f32.xlu0 %v703
    %v705 = vpop.xlane.xlu0 %704
    %v706 = vsub.f32 %v701, %v705
    %v707 = vmul.f32 %v706, 1.442695
    %v708 = vpow.pop %v707
    %v709 = vsel %vm702, %v708, 0.0
    %710 = vadd.xlane.f32.xlu0 %v709
    %v711 = vpop.xlane.xlu0 %710
    %v712 = vrcp.pop %v711
    %v713 = vmul.f32 %v708, %v712
    %v714 = vpack.c.bf16 %v713, %v713
    %vm715 = vcmask 31744
    %v717 = vsel %vm715, %v714, 0
    %vm719 = vcmask 1041408
    %v721 = vsel %vm719, %v652, 0
    %723 = vmatprep.subr.bf16.mxu0 0
    %724 = vmatpush1.bf16.msra.mxu0 %v721
    %725 = vmatprep.subr.bf16.mxu0 0
    %726 = vmatpush1.bf16.msra.mxu0 0
    %727 = vmatprep.subr.bf16.mxu0 0
    %728 = vmatpush1.bf16.msra.mxu0 0
    %729 = vmatprep.subr.bf16.mxu0 0
    %730 = vmatpush1.bf16.msra.mxu0 0
    %731 = vmatprep.subr.bf16.mxu0 0
    %732 = vmatpush1.bf16.msra.mxu0 0
    %733 = vmatprep.subr.bf16.mxu0 0
    %734 = vmatpush1.bf16.msra.mxu0 0
    %735 = vmatprep.subr.bf16.mxu0 0
    %736 = vmatpush1.bf16.msra.mxu0 0
    %737 = vmatprep.subr.bf16.mxu0 0
    %738 = vmatpush1.bf16.msra.mxu0 0
    %739 = vmatprep.subr.bf16.mxu0 0
    %740 = vmatpush1.bf16.msra.mxu0 0
    %741 = vmatprep.subr.bf16.mxu0 0
    %742 = vmatpush1.bf16.msra.mxu0 0
    %743 = vmatprep.subr.bf16.mxu0 0
    %744 = vmatpush1.bf16.msra.mxu0 0
    %745 = vmatprep.subr.bf16.mxu0 0
    %746 = vmatpush1.bf16.msra.mxu0 0
    %747 = vmatprep.subr.bf16.mxu0 0
    %748 = vmatpush1.bf16.msra.mxu0 0
    %749 = vmatprep.subr.bf16.mxu0 0
    %750 = vmatpush1.bf16.msra.mxu0 0
    %751 = vmatprep.subr.bf16.mxu0 0
    %752 = vmatpush1.bf16.msra.mxu0 0
    %753 = vmatprep.subr.bf16.mxu0 0
    %754 = vmatpush1.bf16.msra.mxu0 0
    %755 = vmatprep.mubr.bf16.mxu0 0
    %756 = vmatmul.mubr.bf16.gmra.mrb[0].mxu0 %v717
    %v757 = vpop.f32.mrb[0].mxu0
    %v758 = vadd.f32 0.0, %v757
    %v759 = vpop.f32.mrb[0].mxu0
    %v760 = vpop.f32.mrb[0].mxu0
    %v761 = vpop.f32.mrb[0].mxu0
    %762 = vdwg.mxu0
    %764 = vrot.lane.b32.xlu0 %v650, 112
    %v765 = vpop.permute.xlu0 %764
    %767 = vrot.lane.b32.xlu0 %v651, 112
    %v768 = vpop.permute.xlu0 %767
    %v770 = vsel %vm653, %v765, 0
    %v773 = vsel %vm653, %v768, 0
    %775 = vmatprep.subr.bf16.mxu0 0
    %776 = vmatpush1.bf16.xpose.msra.mxu0 %v773
    %777 = vmatprep.subr.bf16.mxu0 0
    %778 = vmatpush1.bf16.xpose.msra.mxu0 0
    %779 = vmatprep.subr.bf16.mxu0 0
    %780 = vmatpush1.bf16.xpose.msra.mxu0 0
    %781 = vmatprep.subr.bf16.mxu0 0
    %782 = vmatpush1.bf16.xpose.msra.mxu0 0
    %783 = vmatprep.subr.bf16.mxu0 0
    %784 = vmatpush1.bf16.xpose.msra.mxu0 0
    %785 = vmatprep.subr.bf16.mxu0 0
    %786 = vmatpush1.bf16.xpose.msra.mxu0 0
    %787 = vmatprep.subr.bf16.mxu0 0
    %788 = vmatpush1.bf16.xpose.msra.mxu0 0
    %789 = vmatprep.subr.bf16.mxu0 0
    %790 = vmatpush1.bf16.xpose.msra.mxu0 0
    %791 = vmatprep.subr.bf16.mxu0 0
    %792 = vmatpush1.bf16.xpose.msra.mxu0 0
    %793 = vmatprep.subr.bf16.mxu0 0
    %794 = vmatpush1.bf16.xpose.msra.mxu0 0
    %795 = vmatprep.subr.bf16.mxu0 0
    %796 = vmatpush1.bf16.xpose.msra.mxu0 0
    %797 = vmatprep.subr.bf16.mxu0 0
    %798 = vmatpush1.bf16.xpose.msra.mxu0 0
    %799 = vmatprep.subr.bf16.mxu0 0
    %800 = vmatpush1.bf16.xpose.msra.mxu0 0
    %801 = vmatprep.subr.bf16.mxu0 0
    %802 = vmatpush1.bf16.xpose.msra.mxu0 0
    %803 = vmatprep.subr.bf16.mxu0 0
    %804 = vmatpush1.bf16.xpose.msra.mxu0 0
    %805 = vmatprep.subr.bf16.mxu0 0
    %806 = vmatpush1.bf16.xpose.msra.mxu0 0
    %807 = vmatprep.mubr.bf16.mxu0 0
    %808 = vmatmul.mubr.bf16.gmra.mrb[0].mxu0 %v770
    %v809 = vpop.f32.mrb[0].mxu0
    %v810 = vadd.f32 0.0, %v809
    %v811 = vpop.f32.mrb[0].mxu0
    %v812 = vpop.f32.mrb[0].mxu0
    %v813 = vpop.f32.mrb[0].mxu0
    %814 = vdwg.mxu0
    %v815 = vmul.f32 %v810, 0.25
    %v816 = vadd.f32 %v815, %v390
    %v817 = vsel %vm702, %v816, -inf
    %818 = vmax.xlane.f32.xlu0 %v817
    %v819 = vpop.xlane.xlu0 %818
    %v820 = vsub.f32 %v816, %v819
    %v821 = vmul.f32 %v820, 1.442695
    %v822 = vpow.pop %v821
    %v823 = vsel %vm702, %v822, 0.0
    %824 = vadd.xlane.f32.xlu0 %v823
    %v825 = vpop.xlane.xlu0 %824
    %v826 = vrcp.pop %v825
    %v827 = vmul.f32 %v822, %v826
    %v828 = vpack.c.bf16 %v827, %v827
    %830 = vrot.lane.b32.xlu0 %v652, 112
    %v831 = vpop.permute.xlu0 %830
    %v833 = vsel %vm715, %v828, 0
    %v836 = vsel %vm719, %v831, 0
    %838 = vmatprep.subr.bf16.mxu0 0
    %839 = vmatpush1.bf16.msra.mxu0 %v836
    %840 = vmatprep.subr.bf16.mxu0 0
    %841 = vmatpush1.bf16.msra.mxu0 0
    %842 = vmatprep.subr.bf16.mxu0 0
    %843 = vmatpush1.bf16.msra.mxu0 0
    %844 = vmatprep.subr.bf16.mxu0 0
    %845 = vmatpush1.bf16.msra.mxu0 0
    %846 = vmatprep.subr.bf16.mxu0 0
    %847 = vmatpush1.bf16.msra.mxu0 0
    %848 = vmatprep.subr.bf16.mxu0 0
    %849 = vmatpush1.bf16.msra.mxu0 0
    %850 = vmatprep.subr.bf16.mxu0 0
    %851 = vmatpush1.bf16.msra.mxu0 0
    %852 = vmatprep.subr.bf16.mxu0 0
    %853 = vmatpush1.bf16.msra.mxu0 0
    %854 = vmatprep.subr.bf16.mxu0 0
    %855 = vmatpush1.bf16.msra.mxu0 0
    %856 = vmatprep.subr.bf16.mxu0 0
    %857 = vmatpush1.bf16.msra.mxu0 0
    %858 = vmatprep.subr.bf16.mxu0 0
    %859 = vmatpush1.bf16.msra.mxu0 0
    %860 = vmatprep.subr.bf16.mxu0 0
    %861 = vmatpush1.bf16.msra.mxu0 0
    %862 = vmatprep.subr.bf16.mxu0 0
    %863 = vmatpush1.bf16.msra.mxu0 0
    %864 = vmatprep.subr.bf16.mxu0 0
    %865 = vmatpush1.bf16.msra.mxu0 0
    %866 = vmatprep.subr.bf16.mxu0 0
    %867 = vmatpush1.bf16.msra.mxu0 0
    %868 = vmatprep.subr.bf16.mxu0 0
    %869 = vmatpush1.bf16.msra.mxu0 0
    %870 = vmatprep.mubr.bf16.mxu0 0
    %871 = vmatmul.mubr.bf16.gmra.mrb[0].mxu0 %v833
    %v872 = vpop.f32.mrb[0].mxu0
    %v873 = vadd.f32 0.0, %v872
    %v874 = vpop.f32.mrb[0].mxu0
    %v875 = vpop.f32.mrb[0].mxu0
    %v876 = vpop.f32.mrb[0].mxu0
    %877 = vdwg.mxu0
    %878 = vrot.lane.b32.xlu0 %v650, 96
    %v879 = vpop.permute.xlu0 %878
    %880 = vrot.lane.b32.xlu0 %v651, 96
    %v881 = vpop.permute.xlu0 %880
    %v883 = vsel %vm653, %v879, 0
    %v886 = vsel %vm653, %v881, 0
    %888 = vmatprep.subr.bf16.mxu0 0
    %889 = vmatpush1.bf16.xpose.msra.mxu0 %v886
    %890 = vmatprep.subr.bf16.mxu0 0
    %891 = vmatpush1.bf16.xpose.msra.mxu0 0
    %892 = vmatprep.subr.bf16.mxu0 0
    %893 = vmatpush1.bf16.xpose.msra.mxu0 0
    %894 = vmatprep.subr.bf16.mxu0 0
    %895 = vmatpush1.bf16.xpose.msra.mxu0 0
    %896 = vmatprep.subr.bf16.mxu0 0
    %897 = vmatpush1.bf16.xpose.msra.mxu0 0
    %898 = vmatprep.subr.bf16.mxu0 0
    %899 = vmatpush1.bf16.xpose.msra.mxu0 0
    %900 = vmatprep.subr.bf16.mxu0 0
    %901 = vmatpush1.bf16.xpose.msra.mxu0 0
    %902 = vmatprep.subr.bf16.mxu0 0
    %903 = vmatpush1.bf16.xpose.msra.mxu0 0
    %904 = vmatprep.subr.bf16.mxu0 0
    %905 = vmatpush1.bf16.xpose.msra.mxu0 0
    %906 = vmatprep.subr.bf16.mxu0 0
    %907 = vmatpush1.bf16.xpose.msra.mxu0 0
    %908 = vmatprep.subr.bf16.mxu0 0
    %909 = vmatpush1.bf16.xpose.msra.mxu0 0
    %910 = vmatprep.subr.bf16.mxu0 0
    %911 = vmatpush1.bf16.xpose.msra.mxu0 0
    %912 = vmatprep.subr.bf16.mxu0 0
    %913 = vmatpush1.bf16.xpose.msra.mxu0 0
    %914 = vmatprep.subr.bf16.mxu0 0
    %915 = vmatpush1.bf16.xpose.msra.mxu0 0
    %916 = vmatprep.subr.bf16.mxu0 0
    %917 = vmatpush1.bf16.xpose.msra.mxu0 0
    %918 = vmatprep.subr.bf16.mxu0 0
    %919 = vmatpush1.bf16.xpose.msra.mxu0 0
    %920 = vmatprep.mubr.bf16.mxu0 0
    %921 = vmatmul.mubr.bf16.gmra.mrb[0].mxu0 %v883
    %v922 = vpop.f32.mrb[0].mxu0
    %v923 = vadd.f32 0.0, %v922
    %v924 = vpop.f32.mrb[0].mxu0
    %v925 = vpop.f32.mrb[0].mxu0
    %v926 = vpop.f32.mrb[0].mxu0
    %927 = vdwg.mxu0
    %v928 = vmul.f32 %v923, 0.25
    %v929 = vadd.f32 %v928, %v390
    %v930 = vsel %vm702, %v929, -inf
    %931 = vmax.xlane.f32.xlu0 %v930
    %v932 = vpop.xlane.xlu0 %931
    %v933 = vsub.f32 %v929, %v932
    %v934 = vmul.f32 %v933, 1.442695
    %v935 = vpow.pop %v934
    %v936 = vsel %vm702, %v935, 0.0
    %937 = vadd.xlane.f32.xlu0 %v936
    %v938 = vpop.xlane.xlu0 %937
    %v939 = vrcp.pop %v938
    %v940 = vmul.f32 %v935, %v939
    %v941 = vpack.c.bf16 %v940, %v940
    %942 = vrot.lane.b32.xlu0 %v652, 96
    %v943 = vpop.permute.xlu0 %942
    %v945 = vsel %vm715, %v941, 0
    %v948 = vsel %vm719, %v943, 0
    %950 = vmatprep.subr.bf16.mxu0 0
    %951 = vmatpush1.bf16.msra.mxu0 %v948
    %952 = vmatprep.subr.bf16.mxu0 0
    %953 = vmatpush1.bf16.msra.mxu0 0
    %954 = vmatprep.subr.bf16.mxu0 0
    %955 = vmatpush1.bf16.msra.mxu0 0
    %956 = vmatprep.subr.bf16.mxu0 0
    %957 = vmatpush1.bf16.msra.mxu0 0
    %958 = vmatprep.subr.bf16.mxu0 0
    %959 = vmatpush1.bf16.msra.mxu0 0
    %960 = vmatprep.subr.bf16.mxu0 0
    %961 = vmatpush1.bf16.msra.mxu0 0
    %962 = vmatprep.subr.bf16.mxu0 0
    %963 = vmatpush1.bf16.msra.mxu0 0
    %964 = vmatprep.subr.bf16.mxu0 0
    %965 = vmatpush1.bf16.msra.mxu0 0
    %966 = vmatprep.subr.bf16.mxu0 0
    %967 = vmatpush1.bf16.msra.mxu0 0
    %968 = vmatprep.subr.bf16.mxu0 0
    %969 = vmatpush1.bf16.msra.mxu0 0
    %970 = vmatprep.subr.bf16.mxu0 0
    %971 = vmatpush1.bf16.msra.mxu0 0
    %972 = vmatprep.subr.bf16.mxu0 0
    %973 = vmatpush1.bf16.msra.mxu0 0
    %974 = vmatprep.subr.bf16.mxu0 0
    %975 = vmatpush1.bf16.msra.mxu0 0
    %976 = vmatprep.subr.bf16.mxu0 0
    %977 = vmatpush1.bf16.msra.mxu0 0
    %978 = vmatprep.subr.bf16.mxu0 0
    %979 = vmatpush1.bf16.msra.mxu0 0
    %980 = vmatprep.subr.bf16.mxu0 0
    %981 = vmatpush1.bf16.msra.mxu0 0
    %982 = vmatprep.mubr.bf16.mxu0 0
    %983 = vmatmul.mubr.bf16.gmra.mrb[0].mxu0 %v945
    %v984 = vpop.f32.mrb[0].mxu0
    %v985 = vadd.f32 0.0, %v984
    %v986 = vpop.f32.mrb[0].mxu0
    %v987 = vpop.f32.mrb[0].mxu0
    %v988 = vpop.f32.mrb[0].mxu0
    %989 = vdwg.mxu0
    %990 = vrot.lane.b32.xlu0 %v650, 80
    %v991 = vpop.permute.xlu0 %990
    %992 = vrot.lane.b32.xlu0 %v651, 80
    %v993 = vpop.permute.xlu0 %992
    %v995 = vsel %vm653, %v991, 0
    %v998 = vsel %vm653, %v993, 0
    %1000 = vmatprep.subr.bf16.mxu0 0
    %1001 = vmatpush1.bf16.xpose.msra.mxu0 %v998
    %1002 = vmatprep.subr.bf16.mxu0 0
    %1003 = vmatpush1.bf16.xpose.msra.mxu0 0
    %1004 = vmatprep.subr.bf16.mxu0 0
    %1005 = vmatpush1.bf16.xpose.msra.mxu0 0
    %1006 = vmatprep.subr.bf16.mxu0 0
    %1007 = vmatpush1.bf16.xpose.msra.mxu0 0
    %1008 = vmatprep.subr.bf16.mxu0 0
    %1009 = vmatpush1.bf16.xpose.msra.mxu0 0
    %1010 = vmatprep.subr.bf16.mxu0 0
    %1011 = vmatpush1.bf16.xpose.msra.mxu0 0
    %1012 = vmatprep.subr.bf16.mxu0 0
    %1013 = vmatpush1.bf16.xpose.msra.mxu0 0
    %1014 = vmatprep.subr.bf16.mxu0 0
    %1015 = vmatpush1.bf16.xpose.msra.mxu0 0
    %1016 = vmatprep.subr.bf16.mxu0 0
    %1017 = vmatpush1.bf16.xpose.msra.mxu0 0
    %1018 = vmatprep.subr.bf16.mxu0 0
    %1019 = vmatpush1.bf16.xpose.msra.mxu0 0
    %1020 = vmatprep.subr.bf16.mxu0 0
    %1021 = vmatpush1.bf16.xpose.msra.mxu0 0
    %1022 = vmatprep.subr.bf16.mxu0 0
    %1023 = vmatpush1.bf16.xpose.msra.mxu0 0
    %1024 = vmatprep.subr.bf16.mxu0 0
    %1025 = vmatpush1.bf16.xpose.msra.mxu0 0
    %1026 = vmatprep.subr.bf16.mxu0 0
    %1027 = vmatpush1.bf16.xpose.msra.mxu0 0
    %1028 = vmatprep.subr.bf16.mxu0 0
    %1029 = vmatpush1.bf16.xpose.msra.mxu0 0
    %1030 = vmatprep.subr.bf16.mxu0 0
    %1031 = vmatpush1.bf16.xpose.msra.mxu0 0
    %1032 = vmatprep.mubr.bf16.mxu0 0
    %1033 = vmatmul.mubr.bf16.gmra.mrb[0].mxu0 %v995
    %v1034 = vpop.f32.mrb[0].mxu0
    %v1035 = vadd.f32 0.0, %v1034
    %v1036 = vpop.f32.mrb[0].mxu0
    %v1037 = vpop.f32.mrb[0].mxu0
    %v1038 = vpop.f32.mrb[0].mxu0
    %1039 = vdwg.mxu0
    %v1040 = vmul.f32 %v1035, 0.25
    %v1041 = vadd.f32 %v1040, %v390
    %v1042 = vsel %vm702, %v1041, -inf
    %1043 = vmax.xlane.f32.xlu0 %v1042
    %v1044 = vpop.xlane.xlu0 %1043
    %v1045 = vsub.f32 %v1041, %v1044
    %v1046 = vmul.f32 %v1045, 1.442695
    %v1047 = vpow.pop %v1046
    %v1048 = vsel %vm702, %v1047, 0.0
    %1049 = vadd.xlane.f32.xlu0 %v1048
    %v1050 = vpop.xlane.xlu0 %1049
    %v1051 = vrcp.pop %v1050
    %v1052 = vmul.f32 %v1047, %v1051
    %v1053 = vpack.c.bf16 %v1052, %v1052
    %1054 = vrot.lane.b32.xlu0 %v652, 80
    %v1055 = vpop.permute.xlu0 %1054
    %v1057 = vsel %vm715, %v1053, 0
    %v1060 = vsel %vm719, %v1055, 0
    %1062 = vmatprep.subr.bf16.mxu0 0
    %1063 = vmatpush1.bf16.msra.mxu0 %v1060
    %1064 = vmatprep.subr.bf16.mxu0 0
    %1065 = vmatpush1.bf16.msra.mxu0 0
    %1066 = vmatprep.subr.bf16.mxu0 0
    %1067 = vmatpush1.bf16.msra.mxu0 0
    %1068 = vmatprep.subr.bf16.mxu0 0
    %1069 = vmatpush1.bf16.msra.mxu0 0
    %1070 = vmatprep.subr.bf16.mxu0 0
    %1071 = vmatpush1.bf16.msra.mxu0 0
    %1072 = vmatprep.subr.bf16.mxu0 0
    %1073 = vmatpush1.bf16.msra.mxu0 0
    %1074 = vmatprep.subr.bf16.mxu0 0
    %1075 = vmatpush1.bf16.msra.mxu0 0
    %1076 = vmatprep.subr.bf16.mxu0 0
    %1077 = vmatpush1.bf16.msra.mxu0 0
    %1078 = vmatprep.subr.bf16.mxu0 0
    %1079 = vmatpush1.bf16.msra.mxu0 0
    %1080 = vmatprep.subr.bf16.mxu0 0
    %1081 = vmatpush1.bf16.msra.mxu0 0
    %1082 = vmatprep.subr.bf16.mxu0 0
    %1083 = vmatpush1.bf16.msra.mxu0 0
    %1084 = vmatprep.subr.bf16.mxu0 0
    %1085 = vmatpush1.bf16.msra.mxu0 0
    %1086 = vmatprep.subr.bf16.mxu0 0
    %1087 = vmatpush1.bf16.msra.mxu0 0
    %1088 = vmatprep.subr.bf16.mxu0 0
    %1089 = vmatpush1.bf16.msra.mxu0 0
    %1090 = vmatprep.subr.bf16.mxu0 0
    %1091 = vmatpush1.bf16.msra.mxu0 0
    %1092 = vmatprep.subr.bf16.mxu0 0
    %1093 = vmatpush1.bf16.msra.mxu0 0
    %1094 = vmatprep.mubr.bf16.mxu0 0
    %1095 = vmatmul.mubr.bf16.gmra.mrb[0].mxu0 %v1057
    %v1096 = vpop.f32.mrb[0].mxu0
    %v1097 = vadd.f32 0.0, %v1096
    %v1098 = vpop.f32.mrb[0].mxu0
    %v1099 = vpop.f32.mrb[0].mxu0
    %v1100 = vpop.f32.mrb[0].mxu0
    %1101 = vdwg.mxu0
    %1102 = vrot.lane.b32.xlu0 %v650, 64
    %v1103 = vpop.permute.xlu0 %1102
    %1104 = vrot.lane.b32.xlu0 %v651, 64
    %v1105 = vpop.permute.xlu0 %1104
    %v1107 = vsel %vm653, %v1103, 0
    %v1110 = vsel %vm653, %v1105, 0
    %1112 = vmatprep.subr.bf16.mxu0 0
    %1113 = vmatpush1.bf16.xpose.msra.mxu0 %v1110
    %1114 = vmatprep.subr.bf16.mxu0 0
    %1115 = vmatpush1.bf16.xpose.msra.mxu0 0
    %1116 = vmatprep.subr.bf16.mxu0 0
    %1117 = vmatpush1.bf16.xpose.msra.mxu0 0
    %1118 = vmatprep.subr.bf16.mxu0 0
    %1119 = vmatpush1.bf16.xpose.msra.mxu0 0
    %1120 = vmatprep.subr.bf16.mxu0 0
    %1121 = vmatpush1.bf16.xpose.msra.mxu0 0
    %1122 = vmatprep.subr.bf16.mxu0 0
    %1123 = vmatpush1.bf16.xpose.msra.mxu0 0
    %1124 = vmatprep.subr.bf16.mxu0 0
    %1125 = vmatpush1.bf16.xpose.msra.mxu0 0
    %1126 = vmatprep.subr.bf16.mxu0 0
    %1127 = vmatpush1.bf16.xpose.msra.mxu0 0
    %1128 = vmatprep.subr.bf16.mxu0 0
    %1129 = vmatpush1.bf16.xpose.msra.mxu0 0
    %1130 = vmatprep.subr.bf16.mxu0 0
    %1131 = vmatpush1.bf16.xpose.msra.mxu0 0
    %1132 = vmatprep.subr.bf16.mxu0 0
    %1133 = vmatpush1.bf16.xpose.msra.mxu0 0
    %1134 = vmatprep.subr.bf16.mxu0 0
    %1135 = vmatpush1.bf16.xpose.msra.mxu0 0
    %1136 = vmatprep.subr.bf16.mxu0 0
    %1137 = vmatpush1.bf16.xpose.msra.mxu0 0
    %1138 = vmatprep.subr.bf16.mxu0 0
    %1139 = vmatpush1.bf16.xpose.msra.mxu0 0
    %1140 = vmatprep.subr.bf16.mxu0 0
    %1141 = vmatpush1.bf16.xpose.msra.mxu0 0
    %1142 = vmatprep.subr.bf16.mxu0 0
    %1143 = vmatpush1.bf16.xpose.msra.mxu0 0
    %1144 = vmatprep.mubr.bf16.mxu0 0
    %1145 = vmatmul.mubr.bf16.gmra.mrb[0].mxu0 %v1107
    %v1146 = vpop.f32.mrb[0].mxu0
    %v1147 = vadd.f32 0.0, %v1146
    %v1148 = vpop.f32.mrb[0].mxu0
    %v1149 = vpop.f32.mrb[0].mxu0
    %v1150 = vpop.f32.mrb[0].mxu0
    %1151 = vdwg.mxu0
    %v1152 = vmul.f32 %v1147, 0.25
    %v1153 = vadd.f32 %v1152, %v390
    %v1154 = vsel %vm702, %v1153, -inf
    %1155 = vmax.xlane.f32.xlu0 %v1154
    %v1156 = vpop.xlane.xlu0 %1155
    %v1157 = vsub.f32 %v1153, %v1156
    %v1158 = vmul.f32 %v1157, 1.442695
    %v1159 = vpow.pop %v1158
    %v1160 = vsel %vm702, %v1159, 0.0
    %1161 = vadd.xlane.f32.xlu0 %v1160
    %v1162 = vpop.xlane.xlu0 %1161
    %v1163 = vrcp.pop %v1162
    %v1164 = vmul.f32 %v1159, %v1163
    %v1165 = vpack.c.bf16 %v1164, %v1164
    %1166 = vrot.lane.b32.xlu0 %v652, 64
    %v1167 = vpop.permute.xlu0 %1166
    %v1169 = vsel %vm715, %v1165, 0
    %v1172 = vsel %vm719, %v1167, 0
    %1174 = vmatprep.subr.bf16.mxu0 0
    %1175 = vmatpush1.bf16.msra.mxu0 %v1172
    %1176 = vmatprep.subr.bf16.mxu0 0
    %1177 = vmatpush1.bf16.msra.mxu0 0
    %1178 = vmatprep.subr.bf16.mxu0 0
    %1179 = vmatpush1.bf16.msra.mxu0 0
    %1180 = vmatprep.subr.bf16.mxu0 0
    %1181 = vmatpush1.bf16.msra.mxu0 0
    %1182 = vmatprep.subr.bf16.mxu0 0
    %1183 = vmatpush1.bf16.msra.mxu0 0
    %1184 = vmatprep.subr.bf16.mxu0 0
    %1185 = vmatpush1.bf16.msra.mxu0 0
    %1186 = vmatprep.subr.bf16.mxu0 0
    %1187 = vmatpush1.bf16.msra.mxu0 0
    %1188 = vmatprep.subr.bf16.mxu0 0
    %1189 = vmatpush1.bf16.msra.mxu0 0
    %1190 = vmatprep.subr.bf16.mxu0 0
    %1191 = vmatpush1.bf16.msra.mxu0 0
    %1192 = vmatprep.subr.bf16.mxu0 0
    %1193 = vmatpush1.bf16.msra.mxu0 0
    %1194 = vmatprep.subr.bf16.mxu0 0
    %1195 = vmatpush1.bf16.msra.mxu0 0
    %1196 = vmatprep.subr.bf16.mxu0 0
    %1197 = vmatpush1.bf16.msra.mxu0 0
    %1198 = vmatprep.subr.bf16.mxu0 0
    %1199 = vmatpush1.bf16.msra.mxu0 0
    %1200 = vmatprep.subr.bf16.mxu0 0
    %1201 = vmatpush1.bf16.msra.mxu0 0
    %1202 = vmatprep.subr.bf16.mxu0 0
    %1203 = vmatpush1.bf16.msra.mxu0 0
    %1204 = vmatprep.subr.bf16.mxu0 0
    %1205 = vmatpush1.bf16.msra.mxu0 0
    %1206 = vmatprep.mubr.bf16.mxu0 0
    %1207 = vmatmul.mubr.bf16.gmra.mrb[0].mxu0 %v1169
    %v1208 = vpop.f32.mrb[0].mxu0
    %v1209 = vadd.f32 0.0, %v1208
    %v1210 = vpop.f32.mrb[0].mxu0
    %v1211 = vpop.f32.mrb[0].mxu0
    %v1212 = vpop.f32.mrb[0].mxu0
    %1213 = vdwg.mxu0
    %1214 = vrot.lane.b32.xlu0 %v650, 48
    %v1215 = vpop.permute.xlu0 %1214
    %1216 = vrot.lane.b32.xlu0 %v651, 48
    %v1217 = vpop.permute.xlu0 %1216
    %v1219 = vsel %vm653, %v1215, 0
    %v1222 = vsel %vm653, %v1217, 0
    %1224 = vmatprep.subr.bf16.mxu0 0
    %1225 = vmatpush1.bf16.xpose.msra.mxu0 %v1222
    %1226 = vmatprep.subr.bf16.mxu0 0
    %1227 = vmatpush1.bf16.xpose.msra.mxu0 0
    %1228 = vmatprep.subr.bf16.mxu0 0
    %1229 = vmatpush1.bf16.xpose.msra.mxu0 0
    %1230 = vmatprep.subr.bf16.mxu0 0
    %1231 = vmatpush1.bf16.xpose.msra.mxu0 0
    %1232 = vmatprep.subr.bf16.mxu0 0
    %1233 = vmatpush1.bf16.xpose.msra.mxu0 0
    %1234 = vmatprep.subr.bf16.mxu0 0
    %1235 = vmatpush1.bf16.xpose.msra.mxu0 0
    %1236 = vmatprep.subr.bf16.mxu0 0
    %1237 = vmatpush1.bf16.xpose.msra.mxu0 0
    %1238 = vmatprep.subr.bf16.mxu0 0
    %1239 = vmatpush1.bf16.xpose.msra.mxu0 0
    %1240 = vmatprep.subr.bf16.mxu0 0
    %1241 = vmatpush1.bf16.xpose.msra.mxu0 0
    %1242 = vmatprep.subr.bf16.mxu0 0
    %1243 = vmatpush1.bf16.xpose.msra.mxu0 0
    %1244 = vmatprep.subr.bf16.mxu0 0
    %1245 = vmatpush1.bf16.xpose.msra.mxu0 0
    %1246 = vmatprep.subr.bf16.mxu0 0
    %1247 = vmatpush1.bf16.xpose.msra.mxu0 0
    %1248 = vmatprep.subr.bf16.mxu0 0
    %1249 = vmatpush1.bf16.xpose.msra.mxu0 0
    %1250 = vmatprep.subr.bf16.mxu0 0
    %1251 = vmatpush1.bf16.xpose.msra.mxu0 0
    %1252 = vmatprep.subr.bf16.mxu0 0
    %1253 = vmatpush1.bf16.xpose.msra.mxu0 0
    %1254 = vmatprep.subr.bf16.mxu0 0
    %1255 = vmatpush1.bf16.xpose.msra.mxu0 0
    %1256 = vmatprep.mubr.bf16.mxu0 0
    %1257 = vmatmul.mubr.bf16.gmra.mrb[0].mxu0 %v1219
    %v1258 = vpop.f32.mrb[0].mxu0
    %v1259 = vadd.f32 0.0, %v1258
    %v1260 = vpop.f32.mrb[0].mxu0
    %v1261 = vpop.f32.mrb[0].mxu0
    %v1262 = vpop.f32.mrb[0].mxu0
    %1263 = vdwg.mxu0
    %v1264 = vmul.f32 %v1259, 0.25
    %v1265 = vadd.f32 %v1264, %v390
    %v1266 = vsel %vm702, %v1265, -inf
    %1267 = vmax.xlane.f32.xlu0 %v1266
    %v1268 = vpop.xlane.xlu0 %1267
    %v1269 = vsub.f32 %v1265, %v1268
    %v1270 = vmul.f32 %v1269, 1.442695
    %v1271 = vpow.pop %v1270
    %v1272 = vsel %vm702, %v1271, 0.0
    %1273 = vadd.xlane.f32.xlu0 %v1272
    %v1274 = vpop.xlane.xlu0 %1273
    %v1275 = vrcp.pop %v1274
    %v1276 = vmul.f32 %v1271, %v1275
    %v1277 = vpack.c.bf16 %v1276, %v1276
    %1278 = vrot.lane.b32.xlu0 %v652, 48
    %v1279 = vpop.permute.xlu0 %1278
    %v1281 = vsel %vm715, %v1277, 0
    %v1284 = vsel %vm719, %v1279, 0
    %1286 = vmatprep.subr.bf16.mxu0 0
    %1287 = vmatpush1.bf16.msra.mxu0 %v1284
    %1288 = vmatprep.subr.bf16.mxu0 0
    %1289 = vmatpush1.bf16.msra.mxu0 0
    %1290 = vmatprep.subr.bf16.mxu0 0
    %1291 = vmatpush1.bf16.msra.mxu0 0
    %1292 = vmatprep.subr.bf16.mxu0 0
    %1293 = vmatpush1.bf16.msra.mxu0 0
    %1294 = vmatprep.subr.bf16.mxu0 0
    %1295 = vmatpush1.bf16.msra.mxu0 0
    %1296 = vmatprep.subr.bf16.mxu0 0
    %1297 = vmatpush1.bf16.msra.mxu0 0
    %1298 = vmatprep.subr.bf16.mxu0 0
    %1299 = vmatpush1.bf16.msra.mxu0 0
    %1300 = vmatprep.subr.bf16.mxu0 0
    %1301 = vmatpush1.bf16.msra.mxu0 0
    %1302 = vmatprep.subr.bf16.mxu0 0
    %1303 = vmatpush1.bf16.msra.mxu0 0
    %1304 = vmatprep.subr.bf16.mxu0 0
    %1305 = vmatpush1.bf16.msra.mxu0 0
    %1306 = vmatprep.subr.bf16.mxu0 0
    %1307 = vmatpush1.bf16.msra.mxu0 0
    %1308 = vmatprep.subr.bf16.mxu0 0
    %1309 = vmatpush1.bf16.msra.mxu0 0
    %1310 = vmatprep.subr.bf16.mxu0 0
    %1311 = vmatpush1.bf16.msra.mxu0 0
    %1312 = vmatprep.subr.bf16.mxu0 0
    %1313 = vmatpush1.bf16.msra.mxu0 0
    %1314 = vmatprep.subr.bf16.mxu0 0
    %1315 = vmatpush1.bf16.msra.mxu0 0
    %1316 = vmatprep.subr.bf16.mxu0 0
    %1317 = vmatpush1.bf16.msra.mxu0 0
    %1318 = vmatprep.mubr.bf16.mxu0 0
    %1319 = vmatmul.mubr.bf16.gmra.mrb[0].mxu0 %v1281
    %v1320 = vpop.f32.mrb[0].mxu0
    %v1321 = vadd.f32 0.0, %v1320
    %v1322 = vpop.f32.mrb[0].mxu0
    %v1323 = vpop.f32.mrb[0].mxu0
    %v1324 = vpop.f32.mrb[0].mxu0
    %1325 = vdwg.mxu0
    %1326 = vrot.lane.b32.xlu0 %v650, 32
    %v1327 = vpop.permute.xlu0 %1326
    %1328 = vrot.lane.b32.xlu0 %v651, 32
    %v1329 = vpop.permute.xlu0 %1328
    %v1331 = vsel %vm653, %v1327, 0
    %v1334 = vsel %vm653, %v1329, 0
    %1336 = vmatprep.subr.bf16.mxu0 0
    %1337 = vmatpush1.bf16.xpose.msra.mxu0 %v1334
    %1338 = vmatprep.subr.bf16.mxu0 0
    %1339 = vmatpush1.bf16.xpose.msra.mxu0 0
    %1340 = vmatprep.subr.bf16.mxu0 0
    %1341 = vmatpush1.bf16.xpose.msra.mxu0 0
    %1342 = vmatprep.subr.bf16.mxu0 0
    %1343 = vmatpush1.bf16.xpose.msra.mxu0 0
    %1344 = vmatprep.subr.bf16.mxu0 0
    %1345 = vmatpush1.bf16.xpose.msra.mxu0 0
    %1346 = vmatprep.subr.bf16.mxu0 0
    %1347 = vmatpush1.bf16.xpose.msra.mxu0 0
    %1348 = vmatprep.subr.bf16.mxu0 0
    %1349 = vmatpush1.bf16.xpose.msra.mxu0 0
    %1350 = vmatprep.subr.bf16.mxu0 0
    %1351 = vmatpush1.bf16.xpose.msra.mxu0 0
    %1352 = vmatprep.subr.bf16.mxu0 0
    %1353 = vmatpush1.bf16.xpose.msra.mxu0 0
    %1354 = vmatprep.subr.bf16.mxu0 0
    %1355 = vmatpush1.bf16.xpose.msra.mxu0 0
    %1356 = vmatprep.subr.bf16.mxu0 0
    %1357 = vmatpush1.bf16.xpose.msra.mxu0 0
    %1358 = vmatprep.subr.bf16.mxu0 0
    %1359 = vmatpush1.bf16.xpose.msra.mxu0 0
    %1360 = vmatprep.subr.bf16.mxu0 0
    %1361 = vmatpush1.bf16.xpose.msra.mxu0 0
    %1362 = vmatprep.subr.bf16.mxu0 0
    %1363 = vmatpush1.bf16.xpose.msra.mxu0 0
    %1364 = vmatprep.subr.bf16.mxu0 0
    %1365 = vmatpush1.bf16.xpose.msra.mxu0 0
    %1366 = vmatprep.subr.bf16.mxu0 0
    %1367 = vmatpush1.bf16.xpose.msra.mxu0 0
    %1368 = vmatprep.mubr.bf16.mxu0 0
    %1369 = vmatmul.mubr.bf16.gmra.mrb[0].mxu0 %v1331
    %v1370 = vpop.f32.mrb[0].mxu0
    %v1371 = vadd.f32 0.0, %v1370
    %v1372 = vpop.f32.mrb[0].mxu0
    %v1373 = vpop.f32.mrb[0].mxu0
    %v1374 = vpop.f32.mrb[0].mxu0
    %1375 = vdwg.mxu0
    %v1376 = vmul.f32 %v1371, 0.25
    %v1377 = vadd.f32 %v1376, %v390
    %v1378 = vsel %vm702, %v1377, -inf
    %1379 = vmax.xlane.f32.xlu0 %v1378
    %v1380 = vpop.xlane.xlu0 %1379
    %v1381 = vsub.f32 %v1377, %v1380
    %v1382 = vmul.f32 %v1381, 1.442695
    %v1383 = vpow.pop %v1382
    %v1384 = vsel %vm702, %v1383, 0.0
    %1385 = vadd.xlane.f32.xlu0 %v1384
    %v1386 = vpop.xlane.xlu0 %1385
    %v1387 = vrcp.pop %v1386
    %v1388 = vmul.f32 %v1383, %v1387
    %v1389 = vpack.c.bf16 %v1388, %v1388
    %1390 = vrot.lane.b32.xlu0 %v652, 32
    %v1391 = vpop.permute.xlu0 %1390
    %v1393 = vsel %vm715, %v1389, 0
    %v1396 = vsel %vm719, %v1391, 0
    %1398 = vmatprep.subr.bf16.mxu0 0
    %1399 = vmatpush1.bf16.msra.mxu0 %v1396
    %1400 = vmatprep.subr.bf16.mxu0 0
    %1401 = vmatpush1.bf16.msra.mxu0 0
    %1402 = vmatprep.subr.bf16.mxu0 0
    %1403 = vmatpush1.bf16.msra.mxu0 0
    %1404 = vmatprep.subr.bf16.mxu0 0
    %1405 = vmatpush1.bf16.msra.mxu0 0
    %1406 = vmatprep.subr.bf16.mxu0 0
    %1407 = vmatpush1.bf16.msra.mxu0 0
    %1408 = vmatprep.subr.bf16.mxu0 0
    %1409 = vmatpush1.bf16.msra.mxu0 0
    %1410 = vmatprep.subr.bf16.mxu0 0
    %1411 = vmatpush1.bf16.msra.mxu0 0
    %1412 = vmatprep.subr.bf16.mxu0 0
    %1413 = vmatpush1.bf16.msra.mxu0 0
    %1414 = vmatprep.subr.bf16.mxu0 0
    %1415 = vmatpush1.bf16.msra.mxu0 0
    %1416 = vmatprep.subr.bf16.mxu0 0
    %1417 = vmatpush1.bf16.msra.mxu0 0
    %1418 = vmatprep.subr.bf16.mxu0 0
    %1419 = vmatpush1.bf16.msra.mxu0 0
    %1420 = vmatprep.subr.bf16.mxu0 0
    %1421 = vmatpush1.bf16.msra.mxu0 0
    %1422 = vmatprep.subr.bf16.mxu0 0
    %1423 = vmatpush1.bf16.msra.mxu0 0
    %1424 = vmatprep.subr.bf16.mxu0 0
    %1425 = vmatpush1.bf16.msra.mxu0 0
    %1426 = vmatprep.subr.bf16.mxu0 0
    %1427 = vmatpush1.bf16.msra.mxu0 0
    %1428 = vmatprep.subr.bf16.mxu0 0
    %1429 = vmatpush1.bf16.msra.mxu0 0
    %1430 = vmatprep.mubr.bf16.mxu0 0
    %1431 = vmatmul.mubr.bf16.gmra.mrb[0].mxu0 %v1393
    %v1432 = vpop.f32.mrb[0].mxu0
    %v1433 = vadd.f32 0.0, %v1432
    %v1434 = vpop.f32.mrb[0].mxu0
    %v1435 = vpop.f32.mrb[0].mxu0
    %v1436 = vpop.f32.mrb[0].mxu0
    %1437 = vdwg.mxu0
    %1438 = vrot.lane.b32.xlu0 %v650, 16
    %v1439 = vpop.permute.xlu0 %1438
    %1440 = vrot.lane.b32.xlu0 %v651, 16
    %v1441 = vpop.permute.xlu0 %1440
    %v1443 = vsel %vm653, %v1439, 0
    %v1446 = vsel %vm653, %v1441, 0
    %1448 = vmatprep.subr.bf16.mxu0 0
    %1449 = vmatpush1.bf16.xpose.msra.mxu0 %v1446
    %1450 = vmatprep.subr.bf16.mxu0 0
    %1451 = vmatpush1.bf16.xpose.msra.mxu0 0
    %1452 = vmatprep.subr.bf16.mxu0 0
    %1453 = vmatpush1.bf16.xpose.msra.mxu0 0
    %1454 = vmatprep.subr.bf16.mxu0 0
    %1455 = vmatpush1.bf16.xpose.msra.mxu0 0
    %1456 = vmatprep.subr.bf16.mxu0 0
    %1457 = vmatpush1.bf16.xpose.msra.mxu0 0
    %1458 = vmatprep.subr.bf16.mxu0 0
    %1459 = vmatpush1.bf16.xpose.msra.mxu0 0
    %1460 = vmatprep.subr.bf16.mxu0 0
    %1461 = vmatpush1.bf16.xpose.msra.mxu0 0
    %1462 = vmatprep.subr.bf16.mxu0 0
    %1463 = vmatpush1.bf16.xpose.msra.mxu0 0
    %1464 = vmatprep.subr.bf16.mxu0 0
    %1465 = vmatpush1.bf16.xpose.msra.mxu0 0
    %1466 = vmatprep.subr.bf16.mxu0 0
    %1467 = vmatpush1.bf16.xpose.msra.mxu0 0
    %1468 = vmatprep.subr.bf16.mxu0 0
    %1469 = vmatpush1.bf16.xpose.msra.mxu0 0
    %1470 = vmatprep.subr.bf16.mxu0 0
    %1471 = vmatpush1.bf16.xpose.msra.mxu0 0
    %1472 = vmatprep.subr.bf16.mxu0 0
    %1473 = vmatpush1.bf16.xpose.msra.mxu0 0
    %1474 = vmatprep.subr.bf16.mxu0 0
    %1475 = vmatpush1.bf16.xpose.msra.mxu0 0
    %1476 = vmatprep.subr.bf16.mxu0 0
    %1477 = vmatpush1.bf16.xpose.msra.mxu0 0
    %1478 = vmatprep.subr.bf16.mxu0 0
    %1479 = vmatpush1.bf16.xpose.msra.mxu0 0
    %1480 = vmatprep.mubr.bf16.mxu0 0
    %1481 = vmatmul.mubr.bf16.gmra.mrb[0].mxu0 %v1443
    %v1482 = vpop.f32.mrb[0].mxu0
    %v1483 = vadd.f32 0.0, %v1482
    %v1484 = vpop.f32.mrb[0].mxu0
    %v1485 = vpop.f32.mrb[0].mxu0
    %v1486 = vpop.f32.mrb[0].mxu0
    %1487 = vdwg.mxu0
    %v1488 = vmul.f32 %v1483, 0.25
    %v1489 = vadd.f32 %v1488, %v390
    %v1490 = vsel %vm702, %v1489, -inf
    %1491 = vmax.xlane.f32.xlu0 %v1490
    %v1492 = vpop.xlane.xlu0 %1491
    %v1493 = vsub.f32 %v1489, %v1492
    %v1494 = vmul.f32 %v1493, 1.442695
    %v1495 = vpow.pop %v1494
    %v1496 = vsel %vm702, %v1495, 0.0
    %1497 = vadd.xlane.f32.xlu0 %v1496
    %v1498 = vpop.xlane.xlu0 %1497
    %v1499 = vrcp.pop %v1498
    %v1500 = vmul.f32 %v1495, %v1499
    %v1501 = vpack.c.bf16 %v1500, %v1500
    %1502 = vrot.lane.b32.xlu0 %v652, 16
    %v1503 = vpop.permute.xlu0 %1502
    %v1505 = vsel %vm715, %v1501, 0
    %v1508 = vsel %vm719, %v1503, 0
    %1510 = vmatprep.subr.bf16.mxu0 0
    %1511 = vmatpush1.bf16.msra.mxu0 %v1508
    %1512 = vmatprep.subr.bf16.mxu0 0
    %1513 = vmatpush1.bf16.msra.mxu0 0
    %1514 = vmatprep.subr.bf16.mxu0 0
    %1515 = vmatpush1.bf16.msra.mxu0 0
    %1516 = vmatprep.subr.bf16.mxu0 0
    %1517 = vmatpush1.bf16.msra.mxu0 0
    %1518 = vmatprep.subr.bf16.mxu0 0
    %1519 = vmatpush1.bf16.msra.mxu0 0
    %1520 = vmatprep.subr.bf16.mxu0 0
    %1521 = vmatpush1.bf16.msra.mxu0 0
    %1522 = vmatprep.subr.bf16.mxu0 0
    %1523 = vmatpush1.bf16.msra.mxu0 0
    %1524 = vmatprep.subr.bf16.mxu0 0
    %1525 = vmatpush1.bf16.msra.mxu0 0
    %1526 = vmatprep.subr.bf16.mxu0 0
    %1527 = vmatpush1.bf16.msra.mxu0 0
    %1528 = vmatprep.subr.bf16.mxu0 0
    %1529 = vmatpush1.bf16.msra.mxu0 0
    %1530 = vmatprep.subr.bf16.mxu0 0
    %1531 = vmatpush1.bf16.msra.mxu0 0
    %1532 = vmatprep.subr.bf16.mxu0 0
    %1533 = vmatpush1.bf16.msra.mxu0 0
    %1534 = vmatprep.subr.bf16.mxu0 0
    %1535 = vmatpush1.bf16.msra.mxu0 0
    %1536 = vmatprep.subr.bf16.mxu0 0
    %1537 = vmatpush1.bf16.msra.mxu0 0
    %1538 = vmatprep.subr.bf16.mxu0 0
    %1539 = vmatpush1.bf16.msra.mxu0 0
    %1540 = vmatprep.subr.bf16.mxu0 0
    %1541 = vmatpush1.bf16.msra.mxu0 0
    %1542 = vmatprep.mubr.bf16.mxu0 0
    %1543 = vmatmul.mubr.bf16.gmra.mrb[0].mxu0 %v1505
    %v1544 = vpop.f32.mrb[0].mxu0
    %v1545 = vadd.f32 0.0, %v1544
    %v1546 = vpop.f32.mrb[0].mxu0
    %v1547 = vpop.f32.mrb[0].mxu0
    %v1548 = vpop.f32.mrb[0].mxu0
    %1549 = vdwg.mxu0
    %1551 = vrot.lane.b32.xlu0 %v873, 16
    %v1552 = vpop.permute.xlu0 %1551
    %1555 = vrot.lane.b32.xlu0 %v985, 32
    %v1556 = vpop.permute.xlu0 %1555
    %1559 = vrot.lane.b32.xlu0 %v1097, 48
    %v1560 = vpop.permute.xlu0 %1559
    %1563 = vrot.lane.b32.xlu0 %v1209, 64
    %v1564 = vpop.permute.xlu0 %1563
    %1567 = vrot.lane.b32.xlu0 %v1321, 80
    %v1568 = vpop.permute.xlu0 %1567
    %1571 = vrot.lane.b32.xlu0 %v1433, 96
    %v1572 = vpop.permute.xlu0 %1571
    %1575 = vrot.lane.b32.xlu0 %v1545, 112
    %v1576 = vpop.permute.xlu0 %1575
    %v1578 = vsel %vm653, %v758, %v1552
    %vm1579 = vcmask 261120
    %v1580 = vsel %vm1579, %v1578, %v1556
    %vm1581 = vcmask 392192
    %v1582 = vsel %vm1581, %v1580, %v1560
    %v1583 = vsel %vm206, %v1582, %v1564
    %vm1584 = vcmask 654336
    %v1585 = vsel %vm1584, %v1583, %v1568
    %vm1586 = vcmask 785408
    %v1587 = vsel %vm1586, %v1585, %v1572
    %vm1588 = vcmask 916480
    %v1589 = vsel %vm1588, %v1587, %v1576
    %v1590 = vpack.c.bf16 %v1589, %v1589
    %v1591 = vld [vmem:[%s11] sm:$0xf]
    %v1592 = vld [vmem:[%s11 + $0x4] sm:$0xf]
    %v1593 = vld [vmem:[%s11 + $0x8] sm:$0xf]
    %v1594 = vld [vmem:[%s11 + $0xc] sm:$0xf]
    %v1595 = vld [vmem:[%s11 + $0x10] sm:$0xf]
    %v1596 = vld [vmem:[%s11 + $0x14] sm:$0xf]
    %v1597 = vld [vmem:[%s11 + $0x18] sm:$0xf]
    %v1598 = vld [vmem:[%s11 + $0x1c] sm:$0xf]
    %v1599 = vld [vmem:[%s11 + $0x20] sm:$0xf]
    %v1600 = vld [vmem:[%s11 + $0x24] sm:$0xf]
    %v1601 = vld [vmem:[%s11 + $0x28] sm:$0xf]
    %v1602 = vld [vmem:[%s11 + $0x2c] sm:$0xf]
    %v1603 = vld [vmem:[%s11 + $0x30] sm:$0xf]
    %v1604 = vld [vmem:[%s11 + $0x34] sm:$0xf]
    %v1605 = vld [vmem:[%s11 + $0x38] sm:$0xf]
    %v1606 = vld [vmem:[%s11 + $0x3c] sm:$0xf]
    %v1607 = vld [vmem:[#allocation7] sm:$0x1]
    %v1609 = vlaneseq
    %v1610 = vshrl.u32 %v1609, 7
    %v1611 = vsub.s32 0, %v1610
    %v1612 = vrot.slane %v1607, %v1611
    %v1630 = vunpack.c.l.b16 %v1591
    %v1631 = vunpack.c.l.b16 %v1592
    %v1632 = vunpack.c.l.b16 %v1593
    %v1633 = vunpack.c.l.b16 %v1594
    %v1634 = vunpack.c.l.b16 %v1595
    %v1635 = vunpack.c.l.b16 %v1596
    %v1636 = vunpack.c.l.b16 %v1597
    %v1637 = vunpack.c.l.b16 %v1598
    %v1638 = vunpack.c.l.b16 %v1599
    %v1639 = vunpack.c.l.b16 %v1600
    %v1640 = vunpack.c.l.b16 %v1601
    %v1641 = vunpack.c.l.b16 %v1602
    %v1642 = vunpack.c.l.b16 %v1603
    %v1643 = vunpack.c.l.b16 %v1604
    %v1644 = vunpack.c.l.b16 %v1605
    %v1645 = vunpack.c.l.b16 %v1606
    %v1646 = vpack.c.b16 %v1631, %v1630
    %v1647 = vpack.c.b16 %v1633, %v1632
    %v1648 = vpack.c.b16 %v1635, %v1634
    %v1649 = vpack.c.b16 %v1637, %v1636
    %v1650 = vpack.c.b16 %v1639, %v1638
    %v1651 = vpack.c.b16 %v1641, %v1640
    %v1652 = vpack.c.b16 %v1643, %v1642
    %v1653 = vpack.c.b16 %v1645, %v1644
    %1662 = vmatprep.subr.bf16.mxu0 0
    %1663 = vmatpush1.bf16.msra.mxu0 %v1646
    %1664 = vmatprep.subr.bf16.mxu0 0
    %1665 = vmatpush1.bf16.msra.mxu0 %v1647
    %1666 = vmatprep.subr.bf16.mxu0 0
    %1667 = vmatpush1.bf16.msra.mxu0 %v1648
    %1668 = vmatprep.subr.bf16.mxu0 0
    %1669 = vmatpush1.bf16.msra.mxu0 %v1649
    %1670 = vmatprep.subr.bf16.mxu0 0
    %1671 = vmatpush1.bf16.msra.mxu0 %v1650
    %1672 = vmatprep.subr.bf16.mxu0 0
    %1673 = vmatpush1.bf16.msra.mxu0 %v1651
    %1674 = vmatprep.subr.bf16.mxu0 0
    %1675 = vmatpush1.bf16.msra.mxu0 %v1652
    %1676 = vmatprep.subr.bf16.mxu0 0
    %1677 = vmatpush1.bf16.msra.mxu0 %v1653
    %1678 = vmatprep.subr.bf16.mxu0 0
    %1679 = vmatpush1.bf16.msra.mxu0 0
    %1680 = vmatprep.subr.bf16.mxu0 0
    %1681 = vmatpush1.bf16.msra.mxu0 0
    %1682 = vmatprep.subr.bf16.mxu0 0
    %1683 = vmatpush1.bf16.msra.mxu0 0
    %1684 = vmatprep.subr.bf16.mxu0 0
    %1685 = vmatpush1.bf16.msra.mxu0 0
    %1686 = vmatprep.subr.bf16.mxu0 0
    %1687 = vmatpush1.bf16.msra.mxu0 0
    %1688 = vmatprep.subr.bf16.mxu0 0
    %1689 = vmatpush1.bf16.msra.mxu0 0
    %1690 = vmatprep.subr.bf16.mxu0 0
    %1691 = vmatpush1.bf16.msra.mxu0 0
    %1692 = vmatprep.subr.bf16.mxu0 0
    %1693 = vmatpush1.bf16.msra.mxu0 0
    %1694 = vmatprep.mubr.bf16.mxu0 0
    %1695 = vmatmul.mubr.bf16.gmra.mrb[0].mxu0 %v1590
    %v1696 = vpop.f32.mrb[0].mxu0
    %v1697 = vadd.f32 %v1612, %v1696
    %v1698 = vpop.f32.mrb[0].mxu0
    %v1699 = vpop.f32.mrb[0].mxu0
    %v1700 = vpop.f32.mrb[0].mxu0
    %1701 = vdwg.mxu0
    %v1702 = vadd.f32 %v389, %v1697
    %v1703 = vld [vmem:[#allocation10] sm:$0x1]
    %v1704 = vld [vmem:[#allocation12] sm:$0x1]
    %v1705 = vsel %vm359, %v1702, 0.0
    %1706 = vadd.xlane.f32.xlu0 %v1705
    %v1707 = vpop.xlane.xlu0 %1706
    %v1708 = vmul.f32 %v1707, %v363
    %v1709 = vsub.f32 %v1702, %v1708
    %v1710 = vmul.f32 %v1709, %v1709
    %v1711 = vsel %vm359, %v1710, 0.0
    %1712 = vadd.xlane.f32.xlu0 %v1711
    %v1713 = vpop.xlane.xlu0 %1712
    %v1714 = vmul.f32 %v1713, %v363
    %v1715 = vadd.f32 %v1714, 1e-05
    %v1716 = vrsqrt.pop %v1715
    %v1717 = vmul.f32 %v1709, %v1716
    %v1719 = vlaneseq
    %v1720 = vshrl.u32 %v1719, 7
    %v1721 = vsub.s32 0, %v1720
    %v1722 = vrot.slane %v1703, %v1721
    %v1724 = vmul.f32 %v1717, %v1722
    %v1726 = vlaneseq
    %v1727 = vshrl.u32 %v1726, 7
    %v1728 = vsub.s32 0, %v1727
    %v1729 = vrot.slane %v1704, %v1728
    %v1731 = vadd.f32 %v1724, %v1729
    %v1732 = vpack.c.bf16 %v1731, %v1731
    %v1733 = vld [vmem:[%s13] sm:$0xff]
    %v1734 = vld [vmem:[%s13 + $0x8] sm:$0xff]
    %v1735 = vld [vmem:[%s13 + $0x10] sm:$0xff]
    %v1736 = vld [vmem:[%s13 + $0x18] sm:$0xff]
    %v1737 = vld [vmem:[%s13 + $0x20] sm:$0xff]
    %v1738 = vld [vmem:[%s13 + $0x28] sm:$0xff]
    %v1739 = vld [vmem:[%s13 + $0x30] sm:$0xff]
    %v1740 = vld [vmem:[%s13 + $0x38] sm:$0xff]
    %v1741 = vld [vmem:[%s13 + $0x40] sm:$0xff]
    %v1742 = vld [vmem:[%s13 + $0x48] sm:$0xff]
    %v1743 = vld [vmem:[%s13 + $0x50] sm:$0xff]
    %v1744 = vld [vmem:[%s13 + $0x58] sm:$0xff]
    %v1745 = vld [vmem:[%s13 + $0x60] sm:$0xff]
    %v1746 = vld [vmem:[%s13 + $0x68] sm:$0xff]
    %v1747 = vld [vmem:[%s13 + $0x70] sm:$0xff]
    %v1748 = vld [vmem:[%s13 + $0x78] sm:$0xff]
    %v1749 = vld [vmem:[%s13 + $0x80] sm:$0xff]
    %v1750 = vld [vmem:[%s13 + $0x88] sm:$0xff]
    %v1751 = vld [vmem:[%s13 + $0x90] sm:$0xff]
    %v1752 = vld [vmem:[%s13 + $0x98] sm:$0xff]
    %v1753 = vld [vmem:[%s13 + $0xa0] sm:$0xff]
    %v1754 = vld [vmem:[%s13 + $0xa8] sm:$0xff]
    %v1755 = vld [vmem:[%s13 + $0xb0] sm:$0xff]
    %v1756 = vld [vmem:[%s13 + $0xb8] sm:$0xff]
    %v1757 = vld [vmem:[%s13 + $0xc0] sm:$0xff]
    %v1758 = vld [vmem:[%s13 + $0xc8] sm:$0xff]
    %v1759 = vld [vmem:[%s13 + $0xd0] sm:$0xff]
    %v1760 = vld [vmem:[%s13 + $0xd8] sm:$0xff]
    %v1761 = vld [vmem:[%s13 + $0xe0] sm:$0xff]
    %v1762 = vld [vmem:[%s13 + $0xe8] sm:$0xff]
    %v1763 = vld [vmem:[%s13 + $0xf0] sm:$0xff]
    %v1764 = vld [vmem:[%s13 + $0xf8] sm:$0xff]
    %v1765 = vld [vmem:[%s14] sm:$0xf]
    %v1767 = vlaneseq
    %v1768 = vshrl.u32 %v1767, 7
    %v1769 = vsub.s32 0, %v1768
    %v1770 = vrot.slane %v1765, %v1769
    %v1771 = vlaneseq
    %v1772 = vshrl.u32 %v1771, 7
    %v1773 = vsub.s32 1, %v1772
    %v1774 = vrot.slane %v1765, %v1773
    %v1775 = vlaneseq
    %v1776 = vshrl.u32 %v1775, 7
    %v1777 = vsub.s32 2, %v1776
    %v1778 = vrot.slane %v1765, %v1777
    %v1779 = vlaneseq
    %v1780 = vshrl.u32 %v1779, 7
    %v1781 = vsub.s32 3, %v1780
    %v1782 = vrot.slane %v1765, %v1781
    %v1819 = vunpack.c.l.b16 %v1733
    %v1820 = vunpack.c.h.b16 %v1733
    %v1821 = vunpack.c.l.b16 %v1734
    %v1822 = vunpack.c.h.b16 %v1734
    %v1823 = vunpack.c.l.b16 %v1735
    %v1824 = vunpack.c.h.b16 %v1735
    %v1825 = vunpack.c.l.b16 %v1736
    %v1826 = vunpack.c.h.b16 %v1736
    %v1827 = vunpack.c.l.b16 %v1737
    %v1828 = vunpack.c.h.b16 %v1737
    %v1829 = vunpack.c.l.b16 %v1738
    %v1830 = vunpack.c.h.b16 %v1738
    %v1831 = vunpack.c.l.b16 %v1739
    %v1832 = vunpack.c.h.b16 %v1739
    %v1833 = vunpack.c.l.b16 %v1740
    %v1834 = vunpack.c.h.b16 %v1740
    %v1835 = vunpack.c.l.b16 %v1741
    %v1836 = vunpack.c.h.b16 %v1741
    %v1837 = vunpack.c.l.b16 %v1742
    %v1838 = vunpack.c.h.b16 %v1742
    %v1839 = vunpack.c.l.b16 %v1743
    %v1840 = vunpack.c.h.b16 %v1743
    %v1841 = vunpack.c.l.b16 %v1744
    %v1842 = vunpack.c.h.b16 %v1744
    %v1843 = vunpack.c.l.b16 %v1745
    %v1844 = vunpack.c.h.b16 %v1745
    %v1845 = vunpack.c.l.b16 %v1746
    %v1846 = vunpack.c.h.b16 %v1746
    %v1847 = vunpack.c.l.b16 %v1747
    %v1848 = vunpack.c.h.b16 %v1747
    %v1849 = vunpack.c.l.b16 %v1748
    %v1850 = vunpack.c.h.b16 %v1748
    %v1851 = vunpack.c.l.b16 %v1749
    %v1852 = vunpack.c.h.b16 %v1749
    %v1853 = vunpack.c.l.b16 %v1750
    %v1854 = vunpack.c.h.b16 %v1750
    %v1855 = vunpack.c.l.b16 %v1751
    %v1856 = vunpack.c.h.b16 %v1751
    %v1857 = vunpack.c.l.b16 %v1752
    %v1858 = vunpack.c.h.b16 %v1752
    %v1859 = vunpack.c.l.b16 %v1753
    %v1860 = vunpack.c.h.b16 %v1753
    %v1861 = vunpack.c.l.b16 %v1754
    %v1862 = vunpack.c.h.b16 %v1754
    %v1863 = vunpack.c.l.b16 %v1755
    %v1864 = vunpack.c.h.b16 %v1755
    %v1865 = vunpack.c.l.b16 %v1756
    %v1866 = vunpack.c.h.b16 %v1756
    %v1867 = vunpack.c.l.b16 %v1757
    %v1868 = vunpack.c.h.b16 %v1757
    %v1869 = vunpack.c.l.b16 %v1758
    %v1870 = vunpack.c.h.b16 %v1758
    %v1871 = vunpack.c.l.b16 %v1759
    %v1872 = vunpack.c.h.b16 %v1759
    %v1873 = vunpack.c.l.b16 %v1760
    %v1874 = vunpack.c.h.b16 %v1760
    %v1875 = vunpack.c.l.b16 %v1761
    %v1876 = vunpack.c.h.b16 %v1761
    %v1877 = vunpack.c.l.b16 %v1762
    %v1878 = vunpack.c.h.b16 %v1762
    %v1879 = vunpack.c.l.b16 %v1763
    %v1880 = vunpack.c.h.b16 %v1763
    %v1881 = vunpack.c.l.b16 %v1764
    %v1882 = vunpack.c.h.b16 %v1764
    %v1883 = vpack.c.b16 %v1823, %v1819
    %v1884 = vpack.c.b16 %v1824, %v1820
    %v1885 = vpack.c.b16 %v1825, %v1821
    %v1886 = vpack.c.b16 %v1826, %v1822
    %v1887 = vpack.c.b16 %v1831, %v1827
    %v1888 = vpack.c.b16 %v1832, %v1828
    %v1889 = vpack.c.b16 %v1833, %v1829
    %v1890 = vpack.c.b16 %v1834, %v1830
    %v1891 = vpack.c.b16 %v1839, %v1835
    %v1892 = vpack.c.b16 %v1840, %v1836
    %v1893 = vpack.c.b16 %v1841, %v1837
    %v1894 = vpack.c.b16 %v1842, %v1838
    %v1895 = vpack.c.b16 %v1847, %v1843
    %v1896 = vpack.c.b16 %v1848, %v1844
    %v1897 = vpack.c.b16 %v1849, %v1845
    %v1898 = vpack.c.b16 %v1850, %v1846
    %v1899 = vpack.c.b16 %v1855, %v1851
    %v1900 = vpack.c.b16 %v1856, %v1852
    %v1901 = vpack.c.b16 %v1857, %v1853
    %v1902 = vpack.c.b16 %v1858, %v1854
    %v1903 = vpack.c.b16 %v1863, %v1859
    %v1904 = vpack.c.b16 %v1864, %v1860
    %v1905 = vpack.c.b16 %v1865, %v1861
    %v1906 = vpack.c.b16 %v1866, %v1862
    %v1907 = vpack.c.b16 %v1871, %v1867
    %v1908 = vpack.c.b16 %v1872, %v1868
    %v1909 = vpack.c.b16 %v1873, %v1869
    %v1910 = vpack.c.b16 %v1874, %v1870
    %v1911 = vpack.c.b16 %v1879, %v1875
    %v1912 = vpack.c.b16 %v1880, %v1876
    %v1913 = vpack.c.b16 %v1881, %v1877
    %v1914 = vpack.c.b16 %v1882, %v1878
    %1947 = vmatprep.subr.bf16.mxu0 %v1884
    %1948 = vmatpush1.bf16.msra.mxu0 %v1883
    %1949 = vmatprep.subr.bf16.mxu0 %v1888
    %1950 = vmatpush1.bf16.msra.mxu0 %v1887
    %1951 = vmatprep.subr.bf16.mxu0 %v1892
    %1952 = vmatpush1.bf16.msra.mxu0 %v1891
    %1953 = vmatprep.subr.bf16.mxu0 %v1896
    %1954 = vmatpush1.bf16.msra.mxu0 %v1895
    %1955 = vmatprep.subr.bf16.mxu0 %v1900
    %1956 = vmatpush1.bf16.msra.mxu0 %v1899
    %1957 = vmatprep.subr.bf16.mxu0 %v1904
    %1958 = vmatpush1.bf16.msra.mxu0 %v1903
    %1959 = vmatprep.subr.bf16.mxu0 %v1908
    %1960 = vmatpush1.bf16.msra.mxu0 %v1907
    %1961 = vmatprep.subr.bf16.mxu0 %v1912
    %1962 = vmatpush1.bf16.msra.mxu0 %v1911
    %1963 = vmatprep.subr.bf16.mxu0 0
    %1964 = vmatpush1.bf16.msra.mxu0 0
    %1965 = vmatprep.subr.bf16.mxu0 0
    %1966 = vmatpush1.bf16.msra.mxu0 0
    %1967 = vmatprep.subr.bf16.mxu0 0
    %1968 = vmatpush1.bf16.msra.mxu0 0
    %1969 = vmatprep.subr.bf16.mxu0 0
    %1970 = vmatpush1.bf16.msra.mxu0 0
    %1971 = vmatprep.subr.bf16.mxu0 0
    %1972 = vmatpush1.bf16.msra.mxu0 0
    %1973 = vmatprep.subr.bf16.mxu0 0
    %1974 = vmatpush1.bf16.msra.mxu0 0
    %1975 = vmatprep.subr.bf16.mxu0 0
    %1976 = vmatpush1.bf16.msra.mxu0 0
    %1977 = vmatprep.subr.bf16.mxu0 0
    %1978 = vmatpush1.bf16.msra.mxu0 0
    %1979 = vmatprep.mubr.bf16.mxu0 0
    %1980 = vmatmul.mubr.bf16.gmra.mrb[0].mxu0 %v1732
    %v1981 = vpop.f32.mrb[0].mxu0
    %v1982 = vadd.f32 %v1770, %v1981
    %v1983 = vpop.f32.mrb[0].mxu0
    %v1984 = vadd.f32 %v1774, %v1983
    %v1985 = vpop.f32.mrb[0].mxu0
    %v1986 = vpop.f32.mrb[0].mxu0
    %1987 = vdwg.mxu0
    %1988 = vmatprep.subr.bf16.mxu0 %v1886
    %1989 = vmatpush1.bf16.msra.mxu0 %v1885
    %1990 = vmatprep.subr.bf16.mxu0 %v1890
    %1991 = vmatpush1.bf16.msra.mxu0 %v1889
    %1992 = vmatprep.subr.bf16.mxu0 %v1894
    %1993 = vmatpush1.bf16.msra.mxu0 %v1893
    %1994 = vmatprep.subr.bf16.mxu0 %v1898
    %1995 = vmatpush1.bf16.msra.mxu0 %v1897
    %1996 = vmatprep.subr.bf16.mxu0 %v1902
    %1997 = vmatpush1.bf16.msra.mxu0 %v1901
    %1998 = vmatprep.subr.bf16.mxu0 %v1906
    %1999 = vmatpush1.bf16.msra.mxu0 %v1905
    %2000 = vmatprep.subr.bf16.mxu0 %v1910
    %2001 = vmatpush1.bf16.msra.mxu0 %v1909
    %2002 = vmatprep.subr.bf16.mxu0 %v1914
    %2003 = vmatpush1.bf16.msra.mxu0 %v1913
    %2004 = vmatprep.subr.bf16.mxu0 0
    %2005 = vmatpush1.bf16.msra.mxu0 0
    %2006 = vmatprep.subr.bf16.mxu0 0
    %2007 = vmatpush1.bf16.msra.mxu0 0
    %2008 = vmatprep.subr.bf16.mxu0 0
    %2009 = vmatpush1.bf16.msra.mxu0 0
    %2010 = vmatprep.subr.bf16.mxu0 0
    %2011 = vmatpush1.bf16.msra.mxu0 0
    %2012 = vmatprep.subr.bf16.mxu0 0
    %2013 = vmatpush1.bf16.msra.mxu0 0
    %2014 = vmatprep.subr.bf16.mxu0 0
    %2015 = vmatpush1.bf16.msra.mxu0 0
    %2016 = vmatprep.subr.bf16.mxu0 0
    %2017 = vmatpush1.bf16.msra.mxu0 0
    %2018 = vmatprep.subr.bf16.mxu0 0
    %2019 = vmatpush1.bf16.msra.mxu0 0
    %2020 = vmatprep.mubr.bf16.mxu0 0
    %2021 = vmatmul.mubr.bf16.gmra.mrb[0].mxu0 %v1732
    %v2022 = vpop.f32.mrb[0].mxu0
    %v2023 = vadd.f32 %v1778, %v2022
    %v2024 = vpop.f32.mrb[0].mxu0
    %v2025 = vadd.f32 %v1782, %v2024
    %v2026 = vpop.f32.mrb[0].mxu0
    %v2027 = vpop.f32.mrb[0].mxu0
    %2028 = vdwg.mxu0
    %v2029 = vmax.f32 %v1982, 0.0
    %v2030 = vmax.f32 %v1984, 0.0
    %v2031 = vmax.f32 %v2023, 0.0
    %v2032 = vmax.f32 %v2025, 0.0
    %v2033 = vpack.c.bf16 %v2029, %v2029
    %v2034 = vpack.c.bf16 %v2030, %v2030
    %v2035 = vpack.c.bf16 %v2031, %v2031
    %v2036 = vpack.c.bf16 %v2032, %v2032
    %v2037 = vld [vmem:[%s15] sm:$0xf]
    %v2038 = vld [vmem:[%s15 + $0x4] sm:$0xf]
    %v2039 = vld [vmem:[%s15 + $0x8] sm:$0xf]
    %v2040 = vld [vmem:[%s15 + $0xc] sm:$0xf]
    %v2041 = vld [vmem:[%s15 + $0x10] sm:$0xf]
    %v2042 = vld [vmem:[%s15 + $0x14] sm:$0xf]
    %v2043 = vld [vmem:[%s15 + $0x18] sm:$0xf]
    %v2044 = vld [vmem:[%s15 + $0x1c] sm:$0xf]
    %v2045 = vld [vmem:[%s15 + $0x20] sm:$0xf]
    %v2046 = vld [vmem:[%s15 + $0x24] sm:$0xf]
    %v2047 = vld [vmem:[%s15 + $0x28] sm:$0xf]
    %v2048 = vld [vmem:[%s15 + $0x2c] sm:$0xf]
    %v2049 = vld [vmem:[%s15 + $0x30] sm:$0xf]
    %v2050 = vld [vmem:[%s15 + $0x34] sm:$0xf]
    %v2051 = vld [vmem:[%s15 + $0x38] sm:$0xf]
    %v2052 = vld [vmem:[%s15 + $0x3c] sm:$0xf]
    %v2053 = vld [vmem:[%s15 + $0x40] sm:$0xf]
    %v2054 = vld [vmem:[%s15 + $0x44] sm:$0xf]
    %v2055 = vld [vmem:[%s15 + $0x48] sm:$0xf]
    %v2056 = vld [vmem:[%s15 + $0x4c] sm:$0xf]
    %v2057 = vld [vmem:[%s15 + $0x50] sm:$0xf]
    %v2058 = vld [vmem:[%s15 + $0x54] sm:$0xf]
    %v2059 = vld [vmem:[%s15 + $0x58] sm:$0xf]
    %v2060 = vld [vmem:[%s15 + $0x5c] sm:$0xf]
    %v2061 = vld [vmem:[%s15 + $0x60] sm:$0xf]
    %v2062 = vld [vmem:[%s15 + $0x64] sm:$0xf]
    %v2063 = vld [vmem:[%s15 + $0x68] sm:$0xf]
    %v2064 = vld [vmem:[%s15 + $0x6c] sm:$0xf]
    %v2065 = vld [vmem:[%s15 + $0x70] sm:$0xf]
    %v2066 = vld [vmem:[%s15 + $0x74] sm:$0xf]
    %v2067 = vld [vmem:[%s15 + $0x78] sm:$0xf]
    %v2068 = vld [vmem:[%s15 + $0x7c] sm:$0xf]
    %v2069 = vld [vmem:[%s15 + $0x80] sm:$0xf]
    %v2070 = vld [vmem:[%s15 + $0x84] sm:$0xf]
    %v2071 = vld [vmem:[%s15 + $0x88] sm:$0xf]
    %v2072 = vld [vmem:[%s15 + $0x8c] sm:$0xf]
    %v2073 = vld [vmem:[%s15 + $0x90] sm:$0xf]
    %v2074 = vld [vmem:[%s15 + $0x94] sm:$0xf]
    %v2075 = vld [vmem:[%s15 + $0x98] sm:$0xf]
    %v2076 = vld [vmem:[%s15 + $0x9c] sm:$0xf]
    %v2077 = vld [vmem:[%s15 + $0xa0] sm:$0xf]
    %v2078 = vld [vmem:[%s15 + $0xa4] sm:$0xf]
    %v2079 = vld [vmem:[%s15 + $0xa8] sm:$0xf]
    %v2080 = vld [vmem:[%s15 + $0xac] sm:$0xf]
    %v2081 = vld [vmem:[%s15 + $0xb0] sm:$0xf]
    %v2082 = vld [vmem:[%s15 + $0xb4] sm:$0xf]
    %v2083 = vld [vmem:[%s15 + $0xb8] sm:$0xf]
    %v2084 = vld [vmem:[%s15 + $0xbc] sm:$0xf]
    %v2085 = vld [vmem:[%s15 + $0xc0] sm:$0xf]
    %v2086 = vld [vmem:[%s15 + $0xc4] sm:$0xf]
    %v2087 = vld [vmem:[%s15 + $0xc8] sm:$0xf]
    %v2088 = vld [vmem:[%s15 + $0xcc] sm:$0xf]
    %v2089 = vld [vmem:[%s15 + $0xd0] sm:$0xf]
    %v2090 = vld [vmem:[%s15 + $0xd4] sm:$0xf]
    %v2091 = vld [vmem:[%s15 + $0xd8] sm:$0xf]
    %v2092 = vld [vmem:[%s15 + $0xdc] sm:$0xf]
    %v2093 = vld [vmem:[%s15 + $0xe0] sm:$0xf]
    %v2094 = vld [vmem:[%s15 + $0xe4] sm:$0xf]
    %v2095 = vld [vmem:[%s15 + $0xe8] sm:$0xf]
    %v2096 = vld [vmem:[%s15 + $0xec] sm:$0xf]
    %v2097 = vld [vmem:[%s15 + $0xf0] sm:$0xf]
    %v2098 = vld [vmem:[%s15 + $0xf4] sm:$0xf]
    %v2099 = vld [vmem:[%s15 + $0xf8] sm:$0xf]
    %v2100 = vld [vmem:[%s15 + $0xfc] sm:$0xf]
    %v2101 = vld [vmem:[#allocation9] sm:$0x1]
    %v2103 = vlaneseq
    %v2104 = vshrl.u32 %v2103, 7
    %v2105 = vsub.s32 0, %v2104
    %v2106 = vrot.slane %v2101, %v2105
    %v2172 = vunpack.c.l.b16 %v2037
    %v2173 = vunpack.c.l.b16 %v2038
    %v2174 = vunpack.c.l.b16 %v2039
    %v2175 = vunpack.c.l.b16 %v2040
    %v2176 = vunpack.c.l.b16 %v2041
    %v2177 = vunpack.c.l.b16 %v2042
    %v2178 = vunpack.c.l.b16 %v2043
    %v2179 = vunpack.c.l.b16 %v2044
    %v2180 = vunpack.c.l.b16 %v2045
    %v2181 = vunpack.c.l.b16 %v2046
    %v2182 = vunpack.c.l.b16 %v2047
    %v2183 = vunpack.c.l.b16 %v2048
    %v2184 = vunpack.c.l.b16 %v2049
    %v2185 = vunpack.c.l.b16 %v2050
    %v2186 = vunpack.c.l.b16 %v2051
    %v2187 = vunpack.c.l.b16 %v2052
    %v2188 = vunpack.c.l.b16 %v2053
    %v2189 = vunpack.c.l.b16 %v2054
    %v2190 = vunpack.c.l.b16 %v2055
    %v2191 = vunpack.c.l.b16 %v2056
    %v2192 = vunpack.c.l.b16 %v2057
    %v2193 = vunpack.c.l.b16 %v2058
    %v2194 = vunpack.c.l.b16 %v2059
    %v2195 = vunpack.c.l.b16 %v2060
    %v2196 = vunpack.c.l.b16 %v2061
    %v2197 = vunpack.c.l.b16 %v2062
    %v2198 = vunpack.c.l.b16 %v2063
    %v2199 = vunpack.c.l.b16 %v2064
    %v2200 = vunpack.c.l.b16 %v2065
    %v2201 = vunpack.c.l.b16 %v2066
    %v2202 = vunpack.c.l.b16 %v2067
    %v2203 = vunpack.c.l.b16 %v2068
    %v2204 = vunpack.c.l.b16 %v2069
    %v2205 = vunpack.c.l.b16 %v2070
    %v2206 = vunpack.c.l.b16 %v2071
    %v2207 = vunpack.c.l.b16 %v2072
    %v2208 = vunpack.c.l.b16 %v2073
    %v2209 = vunpack.c.l.b16 %v2074
    %v2210 = vunpack.c.l.b16 %v2075
    %v2211 = vunpack.c.l.b16 %v2076
    %v2212 = vunpack.c.l.b16 %v2077
    %v2213 = vunpack.c.l.b16 %v2078
    %v2214 = vunpack.c.l.b16 %v2079
    %v2215 = vunpack.c.l.b16 %v2080
    %v2216 = vunpack.c.l.b16 %v2081
    %v2217 = vunpack.c.l.b16 %v2082
    %v2218 = vunpack.c.l.b16 %v2083
    %v2219 = vunpack.c.l.b16 %v2084
    %v2220 = vunpack.c.l.b16 %v2085
    %v2221 = vunpack.c.l.b16 %v2086
    %v2222 = vunpack.c.l.b16 %v2087
    %v2223 = vunpack.c.l.b16 %v2088
    %v2224 = vunpack.c.l.b16 %v2089
    %v2225 = vunpack.c.l.b16 %v2090
    %v2226 = vunpack.c.l.b16 %v2091
    %v2227 = vunpack.c.l.b16 %v2092
    %v2228 = vunpack.c.l.b16 %v2093
    %v2229 = vunpack.c.l.b16 %v2094
    %v2230 = vunpack.c.l.b16 %v2095
    %v2231 = vunpack.c.l.b16 %v2096
    %v2232 = vunpack.c.l.b16 %v2097
    %v2233 = vunpack.c.l.b16 %v2098
    %v2234 = vunpack.c.l.b16 %v2099
    %v2235 = vunpack.c.l.b16 %v2100
    %v2236 = vpack.c.b16 %v2173, %v2172
    %v2237 = vpack.c.b16 %v2175, %v2174
    %v2238 = vpack.c.b16 %v2177, %v2176
    %v2239 = vpack.c.b16 %v2179, %v2178
    %v2240 = vpack.c.b16 %v2181, %v2180
    %v2241 = vpack.c.b16 %v2183, %v2182
    %v2242 = vpack.c.b16 %v2185, %v2184
    %v2243 = vpack.c.b16 %v2187, %v2186
    %v2244 = vpack.c.b16 %v2189, %v2188
    %v2245 = vpack.c.b16 %v2191, %v2190
    %v2246 = vpack.c.b16 %v2193, %v2192
    %v2247 = vpack.c.b16 %v2195, %v2194
    %v2248 = vpack.c.b16 %v2197, %v2196
    %v2249 = vpack.c.b16 %v2199, %v2198
    %v2250 = vpack.c.b16 %v2201, %v2200
    %v2251 = vpack.c.b16 %v2203, %v2202
    %v2252 = vpack.c.b16 %v2205, %v2204
    %v2253 = vpack.c.b16 %v2207, %v2206
    %v2254 = vpack.c.b16 %v2209, %v2208
    %v2255 = vpack.c.b16 %v2211, %v2210
    %v2256 = vpack.c.b16 %v2213, %v2212
    %v2257 = vpack.c.b16 %v2215, %v2214
    %v2258 = vpack.c.b16 %v2217, %v2216
    %v2259 = vpack.c.b16 %v2219, %v2218
    %v2260 = vpack.c.b16 %v2221, %v2220
    %v2261 = vpack.c.b16 %v2223, %v2222
    %v2262 = vpack.c.b16 %v2225, %v2224
    %v2263 = vpack.c.b16 %v2227, %v2226
    %v2264 = vpack.c.b16 %v2229, %v2228
    %v2265 = vpack.c.b16 %v2231, %v2230
    %v2266 = vpack.c.b16 %v2233, %v2232
    %v2267 = vpack.c.b16 %v2235, %v2234
    %2300 = vmatprep.subr.bf16.mxu0 0
    %2301 = vmatpush1.bf16.msra.mxu0 %v2236
    %2302 = vmatprep.subr.bf16.mxu0 0
    %2303 = vmatpush1.bf16.msra.mxu0 %v2237
    %2304 = vmatprep.subr.bf16.mxu0 0
    %2305 = vmatpush1.bf16.msra.mxu0 %v2238
    %2306 = vmatprep.subr.bf16.mxu0 0
    %2307 = vmatpush1.bf16.msra.mxu0 %v2239
    %2308 = vmatprep.subr.bf16.mxu0 0
    %2309 = vmatpush1.bf16.msra.mxu0 %v2240
    %2310 = vmatprep.subr.bf16.mxu0 0
    %2311 = vmatpush1.bf16.msra.mxu0 %v2241
    %2312 = vmatprep.subr.bf16.mxu0 0
    %2313 = vmatpush1.bf16.msra.mxu0 %v2242
    %2314 = vmatprep.subr.bf16.mxu0 0
    %2315 = vmatpush1.bf16.msra.mxu0 %v2243
    %2316 = vmatprep.subr.bf16.mxu0 0
    %2317 = vmatpush1.bf16.msra.mxu0 %v2244
    %2318 = vmatprep.subr.bf16.mxu0 0
    %2319 = vmatpush1.bf16.msra.mxu0 %v2245
    %2320 = vmatprep.subr.bf16.mxu0 0
    %2321 = vmatpush1.bf16.msra.mxu0 %v2246
    %2322 = vmatprep.subr.bf16.mxu0 0
    %2323 = vmatpush1.bf16.msra.mxu0 %v2247
    %2324 = vmatprep.subr.bf16.mxu0 0
    %2325 = vmatpush1.bf16.msra.mxu0 %v2248
    %2326 = vmatprep.subr.bf16.mxu0 0
    %2327 = vmatpush1.bf16.msra.mxu0 %v2249
    %2328 = vmatprep.subr.bf16.mxu0 0
    %2329 = vmatpush1.bf16.msra.mxu0 %v2250
    %2330 = vmatprep.subr.bf16.mxu0 0
    %2331 = vmatpush1.bf16.msra.mxu0 %v2251
    %2332 = vmatprep.mubr.bf16.mxu0 %v2034
    %2333 = vmatmul.mubr.bf16.gmra.mrb[0].mxu0 %v2033
    %v2334 = vpop.f32.mrb[0].mxu0
    %v2335 = vadd.f32 %v2106, %v2334
    %v2336 = vpop.f32.mrb[0].mxu0
    %v2337 = vpop.f32.mrb[0].mxu0
    %v2338 = vpop.f32.mrb[0].mxu0
    %2339 = vdwg.mxu0
    %2340 = vmatprep.subr.bf16.mxu0 0
    %2341 = vmatpush1.bf16.msra.mxu0 %v2252
    %2342 = vmatprep.subr.bf16.mxu0 0
    %2343 = vmatpush1.bf16.msra.mxu0 %v2253
    %2344 = vmatprep.subr.bf16.mxu0 0
    %2345 = vmatpush1.bf16.msra.mxu0 %v2254
    %2346 = vmatprep.subr.bf16.mxu0 0
    %2347 = vmatpush1.bf16.msra.mxu0 %v2255
    %2348 = vmatprep.subr.bf16.mxu0 0
    %2349 = vmatpush1.bf16.msra.mxu0 %v2256
    %2350 = vmatprep.subr.bf16.mxu0 0
    %2351 = vmatpush1.bf16.msra.mxu0 %v2257
    %2352 = vmatprep.subr.bf16.mxu0 0
    %2353 = vmatpush1.bf16.msra.mxu0 %v2258
    %2354 = vmatprep.subr.bf16.mxu0 0
    %2355 = vmatpush1.bf16.msra.mxu0 %v2259
    %2356 = vmatprep.subr.bf16.mxu0 0
    %2357 = vmatpush1.bf16.msra.mxu0 %v2260
    %2358 = vmatprep.subr.bf16.mxu0 0
    %2359 = vmatpush1.bf16.msra.mxu0 %v2261
    %2360 = vmatprep.subr.bf16.mxu0 0
    %2361 = vmatpush1.bf16.msra.mxu0 %v2262
    %2362 = vmatprep.subr.bf16.mxu0 0
    %2363 = vmatpush1.bf16.msra.mxu0 %v2263
    %2364 = vmatprep.subr.bf16.mxu0 0
    %2365 = vmatpush1.bf16.msra.mxu0 %v2264
    %2366 = vmatprep.subr.bf16.mxu0 0
    %2367 = vmatpush1.bf16.msra.mxu0 %v2265
    %2368 = vmatprep.subr.bf16.mxu0 0
    %2369 = vmatpush1.bf16.msra.mxu0 %v2266
    %2370 = vmatprep.subr.bf16.mxu0 0
    %2371 = vmatpush1.bf16.msra.mxu0 %v2267
    %2372 = vmatprep.mubr.bf16.mxu0 %v2036
    %2373 = vmatmul.mubr.bf16.gmra.mrb[0].mxu0 %v2035
    %v2374 = vpop.f32.mrb[0].mxu0
    %v2375 = vadd.f32 %v2335, %v2374
    %v2376 = vpop.f32.mrb[0].mxu0
    %v2377 = vpop.f32.mrb[0].mxu0
    %v2378 = vpop.f32.mrb[0].mxu0
    %2379 = vdwg.mxu0
    %v2380 = vadd.f32 %v1731, %v2375
    %v2381 = vld [vmem:[#allocation13] sm:$0x1]
    %v2382 = vld [vmem:[#allocation15] sm:$0x1]
    %v2383 = vsel %vm359, %v2380, 0.0
    %2384 = vadd.xlane.f32.xlu0 %v2383
    %v2385 = vpop.xlane.xlu0 %2384
    %v2386 = vmul.f32 %v2385, %v363
    %v2387 = vsub.f32 %v2380, %v2386
    %v2388 = vmul.f32 %v2387, %v2387
    %v2389 = vsel %vm359, %v2388, 0.0
    %2390 = vadd.xlane.f32.xlu0 %v2389
    %v2391 = vpop.xlane.xlu0 %2390
    %v2392 = vmul.f32 %v2391, %v363
    %v2393 = vadd.f32 %v2392, 1e-05
    %v2394 = vrsqrt.pop %v2393
    %v2395 = vmul.f32 %v2387, %v2394
    %v2397 = vlaneseq
    %v2398 = vshrl.u32 %v2397, 7
    %v2399 = vsub.s32 0, %v2398
    %v2400 = vrot.slane %v2381, %v2399
    %v2402 = vmul.f32 %v2395, %v2400
    %v2404 = vlaneseq
    %v2405 = vshrl.u32 %v2404, 7
    %v2406 = vsub.s32 0, %v2405
    %v2407 = vrot.slane %v2382, %v2406
    %v2409 = vadd.f32 %v2402, %v2407
    %v2410 = vpack.c.bf16 %v2409, %v2409
    %2411 = vst [vmem:[%s21] sm:$0x3] %v2410
    // Predicated region
    $region122: #{forward.8} parent=1 // pred_check
      _
    $region123: #{forward.8} parent=1 // pred_check_branch
      %2413 = sbr.rel (0) target = $region125
    $region124: #{forward.8} parent=1 // pred_region
      _
    $region125: #{forward.8} parent=1 // pred_fallthru
      _
    // Predicated region
    $region126: #{forward.8} parent=1 // pred_check
      _
    $region127: #{forward.8} parent=1 // pred_check_branch
      %2415 = sbr.rel (0) target = $region129
    $region128: #{forward.8} parent=1 // pred_region
      _
    $region129: #{forward.8} parent=1 // pred_fallthru
      _
    %2416 = vsyncpa [#allocation3], 1
    %2417 = vsyncpa [#allocation5], 1
    %2418 = vsyncpa [#allocation8], 1
    %2419 = vsyncpa [#allocation11], 1
    %2420 = vsyncpa [#allocation14], 1

// kernel: forward.11
$region0: #{forward.11}
  #allocation0 [shape = 'u32[]', space=smem, size = 0x4, offset = 0x4, fixed_abs, tag = 'smem constant byte address 0x4 - core index']
  #allocation1 [shape = 'u32[144,128]{1,0:T(1,128)}', space=vmem, size = 0x12000, scoped, tag = 'internal scratch']
  %s0 = inlined_call_operand.vmem [shape: bf16[16,32], index: 0, kind: input, shape index: {}]
  %s1 = inlined_call_operand.vmem [shape: bf16[16,32], index: 1, kind: input, shape index: {}]
  %s2 = inlined_call_operand.vmem [shape: f32[16,16], index: 2, kind: input, shape index: {}]
  %s3 = inlined_call_operand.vmem [shape: bf16[32,128], index: 3, kind: input, shape index: {}]
  %s4 = inlined_call_operand.vmem [shape: f32[1,128], index: 4, kind: input, shape index: {}]
  %s5 = inlined_call_operand.vmem [shape: bf16[32,96], index: 5, kind: input, shape index: {}]
  %s6 = inlined_call_operand.vmem [shape: f32[1,96], index: 6, kind: input, shape index: {}]
  %s7 = inlined_call_operand.vmem [shape: bf16[32,32], index: 7, kind: input, shape index: {}]
  %s8 = inlined_call_operand.vmem [shape: f32[1,32], index: 8, kind: input, shape index: {}]
  %s9 = inlined_call_operand.vmem [shape: bf16[32,128], index: 9, kind: input, shape index: {}]
  %s10 = inlined_call_operand.vmem [shape: f32[1,128], index: 10, kind: input, shape index: {}]
  %s11 = inlined_call_operand.vmem [shape: bf16[128,32], index: 11, kind: input, shape index: {}]
  %s12 = inlined_call_operand.vmem [shape: f32[1,32], index: 12, kind: input, shape index: {}]
  %s13 = inlined_call_operand.vmem [shape: f32[1,32], index: 13, kind: input, shape index: {}]
  %s14 = inlined_call_operand.vmem [shape: f32[1,32], index: 14, kind: input, shape index: {}]
  %s15 = inlined_call_operand.vmem [shape: f32[1,32], index: 15, kind: input, shape index: {}]
  %s16 = inlined_call_operand.vmem [shape: f32[1,32], index: 16, kind: input, shape index: {}]
  %s17 = inlined_call_operand.vmem [shape: f32[16,128], index: 17, kind: output, shape index: {}]
  %s18 = sld [smem:[#allocation0]]
  $region78: #{forward.11} parent=0
    _
  %s20 = ssub.s32 1, %s18
  %s21 = scalar_select 0, %s20, %s18
  // Predicated region
  $region2: #{forward.11} parent=0 // pred_check
    _
  $region3: #{forward.11} parent=0 // pred_check_branch
    %23 = sbr.rel (0) target = $region5
  $region4: #{forward.11} parent=0 // pred_region
    _
  $region5: #{forward.11} parent=0 // pred_fallthru
    _
  // Predicated region
  $region6: #{forward.11} parent=0 // pred_check
    _
  $region7: #{forward.11} parent=0 // pred_check_branch
    %25 = sbr.rel (0) target = $region9
  $region8: #{forward.11} parent=0 // pred_region
    _
  $region9: #{forward.11} parent=0 // pred_fallthru
    _
  // Predicated region
  $region10: #{forward.11} parent=0 // pred_check
    _
  $region11: #{forward.11} parent=0 // pred_check_branch
    %27 = sbr.rel (0) target = $region13
  $region12: #{forward.11} parent=0 // pred_region
    _
  $region13: #{forward.11} parent=0 // pred_fallthru
    _
  // Predicated region
  $region14: #{forward.11} parent=0 // pred_check
    _
  $region15: #{forward.11} parent=0 // pred_check_branch
    %29 = sbr.rel (0) target = $region17
  $region16: #{forward.11} parent=0 // pred_region
    _
  $region17: #{forward.11} parent=0 // pred_fallthru
    _
  // Predicated region
  $region18: #{forward.11} parent=0 // pred_check
    _
  $region19: #{forward.11} parent=0 // pred_check_branch
    %31 = sbr.rel (0) target = $region21
  $region20: #{forward.11} parent=0 // pred_region
    _
  $region21: #{forward.11} parent=0 // pred_fallthru
    _
  // Predicated region
  $region22: #{forward.11} parent=0 // pred_check
    _
  $region23: #{forward.11} parent=0 // pred_check_branch
    %33 = sbr.rel (0) target = $region25
  $region24: #{forward.11} parent=0 // pred_region
    _
  $region25: #{forward.11} parent=0 // pred_fallthru
    _
  // Predicated region
  $region26: #{forward.11} parent=0 // pred_check
    _
  $region27: #{forward.11} parent=0 // pred_check_branch
    %35 = sbr.rel (0) target = $region29
  $region28: #{forward.11} parent=0 // pred_region
    _
  $region29: #{forward.11} parent=0 // pred_fallthru
    _
  // Predicated region
  $region30: #{forward.11} parent=0 // pred_check
    _
  $region31: #{forward.11} parent=0 // pred_check_branch
    %37 = sbr.rel (0) target = $region33
  $region32: #{forward.11} parent=0 // pred_region
    _
  $region33: #{forward.11} parent=0 // pred_fallthru
    _
  // Predicated region
  $region34: #{forward.11} parent=0 // pred_check
    _
  $region35: #{forward.11} parent=0 // pred_check_branch
    %39 = sbr.rel (0) target = $region37
  $region36: #{forward.11} parent=0 // pred_region
    _
  $region37: #{forward.11} parent=0 // pred_fallthru
    _
  // Predicated region
  $region38: #{forward.11} parent=0 // pred_check
    _
  $region39: #{forward.11} parent=0 // pred_check_branch
    %41 = sbr.rel (0) target = $region41
  $region40: #{forward.11} parent=0 // pred_region
    _
  $region41: #{forward.11} parent=0 // pred_fallthru
    _
  // Predicated region
  $region42: #{forward.11} parent=0 // pred_check
    _
  $region43: #{forward.11} parent=0 // pred_check_branch
    %43 = sbr.rel (0) target = $region45
  $region44: #{forward.11} parent=0 // pred_region
    _
  $region45: #{forward.11} parent=0 // pred_fallthru
    _
  // Predicated region
  $region46: #{forward.11} parent=0 // pred_check
    _
  $region47: #{forward.11} parent=0 // pred_check_branch
    %45 = sbr.rel (0) target = $region49
  $region48: #{forward.11} parent=0 // pred_region
    _
  $region49: #{forward.11} parent=0 // pred_fallthru
    _
  // Predicated region
  $region50: #{forward.11} parent=0 // pred_check
    _
  $region51: #{forward.11} parent=0 // pred_check_branch
    %47 = sbr.rel (0) target = $region53
  $region52: #{forward.11} parent=0 // pred_region
    _
  $region53: #{forward.11} parent=0 // pred_fallthru
    _
  // Predicated region
  $region54: #{forward.11} parent=0 // pred_check
    _
  $region55: #{forward.11} parent=0 // pred_check_branch
    %49 = sbr.rel (0) target = $region57
  $region56: #{forward.11} parent=0 // pred_region
    _
  $region57: #{forward.11} parent=0 // pred_fallthru
    _
  // Predicated region
  $region58: #{forward.11} parent=0 // pred_check
    _
  $region59: #{forward.11} parent=0 // pred_check_branch
    %51 = sbr.rel (0) target = $region61
  $region60: #{forward.11} parent=0 // pred_region
    _
  $region61: #{forward.11} parent=0 // pred_fallthru
    _
  // Predicated region
  $region62: #{forward.11} parent=0 // pred_check
    _
  $region63: #{forward.11} parent=0 // pred_check_branch
    %53 = sbr.rel (0) target = $region65
  $region64: #{forward.11} parent=0 // pred_region
    _
  $region65: #{forward.11} parent=0 // pred_fallthru
    _
  // Predicated region
  $region66: #{forward.11} parent=0 // pred_check
    _
  $region67: #{forward.11} parent=0 // pred_check_branch
    %55 = sbr.rel (0) target = $region69
  $region68: #{forward.11} parent=0 // pred_region
    _
  $region69: #{forward.11} parent=0 // pred_fallthru
    _
  %v57 = vld [vmem:[%s0] sm:$0xf]
  %v58 = vld [vmem:[%s0 + $0x4] sm:$0xf]
  %v59 = vunpack.c.l.bf16 %v57
  %v60 = vunpack.c.l.bf16 %v58
  %v61 = vld [vmem:[%s1] sm:$0xf]
  %v62 = vld [vmem:[%s1 + $0x4] sm:$0xf]
  %v63 = vunpack.c.l.bf16 %v61
  %v64 = vunpack.c.l.bf16 %v62
  %v65 = vadd.f32 %v59, %v63
  %v66 = vadd.f32 %v60, %v64
  %v67 = vld [vmem:[%s2] sm:$0xff]
  %v68 = vld [vmem:[%s2 + $0x8] sm:$0xff]
  %v69 = vpack.c.bf16 %v66, %v65
  %v70 = vld [vmem:[%s5] sm:$0xf]
  %v71 = vld [vmem:[%s5 + $0x4] sm:$0xf]
  %v72 = vld [vmem:[%s5 + $0x8] sm:$0xf]
  %v73 = vld [vmem:[%s5 + $0xc] sm:$0xf]
  %v74 = vld [vmem:[%s6] sm:$0x1]
  %v76 = vlaneseq
  %v77 = vshrl.u32 %v76, 7
  %v78 = vsub.s32 0, %v77
  %v79 = vrot.slane %v74, %v78
  %v85 = vunpack.c.l.b16 %v70
  %v86 = vunpack.c.l.b16 %v71
  %v87 = vunpack.c.l.b16 %v72
  %v88 = vunpack.c.l.b16 %v73
  %v89 = vpack.c.b16 %v86, %v85
  %v90 = vpack.c.b16 %v88, %v87
  %vm93 = vcmask 261120
  %v95 = vsel %vm93, %v69, 0
  %97 = vmatprep.subr.bf16.mxu0 0
  %98 = vmatpush1.bf16.msra.mxu0 %v89
  %99 = vmatprep.subr.bf16.mxu0 0
  %100 = vmatpush1.bf16.msra.mxu0 %v90
  %101 = vmatprep.subr.bf16.mxu0 0
  %102 = vmatpush1.bf16.msra.mxu0 0
  %103 = vmatprep.subr.bf16.mxu0 0
  %104 = vmatpush1.bf16.msra.mxu0 0
  %105 = vmatprep.subr.bf16.mxu0 0
  %106 = vmatpush1.bf16.msra.mxu0 0
  %107 = vmatprep.subr.bf16.mxu0 0
  %108 = vmatpush1.bf16.msra.mxu0 0
  %109 = vmatprep.subr.bf16.mxu0 0
  %110 = vmatpush1.bf16.msra.mxu0 0
  %111 = vmatprep.subr.bf16.mxu0 0
  %112 = vmatpush1.bf16.msra.mxu0 0
  %113 = vmatprep.subr.bf16.mxu0 0
  %114 = vmatpush1.bf16.msra.mxu0 0
  %115 = vmatprep.subr.bf16.mxu0 0
  %116 = vmatpush1.bf16.msra.mxu0 0
  %117 = vmatprep.subr.bf16.mxu0 0
  %118 = vmatpush1.bf16.msra.mxu0 0
  %119 = vmatprep.subr.bf16.mxu0 0
  %120 = vmatpush1.bf16.msra.mxu0 0
  %121 = vmatprep.subr.bf16.mxu0 0
  %122 = vmatpush1.bf16.msra.mxu0 0
  %123 = vmatprep.subr.bf16.mxu0 0
  %124 = vmatpush1.bf16.msra.mxu0 0
  %125 = vmatprep.subr.bf16.mxu0 0
  %126 = vmatpush1.bf16.msra.mxu0 0
  %127 = vmatprep.subr.bf16.mxu0 0
  %128 = vmatpush1.bf16.msra.mxu0 0
  %129 = vmatprep.mubr.bf16.mxu0 0
  %130 = vmatmul.mubr.bf16.gmra.mrb[0].mxu0 %v95
  %v131 = vpop.f32.mrb[0].mxu0
  %v132 = vadd.f32 %v79, %v131
  %v133 = vpop.f32.mrb[0].mxu0
  %v134 = vpop.f32.mrb[0].mxu0
  %v135 = vadd.f32 %v79, %v134
  %v136 = vpop.f32.mrb[0].mxu0
  %137 = vdwg.mxu0
  %v138 = vpack.c.bf16 %v135, %v132
  %140 = vrot.lane.b32.xlu0 %v138, 96
  %v141 = vpop.permute.xlu0 %140
  %vm142 = vcmask 130048
  %v144 = vsel %vm142, %v138, 0
  %v147 = vsel %vm142, %v141, 0
  %149 = vmatprep.subr.bf16.mxu0 0
  %150 = vmatpush1.bf16.xpose.msra.mxu0 %v147
  %151 = vmatprep.subr.bf16.mxu0 0
  %152 = vmatpush1.bf16.xpose.msra.mxu0 0
  %153 = vmatprep.subr.bf16.mxu0 0
  %154 = vmatpush1.bf16.xpose.msra.mxu0 0
  %155 = vmatprep.subr.bf16.mxu0 0
  %156 = vmatpush1.bf16.xpose.msra.mxu0 0
  %157 = vmatprep.subr.bf16.mxu0 0
  %158 = vmatpush1.bf16.xpose.msra.mxu0 0
  %159 = vmatprep.subr.bf16.mxu0 0
  %160 = vmatpush1.bf16.xpose.msra.mxu0 0
  %161 = vmatprep.subr.bf16.mxu0 0
  %162 = vmatpush1.bf16.xpose.msra.mxu0 0
  %163 = vmatprep.subr.bf16.mxu0 0
  %164 = vmatpush1.bf16.xpose.msra.mxu0 0
  %165 = vmatprep.subr.bf16.mxu0 0
  %166 = vmatpush1.bf16.xpose.msra.mxu0 0
  %167 = vmatprep.subr.bf16.mxu0 0
  %168 = vmatpush1.bf16.xpose.msra.mxu0 0
  %169 = vmatprep.subr.bf16.mxu0 0
  %170 = vmatpush1.bf16.xpose.msra.mxu0 0
  %171 = vmatprep.subr.bf16.mxu0 0
  %172 = vmatpush1.bf16.xpose.msra.mxu0 0
  %173 = vmatprep.subr.bf16.mxu0 0
  %174 = vmatpush1.bf16.xpose.msra.mxu0 0
  %175 = vmatprep.subr.bf16.mxu0 0
  %176 = vmatpush1.bf16.xpose.msra.mxu0 0
  %177 = vmatprep.subr.bf16.mxu0 0
  %178 = vmatpush1.bf16.xpose.msra.mxu0 0
  %179 = vmatprep.subr.bf16.mxu0 0
  %180 = vmatpush1.bf16.xpose.msra.mxu0 0
  %181 = vmatprep.mubr.bf16.mxu0 0
  %182 = vmatmul.mubr.bf16.gmra.mrb[0].mxu0 %v144
  %v183 = vpop.f32.mrb[0].mxu0
  %v184 = vadd.f32 0.0, %v183
  %v185 = vpop.f32.mrb[0].mxu0
  %v186 = vpop.f32.mrb[0].mxu0
  %v187 = vadd.f32 0.0, %v186
  %v188 = vpop.f32.mrb[0].mxu0
  %189 = vdwg.mxu0
  %v190 = vmul.f32 %v184, 0.25
  %v191 = vmul.f32 %v187, 0.25
  %v192 = vadd.f32 %v190, %v67
  %v193 = vadd.f32 %v191, %v68
  %v194 = vsel %vm142, %v192, -inf
  %195 = vmax.xlane.f32.xlu0 %v194
  %v196 = vpop.xlane.xlu0 %195
  %v197 = vsel %vm142, %v193, -inf
  %198 = vmax.xlane.f32.xlu0 %v197
  %v199 = vpop.xlane.xlu0 %198
  %v200 = vsub.f32 %v192, %v196
  %v201 = vsub.f32 %v193, %v199
  %v202 = vmul.f32 %v200, 1.442695
  %v203 = vpow.pop %v202
  %v204 = vmul.f32 %v201, 1.442695
  %v205 = vpow.pop %v204
  %v206 = vsel %vm142, %v203, 0.0
  %207 = vadd.xlane.f32.xlu0 %v206
  %v208 = vpop.xlane.xlu0 %207
  %v209 = vsel %vm142, %v205, 0.0
  %210 = vadd.xlane.f32.xlu0 %v209
  %v211 = vpop.xlane.xlu0 %210
  %v212 = vrcp.pop %v208
  %v213 = vrcp.pop %v211
  %v214 = vmul.f32 %v203, %v212
  %v215 = vmul.f32 %v205, %v213
  %v216 = vpack.c.bf16 %v215, %v214
  %217 = vrot.lane.b32.xlu0 %v138, 64
  %v218 = vpop.permute.xlu0 %217
  %v221 = vsel %vm142, %v216, 0
  %223 = vmatprep.subr.bf16.mxu0 0
  %224 = vmatpush1.bf16.msra.mxu0 %v218
  %225 = vmatprep.subr.bf16.mxu0 0
  %226 = vmatpush1.bf16.msra.mxu0 0
  %227 = vmatprep.subr.bf16.mxu0 0
  %228 = vmatpush1.bf16.msra.mxu0 0
  %229 = vmatprep.subr.bf16.mxu0 0
  %230 = vmatpush1.bf16.msra.mxu0 0
  %231 = vmatprep.subr.bf16.mxu0 0
  %232 = vmatpush1.bf16.msra.mxu0 0
  %233 = vmatprep.subr.bf16.mxu0 0
  %234 = vmatpush1.bf16.msra.mxu0 0
  %235 = vmatprep.subr.bf16.mxu0 0
  %236 = vmatpush1.bf16.msra.mxu0 0
  %237 = vmatprep.subr.bf16.mxu0 0
  %238 = vmatpush1.bf16.msra.mxu0 0
  %239 = vmatprep.subr.bf16.mxu0 0
  %240 = vmatpush1.bf16.msra.mxu0 0
  %241 = vmatprep.subr.bf16.mxu0 0
  %242 = vmatpush1.bf16.msra.mxu0 0
  %243 = vmatprep.subr.bf16.mxu0 0
  %244 = vmatpush1.bf16.msra.mxu0 0
  %245 = vmatprep.subr.bf16.mxu0 0
  %246 = vmatpush1.bf16.msra.mxu0 0
  %247 = vmatprep.subr.bf16.mxu0 0
  %248 = vmatpush1.bf16.msra.mxu0 0
  %249 = vmatprep.subr.bf16.mxu0 0
  %250 = vmatpush1.bf16.msra.mxu0 0
  %251 = vmatprep.subr.bf16.mxu0 0
  %252 = vmatpush1.bf16.msra.mxu0 0
  %253 = vmatprep.subr.bf16.mxu0 0
  %254 = vmatpush1.bf16.msra.mxu0 0
  %255 = vmatprep.mubr.bf16.mxu0 0
  %256 = vmatmul.mubr.bf16.gmra.mrb[0].mxu0 %v221
  %v257 = vpop.f32.mrb[0].mxu0
  %v258 = vadd.f32 0.0, %v257
  %v259 = vpop.f32.mrb[0].mxu0
  %v260 = vpop.f32.mrb[0].mxu0
  %v261 = vadd.f32 0.0, %v260
  %v262 = vpop.f32.mrb[0].mxu0
  %263 = vdwg.mxu0
  %264 = vrot.lane.b32.xlu0 %v138, 112
  %v265 = vpop.permute.xlu0 %264
  %266 = vrot.lane.b32.xlu0 %v138, 80
  %v267 = vpop.permute.xlu0 %266
  %v269 = vsel %vm142, %v265, 0
  %v272 = vsel %vm142, %v267, 0
  %274 = vmatprep.subr.bf16.mxu0 0
  %275 = vmatpush1.bf16.xpose.msra.mxu0 %v272
  %276 = vmatprep.subr.bf16.mxu0 0
  %277 = vmatpush1.bf16.xpose.msra.mxu0 0
  %278 = vmatprep.subr.bf16.mxu0 0
  %279 = vmatpush1.bf16.xpose.msra.mxu0 0
  %280 = vmatprep.subr.bf16.mxu0 0
  %281 = vmatpush1.bf16.xpose.msra.mxu0 0
  %282 = vmatprep.subr.bf16.mxu0 0
  %283 = vmatpush1.bf16.xpose.msra.mxu0 0
  %284 = vmatprep.subr.bf16.mxu0 0
  %285 = vmatpush1.bf16.xpose.msra.mxu0 0
  %286 = vmatprep.subr.bf16.mxu0 0
  %287 = vmatpush1.bf16.xpose.msra.mxu0 0
  %288 = vmatprep.subr.bf16.mxu0 0
  %289 = vmatpush1.bf16.xpose.msra.mxu0 0
  %290 = vmatprep.subr.bf16.mxu0 0
  %291 = vmatpush1.bf16.xpose.msra.mxu0 0
  %292 = vmatprep.subr.bf16.mxu0 0
  %293 = vmatpush1.bf16.xpose.msra.mxu0 0
  %294 = vmatprep.subr.bf16.mxu0 0
  %295 = vmatpush1.bf16.xpose.msra.mxu0 0
  %296 = vmatprep.subr.bf16.mxu0 0
  %297 = vmatpush1.bf16.xpose.msra.mxu0 0
  %298 = vmatprep.subr.bf16.mxu0 0
  %299 = vmatpush1.bf16.xpose.msra.mxu0 0
  %300 = vmatprep.subr.bf16.mxu0 0
  %301 = vmatpush1.bf16.xpose.msra.mxu0 0
  %302 = vmatprep.subr.bf16.mxu0 0
  %303 = vmatpush1.bf16.xpose.msra.mxu0 0
  %304 = vmatprep.subr.bf16.mxu0 0
  %305 = vmatpush1.bf16.xpose.msra.mxu0 0
  %306 = vmatprep.mubr.bf16.mxu0 0
  %307 = vmatmul.mubr.bf16.gmra.mrb[0].mxu0 %v269
  %v308 = vpop.f32.mrb[0].mxu0
  %v309 = vadd.f32 0.0, %v308
  %v310 = vpop.f32.mrb[0].mxu0
  %v311 = vpop.f32.mrb[0].mxu0
  %v312 = vadd.f32 0.0, %v311
  %v313 = vpop.f32.mrb[0].mxu0
  %314 = vdwg.mxu0
  %v315 = vmul.f32 %v309, 0.25
  %v316 = vmul.f32 %v312, 0.25
  %v317 = vadd.f32 %v315, %v67
  %v318 = vadd.f32 %v316, %v68
  %v319 = vsel %vm142, %v317, -inf
  %320 = vmax.xlane.f32.xlu0 %v319
  %v321 = vpop.xlane.xlu0 %320
  %v322 = vsel %vm142, %v318, -inf
  %323 = vmax.xlane.f32.xlu0 %v322
  %v324 = vpop.xlane.xlu0 %323
  %v325 = vsub.f32 %v317, %v321
  %v326 = vsub.f32 %v318, %v324
  %v327 = vmul.f32 %v325, 1.442695
  %v328 = vpow.pop %v327
  %v329 = vmul.f32 %v326, 1.442695
  %v330 = vpow.pop %v329
  %v331 = vsel %vm142, %v328, 0.0
  %332 = vadd.xlane.f32.xlu0 %v331
  %v333 = vpop.xlane.xlu0 %332
  %v334 = vsel %vm142, %v330, 0.0
  %335 = vadd.xlane.f32.xlu0 %v334
  %v336 = vpop.xlane.xlu0 %335
  %v337 = vrcp.pop %v333
  %v338 = vrcp.pop %v336
  %v339 = vmul.f32 %v328, %v337
  %v340 = vmul.f32 %v330, %v338
  %v341 = vpack.c.bf16 %v340, %v339
  %342 = vrot.lane.b32.xlu0 %v138, 48
  %v343 = vpop.permute.xlu0 %342
  %v346 = vsel %vm142, %v341, 0
  %348 = vmatprep.subr.bf16.mxu0 0
  %349 = vmatpush1.bf16.msra.mxu0 %v343
  %350 = vmatprep.subr.bf16.mxu0 0
  %351 = vmatpush1.bf16.msra.mxu0 0
  %352 = vmatprep.subr.bf16.mxu0 0
  %353 = vmatpush1.bf16.msra.mxu0 0
  %354 = vmatprep.subr.bf16.mxu0 0
  %355 = vmatpush1.bf16.msra.mxu0 0
  %356 = vmatprep.subr.bf16.mxu0 0
  %357 = vmatpush1.bf16.msra.mxu0 0
  %358 = vmatprep.subr.bf16.mxu0 0
  %359 = vmatpush1.bf16.msra.mxu0 0
  %360 = vmatprep.subr.bf16.mxu0 0
  %361 = vmatpush1.bf16.msra.mxu0 0
  %362 = vmatprep.subr.bf16.mxu0 0
  %363 = vmatpush1.bf16.msra.mxu0 0
  %364 = vmatprep.subr.bf16.mxu0 0
  %365 = vmatpush1.bf16.msra.mxu0 0
  %366 = vmatprep.subr.bf16.mxu0 0
  %367 = vmatpush1.bf16.msra.mxu0 0
  %368 = vmatprep.subr.bf16.mxu0 0
  %369 = vmatpush1.bf16.msra.mxu0 0
  %370 = vmatprep.subr.bf16.mxu0 0
  %371 = vmatpush1.bf16.msra.mxu0 0
  %372 = vmatprep.subr.bf16.mxu0 0
  %373 = vmatpush1.bf16.msra.mxu0 0
  %374 = vmatprep.subr.bf16.mxu0 0
  %375 = vmatpush1.bf16.msra.mxu0 0
  %376 = vmatprep.subr.bf16.mxu0 0
  %377 = vmatpush1.bf16.msra.mxu0 0
  %378 = vmatprep.subr.bf16.mxu0 0
  %379 = vmatpush1.bf16.msra.mxu0 0
  %380 = vmatprep.mubr.bf16.mxu0 0
  %381 = vmatmul.mubr.bf16.gmra.mrb[0].mxu0 %v346
  %v382 = vpop.f32.mrb[0].mxu0
  %v383 = vadd.f32 0.0, %v382
  %v384 = vpop.f32.mrb[0].mxu0
  %v385 = vpop.f32.mrb[0].mxu0
  %v386 = vadd.f32 0.0, %v385
  %v387 = vpop.f32.mrb[0].mxu0
  %388 = vdwg.mxu0
  %391 = vrot.lane.b32.xlu0 %v383, 16
  %v392 = vpop.permute.xlu0 %391
  %393 = vrot.lane.b32.xlu0 %v386, 16
  %v394 = vpop.permute.xlu0 %393
  %v397 = vsel %vm142, %v258, %v392
  %v398 = vsel %vm142, %v261, %v394
  %v399 = vpack.c.bf16 %v398, %v397
  %v400 = vld [vmem:[%s7] sm:$0xf]
  %v401 = vld [vmem:[%s7 + $0x4] sm:$0xf]
  %v402 = vld [vmem:[%s7 + $0x8] sm:$0xf]
  %v403 = vld [vmem:[%s7 + $0xc] sm:$0xf]
  %v404 = vld [vmem:[%s8] sm:$0x1]
  %v406 = vlaneseq
  %v407 = vshrl.u32 %v406, 7
  %v408 = vsub.s32 0, %v407
  %v409 = vrot.slane %v404, %v408
  %v415 = vunpack.c.l.b16 %v400
  %v416 = vunpack.c.l.b16 %v401
  %v417 = vunpack.c.l.b16 %v402
  %v418 = vunpack.c.l.b16 %v403
  %v419 = vpack.c.b16 %v416, %v415
  %v420 = vpack.c.b16 %v418, %v417
  %v424 = vsel %vm93, %v399, 0
  %426 = vmatprep.subr.bf16.mxu0 0
  %427 = vmatpush1.bf16.msra.mxu0 %v419
  %428 = vmatprep.subr.bf16.mxu0 0
  %429 = vmatpush1.bf16.msra.mxu0 %v420
  %430 = vmatprep.subr.bf16.mxu0 0
  %431 = vmatpush1.bf16.msra.mxu0 0
  %432 = vmatprep.subr.bf16.mxu0 0
  %433 = vmatpush1.bf16.msra.mxu0 0
  %434 = vmatprep.subr.bf16.mxu0 0
  %435 = vmatpush1.bf16.msra.mxu0 0
  %436 = vmatprep.subr.bf16.mxu0 0
  %437 = vmatpush1.bf16.msra.mxu0 0
  %438 = vmatprep.subr.bf16.mxu0 0
  %439 = vmatpush1.bf16.msra.mxu0 0
  %440 = vmatprep.subr.bf16.mxu0 0
  %441 = vmatpush1.bf16.msra.mxu0 0
  %442 = vmatprep.subr.bf16.mxu0 0
  %443 = vmatpush1.bf16.msra.mxu0 0
  %444 = vmatprep.subr.bf16.mxu0 0
  %445 = vmatpush1.bf16.msra.mxu0 0
  %446 = vmatprep.subr.bf16.mxu0 0
  %447 = vmatpush1.bf16.msra.mxu0 0
  %448 = vmatprep.subr.bf16.mxu0 0
  %449 = vmatpush1.bf16.msra.mxu0 0
  %450 = vmatprep.subr.bf16.mxu0 0
  %451 = vmatpush1.bf16.msra.mxu0 0
  %452 = vmatprep.subr.bf16.mxu0 0
  %453 = vmatpush1.bf16.msra.mxu0 0
  %454 = vmatprep.subr.bf16.mxu0 0
  %455 = vmatpush1.bf16.msra.mxu0 0
  %456 = vmatprep.subr.bf16.mxu0 0
  %457 = vmatpush1.bf16.msra.mxu0 0
  %458 = vmatprep.mubr.bf16.mxu0 0
  %459 = vmatmul.mubr.bf16.gmra.mrb[0].mxu0 %v424
  %v460 = vpop.f32.mrb[0].mxu0
  %v461 = vadd.f32 %v409, %v460
  %v462 = vpop.f32.mrb[0].mxu0
  %v463 = vpop.f32.mrb[0].mxu0
  %v464 = vadd.f32 %v409, %v463
  %v465 = vpop.f32.mrb[0].mxu0
  %466 = vdwg.mxu0
  %v467 = vadd.f32 %v65, %v461
  %v468 = vadd.f32 %v66, %v464
  %v469 = vld [vmem:[%s13] sm:$0x1]
  %v470 = vld [vmem:[%s14] sm:$0x1]
  %v471 = vsel %vm93, %v467, 0.0
  %472 = vadd.xlane.f32.xlu0 %v471
  %v473 = vpop.xlane.xlu0 %472
  %v474 = vsel %vm93, %v468, 0.0
  %475 = vadd.xlane.f32.xlu0 %v474
  %v476 = vpop.xlane.xlu0 %475
  %v477 = vrcp.pop 32.0
  %v478 = vmul.f32 %v473, %v477
  %v479 = vmul.f32 %v476, %v477
  %v480 = vsub.f32 %v467, %v478
  %v481 = vsub.f32 %v468, %v479
  %v482 = vmul.f32 %v480, %v480
  %v483 = vmul.f32 %v481, %v481
  %v484 = vsel %vm93, %v482, 0.0
  %485 = vadd.xlane.f32.xlu0 %v484
  %v486 = vpop.xlane.xlu0 %485
  %v487 = vsel %vm93, %v483, 0.0
  %488 = vadd.xlane.f32.xlu0 %v487
  %v489 = vpop.xlane.xlu0 %488
  %v490 = vmul.f32 %v486, %v477
  %v491 = vmul.f32 %v489, %v477
  %v492 = vadd.f32 %v490, 1e-05
  %v493 = vadd.f32 %v491, 1e-05
  %v494 = vrsqrt.pop %v492
  %v495 = vrsqrt.pop %v493
  %v496 = vmul.f32 %v480, %v494
  %v497 = vmul.f32 %v481, %v495
  %v499 = vlaneseq
  %v500 = vshrl.u32 %v499, 7
  %v501 = vsub.s32 0, %v500
  %v502 = vrot.slane %v469, %v501
  %v504 = vmul.f32 %v496, %v502
  %v505 = vmul.f32 %v497, %v502
  %v507 = vlaneseq
  %v508 = vshrl.u32 %v507, 7
  %v509 = vsub.s32 0, %v508
  %v510 = vrot.slane %v470, %v509
  %v512 = vadd.f32 %v504, %v510
  %v513 = vadd.f32 %v505, %v510
  %v514 = vpack.c.bf16 %v513, %v512
  %v515 = vld [vmem:[%s9] sm:$0xf]
  %v516 = vld [vmem:[%s9 + $0x4] sm:$0xf]
  %v517 = vld [vmem:[%s9 + $0x8] sm:$0xf]
  %v518 = vld [vmem:[%s9 + $0xc] sm:$0xf]
  %v519 = vld [vmem:[%s10] sm:$0x1]
  %v521 = vlaneseq
  %v522 = vshrl.u32 %v521, 7
  %v523 = vsub.s32 0, %v522
  %v524 = vrot.slane %v519, %v523
  %v530 = vunpack.c.l.b16 %v515
  %v531 = vunpack.c.l.b16 %v516
  %v532 = vunpack.c.l.b16 %v517
  %v533 = vunpack.c.l.b16 %v518
  %v534 = vpack.c.b16 %v531, %v530
  %v535 = vpack.c.b16 %v533, %v532
  %v539 = vsel %vm93, %v514, 0
  %541 = vmatprep.subr.bf16.mxu0 0
  %542 = vmatpush1.bf16.msra.mxu0 %v534
  %543 = vmatprep.subr.bf16.mxu0 0
  %544 = vmatpush1.bf16.msra.mxu0 %v535
  %545 = vmatprep.subr.bf16.mxu0 0
  %546 = vmatpush1.bf16.msra.mxu0 0
  %547 = vmatprep.subr.bf16.mxu0 0
  %548 = vmatpush1.bf16.msra.mxu0 0
  %549 = vmatprep.subr.bf16.mxu0 0
  %550 = vmatpush1.bf16.msra.mxu0 0
  %551 = vmatprep.subr.bf16.mxu0 0
  %552 = vmatpush1.bf16.msra.mxu0 0
  %553 = vmatprep.subr.bf16.mxu0 0
  %554 = vmatpush1.bf16.msra.mxu0 0
  %555 = vmatprep.subr.bf16.mxu0 0
  %556 = vmatpush1.bf16.msra.mxu0 0
  %557 = vmatprep.subr.bf16.mxu0 0
  %558 = vmatpush1.bf16.msra.mxu0 0
  %559 = vmatprep.subr.bf16.mxu0 0
  %560 = vmatpush1.bf16.msra.mxu0 0
  %561 = vmatprep.subr.bf16.mxu0 0
  %562 = vmatpush1.bf16.msra.mxu0 0
  %563 = vmatprep.subr.bf16.mxu0 0
  %564 = vmatpush1.bf16.msra.mxu0 0
  %565 = vmatprep.subr.bf16.mxu0 0
  %566 = vmatpush1.bf16.msra.mxu0 0
  %567 = vmatprep.subr.bf16.mxu0 0
  %568 = vmatpush1.bf16.msra.mxu0 0
  %569 = vmatprep.subr.bf16.mxu0 0
  %570 = vmatpush1.bf16.msra.mxu0 0
  %571 = vmatprep.subr.bf16.mxu0 0
  %572 = vmatpush1.bf16.msra.mxu0 0
  %573 = vmatprep.mubr.bf16.mxu0 0
  %574 = vmatmul.mubr.bf16.gmra.mrb[0].mxu0 %v539
  %v575 = vpop.f32.mrb[0].mxu0
  %v576 = vadd.f32 %v524, %v575
  %v577 = vpop.f32.mrb[0].mxu0
  %v578 = vpop.f32.mrb[0].mxu0
  %v579 = vadd.f32 %v524, %v578
  %v580 = vpop.f32.mrb[0].mxu0
  %581 = vdwg.mxu0
  %v582 = vmax.f32 %v576, 0.0
  %v583 = vmax.f32 %v579, 0.0
  %v584 = vpack.c.bf16 %v583, %v582
  %v585 = vld [vmem:[%s11] sm:$0xf]
  %v586 = vld [vmem:[%s11 + $0x4] sm:$0xf]
  %v587 = vld [vmem:[%s11 + $0x8] sm:$0xf]
  %v588 = vld [vmem:[%s11 + $0xc] sm:$0xf]
  %v589 = vld [vmem:[%s11 + $0x10] sm:$0xf]
  %v590 = vld [vmem:[%s11 + $0x14] sm:$0xf]
  %v591 = vld [vmem:[%s11 + $0x18] sm:$0xf]
  %v592 = vld [vmem:[%s11 + $0x1c] sm:$0xf]
  %v593 = vld [vmem:[%s11 + $0x20] sm:$0xf]
  %v594 = vld [vmem:[%s11 + $0x24] sm:$0xf]
  %v595 = vld [vmem:[%s11 + $0x28] sm:$0xf]
  %v596 = vld [vmem:[%s11 + $0x2c] sm:$0xf]
  %v597 = vld [vmem:[%s11 + $0x30] sm:$0xf]
  %v598 = vld [vmem:[%s11 + $0x34] sm:$0xf]
  %v599 = vld [vmem:[%s11 + $0x38] sm:$0xf]
  %v600 = vld [vmem:[%s11 + $0x3c] sm:$0xf]
  %v601 = vld [vmem:[%s12] sm:$0x1]
  %v603 = vlaneseq
  %v604 = vshrl.u32 %v603, 7
  %v605 = vsub.s32 0, %v604
  %v606 = vrot.slane %v601, %v605
  %v624 = vunpack.c.l.b16 %v585
  %v625 = vunpack.c.l.b16 %v586
  %v626 = vunpack.c.l.b16 %v587
  %v627 = vunpack.c.l.b16 %v588
  %v628 = vunpack.c.l.b16 %v589
  %v629 = vunpack.c.l.b16 %v590
  %v630 = vunpack.c.l.b16 %v591
  %v631 = vunpack.c.l.b16 %v592
  %v632 = vunpack.c.l.b16 %v593
  %v633 = vunpack.c.l.b16 %v594
  %v634 = vunpack.c.l.b16 %v595
  %v635 = vunpack.c.l.b16 %v596
  %v636 = vunpack.c.l.b16 %v597
  %v637 = vunpack.c.l.b16 %v598
  %v638 = vunpack.c.l.b16 %v599
  %v639 = vunpack.c.l.b16 %v600
  %v640 = vpack.c.b16 %v625, %v624
  %v641 = vpack.c.b16 %v627, %v626
  %v642 = vpack.c.b16 %v629, %v628
  %v643 = vpack.c.b16 %v631, %v630
  %v644 = vpack.c.b16 %v633, %v632
  %v645 = vpack.c.b16 %v635, %v634
  %v646 = vpack.c.b16 %v637, %v636
  %v647 = vpack.c.b16 %v639, %v638
  %656 = vmatprep.subr.bf16.mxu0 0
  %657 = vmatpush1.bf16.msra.mxu0 %v640
  %658 = vmatprep.subr.bf16.mxu0 0
  %659 = vmatpush1.bf16.msra.mxu0 %v641
  %660 = vmatprep.subr.bf16.mxu0 0
  %661 = vmatpush1.bf16.msra.mxu0 %v642
  %662 = vmatprep.subr.bf16.mxu0 0
  %663 = vmatpush1.bf16.msra.mxu0 %v643
  %664 = vmatprep.subr.bf16.mxu0 0
  %665 = vmatpush1.bf16.msra.mxu0 %v644
  %666 = vmatprep.subr.bf16.mxu0 0
  %667 = vmatpush1.bf16.msra.mxu0 %v645
  %668 = vmatprep.subr.bf16.mxu0 0
  %669 = vmatpush1.bf16.msra.mxu0 %v646
  %670 = vmatprep.subr.bf16.mxu0 0
  %671 = vmatpush1.bf16.msra.mxu0 %v647
  %672 = vmatprep.subr.bf16.mxu0 0
  %673 = vmatpush1.bf16.msra.mxu0 0
  %674 = vmatprep.subr.bf16.mxu0 0
  %675 = vmatpush1.bf16.msra.mxu0 0
  %676 = vmatprep.subr.bf16.mxu0 0
  %677 = vmatpush1.bf16.msra.mxu0 0
  %678 = vmatprep.subr.bf16.mxu0 0
  %679 = vmatpush1.bf16.msra.mxu0 0
  %680 = vmatprep.subr.bf16.mxu0 0
  %681 = vmatpush1.bf16.msra.mxu0 0
  %682 = vmatprep.subr.bf16.mxu0 0
  %683 = vmatpush1.bf16.msra.mxu0 0
  %684 = vmatprep.subr.bf16.mxu0 0
  %685 = vmatpush1.bf16.msra.mxu0 0
  %686 = vmatprep.subr.bf16.mxu0 0
  %687 = vmatpush1.bf16.msra.mxu0 0
  %688 = vmatprep.mubr.bf16.mxu0 0
  %689 = vmatmul.mubr.bf16.gmra.mrb[0].mxu0 %v584
  %v690 = vpop.f32.mrb[0].mxu0
  %v691 = vadd.f32 %v606, %v690
  %v692 = vpop.f32.mrb[0].mxu0
  %v693 = vpop.f32.mrb[0].mxu0
  %v694 = vadd.f32 %v606, %v693
  %v695 = vpop.f32.mrb[0].mxu0
  %696 = vdwg.mxu0
  %v697 = vadd.f32 %v512, %v691
  %v698 = vadd.f32 %v513, %v694
  %v699 = vld [vmem:[%s15] sm:$0x1]
  %v700 = vld [vmem:[%s16] sm:$0x1]
  %v701 = vsel %vm93, %v697, 0.0
  %702 = vadd.xlane.f32.xlu0 %v701
  %v703 = vpop.xlane.xlu0 %702
  %v704 = vsel %vm93, %v698, 0.0
  %705 = vadd.xlane.f32.xlu0 %v704
  %v706 = vpop.xlane.xlu0 %705
  %v707 = vmul.f32 %v703, %v477
  %v708 = vmul.f32 %v706, %v477
  %v709 = vsub.f32 %v697, %v707
  %v710 = vsub.f32 %v698, %v708
  %v711 = vmul.f32 %v709, %v709
  %v712 = vmul.f32 %v710, %v710
  %v713 = vsel %vm93, %v711, 0.0
  %714 = vadd.xlane.f32.xlu0 %v713
  %v715 = vpop.xlane.xlu0 %714
  %v716 = vsel %vm93, %v712, 0.0
  %717 = vadd.xlane.f32.xlu0 %v716
  %v718 = vpop.xlane.xlu0 %717
  %v719 = vmul.f32 %v715, %v477
  %v720 = vmul.f32 %v718, %v477
  %v721 = vadd.f32 %v719, 1e-05
  %v722 = vadd.f32 %v720, 1e-05
  %v723 = vrsqrt.pop %v721
  %v724 = vrsqrt.pop %v722
  %v725 = vmul.f32 %v709, %v723
  %v726 = vmul.f32 %v710, %v724
  %v728 = vlaneseq
  %v729 = vshrl.u32 %v728, 7
  %v730 = vsub.s32 0, %v729
  %v731 = vrot.slane %v699, %v730
  %v733 = vmul.f32 %v725, %v731
  %v734 = vmul.f32 %v726, %v731
  %v736 = vlaneseq
  %v737 = vshrl.u32 %v736, 7
  %v738 = vsub.s32 0, %v737
  %v739 = vrot.slane %v700, %v738
  %v741 = vadd.f32 %v733, %v739
  %v742 = vadd.f32 %v734, %v739
  %v743 = vpack.c.bf16 %v742, %v741
  %v744 = vld [vmem:[%s3] sm:$0xf]
  %v745 = vld [vmem:[%s3 + $0x4] sm:$0xf]
  %v746 = vld [vmem:[%s3 + $0x8] sm:$0xf]
  %v747 = vld [vmem:[%s3 + $0xc] sm:$0xf]
  %v748 = vld [vmem:[%s4] sm:$0x1]
  %v750 = vlaneseq
  %v751 = vshrl.u32 %v750, 7
  %v752 = vsub.s32 0, %v751
  %v753 = vrot.slane %v748, %v752
  %v759 = vunpack.c.l.b16 %v744
  %v760 = vunpack.c.l.b16 %v745
  %v761 = vunpack.c.l.b16 %v746
  %v762 = vunpack.c.l.b16 %v747
  %v763 = vpack.c.b16 %v760, %v759
  %v764 = vpack.c.b16 %v762, %v761
  %v768 = vsel %vm93, %v743, 0
  %770 = vmatprep.subr.bf16.mxu0 0
  %771 = vmatpush1.bf16.msra.mxu0 %v763
  %772 = vmatprep.subr.bf16.mxu0 0
  %773 = vmatpush1.bf16.msra.mxu0 %v764
  %774 = vmatprep.subr.bf16.mxu0 0
  %775 = vmatpush1.bf16.msra.mxu0 0
  %776 = vmatprep.subr.bf16.mxu0 0
  %777 = vmatpush1.bf16.msra.mxu0 0
  %778 = vmatprep.subr.bf16.mxu0 0
  %779 = vmatpush1.bf16.msra.mxu0 0
  %780 = vmatprep.subr.bf16.mxu0 0
  %781 = vmatpush1.bf16.msra.mxu0 0
  %782 = vmatprep.subr.bf16.mxu0 0
  %783 = vmatpush1.bf16.msra.mxu0 0
  %784 = vmatprep.subr.bf16.mxu0 0
  %785 = vmatpush1.bf16.msra.mxu0 0
  %786 = vmatprep.subr.bf16.mxu0 0
  %787 = vmatpush1.bf16.msra.mxu0 0
  %788 = vmatprep.subr.bf16.mxu0 0
  %789 = vmatpush1.bf16.msra.mxu0 0
  %790 = vmatprep.subr.bf16.mxu0 0
  %791 = vmatpush1.bf16.msra.mxu0 0
  %792 = vmatprep.subr.bf16.mxu0 0
  %793 = vmatpush1.bf16.msra.mxu0 0
  %794 = vmatprep.subr.bf16.mxu0 0
  %795 = vmatpush1.bf16.msra.mxu0 0
  %796 = vmatprep.subr.bf16.mxu0 0
  %797 = vmatpush1.bf16.msra.mxu0 0
  %798 = vmatprep.subr.bf16.mxu0 0
  %799 = vmatpush1.bf16.msra.mxu0 0
  %800 = vmatprep.subr.bf16.mxu0 0
  %801 = vmatpush1.bf16.msra.mxu0 0
  %802 = vmatprep.mubr.bf16.mxu0 0
  %803 = vmatmul.mubr.bf16.gmra.mrb[0].mxu0 %v768
  %v804 = vpop.f32.mrb[0].mxu0
  %v805 = vadd.f32 %v753, %v804
  %v806 = vpop.f32.mrb[0].mxu0
  %v807 = vpop.f32.mrb[0].mxu0
  %v808 = vadd.f32 %v753, %v807
  %v809 = vpop.f32.mrb[0].mxu0
  %810 = vdwg.mxu0
  %811 = vst [vmem:[%s17] sm:$0xff] %v805
  %812 = vst [vmem:[%s17 + $0x8] sm:$0xff] %v808
  // Predicated region
  $region70: #{forward.11} parent=0 // pred_check
    _
  $region71: #{forward.11} parent=0 // pred_check_branch
    %814 = sbr.rel (0) target = $region73
  $region72: #{forward.11} parent=0 // pred_region
    _
  $region73: #{forward.11} parent=0 // pred_fallthru
    _
  // Predicated region
  $region74: #{forward.11} parent=0 // pred_check
    _
  $region75: #{forward.11} parent=0 // pred_check_branch
    %816 = sbr.rel (0) target = $region77
  $region76: #{forward.11} parent=0 // pred_region
    _
  $region77: #{forward.11} parent=0 // pred_fallthru
    _

// kernel: forward.10
$region0: #{forward.10}
  #allocation0 [shape = 'u32[]', space=smem, size = 0x4, offset = 0x4, fixed_abs, tag = 'smem constant byte address 0x4 - core index']
  #allocation1 [shape = 'u32[144,128]{1,0:T(1,128)}', space=vmem, size = 0x12000, scoped, tag = 'internal scratch']
  %s0 = inlined_call_operand.vmem [shape: bf16[8,64], index: 0, kind: input, shape index: {}]
  %s1 = inlined_call_operand.vmem [shape: bf16[8,64], index: 1, kind: input, shape index: {}]
  %s2 = inlined_call_operand.vmem [shape: f32[8,8], index: 2, kind: input, shape index: {}]
  %s3 = inlined_call_operand.vmem [shape: f32[1,64], index: 3, kind: input, shape index: {}]
  %s4 = inlined_call_operand.vmem [shape: f32[1,64], index: 4, kind: input, shape index: {}]
  %s5 = inlined_call_operand.vmem [shape: bf16[64,64], index: 5, kind: input, shape index: {}]
  %s6 = inlined_call_operand.vmem [shape: f32[1,64], index: 6, kind: input, shape index: {}]
  %s7 = inlined_call_operand.vmem [shape: bf16[64,192], index: 7, kind: input, shape index: {}]
  %s8 = inlined_call_operand.vmem [shape: f32[1,192], index: 8, kind: input, shape index: {}]
  %s9 = inlined_call_operand.vmem [shape: bf16[64,64], index: 9, kind: input, shape index: {}]
  %s10 = inlined_call_operand.vmem [shape: f32[1,64], index: 10, kind: input, shape index: {}]
  %s11 = inlined_call_operand.vmem [shape: bf16[64,256], index: 11, kind: input, shape index: {}]
  %s12 = inlined_call_operand.vmem [shape: f32[1,256], index: 12, kind: input, shape index: {}]
  %s13 = inlined_call_operand.vmem [shape: bf16[256,64], index: 13, kind: input, shape index: {}]
  %s14 = inlined_call_operand.vmem [shape: f32[1,64], index: 14, kind: input, shape index: {}]
  %s15 = inlined_call_operand.vmem [shape: f32[1,64], index: 15, kind: input, shape index: {}]
  %s16 = inlined_call_operand.hbm [shape: f32[1,64], index: 16, kind: input, shape index: {}]
  %s17 = inlined_call_operand.hbm [shape: f32[1,64], index: 17, kind: input, shape index: {}]
  %s18 = inlined_call_operand.hbm [shape: f32[1,64], index: 18, kind: input, shape index: {}]
  %s19 = inlined_call_operand.vmem [shape: bf16[8,64], index: 19, kind: output, shape index: {}]
  %s20 = sld [smem:[#allocation0]]
  $region98: #{forward.10} parent=0
    _
  %s22 = ssub.s32 1, %s20
  %s23 = scalar_select 0, %s22, %s20
  $region1: #{forward.10} parent=0
    #allocation2 [shape = 'u8[512]{0}', space=vmem, size = 0x400, scoped, tag = 'input window, operand 16, single buffered']
    #allocation3 [shape = 's32[1]{0}', space=sflag, size = 0x4, scoped, tag = 'scoped memory for forward.10']
    #allocation4 [shape = 'u8[512]{0}', space=vmem, size = 0x400, scoped, tag = 'input window, operand 17, single buffered']
    #allocation5 [shape = 's32[1]{0}', space=sflag, size = 0x4, scoped, tag = 'scoped memory for forward.10']
    #allocation6 [shape = 'u8[512]{0}', space=vmem, size = 0x400, scoped, tag = 'input window, operand 18, single buffered']
    %24 = vsyncpa [#allocation3], 0
    %25 = vsyncpa [#allocation5], 0
    // Predicated region
    $region2: #{forward.10} parent=1 // pred_check
      _
    $region3: #{forward.10} parent=1 // pred_check_branch
      %27 = sbr.rel (0) target = $region5
    $region4: #{forward.10} parent=1 // pred_region
      _
    $region5: #{forward.10} parent=1 // pred_fallthru
      _
    // Predicated region
    $region6: #{forward.10} parent=1 // pred_check
      _
    $region7: #{forward.10} parent=1 // pred_check_branch
      %29 = sbr.rel (0) target = $region9
    $region8: #{forward.10} parent=1 // pred_region
      _
    $region9: #{forward.10} parent=1 // pred_fallthru
      _
    // Predicated region
    $region10: #{forward.10} parent=1 // pred_check
      _
    $region11: #{forward.10} parent=1 // pred_check_branch
      %31 = sbr.rel (0) target = $region13
    $region12: #{forward.10} parent=1 // pred_region
      _
    $region13: #{forward.10} parent=1 // pred_fallthru
      _
    // Predicated region
    $region14: #{forward.10} parent=1 // pred_check
      _
    $region15: #{forward.10} parent=1 // pred_check_branch
      %33 = sbr.rel (0) target = $region17
    $region16: #{forward.10} parent=1 // pred_region
      _
    $region17: #{forward.10} parent=1 // pred_fallthru
      _
    // Predicated region
    $region18: #{forward.10} parent=1 // pred_check
      _
    $region19: #{forward.10} parent=1 // pred_check_branch
      %35 = sbr.rel (0) target = $region21
    $region20: #{forward.10} parent=1 // pred_region
      _
    $region21: #{forward.10} parent=1 // pred_fallthru
      _
    // Predicated region
    $region22: #{forward.10} parent=1 // pred_check
      _
    $region23: #{forward.10} parent=1 // pred_check_branch
      %37 = sbr.rel (0) target = $region25
    $region24: #{forward.10} parent=1 // pred_region
      _
    $region25: #{forward.10} parent=1 // pred_fallthru
      _
    // Predicated region
    $region26: #{forward.10} parent=1 // pred_check
      _
    $region27: #{forward.10} parent=1 // pred_check_branch
      %39 = sbr.rel (0) target = $region29
    $region28: #{forward.10} parent=1 // pred_region
      _
    $region29: #{forward.10} parent=1 // pred_fallthru
      _
    // Predicated region
    $region30: #{forward.10} parent=1 // pred_check
      _
    $region31: #{forward.10} parent=1 // pred_check_branch
      %41 = sbr.rel (0) target = $region33
    $region32: #{forward.10} parent=1 // pred_region
      _
    $region33: #{forward.10} parent=1 // pred_fallthru
      _
    // Predicated region
    $region34: #{forward.10} parent=1 // pred_check
      _
    $region35: #{forward.10} parent=1 // pred_check_branch
      %43 = sbr.rel (0) target = $region37
    $region36: #{forward.10} parent=1 // pred_region
      _
    $region37: #{forward.10} parent=1 // pred_fallthru
      _
    // Predicated region
    $region38: #{forward.10} parent=1 // pred_check
      _
    $region39: #{forward.10} parent=1 // pred_check_branch
      %45 = sbr.rel (0) target = $region41
    $region40: #{forward.10} parent=1 // pred_region
      _
    $region41: #{forward.10} parent=1 // pred_fallthru
      _
    // Predicated region
    $region42: #{forward.10} parent=1 // pred_check
      _
    $region43: #{forward.10} parent=1 // pred_check_branch
      %47 = sbr.rel (0) target = $region45
    $region44: #{forward.10} parent=1 // pred_region
      _
    $region45: #{forward.10} parent=1 // pred_fallthru
      _
    // Predicated region
    $region46: #{forward.10} parent=1 // pred_check
      _
    $region47: #{forward.10} parent=1 // pred_check_branch
      %49 = sbr.rel (0) target = $region49
    $region48: #{forward.10} parent=1 // pred_region
      _
    $region49: #{forward.10} parent=1 // pred_fallthru
      _
    // Predicated region
    $region50: #{forward.10} parent=1 // pred_check
      _
    $region51: #{forward.10} parent=1 // pred_check_branch
      %51 = sbr.rel (0) target = $region53
    $region52: #{forward.10} parent=1 // pred_region
      _
    $region53: #{forward.10} parent=1 // pred_fallthru
      _
    // Predicated region
    $region54: #{forward.10} parent=1 // pred_check
      _
    $region55: #{forward.10} parent=1 // pred_check_branch
      %53 = sbr.rel (0) target = $region57
    $region56: #{forward.10} parent=1 // pred_region
      _
    $region57: #{forward.10} parent=1 // pred_fallthru
      _
    // Predicated region
    $region58: #{forward.10} parent=1 // pred_check
      _
    $region59: #{forward.10} parent=1 // pred_check_branch
      %55 = sbr.rel (0) target = $region61
    $region60: #{forward.10} parent=1 // pred_region
      _
    $region61: #{forward.10} parent=1 // pred_fallthru
      _
    // Predicated region
    $region62: #{forward.10} parent=1 // pred_check
      _
    $region63: #{forward.10} parent=1 // pred_check_branch
      %57 = sbr.rel (0) target = $region65
    $region64: #{forward.10} parent=1 // pred_region
      _
    $region65: #{forward.10} parent=1 // pred_fallthru
      _
    // Predicated region
    $region66: #{forward.10} parent=1 // pred_check
      _
    $region67: #{forward.10} parent=1 // pred_check_branch
      %59 = sbr.rel (0) target = $region69
    $region68: #{forward.10} parent=1 // pred_region
      %s61 = ssub.s32 16, 16
      %62 = vsyncadd [#allocation3], %s61
      %s64 = sshll.u32 [#allocation2], 4
      %s65 = int_to_ptr.vmem [resolvable:$true] %s64
      %67 = dma.hbm_to_vmem [thread:$0]  %s16, 16, %s65, [#allocation3]
    $region69: #{forward.10} parent=1 // pred_fallthru
      _
    // Predicated region
    $region70: #{forward.10} parent=1 // pred_check
      _
    $region71: #{forward.10} parent=1 // pred_check_branch
      %69 = sbr.rel (0) target = $region73
    $region72: #{forward.10} parent=1 // pred_region
      %s71 = ssub.s32 16, 16
      %72 = vsyncadd [#allocation5], %s71
      %s74 = sshll.u32 [#allocation4], 4
      %s75 = int_to_ptr.vmem [resolvable:$true] %s74
      %77 = dma.hbm_to_vmem [thread:$0]  %s17, 16, %s75, [#allocation5]
    $region73: #{forward.10} parent=1 // pred_fallthru
      _
    // Predicated region
    $region74: #{forward.10} parent=1 // pred_check
      _
    $region75: #{forward.10} parent=1 // pred_check_branch
      %79 = sbr.rel (0) target = $region77
    $region76: #{forward.10} parent=1 // pred_region
      %s81 = ssub.s32 16, 16
      %82 = vsyncadd [#allocation5], %s81
      %s84 = sshll.u32 [#allocation6], 4
      %s85 = int_to_ptr.vmem [resolvable:$true] %s84
      %87 = dma.hbm_to_vmem [thread:$0]  %s18, 16, %s85, [#allocation5]
    $region77: #{forward.10} parent=1 // pred_fallthru
      _
    // Predicated region
    $region78: #{forward.10} parent=1 // pred_check
      _
    $region79: #{forward.10} parent=1 // pred_check_branch
      %89 = sbr.rel (0) target = $region81
    $region80: #{forward.10} parent=1 // pred_region
      %90 = dma.done [#allocation3], 16
    $region81: #{forward.10} parent=1 // pred_fallthru
      _
    // Predicated region
    $region82: #{forward.10} parent=1 // pred_check
      _
    $region83: #{forward.10} parent=1 // pred_check_branch
      %92 = sbr.rel (0) target = $region85
    $region84: #{forward.10} parent=1 // pred_region
      %93 = dma.done [#allocation5], 16
    $region85: #{forward.10} parent=1 // pred_fallthru
      _
    // Predicated region
    $region86: #{forward.10} parent=1 // pred_check
      _
    $region87: #{forward.10} parent=1 // pred_check_branch
      %95 = sbr.rel (0) target = $region89
    $region88: #{forward.10} parent=1 // pred_region
      %96 = dma.done [#allocation5], 16
    $region89: #{forward.10} parent=1 // pred_fallthru
      _
    %v98 = vld [vmem:[%s0] sm:$0xf]
    %v99 = vunpack.c.l.bf16 %v98
    %v100 = vld [vmem:[%s1] sm:$0xf]
    %v101 = vunpack.c.l.bf16 %v100
    %v102 = vadd.f32 %v99, %v101
    %v103 = vld [vmem:[%s2] sm:$0xff]
    %v104 = vpack.c.bf16 %v102, %v102
    %v105 = vld [vmem:[%s7] sm:$0xff]
    %v106 = vld [vmem:[%s7 + $0x8] sm:$0xff]
    %v107 = vld [vmem:[%s7 + $0x10] sm:$0xff]
    %v108 = vld [vmem:[%s7 + $0x18] sm:$0xff]
    %v109 = vld [vmem:[%s7 + $0x20] sm:$0xff]
    %v110 = vld [vmem:[%s7 + $0x28] sm:$0xff]
    %v111 = vld [vmem:[%s7 + $0x30] sm:$0xff]
    %v112 = vld [vmem:[%s7 + $0x38] sm:$0xff]
    %v113 = vld [vmem:[%s8] sm:$0x3]
    %v115 = vlaneseq
    %v116 = vshrl.u32 %v115, 7
    %v117 = vsub.s32 0, %v116
    %v118 = vrot.slane %v113, %v117
    %v119 = vlaneseq
    %v120 = vshrl.u32 %v119, 7
    %v121 = vsub.s32 1, %v120
    %v122 = vrot.slane %v113, %v121
    %v133 = vunpack.c.l.b16 %v105
    %v134 = vunpack.c.h.b16 %v105
    %v135 = vunpack.c.l.b16 %v106
    %v136 = vunpack.c.h.b16 %v106
    %v137 = vunpack.c.l.b16 %v107
    %v138 = vunpack.c.h.b16 %v107
    %v139 = vunpack.c.l.b16 %v108
    %v140 = vunpack.c.h.b16 %v108
    %v141 = vunpack.c.l.b16 %v109
    %v142 = vunpack.c.h.b16 %v109
    %v143 = vunpack.c.l.b16 %v110
    %v144 = vunpack.c.h.b16 %v110
    %v145 = vunpack.c.l.b16 %v111
    %v146 = vunpack.c.h.b16 %v111
    %v147 = vunpack.c.l.b16 %v112
    %v148 = vunpack.c.h.b16 %v112
    %v149 = vpack.c.b16 %v135, %v133
    %v150 = vpack.c.b16 %v136, %v134
    %v151 = vpack.c.b16 %v139, %v137
    %v152 = vpack.c.b16 %v140, %v138
    %v153 = vpack.c.b16 %v143, %v141
    %v154 = vpack.c.b16 %v144, %v142
    %v155 = vpack.c.b16 %v147, %v145
    %v156 = vpack.c.b16 %v148, %v146
    %vm165 = vcmask 523264
    %v167 = vsel %vm165, %v104, 0
    %169 = vmatprep.subr.bf16.mxu0 %v150
    %170 = vmatpush1.bf16.msra.mxu0 %v149
    %171 = vmatprep.subr.bf16.mxu0 %v152
    %172 = vmatpush1.bf16.msra.mxu0 %v151
    %173 = vmatprep.subr.bf16.mxu0 %v154
    %174 = vmatpush1.bf16.msra.mxu0 %v153
    %175 = vmatprep.subr.bf16.mxu0 %v156
    %176 = vmatpush1.bf16.msra.mxu0 %v155
    %177 = vmatprep.subr.bf16.mxu0 0
    %178 = vmatpush1.bf16.msra.mxu0 0
    %179 = vmatprep.subr.bf16.mxu0 0
    %180 = vmatpush1.bf16.msra.mxu0 0
    %181 = vmatprep.subr.bf16.mxu0 0
    %182 = vmatpush1.bf16.msra.mxu0 0
    %183 = vmatprep.subr.bf16.mxu0 0
    %184 = vmatpush1.bf16.msra.mxu0 0
    %185 = vmatprep.subr.bf16.mxu0 0
    %186 = vmatpush1.bf16.msra.mxu0 0
    %187 = vmatprep.subr.bf16.mxu0 0
    %188 = vmatpush1.bf16.msra.mxu0 0
    %189 = vmatprep.subr.bf16.mxu0 0
    %190 = vmatpush1.bf16.msra.mxu0 0
    %191 = vmatprep.subr.bf16.mxu0 0
    %192 = vmatpush1.bf16.msra.mxu0 0
    %193 = vmatprep.subr.bf16.mxu0 0
    %194 = vmatpush1.bf16.msra.mxu0 0
    %195 = vmatprep.subr.bf16.mxu0 0
    %196 = vmatpush1.bf16.msra.mxu0 0
    %197 = vmatprep.subr.bf16.mxu0 0
    %198 = vmatpush1.bf16.msra.mxu0 0
    %199 = vmatprep.subr.bf16.mxu0 0
    %200 = vmatpush1.bf16.msra.mxu0 0
    %201 = vmatprep.mubr.bf16.mxu0 0
    %202 = vmatmul.mubr.bf16.gmra.mrb[0].mxu0 %v167
    %v203 = vpop.f32.mrb[0].mxu0
    %v204 = vadd.f32 %v118, %v203
    %v205 = vpop.f32.mrb[0].mxu0
    %v206 = vadd.f32 %v122, %v205
    %v207 = vpop.f32.mrb[0].mxu0
    %v208 = vpop.f32.mrb[0].mxu0
    %209 = vdwg.mxu0
    %v210 = vpack.c.bf16 %v204, %v204
    %v211 = vpack.c.bf16 %v206, %v206
    %213 = vrot.lane.b32.xlu0 %v210, 64
    %v214 = vpop.permute.xlu0 %213
    %vm215 = vcmask 130048
    %v217 = vsel %vm215, %v210, 0
    %v220 = vsel %vm215, %v214, 0
    %222 = vmatprep.subr.bf16.mxu0 0
    %223 = vmatpush1.bf16.xpose.msra.mxu0 %v220
    %224 = vmatprep.subr.bf16.mxu0 0
    %225 = vmatpush1.bf16.xpose.msra.mxu0 0
    %226 = vmatprep.subr.bf16.mxu0 0
    %227 = vmatpush1.bf16.xpose.msra.mxu0 0
    %228 = vmatprep.subr.bf16.mxu0 0
    %229 = vmatpush1.bf16.xpose.msra.mxu0 0
    %230 = vmatprep.subr.bf16.mxu0 0
    %231 = vmatpush1.bf16.xpose.msra.mxu0 0
    %232 = vmatprep.subr.bf16.mxu0 0
    %233 = vmatpush1.bf16.xpose.msra.mxu0 0
    %234 = vmatprep.subr.bf16.mxu0 0
    %235 = vmatpush1.bf16.xpose.msra.mxu0 0
    %236 = vmatprep.subr.bf16.mxu0 0
    %237 = vmatpush1.bf16.xpose.msra.mxu0 0
    %238 = vmatprep.subr.bf16.mxu0 0
    %239 = vmatpush1.bf16.xpose.msra.mxu0 0
    %240 = vmatprep.subr.bf16.mxu0 0
    %241 = vmatpush1.bf16.xpose.msra.mxu0 0
    %242 = vmatprep.subr.bf16.mxu0 0
    %243 = vmatpush1.bf16.xpose.msra.mxu0 0
    %244 = vmatprep.subr.bf16.mxu0 0
    %245 = vmatpush1.bf16.xpose.msra.mxu0 0
    %246 = vmatprep.subr.bf16.mxu0 0
    %247 = vmatpush1.bf16.xpose.msra.mxu0 0
    %248 = vmatprep.subr.bf16.mxu0 0
    %249 = vmatpush1.bf16.xpose.msra.mxu0 0
    %250 = vmatprep.subr.bf16.mxu0 0
    %251 = vmatpush1.bf16.xpose.msra.mxu0 0
    %252 = vmatprep.subr.bf16.mxu0 0
    %253 = vmatpush1.bf16.xpose.msra.mxu0 0
    %254 = vmatprep.mubr.bf16.mxu0 0
    %255 = vmatmul.mubr.bf16.gmra.mrb[0].mxu0 %v217
    %v256 = vpop.f32.mrb[0].mxu0
    %v257 = vadd.f32 0.0, %v256
    %v258 = vpop.f32.mrb[0].mxu0
    %v259 = vpop.f32.mrb[0].mxu0
    %v260 = vpop.f32.mrb[0].mxu0
    %261 = vdwg.mxu0
    %v262 = vmul.f32 %v257, 0.25
    %v263 = vadd.f32 %v262, %v103
    %vm264 = vcmask 64512
    %v265 = vsel %vm264, %v263, -inf
    %266 = vmax.xlane.f32.xlu0 %v265
    %v267 = vpop.xlane.xlu0 %266
    %v268 = vsub.f32 %v263, %v267
    %v269 = vmul.f32 %v268, 1.442695
    %v270 = vpow.pop %v269
    %v271 = vsel %vm264, %v270, 0.0
    %272 = vadd.xlane.f32.xlu0 %v271
    %v273 = vpop.xlane.xlu0 %272
    %v274 = vrcp.pop %v273
    %v275 = vmul.f32 %v270, %v274
    %v276 = vpack.c.bf16 %v275, %v275
    %v278 = vsel %vm264, %v276, 0
    %vm280 = vcmask 1043456
    %v282 = vsel %vm280, %v211, 0
    %284 = vmatprep.subr.bf16.mxu0 0
    %285 = vmatpush1.bf16.msra.mxu0 %v282
    %286 = vmatprep.subr.bf16.mxu0 0
    %287 = vmatpush1.bf16.msra.mxu0 0
    %288 = vmatprep.subr.bf16.mxu0 0
    %289 = vmatpush1.bf16.msra.mxu0 0
    %290 = vmatprep.subr.bf16.mxu0 0
    %291 = vmatpush1.bf16.msra.mxu0 0
    %292 = vmatprep.subr.bf16.mxu0 0
    %293 = vmatpush1.bf16.msra.mxu0 0
    %294 = vmatprep.subr.bf16.mxu0 0
    %295 = vmatpush1.bf16.msra.mxu0 0
    %296 = vmatprep.subr.bf16.mxu0 0
    %297 = vmatpush1.bf16.msra.mxu0 0
    %298 = vmatprep.subr.bf16.mxu0 0
    %299 = vmatpush1.bf16.msra.mxu0 0
    %300 = vmatprep.subr.bf16.mxu0 0
    %301 = vmatpush1.bf16.msra.mxu0 0
    %302 = vmatprep.subr.bf16.mxu0 0
    %303 = vmatpush1.bf16.msra.mxu0 0
    %304 = vmatprep.subr.bf16.mxu0 0
    %305 = vmatpush1.bf16.msra.mxu0 0
    %306 = vmatprep.subr.bf16.mxu0 0
    %307 = vmatpush1.bf16.msra.mxu0 0
    %308 = vmatprep.subr.bf16.mxu0 0
    %309 = vmatpush1.bf16.msra.mxu0 0
    %310 = vmatprep.subr.bf16.mxu0 0
    %311 = vmatpush1.bf16.msra.mxu0 0
    %312 = vmatprep.subr.bf16.mxu0 0
    %313 = vmatpush1.bf16.msra.mxu0 0
    %314 = vmatprep.subr.bf16.mxu0 0
    %315 = vmatpush1.bf16.msra.mxu0 0
    %316 = vmatprep.mubr.bf16.mxu0 0
    %317 = vmatmul.mubr.bf16.gmra.mrb[0].mxu0 %v278
    %v318 = vpop.f32.mrb[0].mxu0
    %v319 = vadd.f32 0.0, %v318
    %v320 = vpop.f32.mrb[0].mxu0
    %v321 = vpop.f32.mrb[0].mxu0
    %v322 = vpop.f32.mrb[0].mxu0
    %323 = vdwg.mxu0
    %324 = vrot.lane.b32.xlu0 %v210, 112
    %v325 = vpop.permute.xlu0 %324
    %326 = vrot.lane.b32.xlu0 %v210, 48
    %v327 = vpop.permute.xlu0 %326
    %v329 = vsel %vm215, %v325, 0
    %v332 = vsel %vm215, %v327, 0
    %334 = vmatprep.subr.bf16.mxu0 0
    %335 = vmatpush1.bf16.xpose.msra.mxu0 %v332
    %336 = vmatprep.subr.bf16.mxu0 0
    %337 = vmatpush1.bf16.xpose.msra.mxu0 0
    %338 = vmatprep.subr.bf16.mxu0 0
    %339 = vmatpush1.bf16.xpose.msra.mxu0 0
    %340 = vmatprep.subr.bf16.mxu0 0
    %341 = vmatpush1.bf16.xpose.msra.mxu0 0
    %342 = vmatprep.subr.bf16.mxu0 0
    %343 = vmatpush1.bf16.xpose.msra.mxu0 0
    %344 = vmatprep.subr.bf16.mxu0 0
    %345 = vmatpush1.bf16.xpose.msra.mxu0 0
    %346 = vmatprep.subr.bf16.mxu0 0
    %347 = vmatpush1.bf16.xpose.msra.mxu0 0
    %348 = vmatprep.subr.bf16.mxu0 0
    %349 = vmatpush1.bf16.xpose.msra.mxu0 0
    %350 = vmatprep.subr.bf16.mxu0 0
    %351 = vmatpush1.bf16.xpose.msra.mxu0 0
    %352 = vmatprep.subr.bf16.mxu0 0
    %353 = vmatpush1.bf16.xpose.msra.mxu0 0
    %354 = vmatprep.subr.bf16.mxu0 0
    %355 = vmatpush1.bf16.xpose.msra.mxu0 0
    %356 = vmatprep.subr.bf16.mxu0 0
    %357 = vmatpush1.bf16.xpose.msra.mxu0 0
    %358 = vmatprep.subr.bf16.mxu0 0
    %359 = vmatpush1.bf16.xpose.msra.mxu0 0
    %360 = vmatprep.subr.bf16.mxu0 0
    %361 = vmatpush1.bf16.xpose.msra.mxu0 0
    %362 = vmatprep.subr.bf16.mxu0 0
    %363 = vmatpush1.bf16.xpose.msra.mxu0 0
    %364 = vmatprep.subr.bf16.mxu0 0
    %365 = vmatpush1.bf16.xpose.msra.mxu0 0
    %366 = vmatprep.mubr.bf16.mxu0 0
    %367 = vmatmul.mubr.bf16.gmra.mrb[0].mxu0 %v329
    %v368 = vpop.f32.mrb[0].mxu0
    %v369 = vadd.f32 0.0, %v368
    %v370 = vpop.f32.mrb[0].mxu0
    %v371 = vpop.f32.mrb[0].mxu0
    %v372 = vpop.f32.mrb[0].mxu0
    %373 = vdwg.mxu0
    %v374 = vmul.f32 %v369, 0.25
    %v375 = vadd.f32 %v374, %v103
    %v376 = vsel %vm264, %v375, -inf
    %377 = vmax.xlane.f32.xlu0 %v376
    %v378 = vpop.xlane.xlu0 %377
    %v379 = vsub.f32 %v375, %v378
    %v380 = vmul.f32 %v379, 1.442695
    %v381 = vpow.pop %v380
    %v382 = vsel %vm264, %v381, 0.0
    %383 = vadd.xlane.f32.xlu0 %v382
    %v384 = vpop.xlane.xlu0 %383
    %v385 = vrcp.pop %v384
    %v386 = vmul.f32 %v381, %v385
    %v387 = vpack.c.bf16 %v386, %v386
    %389 = vrot.lane.b32.xlu0 %v211, 112
    %v390 = vpop.permute.xlu0 %389
    %v392 = vsel %vm264, %v387, 0
    %v395 = vsel %vm280, %v390, 0
    %397 = vmatprep.subr.bf16.mxu0 0
    %398 = vmatpush1.bf16.msra.mxu0 %v395
    %399 = vmatprep.subr.bf16.mxu0 0
    %400 = vmatpush1.bf16.msra.mxu0 0
    %401 = vmatprep.subr.bf16.mxu0 0
    %402 = vmatpush1.bf16.msra.mxu0 0
    %403 = vmatprep.subr.bf16.mxu0 0
    %404 = vmatpush1.bf16.msra.mxu0 0
    %405 = vmatprep.subr.bf16.mxu0 0
    %406 = vmatpush1.bf16.msra.mxu0 0
    %407 = vmatprep.subr.bf16.mxu0 0
    %408 = vmatpush1.bf16.msra.mxu0 0
    %409 = vmatprep.subr.bf16.mxu0 0
    %410 = vmatpush1.bf16.msra.mxu0 0
    %411 = vmatprep.subr.bf16.mxu0 0
    %412 = vmatpush1.bf16.msra.mxu0 0
    %413 = vmatprep.subr.bf16.mxu0 0
    %414 = vmatpush1.bf16.msra.mxu0 0
    %415 = vmatprep.subr.bf16.mxu0 0
    %416 = vmatpush1.bf16.msra.mxu0 0
    %417 = vmatprep.subr.bf16.mxu0 0
    %418 = vmatpush1.bf16.msra.mxu0 0
    %419 = vmatprep.subr.bf16.mxu0 0
    %420 = vmatpush1.bf16.msra.mxu0 0
    %421 = vmatprep.subr.bf16.mxu0 0
    %422 = vmatpush1.bf16.msra.mxu0 0
    %423 = vmatprep.subr.bf16.mxu0 0
    %424 = vmatpush1.bf16.msra.mxu0 0
    %425 = vmatprep.subr.bf16.mxu0 0
    %426 = vmatpush1.bf16.msra.mxu0 0
    %427 = vmatprep.subr.bf16.mxu0 0
    %428 = vmatpush1.bf16.msra.mxu0 0
    %429 = vmatprep.mubr.bf16.mxu0 0
    %430 = vmatmul.mubr.bf16.gmra.mrb[0].mxu0 %v392
    %v431 = vpop.f32.mrb[0].mxu0
    %v432 = vadd.f32 0.0, %v431
    %v433 = vpop.f32.mrb[0].mxu0
    %v434 = vpop.f32.mrb[0].mxu0
    %v435 = vpop.f32.mrb[0].mxu0
    %436 = vdwg.mxu0
    %437 = vrot.lane.b32.xlu0 %v210, 96
    %v438 = vpop.permute.xlu0 %437
    %439 = vrot.lane.b32.xlu0 %v210, 32
    %v440 = vpop.permute.xlu0 %439
    %v442 = vsel %vm215, %v438, 0
    %v445 = vsel %vm215, %v440, 0
    %447 = vmatprep.subr.bf16.mxu0 0
    %448 = vmatpush1.bf16.xpose.msra.mxu0 %v445
    %449 = vmatprep.subr.bf16.mxu0 0
    %450 = vmatpush1.bf16.xpose.msra.mxu0 0
    %451 = vmatprep.subr.bf16.mxu0 0
    %452 = vmatpush1.bf16.xpose.msra.mxu0 0
    %453 = vmatprep.subr.bf16.mxu0 0
    %454 = vmatpush1.bf16.xpose.msra.mxu0 0
    %455 = vmatprep.subr.bf16.mxu0 0
    %456 = vmatpush1.bf16.xpose.msra.mxu0 0
    %457 = vmatprep.subr.bf16.mxu0 0
    %458 = vmatpush1.bf16.xpose.msra.mxu0 0
    %459 = vmatprep.subr.bf16.mxu0 0
    %460 = vmatpush1.bf16.xpose.msra.mxu0 0
    %461 = vmatprep.subr.bf16.mxu0 0
    %462 = vmatpush1.bf16.xpose.msra.mxu0 0
    %463 = vmatprep.subr.bf16.mxu0 0
    %464 = vmatpush1.bf16.xpose.msra.mxu0 0
    %465 = vmatprep.subr.bf16.mxu0 0
    %466 = vmatpush1.bf16.xpose.msra.mxu0 0
    %467 = vmatprep.subr.bf16.mxu0 0
    %468 = vmatpush1.bf16.xpose.msra.mxu0 0
    %469 = vmatprep.subr.bf16.mxu0 0
    %470 = vmatpush1.bf16.xpose.msra.mxu0 0
    %471 = vmatprep.subr.bf16.mxu0 0
    %472 = vmatpush1.bf16.xpose.msra.mxu0 0
    %473 = vmatprep.subr.bf16.mxu0 0
    %474 = vmatpush1.bf16.xpose.msra.mxu0 0
    %475 = vmatprep.subr.bf16.mxu0 0
    %476 = vmatpush1.bf16.xpose.msra.mxu0 0
    %477 = vmatprep.subr.bf16.mxu0 0
    %478 = vmatpush1.bf16.xpose.msra.mxu0 0
    %479 = vmatprep.mubr.bf16.mxu0 0
    %480 = vmatmul.mubr.bf16.gmra.mrb[0].mxu0 %v442
    %v481 = vpop.f32.mrb[0].mxu0
    %v482 = vadd.f32 0.0, %v481
    %v483 = vpop.f32.mrb[0].mxu0
    %v484 = vpop.f32.mrb[0].mxu0
    %v485 = vpop.f32.mrb[0].mxu0
    %486 = vdwg.mxu0
    %v487 = vmul.f32 %v482, 0.25
    %v488 = vadd.f32 %v487, %v103
    %v489 = vsel %vm264, %v488, -inf
    %490 = vmax.xlane.f32.xlu0 %v489
    %v491 = vpop.xlane.xlu0 %490
    %v492 = vsub.f32 %v488, %v491
    %v493 = vmul.f32 %v492, 1.442695
    %v494 = vpow.pop %v493
    %v495 = vsel %vm264, %v494, 0.0
    %496 = vadd.xlane.f32.xlu0 %v495
    %v497 = vpop.xlane.xlu0 %496
    %v498 = vrcp.pop %v497
    %v499 = vmul.f32 %v494, %v498
    %v500 = vpack.c.bf16 %v499, %v499
    %501 = vrot.lane.b32.xlu0 %v211, 96
    %v502 = vpop.permute.xlu0 %501
    %v504 = vsel %vm264, %v500, 0
    %v507 = vsel %vm280, %v502, 0
    %509 = vmatprep.subr.bf16.mxu0 0
    %510 = vmatpush1.bf16.msra.mxu0 %v507
    %511 = vmatprep.subr.bf16.mxu0 0
    %512 = vmatpush1.bf16.msra.mxu0 0
    %513 = vmatprep.subr.bf16.mxu0 0
    %514 = vmatpush1.bf16.msra.mxu0 0
    %515 = vmatprep.subr.bf16.mxu0 0
    %516 = vmatpush1.bf16.msra.mxu0 0
    %517 = vmatprep.subr.bf16.mxu0 0
    %518 = vmatpush1.bf16.msra.mxu0 0
    %519 = vmatprep.subr.bf16.mxu0 0
    %520 = vmatpush1.bf16.msra.mxu0 0
    %521 = vmatprep.subr.bf16.mxu0 0
    %522 = vmatpush1.bf16.msra.mxu0 0
    %523 = vmatprep.subr.bf16.mxu0 0
    %524 = vmatpush1.bf16.msra.mxu0 0
    %525 = vmatprep.subr.bf16.mxu0 0
    %526 = vmatpush1.bf16.msra.mxu0 0
    %527 = vmatprep.subr.bf16.mxu0 0
    %528 = vmatpush1.bf16.msra.mxu0 0
    %529 = vmatprep.subr.bf16.mxu0 0
    %530 = vmatpush1.bf16.msra.mxu0 0
    %531 = vmatprep.subr.bf16.mxu0 0
    %532 = vmatpush1.bf16.msra.mxu0 0
    %533 = vmatprep.subr.bf16.mxu0 0
    %534 = vmatpush1.bf16.msra.mxu0 0
    %535 = vmatprep.subr.bf16.mxu0 0
    %536 = vmatpush1.bf16.msra.mxu0 0
    %537 = vmatprep.subr.bf16.mxu0 0
    %538 = vmatpush1.bf16.msra.mxu0 0
    %539 = vmatprep.subr.bf16.mxu0 0
    %540 = vmatpush1.bf16.msra.mxu0 0
    %541 = vmatprep.mubr.bf16.mxu0 0
    %542 = vmatmul.mubr.bf16.gmra.mrb[0].mxu0 %v504
    %v543 = vpop.f32.mrb[0].mxu0
    %v544 = vadd.f32 0.0, %v543
    %v545 = vpop.f32.mrb[0].mxu0
    %v546 = vpop.f32.mrb[0].mxu0
    %v547 = vpop.f32.mrb[0].mxu0
    %548 = vdwg.mxu0
    %549 = vrot.lane.b32.xlu0 %v210, 80
    %v550 = vpop.permute.xlu0 %549
    %551 = vrot.lane.b32.xlu0 %v210, 16
    %v552 = vpop.permute.xlu0 %551
    %v554 = vsel %vm215, %v550, 0
    %v557 = vsel %vm215, %v552, 0
    %559 = vmatprep.subr.bf16.mxu0 0
    %560 = vmatpush1.bf16.xpose.msra.mxu0 %v557
    %561 = vmatprep.subr.bf16.mxu0 0
    %562 = vmatpush1.bf16.xpose.msra.mxu0 0
    %563 = vmatprep.subr.bf16.mxu0 0
    %564 = vmatpush1.bf16.xpose.msra.mxu0 0
    %565 = vmatprep.subr.bf16.mxu0 0
    %566 = vmatpush1.bf16.xpose.msra.mxu0 0
    %567 = vmatprep.subr.bf16.mxu0 0
    %568 = vmatpush1.bf16.xpose.msra.mxu0 0
    %569 = vmatprep.subr.bf16.mxu0 0
    %570 = vmatpush1.bf16.xpose.msra.mxu0 0
    %571 = vmatprep.subr.bf16.mxu0 0
    %572 = vmatpush1.bf16.xpose.msra.mxu0 0
    %573 = vmatprep.subr.bf16.mxu0 0
    %574 = vmatpush1.bf16.xpose.msra.mxu0 0
    %575 = vmatprep.subr.bf16.mxu0 0
    %576 = vmatpush1.bf16.xpose.msra.mxu0 0
    %577 = vmatprep.subr.bf16.mxu0 0
    %578 = vmatpush1.bf16.xpose.msra.mxu0 0
    %579 = vmatprep.subr.bf16.mxu0 0
    %580 = vmatpush1.bf16.xpose.msra.mxu0 0
    %581 = vmatprep.subr.bf16.mxu0 0
    %582 = vmatpush1.bf16.xpose.msra.mxu0 0
    %583 = vmatprep.subr.bf16.mxu0 0
    %584 = vmatpush1.bf16.xpose.msra.mxu0 0
    %585 = vmatprep.subr.bf16.mxu0 0
    %586 = vmatpush1.bf16.xpose.msra.mxu0 0
    %587 = vmatprep.subr.bf16.mxu0 0
    %588 = vmatpush1.bf16.xpose.msra.mxu0 0
    %589 = vmatprep.subr.bf16.mxu0 0
    %590 = vmatpush1.bf16.xpose.msra.mxu0 0
    %591 = vmatprep.mubr.bf16.mxu0 0
    %592 = vmatmul.mubr.bf16.gmra.mrb[0].mxu0 %v554
    %v593 = vpop.f32.mrb[0].mxu0
    %v594 = vadd.f32 0.0, %v593
    %v595 = vpop.f32.mrb[0].mxu0
    %v596 = vpop.f32.mrb[0].mxu0
    %v597 = vpop.f32.mrb[0].mxu0
    %598 = vdwg.mxu0
    %v599 = vmul.f32 %v594, 0.25
    %v600 = vadd.f32 %v599, %v103
    %v601 = vsel %vm264, %v600, -inf
    %602 = vmax.xlane.f32.xlu0 %v601
    %v603 = vpop.xlane.xlu0 %602
    %v604 = vsub.f32 %v600, %v603
    %v605 = vmul.f32 %v604, 1.442695
    %v606 = vpow.pop %v605
    %v607 = vsel %vm264, %v606, 0.0
    %608 = vadd.xlane.f32.xlu0 %v607
    %v609 = vpop.xlane.xlu0 %608
    %v610 = vrcp.pop %v609
    %v611 = vmul.f32 %v606, %v610
    %v612 = vpack.c.bf16 %v611, %v611
    %613 = vrot.lane.b32.xlu0 %v211, 80
    %v614 = vpop.permute.xlu0 %613
    %v616 = vsel %vm264, %v612, 0
    %v619 = vsel %vm280, %v614, 0
    %621 = vmatprep.subr.bf16.mxu0 0
    %622 = vmatpush1.bf16.msra.mxu0 %v619
    %623 = vmatprep.subr.bf16.mxu0 0
    %624 = vmatpush1.bf16.msra.mxu0 0
    %625 = vmatprep.subr.bf16.mxu0 0
    %626 = vmatpush1.bf16.msra.mxu0 0
    %627 = vmatprep.subr.bf16.mxu0 0
    %628 = vmatpush1.bf16.msra.mxu0 0
    %629 = vmatprep.subr.bf16.mxu0 0
    %630 = vmatpush1.bf16.msra.mxu0 0
    %631 = vmatprep.subr.bf16.mxu0 0
    %632 = vmatpush1.bf16.msra.mxu0 0
    %633 = vmatprep.subr.bf16.mxu0 0
    %634 = vmatpush1.bf16.msra.mxu0 0
    %635 = vmatprep.subr.bf16.mxu0 0
    %636 = vmatpush1.bf16.msra.mxu0 0
    %637 = vmatprep.subr.bf16.mxu0 0
    %638 = vmatpush1.bf16.msra.mxu0 0
    %639 = vmatprep.subr.bf16.mxu0 0
    %640 = vmatpush1.bf16.msra.mxu0 0
    %641 = vmatprep.subr.bf16.mxu0 0
    %642 = vmatpush1.bf16.msra.mxu0 0
    %643 = vmatprep.subr.bf16.mxu0 0
    %644 = vmatpush1.bf16.msra.mxu0 0
    %645 = vmatprep.subr.bf16.mxu0 0
    %646 = vmatpush1.bf16.msra.mxu0 0
    %647 = vmatprep.subr.bf16.mxu0 0
    %648 = vmatpush1.bf16.msra.mxu0 0
    %649 = vmatprep.subr.bf16.mxu0 0
    %650 = vmatpush1.bf16.msra.mxu0 0
    %651 = vmatprep.subr.bf16.mxu0 0
    %652 = vmatpush1.bf16.msra.mxu0 0
    %653 = vmatprep.mubr.bf16.mxu0 0
    %654 = vmatmul.mubr.bf16.gmra.mrb[0].mxu0 %v616
    %v655 = vpop.f32.mrb[0].mxu0
    %v656 = vadd.f32 0.0, %v655
    %v657 = vpop.f32.mrb[0].mxu0
    %v658 = vpop.f32.mrb[0].mxu0
    %v659 = vpop.f32.mrb[0].mxu0
    %660 = vdwg.mxu0
    %662 = vrot.lane.b32.xlu0 %v432, 16
    %v663 = vpop.permute.xlu0 %662
    %666 = vrot.lane.b32.xlu0 %v544, 32
    %v667 = vpop.permute.xlu0 %666
    %670 = vrot.lane.b32.xlu0 %v656, 48
    %v671 = vpop.permute.xlu0 %670
    %v673 = vsel %vm215, %v319, %v663
    %vm674 = vcmask 261120
    %v675 = vsel %vm674, %v673, %v667
    %vm676 = vcmask 392192
    %v677 = vsel %vm676, %v675, %v671
    %v678 = vpack.c.bf16 %v677, %v677
    %v679 = vld [vmem:[%s9] sm:$0xf]
    %v680 = vld [vmem:[%s9 + $0x4] sm:$0xf]
    %v681 = vld [vmem:[%s9 + $0x8] sm:$0xf]
    %v682 = vld [vmem:[%s9 + $0xc] sm:$0xf]
    %v683 = vld [vmem:[%s9 + $0x10] sm:$0xf]
    %v684 = vld [vmem:[%s9 + $0x14] sm:$0xf]
    %v685 = vld [vmem:[%s9 + $0x18] sm:$0xf]
    %v686 = vld [vmem:[%s9 + $0x1c] sm:$0xf]
    %v687 = vld [vmem:[%s10] sm:$0x1]
    %v689 = vlaneseq
    %v690 = vshrl.u32 %v689, 7
    %v691 = vsub.s32 0, %v690
    %v692 = vrot.slane %v687, %v691
    %v702 = vunpack.c.l.b16 %v679
    %v703 = vunpack.c.l.b16 %v680
    %v704 = vunpack.c.l.b16 %v681
    %v705 = vunpack.c.l.b16 %v682
    %v706 = vunpack.c.l.b16 %v683
    %v707 = vunpack.c.l.b16 %v684
    %v708 = vunpack.c.l.b16 %v685
    %v709 = vunpack.c.l.b16 %v686
    %v710 = vpack.c.b16 %v703, %v702
    %v711 = vpack.c.b16 %v705, %v704
    %v712 = vpack.c.b16 %v707, %v706
    %v713 = vpack.c.b16 %v709, %v708
    %v719 = vsel %vm165, %v678, 0
    %721 = vmatprep.subr.bf16.mxu0 0
    %722 = vmatpush1.bf16.msra.mxu0 %v710
    %723 = vmatprep.subr.bf16.mxu0 0
    %724 = vmatpush1.bf16.msra.mxu0 %v711
    %725 = vmatprep.subr.bf16.mxu0 0
    %726 = vmatpush1.bf16.msra.mxu0 %v712
    %727 = vmatprep.subr.bf16.mxu0 0
    %728 = vmatpush1.bf16.msra.mxu0 %v713
    %729 = vmatprep.subr.bf16.mxu0 0
    %730 = vmatpush1.bf16.msra.mxu0 0
    %731 = vmatprep.subr.bf16.mxu0 0
    %732 = vmatpush1.bf16.msra.mxu0 0
    %733 = vmatprep.subr.bf16.mxu0 0
    %734 = vmatpush1.bf16.msra.mxu0 0
    %735 = vmatprep.subr.bf16.mxu0 0
    %736 = vmatpush1.bf16.msra.mxu0 0
    %737 = vmatprep.subr.bf16.mxu0 0
    %738 = vmatpush1.bf16.msra.mxu0 0
    %739 = vmatprep.subr.bf16.mxu0 0
    %740 = vmatpush1.bf16.msra.mxu0 0
    %741 = vmatprep.subr.bf16.mxu0 0
    %742 = vmatpush1.bf16.msra.mxu0 0
    %743 = vmatprep.subr.bf16.mxu0 0
    %744 = vmatpush1.bf16.msra.mxu0 0
    %745 = vmatprep.subr.bf16.mxu0 0
    %746 = vmatpush1.bf16.msra.mxu0 0
    %747 = vmatprep.subr.bf16.mxu0 0
    %748 = vmatpush1.bf16.msra.mxu0 0
    %749 = vmatprep.subr.bf16.mxu0 0
    %750 = vmatpush1.bf16.msra.mxu0 0
    %751 = vmatprep.subr.bf16.mxu0 0
    %752 = vmatpush1.bf16.msra.mxu0 0
    %753 = vmatprep.mubr.bf16.mxu0 0
    %754 = vmatmul.mubr.bf16.gmra.mrb[0].mxu0 %v719
    %v755 = vpop.f32.mrb[0].mxu0
    %v756 = vadd.f32 %v692, %v755
    %v757 = vpop.f32.mrb[0].mxu0
    %v758 = vpop.f32.mrb[0].mxu0
    %v759 = vpop.f32.mrb[0].mxu0
    %760 = vdwg.mxu0
    %v761 = vadd.f32 %v102, %v756
    %v762 = vld [vmem:[%s15] sm:$0x1]
    %v763 = vld [vmem:[#allocation2] sm:$0x1]
    %v764 = vsel %vm165, %v761, 0.0
    %765 = vadd.xlane.f32.xlu0 %v764
    %v766 = vpop.xlane.xlu0 %765
    %v767 = vrcp.pop 64.0
    %v768 = vmul.f32 %v766, %v767
    %v769 = vsub.f32 %v761, %v768
    %v770 = vmul.f32 %v769, %v769
    %v771 = vsel %vm165, %v770, 0.0
    %772 = vadd.xlane.f32.xlu0 %v771
    %v773 = vpop.xlane.xlu0 %772
    %v774 = vmul.f32 %v773, %v767
    %v775 = vadd.f32 %v774, 1e-05
    %v776 = vrsqrt.pop %v775
    %v777 = vmul.f32 %v769, %v776
    %v779 = vlaneseq
    %v780 = vshrl.u32 %v779, 7
    %v781 = vsub.s32 0, %v780
    %v782 = vrot.slane %v762, %v781
    %v784 = vmul.f32 %v777, %v782
    %v786 = vlaneseq
    %v787 = vshrl.u32 %v786, 7
    %v788 = vsub.s32 0, %v787
    %v789 = vrot.slane %v763, %v788
    %v791 = vadd.f32 %v784, %v789
    %v792 = vpack.c.bf16 %v791, %v791
    %v793 = vld [vmem:[%s11] sm:$0xff]
    %v794 = vld [vmem:[%s11 + $0x8] sm:$0xff]
    %v795 = vld [vmem:[%s11 + $0x10] sm:$0xff]
    %v796 = vld [vmem:[%s11 + $0x18] sm:$0xff]
    %v797 = vld [vmem:[%s11 + $0x20] sm:$0xff]
    %v798 = vld [vmem:[%s11 + $0x28] sm:$0xff]
    %v799 = vld [vmem:[%s11 + $0x30] sm:$0xff]
    %v800 = vld [vmem:[%s11 + $0x38] sm:$0xff]
    %v801 = vld [vmem:[%s12] sm:$0x3]
    %v803 = vlaneseq
    %v804 = vshrl.u32 %v803, 7
    %v805 = vsub.s32 0, %v804
    %v806 = vrot.slane %v801, %v805
    %v807 = vlaneseq
    %v808 = vshrl.u32 %v807, 7
    %v809 = vsub.s32 1, %v808
    %v810 = vrot.slane %v801, %v809
    %v821 = vunpack.c.l.b16 %v793
    %v822 = vunpack.c.h.b16 %v793
    %v823 = vunpack.c.l.b16 %v794
    %v824 = vunpack.c.h.b16 %v794
    %v825 = vunpack.c.l.b16 %v795
    %v826 = vunpack.c.h.b16 %v795
    %v827 = vunpack.c.l.b16 %v796
    %v828 = vunpack.c.h.b16 %v796
    %v829 = vunpack.c.l.b16 %v797
    %v830 = vunpack.c.h.b16 %v797
    %v831 = vunpack.c.l.b16 %v798
    %v832 = vunpack.c.h.b16 %v798
    %v833 = vunpack.c.l.b16 %v799
    %v834 = vunpack.c.h.b16 %v799
    %v835 = vunpack.c.l.b16 %v800
    %v836 = vunpack.c.h.b16 %v800
    %v837 = vpack.c.b16 %v823, %v821
    %v838 = vpack.c.b16 %v824, %v822
    %v839 = vpack.c.b16 %v827, %v825
    %v840 = vpack.c.b16 %v828, %v826
    %v841 = vpack.c.b16 %v831, %v829
    %v842 = vpack.c.b16 %v832, %v830
    %v843 = vpack.c.b16 %v835, %v833
    %v844 = vpack.c.b16 %v836, %v834
    %v854 = vsel %vm165, %v792, 0
    %856 = vmatprep.subr.bf16.mxu0 %v838
    %857 = vmatpush1.bf16.msra.mxu0 %v837
    %858 = vmatprep.subr.bf16.mxu0 %v840
    %859 = vmatpush1.bf16.msra.mxu0 %v839
    %860 = vmatprep.subr.bf16.mxu0 %v842
    %861 = vmatpush1.bf16.msra.mxu0 %v841
    %862 = vmatprep.subr.bf16.mxu0 %v844
    %863 = vmatpush1.bf16.msra.mxu0 %v843
    %864 = vmatprep.subr.bf16.mxu0 0
    %865 = vmatpush1.bf16.msra.mxu0 0
    %866 = vmatprep.subr.bf16.mxu0 0
    %867 = vmatpush1.bf16.msra.mxu0 0
    %868 = vmatprep.subr.bf16.mxu0 0
    %869 = vmatpush1.bf16.msra.mxu0 0
    %870 = vmatprep.subr.bf16.mxu0 0
    %871 = vmatpush1.bf16.msra.mxu0 0
    %872 = vmatprep.subr.bf16.mxu0 0
    %873 = vmatpush1.bf16.msra.mxu0 0
    %874 = vmatprep.subr.bf16.mxu0 0
    %875 = vmatpush1.bf16.msra.mxu0 0
    %876 = vmatprep.subr.bf16.mxu0 0
    %877 = vmatpush1.bf16.msra.mxu0 0
    %878 = vmatprep.subr.bf16.mxu0 0
    %879 = vmatpush1.bf16.msra.mxu0 0
    %880 = vmatprep.subr.bf16.mxu0 0
    %881 = vmatpush1.bf16.msra.mxu0 0
    %882 = vmatprep.subr.bf16.mxu0 0
    %883 = vmatpush1.bf16.msra.mxu0 0
    %884 = vmatprep.subr.bf16.mxu0 0
    %885 = vmatpush1.bf16.msra.mxu0 0
    %886 = vmatprep.subr.bf16.mxu0 0
    %887 = vmatpush1.bf16.msra.mxu0 0
    %888 = vmatprep.mubr.bf16.mxu0 0
    %889 = vmatmul.mubr.bf16.gmra.mrb[0].mxu0 %v854
    %v890 = vpop.f32.mrb[0].mxu0
    %v891 = vadd.f32 %v806, %v890
    %v892 = vpop.f32.mrb[0].mxu0
    %v893 = vadd.f32 %v810, %v892
    %v894 = vpop.f32.mrb[0].mxu0
    %v895 = vpop.f32.mrb[0].mxu0
    %896 = vdwg.mxu0
    %v897 = vmax.f32 %v891, 0.0
    %v898 = vmax.f32 %v893, 0.0
    %v899 = vpack.c.bf16 %v897, %v897
    %v900 = vpack.c.bf16 %v898, %v898
    %v901 = vld [vmem:[%s13] sm:$0xf]
    %v902 = vld [vmem:[%s13 + $0x4] sm:$0xf]
    %v903 = vld [vmem:[%s13 + $0x8] sm:$0xf]
    %v904 = vld [vmem:[%s13 + $0xc] sm:$0xf]
    %v905 = vld [vmem:[%s13 + $0x10] sm:$0xf]
    %v906 = vld [vmem:[%s13 + $0x14] sm:$0xf]
    %v907 = vld [vmem:[%s13 + $0x18] sm:$0xf]
    %v908 = vld [vmem:[%s13 + $0x1c] sm:$0xf]
    %v909 = vld [vmem:[%s13 + $0x20] sm:$0xf]
    %v910 = vld [vmem:[%s13 + $0x24] sm:$0xf]
    %v911 = vld [vmem:[%s13 + $0x28] sm:$0xf]
    %v912 = vld [vmem:[%s13 + $0x2c] sm:$0xf]
    %v913 = vld [vmem:[%s13 + $0x30] sm:$0xf]
    %v914 = vld [vmem:[%s13 + $0x34] sm:$0xf]
    %v915 = vld [vmem:[%s13 + $0x38] sm:$0xf]
    %v916 = vld [vmem:[%s13 + $0x3c] sm:$0xf]
    %v917 = vld [vmem:[%s13 + $0x40] sm:$0xf]
    %v918 = vld [vmem:[%s13 + $0x44] sm:$0xf]
    %v919 = vld [vmem:[%s13 + $0x48] sm:$0xf]
    %v920 = vld [vmem:[%s13 + $0x4c] sm:$0xf]
    %v921 = vld [vmem:[%s13 + $0x50] sm:$0xf]
    %v922 = vld [vmem:[%s13 + $0x54] sm:$0xf]
    %v923 = vld [vmem:[%s13 + $0x58] sm:$0xf]
    %v924 = vld [vmem:[%s13 + $0x5c] sm:$0xf]
    %v925 = vld [vmem:[%s13 + $0x60] sm:$0xf]
    %v926 = vld [vmem:[%s13 + $0x64] sm:$0xf]
    %v927 = vld [vmem:[%s13 + $0x68] sm:$0xf]
    %v928 = vld [vmem:[%s13 + $0x6c] sm:$0xf]
    %v929 = vld [vmem:[%s13 + $0x70] sm:$0xf]
    %v930 = vld [vmem:[%s13 + $0x74] sm:$0xf]
    %v931 = vld [vmem:[%s13 + $0x78] sm:$0xf]
    %v932 = vld [vmem:[%s13 + $0x7c] sm:$0xf]
    %v933 = vld [vmem:[%s14] sm:$0x1]
    %v935 = vlaneseq
    %v936 = vshrl.u32 %v935, 7
    %v937 = vsub.s32 0, %v936
    %v938 = vrot.slane %v933, %v937
    %v972 = vunpack.c.l.b16 %v901
    %v973 = vunpack.c.l.b16 %v902
    %v974 = vunpack.c.l.b16 %v903
    %v975 = vunpack.c.l.b16 %v904
    %v976 = vunpack.c.l.b16 %v905
    %v977 = vunpack.c.l.b16 %v906
    %v978 = vunpack.c.l.b16 %v907
    %v979 = vunpack.c.l.b16 %v908
    %v980 = vunpack.c.l.b16 %v909
    %v981 = vunpack.c.l.b16 %v910
    %v982 = vunpack.c.l.b16 %v911
    %v983 = vunpack.c.l.b16 %v912
    %v984 = vunpack.c.l.b16 %v913
    %v985 = vunpack.c.l.b16 %v914
    %v986 = vunpack.c.l.b16 %v915
    %v987 = vunpack.c.l.b16 %v916
    %v988 = vunpack.c.l.b16 %v917
    %v989 = vunpack.c.l.b16 %v918
    %v990 = vunpack.c.l.b16 %v919
    %v991 = vunpack.c.l.b16 %v920
    %v992 = vunpack.c.l.b16 %v921
    %v993 = vunpack.c.l.b16 %v922
    %v994 = vunpack.c.l.b16 %v923
    %v995 = vunpack.c.l.b16 %v924
    %v996 = vunpack.c.l.b16 %v925
    %v997 = vunpack.c.l.b16 %v926
    %v998 = vunpack.c.l.b16 %v927
    %v999 = vunpack.c.l.b16 %v928
    %v1000 = vunpack.c.l.b16 %v929
    %v1001 = vunpack.c.l.b16 %v930
    %v1002 = vunpack.c.l.b16 %v931
    %v1003 = vunpack.c.l.b16 %v932
    %v1004 = vpack.c.b16 %v973, %v972
    %v1005 = vpack.c.b16 %v975, %v974
    %v1006 = vpack.c.b16 %v977, %v976
    %v1007 = vpack.c.b16 %v979, %v978
    %v1008 = vpack.c.b16 %v981, %v980
    %v1009 = vpack.c.b16 %v983, %v982
    %v1010 = vpack.c.b16 %v985, %v984
    %v1011 = vpack.c.b16 %v987, %v986
    %v1012 = vpack.c.b16 %v989, %v988
    %v1013 = vpack.c.b16 %v991, %v990
    %v1014 = vpack.c.b16 %v993, %v992
    %v1015 = vpack.c.b16 %v995, %v994
    %v1016 = vpack.c.b16 %v997, %v996
    %v1017 = vpack.c.b16 %v999, %v998
    %v1018 = vpack.c.b16 %v1001, %v1000
    %v1019 = vpack.c.b16 %v1003, %v1002
    %1036 = vmatprep.subr.bf16.mxu0 0
    %1037 = vmatpush1.bf16.msra.mxu0 %v1004
    %1038 = vmatprep.subr.bf16.mxu0 0
    %1039 = vmatpush1.bf16.msra.mxu0 %v1005
    %1040 = vmatprep.subr.bf16.mxu0 0
    %1041 = vmatpush1.bf16.msra.mxu0 %v1006
    %1042 = vmatprep.subr.bf16.mxu0 0
    %1043 = vmatpush1.bf16.msra.mxu0 %v1007
    %1044 = vmatprep.subr.bf16.mxu0 0
    %1045 = vmatpush1.bf16.msra.mxu0 %v1008
    %1046 = vmatprep.subr.bf16.mxu0 0
    %1047 = vmatpush1.bf16.msra.mxu0 %v1009
    %1048 = vmatprep.subr.bf16.mxu0 0
    %1049 = vmatpush1.bf16.msra.mxu0 %v1010
    %1050 = vmatprep.subr.bf16.mxu0 0
    %1051 = vmatpush1.bf16.msra.mxu0 %v1011
    %1052 = vmatprep.subr.bf16.mxu0 0
    %1053 = vmatpush1.bf16.msra.mxu0 %v1012
    %1054 = vmatprep.subr.bf16.mxu0 0
    %1055 = vmatpush1.bf16.msra.mxu0 %v1013
    %1056 = vmatprep.subr.bf16.mxu0 0
    %1057 = vmatpush1.bf16.msra.mxu0 %v1014
    %1058 = vmatprep.subr.bf16.mxu0 0
    %1059 = vmatpush1.bf16.msra.mxu0 %v1015
    %1060 = vmatprep.subr.bf16.mxu0 0
    %1061 = vmatpush1.bf16.msra.mxu0 %v1016
    %1062 = vmatprep.subr.bf16.mxu0 0
    %1063 = vmatpush1.bf16.msra.mxu0 %v1017
    %1064 = vmatprep.subr.bf16.mxu0 0
    %1065 = vmatpush1.bf16.msra.mxu0 %v1018
    %1066 = vmatprep.subr.bf16.mxu0 0
    %1067 = vmatpush1.bf16.msra.mxu0 %v1019
    %1068 = vmatprep.mubr.bf16.mxu0 %v900
    %1069 = vmatmul.mubr.bf16.gmra.mrb[0].mxu0 %v899
    %v1070 = vpop.f32.mrb[0].mxu0
    %v1071 = vadd.f32 %v938, %v1070
    %v1072 = vpop.f32.mrb[0].mxu0
    %v1073 = vpop.f32.mrb[0].mxu0
    %v1074 = vpop.f32.mrb[0].mxu0
    %1075 = vdwg.mxu0
    %v1076 = vadd.f32 %v791, %v1071
    %v1077 = vld [vmem:[#allocation4] sm:$0x1]
    %v1078 = vld [vmem:[#allocation6] sm:$0x1]
    %v1079 = vsel %vm165, %v1076, 0.0
    %1080 = vadd.xlane.f32.xlu0 %v1079
    %v1081 = vpop.xlane.xlu0 %1080
    %v1082 = vmul.f32 %v1081, %v767
    %v1083 = vsub.f32 %v1076, %v1082
    %v1084 = vmul.f32 %v1083, %v1083
    %v1085 = vsel %vm165, %v1084, 0.0
    %1086 = vadd.xlane.f32.xlu0 %v1085
    %v1087 = vpop.xlane.xlu0 %1086
    %v1088 = vmul.f32 %v1087, %v767
    %v1089 = vadd.f32 %v1088, 1e-05
    %v1090 = vrsqrt.pop %v1089
    %v1091 = vmul.f32 %v1083, %v1090
    %v1093 = vlaneseq
    %v1094 = vshrl.u32 %v1093, 7
    %v1095 = vsub.s32 0, %v1094
    %v1096 = vrot.slane %v1077, %v1095
    %v1098 = vmul.f32 %v1091, %v1096
    %v1100 = vlaneseq
    %v1101 = vshrl.u32 %v1100, 7
    %v1102 = vsub.s32 0, %v1101
    %v1103 = vrot.slane %v1078, %v1102
    %v1105 = vadd.f32 %v1098, %v1103
    %v1106 = vld [vmem:[%s3] sm:$0x1]
    %v1107 = vld [vmem:[%s4] sm:$0x1]
    %v1108 = vsel %vm165, %v1105, 0.0
    %1109 = vadd.xlane.f32.xlu0 %v1108
    %v1110 = vpop.xlane.xlu0 %1109
    %v1111 = vmul.f32 %v1110, %v767
    %v1112 = vsub.f32 %v1105, %v1111
    %v1113 = vmul.f32 %v1112, %v1112
    %v1114 = vsel %vm165, %v1113, 0.0
    %1115 = vadd.xlane.f32.xlu0 %v1114
    %v1116 = vpop.xlane.xlu0 %1115
    %v1117 = vmul.f32 %v1116, %v767
    %v1118 = vadd.f32 %v1117, 1e-05
    %v1119 = vrsqrt.pop %v1118
    %v1120 = vmul.f32 %v1112, %v1119
    %v1122 = vlaneseq
    %v1123 = vshrl.u32 %v1122, 7
    %v1124 = vsub.s32 0, %v1123
    %v1125 = vrot.slane %v1106, %v1124
    %v1127 = vmul.f32 %v1120, %v1125
    %v1129 = vlaneseq
    %v1130 = vshrl.u32 %v1129, 7
    %v1131 = vsub.s32 0, %v1130
    %v1132 = vrot.slane %v1107, %v1131
    %v1134 = vadd.f32 %v1127, %v1132
    %v1135 = vmax.f32 %v1134, 0.0
    %v1136 = vpack.c.bf16 %v1135, %v1135
    %v1137 = vld [vmem:[%s5] sm:$0xf]
    %v1138 = vld [vmem:[%s5 + $0x4] sm:$0xf]
    %v1139 = vld [vmem:[%s5 + $0x8] sm:$0xf]
    %v1140 = vld [vmem:[%s5 + $0xc] sm:$0xf]
    %v1141 = vld [vmem:[%s5 + $0x10] sm:$0xf]
    %v1142 = vld [vmem:[%s5 + $0x14] sm:$0xf]
    %v1143 = vld [vmem:[%s5 + $0x18] sm:$0xf]
    %v1144 = vld [vmem:[%s5 + $0x1c] sm:$0xf]
    %v1145 = vld [vmem:[%s6] sm:$0x1]
    %v1147 = vlaneseq
    %v1148 = vshrl.u32 %v1147, 7
    %v1149 = vsub.s32 0, %v1148
    %v1150 = vrot.slane %v1145, %v1149
    %v1160 = vunpack.c.l.b16 %v1137
    %v1161 = vunpack.c.l.b16 %v1138
    %v1162 = vunpack.c.l.b16 %v1139
    %v1163 = vunpack.c.l.b16 %v1140
    %v1164 = vunpack.c.l.b16 %v1141
    %v1165 = vunpack.c.l.b16 %v1142
    %v1166 = vunpack.c.l.b16 %v1143
    %v1167 = vunpack.c.l.b16 %v1144
    %v1168 = vpack.c.b16 %v1161, %v1160
    %v1169 = vpack.c.b16 %v1163, %v1162
    %v1170 = vpack.c.b16 %v1165, %v1164
    %v1171 = vpack.c.b16 %v1167, %v1166
    %v1177 = vsel %vm165, %v1136, 0
    %1179 = vmatprep.subr.bf16.mxu0 0
    %1180 = vmatpush1.bf16.msra.mxu0 %v1168
    %1181 = vmatprep.subr.bf16.mxu0 0
    %1182 = vmatpush1.bf16.msra.mxu0 %v1169
    %1183 = vmatprep.subr.bf16.mxu0 0
    %1184 = vmatpush1.bf16.msra.mxu0 %v1170
    %1185 = vmatprep.subr.bf16.mxu0 0
    %1186 = vmatpush1.bf16.msra.mxu0 %v1171
    %1187 = vmatprep.subr.bf16.mxu0 0
    %1188 = vmatpush1.bf16.msra.mxu0 0
    %1189 = vmatprep.subr.bf16.mxu0 0
    %1190 = vmatpush1.bf16.msra.mxu0 0
    %1191 = vmatprep.subr.bf16.mxu0 0
    %1192 = vmatpush1.bf16.msra.mxu0 0
    %1193 = vmatprep.subr.bf16.mxu0 0
    %1194 = vmatpush1.bf16.msra.mxu0 0
    %1195 = vmatprep.subr.bf16.mxu0 0
    %1196 = vmatpush1.bf16.msra.mxu0 0
    %1197 = vmatprep.subr.bf16.mxu0 0
    %1198 = vmatpush1.bf16.msra.mxu0 0
    %1199 = vmatprep.subr.bf16.mxu0 0
    %1200 = vmatpush1.bf16.msra.mxu0 0
    %1201 = vmatprep.subr.bf16.mxu0 0
    %1202 = vmatpush1.bf16.msra.mxu0 0
    %1203 = vmatprep.subr.bf16.mxu0 0
    %1204 = vmatpush1.bf16.msra.mxu0 0
    %1205 = vmatprep.subr.bf16.mxu0 0
    %1206 = vmatpush1.bf16.msra.mxu0 0
    %1207 = vmatprep.subr.bf16.mxu0 0
    %1208 = vmatpush1.bf16.msra.mxu0 0
    %1209 = vmatprep.subr.bf16.mxu0 0
    %1210 = vmatpush1.bf16.msra.mxu0 0
    %1211 = vmatprep.mubr.bf16.mxu0 0
    %1212 = vmatmul.mubr.bf16.gmra.mrb[0].mxu0 %v1177
    %v1213 = vpop.f32.mrb[0].mxu0
    %v1214 = vadd.f32 %v1150, %v1213
    %v1215 = vpop.f32.mrb[0].mxu0
    %v1216 = vpop.f32.mrb[0].mxu0
    %v1217 = vpop.f32.mrb[0].mxu0
    %1218 = vdwg.mxu0
    %v1219 = vpack.c.bf16 %v1214, %v1214
    %vm1220 = vcmask 519168
    %1221 = vst.msk [vmem:[%s19] sm:$0xf] %vm1220, %v1219
    // Predicated region
    $region90: #{forward.10} parent=1 // pred_check
      _
    $region91: #{forward.10} parent=1 // pred_check_branch
      %1223 = sbr.rel (0) target = $region93
    $region92: #{forward.10} parent=1 // pred_region
      _
    $region93: #{forward.10} parent=1 // pred_fallthru
      _
    // Predicated region
    $region94: #{forward.10} parent=1 // pred_check
      _
    $region95: #{forward.10} parent=1 // pred_check_branch
      %1225 = sbr.rel (0) target = $region97
    $region96: #{forward.10} parent=1 // pred_region
      _
    $region97: #{forward.10} parent=1 // pred_fallthru
      _
    %1226 = vsyncpa [#allocation3], 1
    %1227 = vsyncpa [#allocation5], 1

</llo_original>
